<compile_context>
chip_gen: v7x
topology: tpu7x:2x2x1
jax: 0.10.0
libtpu: 0.0.40
codegen_flags: <defaults>
</compile_context>

<pallas_src>
import jax
import jax.numpy as jnp
from jax import lax
from jax.experimental import pallas as pl
from jax.experimental.pallas import tpu as pltpu

_VMEM = pl.BlockSpec(memory_space=pltpu.MemorySpace.VMEM)

# Network geometry (pinned by fc: 320 = 20 * 4 * 4  =>  28x28x1 input).
K = 5                       # conv kernel size (both convs)
H_IN = 28                   # input spatial size
C1_OUT = 10                 # conv1 output channels
C2_IN = 10
C2_OUT = 20                 # conv2 output channels
W1_OUT = H_IN - K + 1       # 24   conv1 spatial output
P1 = W1_OUT // 2            # 12   pooled spatial after conv1 (conv2 input)
W2_OUT = P1 - K + 1         # 8    conv2 spatial output
P2 = W2_OUT // 2            # 4    pooled spatial after conv2
FC_OUT = 10

L1 = P1 * C1_OUT            # 120  conv1 matmul lane width (per column parity)
L2 = P2 * C2_OUT            # 80   conv2 matmul lane width (per column parity)


# ---------------------------------------------------------------------------
# The fused Pallas kernel
# ---------------------------------------------------------------------------
def _net_kernel(xe_ref, xo_ref, b1e_ref, b1o_ref, bias1_ref,
                b2e_ref, b2o_ref, bias2_ref, wfc_ref, bfc_ref, out_ref):
    f32 = jnp.float32
    n_batch = out_ref.shape[0]

    def band_mm(lhs_rows, band_ref):
        # sum_kh  lhs_rows[kh] @ band_ref[kh]   (MXU, f32 accumulate)
        acc = jnp.dot(lhs_rows[0], band_ref[0], preferred_element_type=f32)
        for kh in range(1, K):
            acc = acc + jnp.dot(lhs_rows[kh], band_ref[kh],
                                preferred_element_type=f32)
        return acc

    for n in range(n_batch):                     # tiny static batch loop (N=2)
        # Input image rows, pre-split by parity: xe[i] = row 2i, xo[i] = row 2i+1.
        xe_s = [xe_ref[n, i:i + P1, :] for i in range(3)]   # (12, 28) each
        xo_s = [xo_ref[n, i:i + P1, :] for i in range(3)]
        # conv1 output row ho = 2m   needs image rows 2m + kh     (kh = 0..4)
        rows_even = (xe_s[0], xo_s[0], xe_s[1], xo_s[1], xe_s[2])
        # conv1 output row ho = 2m+1 needs image rows 2m + 1 + kh
        rows_odd = (xo_s[0], xe_s[1], xo_s[1], xe_s[2], xo_s[2])

        # conv1 evaluated for the four (row-parity, column-parity) combinations.
        c_ee = band_mm(rows_even, b1e_ref)       # (12, 120)
        c_eo = band_mm(rows_even, b1o_ref)
        c_oe = band_mm(rows_odd, b1e_ref)
        c_oo = band_mm(rows_odd, b1o_ref)
        # fused 2x2 max-pool + bias + ReLU
        p1 = jnp.maximum(jnp.maximum(c_ee, c_eo), jnp.maximum(c_oe, c_oo))
        p1 = jnp.maximum(p1 + bias1_ref[...], 0.0)           # (12, 120)

        # conv2: LHS rows are contiguous shifted windows of the pooled map.
        rows2 = tuple(p1[kh:kh + W2_OUT, :] for kh in range(K))   # (8, 120)
        m2 = jnp.maximum(band_mm(rows2, b2e_ref),
                         band_mm(rows2, b2o_ref))             # (8, 80) col-pooled

        # row-pool + bias + ReLU + fc, fused per pooled output row.
        y = bfc_ref[...]                                       # (1, 10)
        for h in range(P2):
            r2 = jnp.maximum(m2[2 * h:2 * h + 1, :],
                             m2[2 * h + 1:2 * h + 2, :])       # (1, 80)
            r2 = jnp.maximum(r2 + bias2_ref[...], 0.0)
            y = y + jnp.dot(r2, wfc_ref[h], preferred_element_type=f32)
        out_ref[n:n + 1, :] = y


# ---------------------------------------------------------------------------
# One-time parameter preparation (banded conv weights, tiled biases, fc permute)
# ---------------------------------------------------------------------------
def prepare_params(tp):
    w1, b1 = tp["w1"], tp["b1"]          # (10,1,5,5), (10,)
    w2, b2 = tp["w2"], tp["b2"]          # (20,10,5,5), (20,)
    wfc, bfc = tp["w_fc"], tp["b_fc"]    # (10,320), (10,)

    # conv1 band:  band1[kh, w, wo, co] = w1[co, 0, kh, w - wo]  for 0 <= w-wo < K
    w_idx = jnp.arange(H_IN)[:, None]
    wo_idx = jnp.arange(W1_OUT)[None, :]
    kw = w_idx - wo_idx
    valid1 = (kw >= 0) & (kw < K)
    kw_c1 = jnp.clip(kw, 0, K - 1)
    band1 = []
    for kh in range(K):
        w1t = w1[:, 0, kh, :].T                                  # (K, Co1) [kw, co]
        band1.append(jnp.where(valid1[:, :, None], w1t[kw_c1], 0.0))
    band1 = jnp.stack(band1, axis=0)                             # (5, 28, 24, 10)
    band1e = band1[:, :, 0::2, :].reshape(K, H_IN, L1)           # (5, 28, 120)
    band1o = band1[:, :, 1::2, :].reshape(K, H_IN, L1)

    # conv2 band: rows = (w, ci) of the pooled map, cols = (wo2, co)
    w_idx2 = jnp.arange(P1)[:, None]
    wo_idx2 = jnp.arange(W2_OUT)[None, :]
    kw2 = w_idx2 - wo_idx2
    valid2 = (kw2 >= 0) & (kw2 < K)
    kw_c2 = jnp.clip(kw2, 0, K - 1)
    band2 = []
    for kh in range(K):
        w2t = jnp.transpose(w2[:, :, kh, :], (2, 1, 0))          # (K, Ci, Co)
        full = jnp.transpose(w2t[kw_c2], (0, 2, 1, 3))           # (12, Ci, 8, Co)
        band2.append(jnp.where(valid2[:, None, :, None], full, 0.0))
    band2 = jnp.stack(band2, axis=0)                             # (5, 12, 10, 8, 20)
    band2e = band2[:, :, :, 0::2, :].reshape(K, P1 * C2_IN, L2)  # (5, 120, 80)
    band2o = band2[:, :, :, 1::2, :].reshape(K, P1 * C2_IN, L2)

    # fc weight regrouped per pooled row h: wfc_h[h, wo2*Co2 + co, o]
    #   PyTorch flatten index f = co*(P2*P2) + h*P2 + wo2
    wfc_r = wfc.reshape(FC_OUT, C2_OUT, P2, P2)                  # (o, co, h, wo2)
    wfc_h = jnp.transpose(wfc_r, (2, 3, 1, 0)).reshape(P2, L2, FC_OUT)

    return dict(
        band1e=band1e, band1o=band1o,
        bias1=jnp.tile(b1, P1)[None, :],       # (1, 120)  lane order (wo2, co)
        band2e=band2e, band2o=band2o,
        bias2=jnp.tile(b2, P2)[None, :],       # (1, 80)
        wfc=wfc_h, bfc=bfc[None, :],
    )


# ---------------------------------------------------------------------------
# Forward pass: one pallas_call, everything VMEM-resident
# ---------------------------------------------------------------------------
def net_forward(prep, x_nchw):
    n = x_nchw.shape[0]
    xe = x_nchw[:, 0, 0::2, :]      # (N, 14, 28) even image rows
    xo = x_nchw[:, 0, 1::2, :]      # (N, 14, 28) odd image rows
    return pl.pallas_call(
        _net_kernel,
        out_shape=jax.ShapeDtypeStruct((n, FC_OUT), jnp.float32),
        in_specs=[_VMEM] * 10,
        out_specs=_VMEM,
    )(xe, xo,
      prep["band1e"], prep["band1o"], prep["bias1"],
      prep["band2e"], prep["band2o"], prep["bias2"],
      prep["wfc"], prep["bfc"])


# ---------------------------------------------------------------------------
# PyTorch-layout parameter init and a pure-JAX reference for validation
# ---------------------------------------------------------------------------
def init_params(key):
    k1, k2, k3, k4, k5, k6 = jax.random.split(key, 6)

    def u(k, shape, fan_in):
        bound = 1.0 / jnp.sqrt(jnp.float32(fan_in))
        return jax.random.uniform(k, shape, jnp.float32, -bound, bound)

    return dict(
        w1=u(k1, (C1_OUT, 1, K, K), 1 * K * K), b1=u(k2, (C1_OUT,), 1 * K * K),
        w2=u(k3, (C2_OUT, C2_IN, K, K), C2_IN * K * K),
        b2=u(k4, (C2_OUT,), C2_IN * K * K),
        w_fc=u(k5, (FC_OUT, C2_OUT * P2 * P2), C2_OUT * P2 * P2),
        b_fc=u(k6, (FC_OUT,), C2_OUT * P2 * P2),
    )


def reference_forward(tp, x):
    hp = lax.Precision.HIGHEST
    dn = ("NCHW", "OIHW", "NCHW")
    y = lax.conv_general_dilated(x, tp["w1"], (1, 1), "VALID",
                                 dimension_numbers=dn, precision=hp)
    y = y + tp["b1"][None, :, None, None]
    y = lax.reduce_window(y, -jnp.inf, lax.max, (1, 1, 2, 2), (1, 1, 2, 2), "VALID")
    y = jnp.maximum(y, 0.0)
    y = lax.conv_general_dilated(y, tp["w2"], (1, 1), "VALID",
                                 dimension_numbers=dn, precision=hp)
    y = y + tp["b2"][None, :, None, None]
    y = lax.reduce_window(y, -jnp.inf, lax.max, (1, 1, 2, 2), (1, 1, 2, 2), "VALID")
    y = jnp.maximum(y, 0.0)
    y = y.reshape(x.shape[0], -1)
    return jnp.dot(y, tp["w_fc"].T, precision=hp) + tp["b_fc"]


if __name__ == "__main__":
    key = jax.random.PRNGKey(0)
    kx, kp = jax.random.split(key)
    x = jax.random.normal(kx, (2, 1, H_IN, H_IN), dtype=jnp.float32)

    torch_params = init_params(kp)
    prepared = prepare_params(torch_params)     # one-time weight preparation

    fwd = jax.jit(net_forward)
    out = jax.block_until_ready(fwd(prepared, x))
    assert out.shape == (2, FC_OUT) and out.dtype == jnp.float32

    ref = jax.block_until_ready(reference_forward(torch_params, x))
    assert jnp.allclose(out, ref, rtol=1e-2, atol=1e-2)
    print("KERNEL_OK")
</pallas_src>

<mosaic_0001>
module attributes {stable_mosaic.version = 11 : i64} {
  func.func @_net_kernel(%arg0: memref<2x14x28xf32, #tpu.memory_space<vmem>>, %arg1: memref<2x14x28xf32, #tpu.memory_space<vmem>>, %arg2: memref<5x28x120xf32, #tpu.memory_space<vmem>>, %arg3: memref<5x28x120xf32, #tpu.memory_space<vmem>>, %arg4: memref<1x120xf32, #tpu.memory_space<vmem>>, %arg5: memref<5x120x80xf32, #tpu.memory_space<vmem>>, %arg6: memref<5x120x80xf32, #tpu.memory_space<vmem>>, %arg7: memref<1x80xf32, #tpu.memory_space<vmem>>, %arg8: memref<4x80x10xf32, #tpu.memory_space<vmem>>, %arg9: memref<1x10xf32, #tpu.memory_space<vmem>>, %arg10: memref<2x10xf32, #tpu.memory_space<vmem>>) attributes {dimension_semantics = [], scalar_prefetch = 0 : i64, scratch_operands = 0 : i64, tpu.core_type = #tpu.core_type<tc>} {
    %c0 = arith.constant 0 : index
    %c0_0 = arith.constant 0 : index
    %c0_1 = arith.constant 0 : index
    %0 = vector.load %arg0[%c0, %c0_0, %c0_1] : memref<2x14x28xf32, #tpu.memory_space<vmem>>, vector<1x12x28xf32>
    %1 = vector.shape_cast %0 : vector<1x12x28xf32> to vector<12x28xf32>
    %c0_2 = arith.constant 0 : index
    %c1 = arith.constant 1 : index
    %c0_3 = arith.constant 0 : index
    %2 = vector.load %arg0[%c0_2, %c1, %c0_3] : memref<2x14x28xf32, #tpu.memory_space<vmem>>, vector<1x12x28xf32>
    %3 = vector.shape_cast %2 : vector<1x12x28xf32> to vector<12x28xf32>
    %c0_4 = arith.constant 0 : index
    %c2 = arith.constant 2 : index
    %c0_5 = arith.constant 0 : index
    %4 = vector.load %arg0[%c0_4, %c2, %c0_5] : memref<2x14x28xf32, #tpu.memory_space<vmem>>, vector<1x12x28xf32>
    %5 = vector.shape_cast %4 : vector<1x12x28xf32> to vector<12x28xf32>
    %c0_6 = arith.constant 0 : index
    %c0_7 = arith.constant 0 : index
    %c0_8 = arith.constant 0 : index
    %6 = vector.load %arg1[%c0_6, %c0_7, %c0_8] : memref<2x14x28xf32, #tpu.memory_space<vmem>>, vector<1x12x28xf32>
    %7 = vector.shape_cast %6 : vector<1x12x28xf32> to vector<12x28xf32>
    %c0_9 = arith.constant 0 : index
    %c1_10 = arith.constant 1 : index
    %c0_11 = arith.constant 0 : index
    %8 = vector.load %arg1[%c0_9, %c1_10, %c0_11] : memref<2x14x28xf32, #tpu.memory_space<vmem>>, vector<1x12x28xf32>
    %9 = vector.shape_cast %8 : vector<1x12x28xf32> to vector<12x28xf32>
    %c0_12 = arith.constant 0 : index
    %c2_13 = arith.constant 2 : index
    %c0_14 = arith.constant 0 : index
    %10 = vector.load %arg1[%c0_12, %c2_13, %c0_14] : memref<2x14x28xf32, #tpu.memory_space<vmem>>, vector<1x12x28xf32>
    %11 = vector.shape_cast %10 : vector<1x12x28xf32> to vector<12x28xf32>
    %c0_15 = arith.constant 0 : index
    %c0_16 = arith.constant 0 : index
    %c0_17 = arith.constant 0 : index
    %12 = vector.load %arg2[%c0_15, %c0_16, %c0_17] : memref<5x28x120xf32, #tpu.memory_space<vmem>>, vector<1x28x120xf32>
    %13 = vector.shape_cast %12 : vector<1x28x120xf32> to vector<28x120xf32>
    %cst = arith.constant dense<0.000000e+00> : vector<12x120xf32>
    %14 = tpu.matmul %1, %13, %cst {dimension_numbers = #tpu.dot_dimension_numbers<[1], [0], [0], [1], [0, 0, 1, 1], [], []>} : vector<12x28xf32>, vector<28x120xf32>, vector<12x120xf32> -> vector<12x120xf32>
    %c1_18 = arith.constant 1 : index
    %c0_19 = arith.constant 0 : index
    %c0_20 = arith.constant 0 : index
    %15 = vector.load %arg2[%c1_18, %c0_19, %c0_20] : memref<5x28x120xf32, #tpu.memory_space<vmem>>, vector<1x28x120xf32>
    %16 = vector.shape_cast %15 : vector<1x28x120xf32> to vector<28x120xf32>
    %cst_21 = arith.constant dense<0.000000e+00> : vector<12x120xf32>
    %17 = tpu.matmul %7, %16, %cst_21 {dimension_numbers = #tpu.dot_dimension_numbers<[1], [0], [0], [1], [0, 0, 1, 1], [], []>} : vector<12x28xf32>, vector<28x120xf32>, vector<12x120xf32> -> vector<12x120xf32>
    %18 = arith.addf %14, %17 : vector<12x120xf32>
    %c2_22 = arith.constant 2 : index
    %c0_23 = arith.constant 0 : index
    %c0_24 = arith.constant 0 : index
    %19 = vector.load %arg2[%c2_22, %c0_23, %c0_24] : memref<5x28x120xf32, #tpu.memory_space<vmem>>, vector<1x28x120xf32>
    %20 = vector.shape_cast %19 : vector<1x28x120xf32> to vector<28x120xf32>
    %cst_25 = arith.constant dense<0.000000e+00> : vector<12x120xf32>
    %21 = tpu.matmul %3, %20, %cst_25 {dimension_numbers = #tpu.dot_dimension_numbers<[1], [0], [0], [1], [0, 0, 1, 1], [], []>} : vector<12x28xf32>, vector<28x120xf32>, vector<12x120xf32> -> vector<12x120xf32>
    %22 = arith.addf %18, %21 : vector<12x120xf32>
    %c3 = arith.constant 3 : index
    %c0_26 = arith.constant 0 : index
    %c0_27 = arith.constant 0 : index
    %23 = vector.load %arg2[%c3, %c0_26, %c0_27] : memref<5x28x120xf32, #tpu.memory_space<vmem>>, vector<1x28x120xf32>
    %24 = vector.shape_cast %23 : vector<1x28x120xf32> to vector<28x120xf32>
    %cst_28 = arith.constant dense<0.000000e+00> : vector<12x120xf32>
    %25 = tpu.matmul %9, %24, %cst_28 {dimension_numbers = #tpu.dot_dimension_numbers<[1], [0], [0], [1], [0, 0, 1, 1], [], []>} : vector<12x28xf32>, vector<28x120xf32>, vector<12x120xf32> -> vector<12x120xf32>
    %26 = arith.addf %22, %25 : vector<12x120xf32>
    %c4 = arith.constant 4 : index
    %c0_29 = arith.constant 0 : index
    %c0_30 = arith.constant 0 : index
    %27 = vector.load %arg2[%c4, %c0_29, %c0_30] : memref<5x28x120xf32, #tpu.memory_space<vmem>>, vector<1x28x120xf32>
    %28 = vector.shape_cast %27 : vector<1x28x120xf32> to vector<28x120xf32>
    %cst_31 = arith.constant dense<0.000000e+00> : vector<12x120xf32>
    %29 = tpu.matmul %5, %28, %cst_31 {dimension_numbers = #tpu.dot_dimension_numbers<[1], [0], [0], [1], [0, 0, 1, 1], [], []>} : vector<12x28xf32>, vector<28x120xf32>, vector<12x120xf32> -> vector<12x120xf32>
    %30 = arith.addf %26, %29 : vector<12x120xf32>
    %c0_32 = arith.constant 0 : index
    %c0_33 = arith.constant 0 : index
    %c0_34 = arith.constant 0 : index
    %31 = vector.load %arg3[%c0_32, %c0_33, %c0_34] : memref<5x28x120xf32, #tpu.memory_space<vmem>>, vector<1x28x120xf32>
    %32 = vector.shape_cast %31 : vector<1x28x120xf32> to vector<28x120xf32>
    %cst_35 = arith.constant dense<0.000000e+00> : vector<12x120xf32>
    %33 = tpu.matmul %1, %32, %cst_35 {dimension_numbers = #tpu.dot_dimension_numbers<[1], [0], [0], [1], [0, 0, 1, 1], [], []>} : vector<12x28xf32>, vector<28x120xf32>, vector<12x120xf32> -> vector<12x120xf32>
    %c1_36 = arith.constant 1 : index
    %c0_37 = arith.constant 0 : index
    %c0_38 = arith.constant 0 : index
    %34 = vector.load %arg3[%c1_36, %c0_37, %c0_38] : memref<5x28x120xf32, #tpu.memory_space<vmem>>, vector<1x28x120xf32>
    %35 = vector.shape_cast %34 : vector<1x28x120xf32> to vector<28x120xf32>
    %cst_39 = arith.constant dense<0.000000e+00> : vector<12x120xf32>
    %36 = tpu.matmul %7, %35, %cst_39 {dimension_numbers = #tpu.dot_dimension_numbers<[1], [0], [0], [1], [0, 0, 1, 1], [], []>} : vector<12x28xf32>, vector<28x120xf32>, vector<12x120xf32> -> vector<12x120xf32>
    %37 = arith.addf %33, %36 : vector<12x120xf32>
    %c2_40 = arith.constant 2 : index
    %c0_41 = arith.constant 0 : index
    %c0_42 = arith.constant 0 : index
    %38 = vector.load %arg3[%c2_40, %c0_41, %c0_42] : memref<5x28x120xf32, #tpu.memory_space<vmem>>, vector<1x28x120xf32>
    %39 = vector.shape_cast %38 : vector<1x28x120xf32> to vector<28x120xf32>
    %cst_43 = arith.constant dense<0.000000e+00> : vector<12x120xf32>
    %40 = tpu.matmul %3, %39, %cst_43 {dimension_numbers = #tpu.dot_dimension_numbers<[1], [0], [0], [1], [0, 0, 1, 1], [], []>} : vector<12x28xf32>, vector<28x120xf32>, vector<12x120xf32> -> vector<12x120xf32>
    %41 = arith.addf %37, %40 : vector<12x120xf32>
    %c3_44 = arith.constant 3 : index
    %c0_45 = arith.constant 0 : index
    %c0_46 = arith.constant 0 : index
    %42 = vector.load %arg3[%c3_44, %c0_45, %c0_46] : memref<5x28x120xf32, #tpu.memory_space<vmem>>, vector<1x28x120xf32>
    %43 = vector.shape_cast %42 : vector<1x28x120xf32> to vector<28x120xf32>
    %cst_47 = arith.constant dense<0.000000e+00> : vector<12x120xf32>
    %44 = tpu.matmul %9, %43, %cst_47 {dimension_numbers = #tpu.dot_dimension_numbers<[1], [0], [0], [1], [0, 0, 1, 1], [], []>} : vector<12x28xf32>, vector<28x120xf32>, vector<12x120xf32> -> vector<12x120xf32>
    %45 = arith.addf %41, %44 : vector<12x120xf32>
    %c4_48 = arith.constant 4 : index
    %c0_49 = arith.constant 0 : index
    %c0_50 = arith.constant 0 : index
    %46 = vector.load %arg3[%c4_48, %c0_49, %c0_50] : memref<5x28x120xf32, #tpu.memory_space<vmem>>, vector<1x28x120xf32>
    %47 = vector.shape_cast %46 : vector<1x28x120xf32> to vector<28x120xf32>
    %cst_51 = arith.constant dense<0.000000e+00> : vector<12x120xf32>
    %48 = tpu.matmul %5, %47, %cst_51 {dimension_numbers = #tpu.dot_dimension_numbers<[1], [0], [0], [1], [0, 0, 1, 1], [], []>} : vector<12x28xf32>, vector<28x120xf32>, vector<12x120xf32> -> vector<12x120xf32>
    %49 = arith.addf %45, %48 : vector<12x120xf32>
    %c0_52 = arith.constant 0 : index
    %c0_53 = arith.constant 0 : index
    %c0_54 = arith.constant 0 : index
    %50 = vector.load %arg2[%c0_52, %c0_53, %c0_54] : memref<5x28x120xf32, #tpu.memory_space<vmem>>, vector<1x28x120xf32>
    %51 = vector.shape_cast %50 : vector<1x28x120xf32> to vector<28x120xf32>
    %cst_55 = arith.constant dense<0.000000e+00> : vector<12x120xf32>
    %52 = tpu.matmul %7, %51, %cst_55 {dimension_numbers = #tpu.dot_dimension_numbers<[1], [0], [0], [1], [0, 0, 1, 1], [], []>} : vector<12x28xf32>, vector<28x120xf32>, vector<12x120xf32> -> vector<12x120xf32>
    %c1_56 = arith.constant 1 : index
    %c0_57 = arith.constant 0 : index
    %c0_58 = arith.constant 0 : index
    %53 = vector.load %arg2[%c1_56, %c0_57, %c0_58] : memref<5x28x120xf32, #tpu.memory_space<vmem>>, vector<1x28x120xf32>
    %54 = vector.shape_cast %53 : vector<1x28x120xf32> to vector<28x120xf32>
    %cst_59 = arith.constant dense<0.000000e+00> : vector<12x120xf32>
    %55 = tpu.matmul %3, %54, %cst_59 {dimension_numbers = #tpu.dot_dimension_numbers<[1], [0], [0], [1], [0, 0, 1, 1], [], []>} : vector<12x28xf32>, vector<28x120xf32>, vector<12x120xf32> -> vector<12x120xf32>
    %56 = arith.addf %52, %55 : vector<12x120xf32>
    %c2_60 = arith.constant 2 : index
    %c0_61 = arith.constant 0 : index
    %c0_62 = arith.constant 0 : index
    %57 = vector.load %arg2[%c2_60, %c0_61, %c0_62] : memref<5x28x120xf32, #tpu.memory_space<vmem>>, vector<1x28x120xf32>
    %58 = vector.shape_cast %57 : vector<1x28x120xf32> to vector<28x120xf32>
    %cst_63 = arith.constant dense<0.000000e+00> : vector<12x120xf32>
    %59 = tpu.matmul %9, %58, %cst_63 {dimension_numbers = #tpu.dot_dimension_numbers<[1], [0], [0], [1], [0, 0, 1, 1], [], []>} : vector<12x28xf32>, vector<28x120xf32>, vector<12x120xf32> -> vector<12x120xf32>
    %60 = arith.addf %56, %59 : vector<12x120xf32>
    %c3_64 = arith.constant 3 : index
    %c0_65 = arith.constant 0 : index
    %c0_66 = arith.constant 0 : index
    %61 = vector.load %arg2[%c3_64, %c0_65, %c0_66] : memref<5x28x120xf32, #tpu.memory_space<vmem>>, vector<1x28x120xf32>
    %62 = vector.shape_cast %61 : vector<1x28x120xf32> to vector<28x120xf32>
    %cst_67 = arith.constant dense<0.000000e+00> : vector<12x120xf32>
    %63 = tpu.matmul %5, %62, %cst_67 {dimension_numbers = #tpu.dot_dimension_numbers<[1], [0], [0], [1], [0, 0, 1, 1], [], []>} : vector<12x28xf32>, vector<28x120xf32>, vector<12x120xf32> -> vector<12x120xf32>
    %64 = arith.addf %60, %63 : vector<12x120xf32>
    %c4_68 = arith.constant 4 : index
    %c0_69 = arith.constant 0 : index
    %c0_70 = arith.constant 0 : index
    %65 = vector.load %arg2[%c4_68, %c0_69, %c0_70] : memref<5x28x120xf32, #tpu.memory_space<vmem>>, vector<1x28x120xf32>
    %66 = vector.shape_cast %65 : vector<1x28x120xf32> to vector<28x120xf32>
    %cst_71 = arith.constant dense<0.000000e+00> : vector<12x120xf32>
    %67 = tpu.matmul %11, %66, %cst_71 {dimension_numbers = #tpu.dot_dimension_numbers<[1], [0], [0], [1], [0, 0, 1, 1], [], []>} : vector<12x28xf32>, vector<28x120xf32>, vector<12x120xf32> -> vector<12x120xf32>
    %68 = arith.addf %64, %67 : vector<12x120xf32>
    %c0_72 = arith.constant 0 : index
    %c0_73 = arith.constant 0 : index
    %c0_74 = arith.constant 0 : index
    %69 = vector.load %arg3[%c0_72, %c0_73, %c0_74] : memref<5x28x120xf32, #tpu.memory_space<vmem>>, vector<1x28x120xf32>
    %70 = vector.shape_cast %69 : vector<1x28x120xf32> to vector<28x120xf32>
    %cst_75 = arith.constant dense<0.000000e+00> : vector<12x120xf32>
    %71 = tpu.matmul %7, %70, %cst_75 {dimension_numbers = #tpu.dot_dimension_numbers<[1], [0], [0], [1], [0, 0, 1, 1], [], []>} : vector<12x28xf32>, vector<28x120xf32>, vector<12x120xf32> -> vector<12x120xf32>
    %c1_76 = arith.constant 1 : index
    %c0_77 = arith.constant 0 : index
    %c0_78 = arith.constant 0 : index
    %72 = vector.load %arg3[%c1_76, %c0_77, %c0_78] : memref<5x28x120xf32, #tpu.memory_space<vmem>>, vector<1x28x120xf32>
    %73 = vector.shape_cast %72 : vector<1x28x120xf32> to vector<28x120xf32>
    %cst_79 = arith.constant dense<0.000000e+00> : vector<12x120xf32>
    %74 = tpu.matmul %3, %73, %cst_79 {dimension_numbers = #tpu.dot_dimension_numbers<[1], [0], [0], [1], [0, 0, 1, 1], [], []>} : vector<12x28xf32>, vector<28x120xf32>, vector<12x120xf32> -> vector<12x120xf32>
    %75 = arith.addf %71, %74 : vector<12x120xf32>
    %c2_80 = arith.constant 2 : index
    %c0_81 = arith.constant 0 : index
    %c0_82 = arith.constant 0 : index
    %76 = vector.load %arg3[%c2_80, %c0_81, %c0_82] : memref<5x28x120xf32, #tpu.memory_space<vmem>>, vector<1x28x120xf32>
    %77 = vector.shape_cast %76 : vector<1x28x120xf32> to vector<28x120xf32>
    %cst_83 = arith.constant dense<0.000000e+00> : vector<12x120xf32>
    %78 = tpu.matmul %9, %77, %cst_83 {dimension_numbers = #tpu.dot_dimension_numbers<[1], [0], [0], [1], [0, 0, 1, 1], [], []>} : vector<12x28xf32>, vector<28x120xf32>, vector<12x120xf32> -> vector<12x120xf32>
    %79 = arith.addf %75, %78 : vector<12x120xf32>
    %c3_84 = arith.constant 3 : index
    %c0_85 = arith.constant 0 : index
    %c0_86 = arith.constant 0 : index
    %80 = vector.load %arg3[%c3_84, %c0_85, %c0_86] : memref<5x28x120xf32, #tpu.memory_space<vmem>>, vector<1x28x120xf32>
    %81 = vector.shape_cast %80 : vector<1x28x120xf32> to vector<28x120xf32>
    %cst_87 = arith.constant dense<0.000000e+00> : vector<12x120xf32>
    %82 = tpu.matmul %5, %81, %cst_87 {dimension_numbers = #tpu.dot_dimension_numbers<[1], [0], [0], [1], [0, 0, 1, 1], [], []>} : vector<12x28xf32>, vector<28x120xf32>, vector<12x120xf32> -> vector<12x120xf32>
    %83 = arith.addf %79, %82 : vector<12x120xf32>
    %c4_88 = arith.constant 4 : index
    %c0_89 = arith.constant 0 : index
    %c0_90 = arith.constant 0 : index
    %84 = vector.load %arg3[%c4_88, %c0_89, %c0_90] : memref<5x28x120xf32, #tpu.memory_space<vmem>>, vector<1x28x120xf32>
    %85 = vector.shape_cast %84 : vector<1x28x120xf32> to vector<28x120xf32>
    %cst_91 = arith.constant dense<0.000000e+00> : vector<12x120xf32>
    %86 = tpu.matmul %11, %85, %cst_91 {dimension_numbers = #tpu.dot_dimension_numbers<[1], [0], [0], [1], [0, 0, 1, 1], [], []>} : vector<12x28xf32>, vector<28x120xf32>, vector<12x120xf32> -> vector<12x120xf32>
    %87 = arith.addf %83, %86 : vector<12x120xf32>
    %88 = arith.maximumf %30, %49 : vector<12x120xf32>
    %89 = arith.maximumf %68, %87 : vector<12x120xf32>
    %90 = arith.maximumf %88, %89 : vector<12x120xf32>
    %c0_92 = arith.constant 0 : index
    %c0_93 = arith.constant 0 : index
    %91 = vector.load %arg4[%c0_92, %c0_93] : memref<1x120xf32, #tpu.memory_space<vmem>>, vector<1x120xf32>
    %92 = vector.broadcast %91 : vector<1x120xf32> to vector<12x120xf32>
    %93 = arith.addf %90, %92 : vector<12x120xf32>
    %cst_94 = arith.constant 0.000000e+00 : f32
    %94 = vector.broadcast %cst_94 : f32 to vector<12x120xf32>
    %95 = arith.maximumf %93, %94 : vector<12x120xf32>
    %96 = vector.extract_strided_slice %95 {offsets = [0, 0], sizes = [8, 120], strides = [1, 1]} : vector<12x120xf32> to vector<8x120xf32>
    %97 = vector.extract_strided_slice %95 {offsets = [1, 0], sizes = [8, 120], strides = [1, 1]} : vector<12x120xf32> to vector<8x120xf32>
    %98 = vector.extract_strided_slice %95 {offsets = [2, 0], sizes = [8, 120], strides = [1, 1]} : vector<12x120xf32> to vector<8x120xf32>
    %99 = vector.extract_strided_slice %95 {offsets = [3, 0], sizes = [8, 120], strides = [1, 1]} : vector<12x120xf32> to vector<8x120xf32>
    %100 = vector.extract_strided_slice %95 {offsets = [4, 0], sizes = [8, 120], strides = [1, 1]} : vector<12x120xf32> to vector<8x120xf32>
    %c0_95 = arith.constant 0 : index
    %c0_96 = arith.constant 0 : index
    %c0_97 = arith.constant 0 : index
    %101 = vector.load %arg5[%c0_95, %c0_96, %c0_97] : memref<5x120x80xf32, #tpu.memory_space<vmem>>, vector<1x120x80xf32>
    %102 = vector.shape_cast %101 : vector<1x120x80xf32> to vector<120x80xf32>
    %cst_98 = arith.constant dense<0.000000e+00> : vector<8x80xf32>
    %103 = tpu.matmul %96, %102, %cst_98 {dimension_numbers = #tpu.dot_dimension_numbers<[1], [0], [0], [1], [0, 0, 1, 1], [], []>} : vector<8x120xf32>, vector<120x80xf32>, vector<8x80xf32> -> vector<8x80xf32>
    %c1_99 = arith.constant 1 : index
    %c0_100 = arith.constant 0 : index
    %c0_101 = arith.constant 0 : index
    %104 = vector.load %arg5[%c1_99, %c0_100, %c0_101] : memref<5x120x80xf32, #tpu.memory_space<vmem>>, vector<1x120x80xf32>
    %105 = vector.shape_cast %104 : vector<1x120x80xf32> to vector<120x80xf32>
    %cst_102 = arith.constant dense<0.000000e+00> : vector<8x80xf32>
    %106 = tpu.matmul %97, %105, %cst_102 {dimension_numbers = #tpu.dot_dimension_numbers<[1], [0], [0], [1], [0, 0, 1, 1], [], []>} : vector<8x120xf32>, vector<120x80xf32>, vector<8x80xf32> -> vector<8x80xf32>
    %107 = arith.addf %103, %106 : vector<8x80xf32>
    %c2_103 = arith.constant 2 : index
    %c0_104 = arith.constant 0 : index
    %c0_105 = arith.constant 0 : index
    %108 = vector.load %arg5[%c2_103, %c0_104, %c0_105] : memref<5x120x80xf32, #tpu.memory_space<vmem>>, vector<1x120x80xf32>
    %109 = vector.shape_cast %108 : vector<1x120x80xf32> to vector<120x80xf32>
    %cst_106 = arith.constant dense<0.000000e+00> : vector<8x80xf32>
    %110 = tpu.matmul %98, %109, %cst_106 {dimension_numbers = #tpu.dot_dimension_numbers<[1], [0], [0], [1], [0, 0, 1, 1], [], []>} : vector<8x120xf32>, vector<120x80xf32>, vector<8x80xf32> -> vector<8x80xf32>
    %111 = arith.addf %107, %110 : vector<8x80xf32>
    %c3_107 = arith.constant 3 : index
    %c0_108 = arith.constant 0 : index
    %c0_109 = arith.constant 0 : index
    %112 = vector.load %arg5[%c3_107, %c0_108, %c0_109] : memref<5x120x80xf32, #tpu.memory_space<vmem>>, vector<1x120x80xf32>
    %113 = vector.shape_cast %112 : vector<1x120x80xf32> to vector<120x80xf32>
    %cst_110 = arith.constant dense<0.000000e+00> : vector<8x80xf32>
    %114 = tpu.matmul %99, %113, %cst_110 {dimension_numbers = #tpu.dot_dimension_numbers<[1], [0], [0], [1], [0, 0, 1, 1], [], []>} : vector<8x120xf32>, vector<120x80xf32>, vector<8x80xf32> -> vector<8x80xf32>
    %115 = arith.addf %111, %114 : vector<8x80xf32>
    %c4_111 = arith.constant 4 : index
    %c0_112 = arith.constant 0 : index
    %c0_113 = arith.constant 0 : index
    %116 = vector.load %arg5[%c4_111, %c0_112, %c0_113] : memref<5x120x80xf32, #tpu.memory_space<vmem>>, vector<1x120x80xf32>
    %117 = vector.shape_cast %116 : vector<1x120x80xf32> to vector<120x80xf32>
    %cst_114 = arith.constant dense<0.000000e+00> : vector<8x80xf32>
    %118 = tpu.matmul %100, %117, %cst_114 {dimension_numbers = #tpu.dot_dimension_numbers<[1], [0], [0], [1], [0, 0, 1, 1], [], []>} : vector<8x120xf32>, vector<120x80xf32>, vector<8x80xf32> -> vector<8x80xf32>
    %119 = arith.addf %115, %118 : vector<8x80xf32>
    %c0_115 = arith.constant 0 : index
    %c0_116 = arith.constant 0 : index
    %c0_117 = arith.constant 0 : index
    %120 = vector.load %arg6[%c0_115, %c0_116, %c0_117] : memref<5x120x80xf32, #tpu.memory_space<vmem>>, vector<1x120x80xf32>
    %121 = vector.shape_cast %120 : vector<1x120x80xf32> to vector<120x80xf32>
    %cst_118 = arith.constant dense<0.000000e+00> : vector<8x80xf32>
    %122 = tpu.matmul %96, %121, %cst_118 {dimension_numbers = #tpu.dot_dimension_numbers<[1], [0], [0], [1], [0, 0, 1, 1], [], []>} : vector<8x120xf32>, vector<120x80xf32>, vector<8x80xf32> -> vector<8x80xf32>
    %c1_119 = arith.constant 1 : index
    %c0_120 = arith.constant 0 : index
    %c0_121 = arith.constant 0 : index
    %123 = vector.load %arg6[%c1_119, %c0_120, %c0_121] : memref<5x120x80xf32, #tpu.memory_space<vmem>>, vector<1x120x80xf32>
    %124 = vector.shape_cast %123 : vector<1x120x80xf32> to vector<120x80xf32>
    %cst_122 = arith.constant dense<0.000000e+00> : vector<8x80xf32>
    %125 = tpu.matmul %97, %124, %cst_122 {dimension_numbers = #tpu.dot_dimension_numbers<[1], [0], [0], [1], [0, 0, 1, 1], [], []>} : vector<8x120xf32>, vector<120x80xf32>, vector<8x80xf32> -> vector<8x80xf32>
    %126 = arith.addf %122, %125 : vector<8x80xf32>
    %c2_123 = arith.constant 2 : index
    %c0_124 = arith.constant 0 : index
    %c0_125 = arith.constant 0 : index
    %127 = vector.load %arg6[%c2_123, %c0_124, %c0_125] : memref<5x120x80xf32, #tpu.memory_space<vmem>>, vector<1x120x80xf32>
    %128 = vector.shape_cast %127 : vector<1x120x80xf32> to vector<120x80xf32>
    %cst_126 = arith.constant dense<0.000000e+00> : vector<8x80xf32>
    %129 = tpu.matmul %98, %128, %cst_126 {dimension_numbers = #tpu.dot_dimension_numbers<[1], [0], [0], [1], [0, 0, 1, 1], [], []>} : vector<8x120xf32>, vector<120x80xf32>, vector<8x80xf32> -> vector<8x80xf32>
    %130 = arith.addf %126, %129 : vector<8x80xf32>
    %c3_127 = arith.constant 3 : index
    %c0_128 = arith.constant 0 : index
    %c0_129 = arith.constant 0 : index
    %131 = vector.load %arg6[%c3_127, %c0_128, %c0_129] : memref<5x120x80xf32, #tpu.memory_space<vmem>>, vector<1x120x80xf32>
    %132 = vector.shape_cast %131 : vector<1x120x80xf32> to vector<120x80xf32>
    %cst_130 = arith.constant dense<0.000000e+00> : vector<8x80xf32>
    %133 = tpu.matmul %99, %132, %cst_130 {dimension_numbers = #tpu.dot_dimension_numbers<[1], [0], [0], [1], [0, 0, 1, 1], [], []>} : vector<8x120xf32>, vector<120x80xf32>, vector<8x80xf32> -> vector<8x80xf32>
    %134 = arith.addf %130, %133 : vector<8x80xf32>
    %c4_131 = arith.constant 4 : index
    %c0_132 = arith.constant 0 : index
    %c0_133 = arith.constant 0 : index
    %135 = vector.load %arg6[%c4_131, %c0_132, %c0_133] : memref<5x120x80xf32, #tpu.memory_space<vmem>>, vector<1x120x80xf32>
    %136 = vector.shape_cast %135 : vector<1x120x80xf32> to vector<120x80xf32>
    %cst_134 = arith.constant dense<0.000000e+00> : vector<8x80xf32>
    %137 = tpu.matmul %100, %136, %cst_134 {dimension_numbers = #tpu.dot_dimension_numbers<[1], [0], [0], [1], [0, 0, 1, 1], [], []>} : vector<8x120xf32>, vector<120x80xf32>, vector<8x80xf32> -> vector<8x80xf32>
    %138 = arith.addf %134, %137 : vector<8x80xf32>
    %139 = arith.maximumf %119, %138 : vector<8x80xf32>
    %c0_135 = arith.constant 0 : index
    %c0_136 = arith.constant 0 : index
    %140 = vector.load %arg9[%c0_135, %c0_136] : memref<1x10xf32, #tpu.memory_space<vmem>>, vector<1x10xf32>
    %141 = vector.extract_strided_slice %139 {offsets = [0, 0], sizes = [1, 80], strides = [1, 1]} : vector<8x80xf32> to vector<1x80xf32>
    %142 = vector.extract_strided_slice %139 {offsets = [1, 0], sizes = [1, 80], strides = [1, 1]} : vector<8x80xf32> to vector<1x80xf32>
    %143 = arith.maximumf %141, %142 : vector<1x80xf32>
    %c0_137 = arith.constant 0 : index
    %c0_138 = arith.constant 0 : index
    %144 = vector.load %arg7[%c0_137, %c0_138] : memref<1x80xf32, #tpu.memory_space<vmem>>, vector<1x80xf32>
    %145 = arith.addf %143, %144 : vector<1x80xf32>
    %cst_139 = arith.constant 0.000000e+00 : f32
    %146 = vector.broadcast %cst_139 : f32 to vector<1x80xf32>
    %147 = arith.maximumf %145, %146 : vector<1x80xf32>
    %c0_140 = arith.constant 0 : index
    %c0_141 = arith.constant 0 : index
    %c0_142 = arith.constant 0 : index
    %148 = vector.load %arg8[%c0_140, %c0_141, %c0_142] : memref<4x80x10xf32, #tpu.memory_space<vmem>>, vector<1x80x10xf32>
    %149 = vector.shape_cast %148 : vector<1x80x10xf32> to vector<80x10xf32>
    %cst_143 = arith.constant dense<0.000000e+00> : vector<1x10xf32>
    %150 = tpu.matmul %147, %149, %cst_143 {dimension_numbers = #tpu.dot_dimension_numbers<[1], [0], [0], [1], [0, 0, 1, 1], [], []>} : vector<1x80xf32>, vector<80x10xf32>, vector<1x10xf32> -> vector<1x10xf32>
    %151 = arith.addf %140, %150 : vector<1x10xf32>
    %152 = vector.extract_strided_slice %139 {offsets = [2, 0], sizes = [1, 80], strides = [1, 1]} : vector<8x80xf32> to vector<1x80xf32>
    %153 = vector.extract_strided_slice %139 {offsets = [3, 0], sizes = [1, 80], strides = [1, 1]} : vector<8x80xf32> to vector<1x80xf32>
    %154 = arith.maximumf %152, %153 : vector<1x80xf32>
    %c0_144 = arith.constant 0 : index
    %c0_145 = arith.constant 0 : index
    %155 = vector.load %arg7[%c0_144, %c0_145] : memref<1x80xf32, #tpu.memory_space<vmem>>, vector<1x80xf32>
    %156 = arith.addf %154, %155 : vector<1x80xf32>
    %cst_146 = arith.constant 0.000000e+00 : f32
    %157 = vector.broadcast %cst_146 : f32 to vector<1x80xf32>
    %158 = arith.maximumf %156, %157 : vector<1x80xf32>
    %c1_147 = arith.constant 1 : index
    %c0_148 = arith.constant 0 : index
    %c0_149 = arith.constant 0 : index
    %159 = vector.load %arg8[%c1_147, %c0_148, %c0_149] : memref<4x80x10xf32, #tpu.memory_space<vmem>>, vector<1x80x10xf32>
    %160 = vector.shape_cast %159 : vector<1x80x10xf32> to vector<80x10xf32>
    %cst_150 = arith.constant dense<0.000000e+00> : vector<1x10xf32>
    %161 = tpu.matmul %158, %160, %cst_150 {dimension_numbers = #tpu.dot_dimension_numbers<[1], [0], [0], [1], [0, 0, 1, 1], [], []>} : vector<1x80xf32>, vector<80x10xf32>, vector<1x10xf32> -> vector<1x10xf32>
    %162 = arith.addf %151, %161 : vector<1x10xf32>
    %163 = vector.extract_strided_slice %139 {offsets = [4, 0], sizes = [1, 80], strides = [1, 1]} : vector<8x80xf32> to vector<1x80xf32>
    %164 = vector.extract_strided_slice %139 {offsets = [5, 0], sizes = [1, 80], strides = [1, 1]} : vector<8x80xf32> to vector<1x80xf32>
    %165 = arith.maximumf %163, %164 : vector<1x80xf32>
    %c0_151 = arith.constant 0 : index
    %c0_152 = arith.constant 0 : index
    %166 = vector.load %arg7[%c0_151, %c0_152] : memref<1x80xf32, #tpu.memory_space<vmem>>, vector<1x80xf32>
    %167 = arith.addf %165, %166 : vector<1x80xf32>
    %cst_153 = arith.constant 0.000000e+00 : f32
    %168 = vector.broadcast %cst_153 : f32 to vector<1x80xf32>
    %169 = arith.maximumf %167, %168 : vector<1x80xf32>
    %c2_154 = arith.constant 2 : index
    %c0_155 = arith.constant 0 : index
    %c0_156 = arith.constant 0 : index
    %170 = vector.load %arg8[%c2_154, %c0_155, %c0_156] : memref<4x80x10xf32, #tpu.memory_space<vmem>>, vector<1x80x10xf32>
    %171 = vector.shape_cast %170 : vector<1x80x10xf32> to vector<80x10xf32>
    %cst_157 = arith.constant dense<0.000000e+00> : vector<1x10xf32>
    %172 = tpu.matmul %169, %171, %cst_157 {dimension_numbers = #tpu.dot_dimension_numbers<[1], [0], [0], [1], [0, 0, 1, 1], [], []>} : vector<1x80xf32>, vector<80x10xf32>, vector<1x10xf32> -> vector<1x10xf32>
    %173 = arith.addf %162, %172 : vector<1x10xf32>
    %174 = vector.extract_strided_slice %139 {offsets = [6, 0], sizes = [1, 80], strides = [1, 1]} : vector<8x80xf32> to vector<1x80xf32>
    %175 = vector.extract_strided_slice %139 {offsets = [7, 0], sizes = [1, 80], strides = [1, 1]} : vector<8x80xf32> to vector<1x80xf32>
    %176 = arith.maximumf %174, %175 : vector<1x80xf32>
    %c0_158 = arith.constant 0 : index
    %c0_159 = arith.constant 0 : index
    %177 = vector.load %arg7[%c0_158, %c0_159] : memref<1x80xf32, #tpu.memory_space<vmem>>, vector<1x80xf32>
    %178 = arith.addf %176, %177 : vector<1x80xf32>
    %cst_160 = arith.constant 0.000000e+00 : f32
    %179 = vector.broadcast %cst_160 : f32 to vector<1x80xf32>
    %180 = arith.maximumf %178, %179 : vector<1x80xf32>
    %c3_161 = arith.constant 3 : index
    %c0_162 = arith.constant 0 : index
    %c0_163 = arith.constant 0 : index
    %181 = vector.load %arg8[%c3_161, %c0_162, %c0_163] : memref<4x80x10xf32, #tpu.memory_space<vmem>>, vector<1x80x10xf32>
    %182 = vector.shape_cast %181 : vector<1x80x10xf32> to vector<80x10xf32>
    %cst_164 = arith.constant dense<0.000000e+00> : vector<1x10xf32>
    %183 = tpu.matmul %180, %182, %cst_164 {dimension_numbers = #tpu.dot_dimension_numbers<[1], [0], [0], [1], [0, 0, 1, 1], [], []>} : vector<1x80xf32>, vector<80x10xf32>, vector<1x10xf32> -> vector<1x10xf32>
    %184 = arith.addf %173, %183 : vector<1x10xf32>
    %c0_165 = arith.constant 0 : index
    %c0_166 = arith.constant 0 : index
    %185 = vector.load %arg10[%c0_165, %c0_166] : memref<2x10xf32, #tpu.memory_space<vmem>>, vector<1x10xf32>
    tpu.vector_store %arg10[%c0_165, %c0_166], %184 {strides = array<i32>} : memref<2x10xf32, #tpu.memory_space<vmem>>, vector<1x10xf32>,
    %c1_167 = arith.constant 1 : index
    %c0_168 = arith.constant 0 : index
    %c0_169 = arith.constant 0 : index
    %186 = vector.load %arg0[%c1_167, %c0_168, %c0_169] : memref<2x14x28xf32, #tpu.memory_space<vmem>>, vector<1x12x28xf32>
    %187 = vector.shape_cast %186 : vector<1x12x28xf32> to vector<12x28xf32>
    %c1_170 = arith.constant 1 : index
    %c1_171 = arith.constant 1 : index
    %c0_172 = arith.constant 0 : index
    %188 = vector.load %arg0[%c1_170, %c1_171, %c0_172] : memref<2x14x28xf32, #tpu.memory_space<vmem>>, vector<1x12x28xf32>
    %189 = vector.shape_cast %188 : vector<1x12x28xf32> to vector<12x28xf32>
    %c1_173 = arith.constant 1 : index
    %c2_174 = arith.constant 2 : index
    %c0_175 = arith.constant 0 : index
    %190 = vector.load %arg0[%c1_173, %c2_174, %c0_175] : memref<2x14x28xf32, #tpu.memory_space<vmem>>, vector<1x12x28xf32>
    %191 = vector.shape_cast %190 : vector<1x12x28xf32> to vector<12x28xf32>
    %c1_176 = arith.constant 1 : index
    %c0_177 = arith.constant 0 : index
    %c0_178 = arith.constant 0 : index
    %192 = vector.load %arg1[%c1_176, %c0_177, %c0_178] : memref<2x14x28xf32, #tpu.memory_space<vmem>>, vector<1x12x28xf32>
    %193 = vector.shape_cast %192 : vector<1x12x28xf32> to vector<12x28xf32>
    %c1_179 = arith.constant 1 : index
    %c1_180 = arith.constant 1 : index
    %c0_181 = arith.constant 0 : index
    %194 = vector.load %arg1[%c1_179, %c1_180, %c0_181] : memref<2x14x28xf32, #tpu.memory_space<vmem>>, vector<1x12x28xf32>
    %195 = vector.shape_cast %194 : vector<1x12x28xf32> to vector<12x28xf32>
    %c1_182 = arith.constant 1 : index
    %c2_183 = arith.constant 2 : index
    %c0_184 = arith.constant 0 : index
    %196 = vector.load %arg1[%c1_182, %c2_183, %c0_184] : memref<2x14x28xf32, #tpu.memory_space<vmem>>, vector<1x12x28xf32>
    %197 = vector.shape_cast %196 : vector<1x12x28xf32> to vector<12x28xf32>
    %c0_185 = arith.constant 0 : index
    %c0_186 = arith.constant 0 : index
    %c0_187 = arith.constant 0 : index
    %198 = vector.load %arg2[%c0_185, %c0_186, %c0_187] : memref<5x28x120xf32, #tpu.memory_space<vmem>>, vector<1x28x120xf32>
    %199 = vector.shape_cast %198 : vector<1x28x120xf32> to vector<28x120xf32>
    %cst_188 = arith.constant dense<0.000000e+00> : vector<12x120xf32>
    %200 = tpu.matmul %187, %199, %cst_188 {dimension_numbers = #tpu.dot_dimension_numbers<[1], [0], [0], [1], [0, 0, 1, 1], [], []>} : vector<12x28xf32>, vector<28x120xf32>, vector<12x120xf32> -> vector<12x120xf32>
    %c1_189 = arith.constant 1 : index
    %c0_190 = arith.constant 0 : index
    %c0_191 = arith.constant 0 : index
    %201 = vector.load %arg2[%c1_189, %c0_190, %c0_191] : memref<5x28x120xf32, #tpu.memory_space<vmem>>, vector<1x28x120xf32>
    %202 = vector.shape_cast %201 : vector<1x28x120xf32> to vector<28x120xf32>
    %cst_192 = arith.constant dense<0.000000e+00> : vector<12x120xf32>
    %203 = tpu.matmul %193, %202, %cst_192 {dimension_numbers = #tpu.dot_dimension_numbers<[1], [0], [0], [1], [0, 0, 1, 1], [], []>} : vector<12x28xf32>, vector<28x120xf32>, vector<12x120xf32> -> vector<12x120xf32>
    %204 = arith.addf %200, %203 : vector<12x120xf32>
    %c2_193 = arith.constant 2 : index
    %c0_194 = arith.constant 0 : index
    %c0_195 = arith.constant 0 : index
    %205 = vector.load %arg2[%c2_193, %c0_194, %c0_195] : memref<5x28x120xf32, #tpu.memory_space<vmem>>, vector<1x28x120xf32>
    %206 = vector.shape_cast %205 : vector<1x28x120xf32> to vector<28x120xf32>
    %cst_196 = arith.constant dense<0.000000e+00> : vector<12x120xf32>
    %207 = tpu.matmul %189, %206, %cst_196 {dimension_numbers = #tpu.dot_dimension_numbers<[1], [0], [0], [1], [0, 0, 1, 1], [], []>} : vector<12x28xf32>, vector<28x120xf32>, vector<12x120xf32> -> vector<12x120xf32>
    %208 = arith.addf %204, %207 : vector<12x120xf32>
    %c3_197 = arith.constant 3 : index
    %c0_198 = arith.constant 0 : index
    %c0_199 = arith.constant 0 : index
    %209 = vector.load %arg2[%c3_197, %c0_198, %c0_199] : memref<5x28x120xf32, #tpu.memory_space<vmem>>, vector<1x28x120xf32>
    %210 = vector.shape_cast %209 : vector<1x28x120xf32> to vector<28x120xf32>
    %cst_200 = arith.constant dense<0.000000e+00> : vector<12x120xf32>
    %211 = tpu.matmul %195, %210, %cst_200 {dimension_numbers = #tpu.dot_dimension_numbers<[1], [0], [0], [1], [0, 0, 1, 1], [], []>} : vector<12x28xf32>, vector<28x120xf32>, vector<12x120xf32> -> vector<12x120xf32>
    %212 = arith.addf %208, %211 : vector<12x120xf32>
    %c4_201 = arith.constant 4 : index
    %c0_202 = arith.constant 0 : index
    %c0_203 = arith.constant 0 : index
    %213 = vector.load %arg2[%c4_201, %c0_202, %c0_203] : memref<5x28x120xf32, #tpu.memory_space<vmem>>, vector<1x28x120xf32>
    %214 = vector.shape_cast %213 : vector<1x28x120xf32> to vector<28x120xf32>
    %cst_204 = arith.constant dense<0.000000e+00> : vector<12x120xf32>
    %215 = tpu.matmul %191, %214, %cst_204 {dimension_numbers = #tpu.dot_dimension_numbers<[1], [0], [0], [1], [0, 0, 1, 1], [], []>} : vector<12x28xf32>, vector<28x120xf32>, vector<12x120xf32> -> vector<12x120xf32>
    %216 = arith.addf %212, %215 : vector<12x120xf32>
    %c0_205 = arith.constant 0 : index
    %c0_206 = arith.constant 0 : index
    %c0_207 = arith.constant 0 : index
    %217 = vector.load %arg3[%c0_205, %c0_206, %c0_207] : memref<5x28x120xf32, #tpu.memory_space<vmem>>, vector<1x28x120xf32>
    %218 = vector.shape_cast %217 : vector<1x28x120xf32> to vector<28x120xf32>
    %cst_208 = arith.constant dense<0.000000e+00> : vector<12x120xf32>
    %219 = tpu.matmul %187, %218, %cst_208 {dimension_numbers = #tpu.dot_dimension_numbers<[1], [0], [0], [1], [0, 0, 1, 1], [], []>} : vector<12x28xf32>, vector<28x120xf32>, vector<12x120xf32> -> vector<12x120xf32>
    %c1_209 = arith.constant 1 : index
    %c0_210 = arith.constant 0 : index
    %c0_211 = arith.constant 0 : index
    %220 = vector.load %arg3[%c1_209, %c0_210, %c0_211] : memref<5x28x120xf32, #tpu.memory_space<vmem>>, vector<1x28x120xf32>
    %221 = vector.shape_cast %220 : vector<1x28x120xf32> to vector<28x120xf32>
    %cst_212 = arith.constant dense<0.000000e+00> : vector<12x120xf32>
    %222 = tpu.matmul %193, %221, %cst_212 {dimension_numbers = #tpu.dot_dimension_numbers<[1], [0], [0], [1], [0, 0, 1, 1], [], []>} : vector<12x28xf32>, vector<28x120xf32>, vector<12x120xf32> -> vector<12x120xf32>
    %223 = arith.addf %219, %222 : vector<12x120xf32>
    %c2_213 = arith.constant 2 : index
    %c0_214 = arith.constant 0 : index
    %c0_215 = arith.constant 0 : index
    %224 = vector.load %arg3[%c2_213, %c0_214, %c0_215] : memref<5x28x120xf32, #tpu.memory_space<vmem>>, vector<1x28x120xf32>
    %225 = vector.shape_cast %224 : vector<1x28x120xf32> to vector<28x120xf32>
    %cst_216 = arith.constant dense<0.000000e+00> : vector<12x120xf32>
    %226 = tpu.matmul %189, %225, %cst_216 {dimension_numbers = #tpu.dot_dimension_numbers<[1], [0], [0], [1], [0, 0, 1, 1], [], []>} : vector<12x28xf32>, vector<28x120xf32>, vector<12x120xf32> -> vector<12x120xf32>
    %227 = arith.addf %223, %226 : vector<12x120xf32>
    %c3_217 = arith.constant 3 : index
    %c0_218 = arith.constant 0 : index
    %c0_219 = arith.constant 0 : index
    %228 = vector.load %arg3[%c3_217, %c0_218, %c0_219] : memref<5x28x120xf32, #tpu.memory_space<vmem>>, vector<1x28x120xf32>
    %229 = vector.shape_cast %228 : vector<1x28x120xf32> to vector<28x120xf32>
    %cst_220 = arith.constant dense<0.000000e+00> : vector<12x120xf32>
    %230 = tpu.matmul %195, %229, %cst_220 {dimension_numbers = #tpu.dot_dimension_numbers<[1], [0], [0], [1], [0, 0, 1, 1], [], []>} : vector<12x28xf32>, vector<28x120xf32>, vector<12x120xf32> -> vector<12x120xf32>
    %231 = arith.addf %227, %230 : vector<12x120xf32>
    %c4_221 = arith.constant 4 : index
    %c0_222 = arith.constant 0 : index
    %c0_223 = arith.constant 0 : index
    %232 = vector.load %arg3[%c4_221, %c0_222, %c0_223] : memref<5x28x120xf32, #tpu.memory_space<vmem>>, vector<1x28x120xf32>
    %233 = vector.shape_cast %232 : vector<1x28x120xf32> to vector<28x120xf32>
    %cst_224 = arith.constant dense<0.000000e+00> : vector<12x120xf32>
    %234 = tpu.matmul %191, %233, %cst_224 {dimension_numbers = #tpu.dot_dimension_numbers<[1], [0], [0], [1], [0, 0, 1, 1], [], []>} : vector<12x28xf32>, vector<28x120xf32>, vector<12x120xf32> -> vector<12x120xf32>
    %235 = arith.addf %231, %234 : vector<12x120xf32>
    %c0_225 = arith.constant 0 : index
    %c0_226 = arith.constant 0 : index
    %c0_227 = arith.constant 0 : index
    %236 = vector.load %arg2[%c0_225, %c0_226, %c0_227] : memref<5x28x120xf32, #tpu.memory_space<vmem>>, vector<1x28x120xf32>
    %237 = vector.shape_cast %236 : vector<1x28x120xf32> to vector<28x120xf32>
    %cst_228 = arith.constant dense<0.000000e+00> : vector<12x120xf32>
    %238 = tpu.matmul %193, %237, %cst_228 {dimension_numbers = #tpu.dot_dimension_numbers<[1], [0], [0], [1], [0, 0, 1, 1], [], []>} : vector<12x28xf32>, vector<28x120xf32>, vector<12x120xf32> -> vector<12x120xf32>
    %c1_229 = arith.constant 1 : index
    %c0_230 = arith.constant 0 : index
    %c0_231 = arith.constant 0 : index
    %239 = vector.load %arg2[%c1_229, %c0_230, %c0_231] : memref<5x28x120xf32, #tpu.memory_space<vmem>>, vector<1x28x120xf32>
    %240 = vector.shape_cast %239 : vector<1x28x120xf32> to vector<28x120xf32>
    %cst_232 = arith.constant dense<0.000000e+00> : vector<12x120xf32>
    %241 = tpu.matmul %189, %240, %cst_232 {dimension_numbers = #tpu.dot_dimension_numbers<[1], [0], [0], [1], [0, 0, 1, 1], [], []>} : vector<12x28xf32>, vector<28x120xf32>, vector<12x120xf32> -> vector<12x120xf32>
    %242 = arith.addf %238, %241 : vector<12x120xf32>
    %c2_233 = arith.constant 2 : index
    %c0_234 = arith.constant 0 : index
    %c0_235 = arith.constant 0 : index
    %243 = vector.load %arg2[%c2_233, %c0_234, %c0_235] : memref<5x28x120xf32, #tpu.memory_space<vmem>>, vector<1x28x120xf32>
    %244 = vector.shape_cast %243 : vector<1x28x120xf32> to vector<28x120xf32>
    %cst_236 = arith.constant dense<0.000000e+00> : vector<12x120xf32>
    %245 = tpu.matmul %195, %244, %cst_236 {dimension_numbers = #tpu.dot_dimension_numbers<[1], [0], [0], [1], [0, 0, 1, 1], [], []>} : vector<12x28xf32>, vector<28x120xf32>, vector<12x120xf32> -> vector<12x120xf32>
    %246 = arith.addf %242, %245 : vector<12x120xf32>
    %c3_237 = arith.constant 3 : index
    %c0_238 = arith.constant 0 : index
    %c0_239 = arith.constant 0 : index
    %247 = vector.load %arg2[%c3_237, %c0_238, %c0_239] : memref<5x28x120xf32, #tpu.memory_space<vmem>>, vector<1x28x120xf32>
    %248 = vector.shape_cast %247 : vector<1x28x120xf32> to vector<28x120xf32>
    %cst_240 = arith.constant dense<0.000000e+00> : vector<12x120xf32>
    %249 = tpu.matmul %191, %248, %cst_240 {dimension_numbers = #tpu.dot_dimension_numbers<[1], [0], [0], [1], [0, 0, 1, 1], [], []>} : vector<12x28xf32>, vector<28x120xf32>, vector<12x120xf32> -> vector<12x120xf32>
    %250 = arith.addf %246, %249 : vector<12x120xf32>
    %c4_241 = arith.constant 4 : index
    %c0_242 = arith.constant 0 : index
    %c0_243 = arith.constant 0 : index
    %251 = vector.load %arg2[%c4_241, %c0_242, %c0_243] : memref<5x28x120xf32, #tpu.memory_space<vmem>>, vector<1x28x120xf32>
    %252 = vector.shape_cast %251 : vector<1x28x120xf32> to vector<28x120xf32>
    %cst_244 = arith.constant dense<0.000000e+00> : vector<12x120xf32>
    %253 = tpu.matmul %197, %252, %cst_244 {dimension_numbers = #tpu.dot_dimension_numbers<[1], [0], [0], [1], [0, 0, 1, 1], [], []>} : vector<12x28xf32>, vector<28x120xf32>, vector<12x120xf32> -> vector<12x120xf32>
    %254 = arith.addf %250, %253 : vector<12x120xf32>
    %c0_245 = arith.constant 0 : index
    %c0_246 = arith.constant 0 : index
    %c0_247 = arith.constant 0 : index
    %255 = vector.load %arg3[%c0_245, %c0_246, %c0_247] : memref<5x28x120xf32, #tpu.memory_space<vmem>>, vector<1x28x120xf32>
    %256 = vector.shape_cast %255 : vector<1x28x120xf32> to vector<28x120xf32>
    %cst_248 = arith.constant dense<0.000000e+00> : vector<12x120xf32>
    %257 = tpu.matmul %193, %256, %cst_248 {dimension_numbers = #tpu.dot_dimension_numbers<[1], [0], [0], [1], [0, 0, 1, 1], [], []>} : vector<12x28xf32>, vector<28x120xf32>, vector<12x120xf32> -> vector<12x120xf32>
    %c1_249 = arith.constant 1 : index
    %c0_250 = arith.constant 0 : index
    %c0_251 = arith.constant 0 : index
    %258 = vector.load %arg3[%c1_249, %c0_250, %c0_251] : memref<5x28x120xf32, #tpu.memory_space<vmem>>, vector<1x28x120xf32>
    %259 = vector.shape_cast %258 : vector<1x28x120xf32> to vector<28x120xf32>
    %cst_252 = arith.constant dense<0.000000e+00> : vector<12x120xf32>
    %260 = tpu.matmul %189, %259, %cst_252 {dimension_numbers = #tpu.dot_dimension_numbers<[1], [0], [0], [1], [0, 0, 1, 1], [], []>} : vector<12x28xf32>, vector<28x120xf32>, vector<12x120xf32> -> vector<12x120xf32>
    %261 = arith.addf %257, %260 : vector<12x120xf32>
    %c2_253 = arith.constant 2 : index
    %c0_254 = arith.constant 0 : index
    %c0_255 = arith.constant 0 : index
    %262 = vector.load %arg3[%c2_253, %c0_254, %c0_255] : memref<5x28x120xf32, #tpu.memory_space<vmem>>, vector<1x28x120xf32>
    %263 = vector.shape_cast %262 : vector<1x28x120xf32> to vector<28x120xf32>
    %cst_256 = arith.constant dense<0.000000e+00> : vector<12x120xf32>
    %264 = tpu.matmul %195, %263, %cst_256 {dimension_numbers = #tpu.dot_dimension_numbers<[1], [0], [0], [1], [0, 0, 1, 1], [], []>} : vector<12x28xf32>, vector<28x120xf32>, vector<12x120xf32> -> vector<12x120xf32>
    %265 = arith.addf %261, %264 : vector<12x120xf32>
    %c3_257 = arith.constant 3 : index
    %c0_258 = arith.constant 0 : index
    %c0_259 = arith.constant 0 : index
    %266 = vector.load %arg3[%c3_257, %c0_258, %c0_259] : memref<5x28x120xf32, #tpu.memory_space<vmem>>, vector<1x28x120xf32>
    %267 = vector.shape_cast %266 : vector<1x28x120xf32> to vector<28x120xf32>
    %cst_260 = arith.constant dense<0.000000e+00> : vector<12x120xf32>
    %268 = tpu.matmul %191, %267, %cst_260 {dimension_numbers = #tpu.dot_dimension_numbers<[1], [0], [0], [1], [0, 0, 1, 1], [], []>} : vector<12x28xf32>, vector<28x120xf32>, vector<12x120xf32> -> vector<12x120xf32>
    %269 = arith.addf %265, %268 : vector<12x120xf32>
    %c4_261 = arith.constant 4 : index
    %c0_262 = arith.constant 0 : index
    %c0_263 = arith.constant 0 : index
    %270 = vector.load %arg3[%c4_261, %c0_262, %c0_263] : memref<5x28x120xf32, #tpu.memory_space<vmem>>, vector<1x28x120xf32>
    %271 = vector.shape_cast %270 : vector<1x28x120xf32> to vector<28x120xf32>
    %cst_264 = arith.constant dense<0.000000e+00> : vector<12x120xf32>
    %272 = tpu.matmul %197, %271, %cst_264 {dimension_numbers = #tpu.dot_dimension_numbers<[1], [0], [0], [1], [0, 0, 1, 1], [], []>} : vector<12x28xf32>, vector<28x120xf32>, vector<12x120xf32> -> vector<12x120xf32>
    %273 = arith.addf %269, %272 : vector<12x120xf32>
    %274 = arith.maximumf %216, %235 : vector<12x120xf32>
    %275 = arith.maximumf %254, %273 : vector<12x120xf32>
    %276 = arith.maximumf %274, %275 : vector<12x120xf32>
    %c0_265 = arith.constant 0 : index
    %c0_266 = arith.constant 0 : index
    %277 = vector.load %arg4[%c0_265, %c0_266] : memref<1x120xf32, #tpu.memory_space<vmem>>, vector<1x120xf32>
    %278 = vector.broadcast %277 : vector<1x120xf32> to vector<12x120xf32>
    %279 = arith.addf %276, %278 : vector<12x120xf32>
    %cst_267 = arith.constant 0.000000e+00 : f32
    %280 = vector.broadcast %cst_267 : f32 to vector<12x120xf32>
    %281 = arith.maximumf %279, %280 : vector<12x120xf32>
    %282 = vector.extract_strided_slice %281 {offsets = [0, 0], sizes = [8, 120], strides = [1, 1]} : vector<12x120xf32> to vector<8x120xf32>
    %283 = vector.extract_strided_slice %281 {offsets = [1, 0], sizes = [8, 120], strides = [1, 1]} : vector<12x120xf32> to vector<8x120xf32>
    %284 = vector.extract_strided_slice %281 {offsets = [2, 0], sizes = [8, 120], strides = [1, 1]} : vector<12x120xf32> to vector<8x120xf32>
    %285 = vector.extract_strided_slice %281 {offsets = [3, 0], sizes = [8, 120], strides = [1, 1]} : vector<12x120xf32> to vector<8x120xf32>
    %286 = vector.extract_strided_slice %281 {offsets = [4, 0], sizes = [8, 120], strides = [1, 1]} : vector<12x120xf32> to vector<8x120xf32>
    %c0_268 = arith.constant 0 : index
    %c0_269 = arith.constant 0 : index
    %c0_270 = arith.constant 0 : index
    %287 = vector.load %arg5[%c0_268, %c0_269, %c0_270] : memref<5x120x80xf32, #tpu.memory_space<vmem>>, vector<1x120x80xf32>
    %288 = vector.shape_cast %287 : vector<1x120x80xf32> to vector<120x80xf32>
    %cst_271 = arith.constant dense<0.000000e+00> : vector<8x80xf32>
    %289 = tpu.matmul %282, %288, %cst_271 {dimension_numbers = #tpu.dot_dimension_numbers<[1], [0], [0], [1], [0, 0, 1, 1], [], []>} : vector<8x120xf32>, vector<120x80xf32>, vector<8x80xf32> -> vector<8x80xf32>
    %c1_272 = arith.constant 1 : index
    %c0_273 = arith.constant 0 : index
    %c0_274 = arith.constant 0 : index
    %290 = vector.load %arg5[%c1_272, %c0_273, %c0_274] : memref<5x120x80xf32, #tpu.memory_space<vmem>>, vector<1x120x80xf32>
    %291 = vector.shape_cast %290 : vector<1x120x80xf32> to vector<120x80xf32>
    %cst_275 = arith.constant dense<0.000000e+00> : vector<8x80xf32>
    %292 = tpu.matmul %283, %291, %cst_275 {dimension_numbers = #tpu.dot_dimension_numbers<[1], [0], [0], [1], [0, 0, 1, 1], [], []>} : vector<8x120xf32>, vector<120x80xf32>, vector<8x80xf32> -> vector<8x80xf32>
    %293 = arith.addf %289, %292 : vector<8x80xf32>
    %c2_276 = arith.constant 2 : index
    %c0_277 = arith.constant 0 : index
    %c0_278 = arith.constant 0 : index
    %294 = vector.load %arg5[%c2_276, %c0_277, %c0_278] : memref<5x120x80xf32, #tpu.memory_space<vmem>>, vector<1x120x80xf32>
    %295 = vector.shape_cast %294 : vector<1x120x80xf32> to vector<120x80xf32>
    %cst_279 = arith.constant dense<0.000000e+00> : vector<8x80xf32>
    %296 = tpu.matmul %284, %295, %cst_279 {dimension_numbers = #tpu.dot_dimension_numbers<[1], [0], [0], [1], [0, 0, 1, 1], [], []>} : vector<8x120xf32>, vector<120x80xf32>, vector<8x80xf32> -> vector<8x80xf32>
    %297 = arith.addf %293, %296 : vector<8x80xf32>
    %c3_280 = arith.constant 3 : index
    %c0_281 = arith.constant 0 : index
    %c0_282 = arith.constant 0 : index
    %298 = vector.load %arg5[%c3_280, %c0_281, %c0_282] : memref<5x120x80xf32, #tpu.memory_space<vmem>>, vector<1x120x80xf32>
    %299 = vector.shape_cast %298 : vector<1x120x80xf32> to vector<120x80xf32>
    %cst_283 = arith.constant dense<0.000000e+00> : vector<8x80xf32>
    %300 = tpu.matmul %285, %299, %cst_283 {dimension_numbers = #tpu.dot_dimension_numbers<[1], [0], [0], [1], [0, 0, 1, 1], [], []>} : vector<8x120xf32>, vector<120x80xf32>, vector<8x80xf32> -> vector<8x80xf32>
    %301 = arith.addf %297, %300 : vector<8x80xf32>
    %c4_284 = arith.constant 4 : index
    %c0_285 = arith.constant 0 : index
    %c0_286 = arith.constant 0 : index
    %302 = vector.load %arg5[%c4_284, %c0_285, %c0_286] : memref<5x120x80xf32, #tpu.memory_space<vmem>>, vector<1x120x80xf32>
    %303 = vector.shape_cast %302 : vector<1x120x80xf32> to vector<120x80xf32>
    %cst_287 = arith.constant dense<0.000000e+00> : vector<8x80xf32>
    %304 = tpu.matmul %286, %303, %cst_287 {dimension_numbers = #tpu.dot_dimension_numbers<[1], [0], [0], [1], [0, 0, 1, 1], [], []>} : vector<8x120xf32>, vector<120x80xf32>, vector<8x80xf32> -> vector<8x80xf32>
    %305 = arith.addf %301, %304 : vector<8x80xf32>
    %c0_288 = arith.constant 0 : index
    %c0_289 = arith.constant 0 : index
    %c0_290 = arith.constant 0 : index
    %306 = vector.load %arg6[%c0_288, %c0_289, %c0_290] : memref<5x120x80xf32, #tpu.memory_space<vmem>>, vector<1x120x80xf32>
    %307 = vector.shape_cast %306 : vector<1x120x80xf32> to vector<120x80xf32>
    %cst_291 = arith.constant dense<0.000000e+00> : vector<8x80xf32>
    %308 = tpu.matmul %282, %307, %cst_291 {dimension_numbers = #tpu.dot_dimension_numbers<[1], [0], [0], [1], [0, 0, 1, 1], [], []>} : vector<8x120xf32>, vector<120x80xf32>, vector<8x80xf32> -> vector<8x80xf32>
    %c1_292 = arith.constant 1 : index
    %c0_293 = arith.constant 0 : index
    %c0_294 = arith.constant 0 : index
    %309 = vector.load %arg6[%c1_292, %c0_293, %c0_294] : memref<5x120x80xf32, #tpu.memory_space<vmem>>, vector<1x120x80xf32>
    %310 = vector.shape_cast %309 : vector<1x120x80xf32> to vector<120x80xf32>
    %cst_295 = arith.constant dense<0.000000e+00> : vector<8x80xf32>
    %311 = tpu.matmul %283, %310, %cst_295 {dimension_numbers = #tpu.dot_dimension_numbers<[1], [0], [0], [1], [0, 0, 1, 1], [], []>} : vector<8x120xf32>, vector<120x80xf32>, vector<8x80xf32> -> vector<8x80xf32>
    %312 = arith.addf %308, %311 : vector<8x80xf32>
    %c2_296 = arith.constant 2 : index
    %c0_297 = arith.constant 0 : index
    %c0_298 = arith.constant 0 : index
    %313 = vector.load %arg6[%c2_296, %c0_297, %c0_298] : memref<5x120x80xf32, #tpu.memory_space<vmem>>, vector<1x120x80xf32>
    %314 = vector.shape_cast %313 : vector<1x120x80xf32> to vector<120x80xf32>
    %cst_299 = arith.constant dense<0.000000e+00> : vector<8x80xf32>
    %315 = tpu.matmul %284, %314, %cst_299 {dimension_numbers = #tpu.dot_dimension_numbers<[1], [0], [0], [1], [0, 0, 1, 1], [], []>} : vector<8x120xf32>, vector<120x80xf32>, vector<8x80xf32> -> vector<8x80xf32>
    %316 = arith.addf %312, %315 : vector<8x80xf32>
    %c3_300 = arith.constant 3 : index
    %c0_301 = arith.constant 0 : index
    %c0_302 = arith.constant 0 : index
    %317 = vector.load %arg6[%c3_300, %c0_301, %c0_302] : memref<5x120x80xf32, #tpu.memory_space<vmem>>, vector<1x120x80xf32>
    %318 = vector.shape_cast %317 : vector<1x120x80xf32> to vector<120x80xf32>
    %cst_303 = arith.constant dense<0.000000e+00> : vector<8x80xf32>
    %319 = tpu.matmul %285, %318, %cst_303 {dimension_numbers = #tpu.dot_dimension_numbers<[1], [0], [0], [1], [0, 0, 1, 1], [], []>} : vector<8x120xf32>, vector<120x80xf32>, vector<8x80xf32> -> vector<8x80xf32>
    %320 = arith.addf %316, %319 : vector<8x80xf32>
    %c4_304 = arith.constant 4 : index
    %c0_305 = arith.constant 0 : index
    %c0_306 = arith.constant 0 : index
    %321 = vector.load %arg6[%c4_304, %c0_305, %c0_306] : memref<5x120x80xf32, #tpu.memory_space<vmem>>, vector<1x120x80xf32>
    %322 = vector.shape_cast %321 : vector<1x120x80xf32> to vector<120x80xf32>
    %cst_307 = arith.constant dense<0.000000e+00> : vector<8x80xf32>
    %323 = tpu.matmul %286, %322, %cst_307 {dimension_numbers = #tpu.dot_dimension_numbers<[1], [0], [0], [1], [0, 0, 1, 1], [], []>} : vector<8x120xf32>, vector<120x80xf32>, vector<8x80xf32> -> vector<8x80xf32>
    %324 = arith.addf %320, %323 : vector<8x80xf32>
    %325 = arith.maximumf %305, %324 : vector<8x80xf32>
    %c0_308 = arith.constant 0 : index
    %c0_309 = arith.constant 0 : index
    %326 = vector.load %arg9[%c0_308, %c0_309] : memref<1x10xf32, #tpu.memory_space<vmem>>, vector<1x10xf32>
    %327 = vector.extract_strided_slice %325 {offsets = [0, 0], sizes = [1, 80], strides = [1, 1]} : vector<8x80xf32> to vector<1x80xf32>
    %328 = vector.extract_strided_slice %325 {offsets = [1, 0], sizes = [1, 80], strides = [1, 1]} : vector<8x80xf32> to vector<1x80xf32>
    %329 = arith.maximumf %327, %328 : vector<1x80xf32>
    %c0_310 = arith.constant 0 : index
    %c0_311 = arith.constant 0 : index
    %330 = vector.load %arg7[%c0_310, %c0_311] : memref<1x80xf32, #tpu.memory_space<vmem>>, vector<1x80xf32>
    %331 = arith.addf %329, %330 : vector<1x80xf32>
    %cst_312 = arith.constant 0.000000e+00 : f32
    %332 = vector.broadcast %cst_312 : f32 to vector<1x80xf32>
    %333 = arith.maximumf %331, %332 : vector<1x80xf32>
    %c0_313 = arith.constant 0 : index
    %c0_314 = arith.constant 0 : index
    %c0_315 = arith.constant 0 : index
    %334 = vector.load %arg8[%c0_313, %c0_314, %c0_315] : memref<4x80x10xf32, #tpu.memory_space<vmem>>, vector<1x80x10xf32>
    %335 = vector.shape_cast %334 : vector<1x80x10xf32> to vector<80x10xf32>
    %cst_316 = arith.constant dense<0.000000e+00> : vector<1x10xf32>
    %336 = tpu.matmul %333, %335, %cst_316 {dimension_numbers = #tpu.dot_dimension_numbers<[1], [0], [0], [1], [0, 0, 1, 1], [], []>} : vector<1x80xf32>, vector<80x10xf32>, vector<1x10xf32> -> vector<1x10xf32>
    %337 = arith.addf %326, %336 : vector<1x10xf32>
    %338 = vector.extract_strided_slice %325 {offsets = [2, 0], sizes = [1, 80], strides = [1, 1]} : vector<8x80xf32> to vector<1x80xf32>
    %339 = vector.extract_strided_slice %325 {offsets = [3, 0], sizes = [1, 80], strides = [1, 1]} : vector<8x80xf32> to vector<1x80xf32>
    %340 = arith.maximumf %338, %339 : vector<1x80xf32>
    %c0_317 = arith.constant 0 : index
    %c0_318 = arith.constant 0 : index
    %341 = vector.load %arg7[%c0_317, %c0_318] : memref<1x80xf32, #tpu.memory_space<vmem>>, vector<1x80xf32>
    %342 = arith.addf %340, %341 : vector<1x80xf32>
    %cst_319 = arith.constant 0.000000e+00 : f32
    %343 = vector.broadcast %cst_319 : f32 to vector<1x80xf32>
    %344 = arith.maximumf %342, %343 : vector<1x80xf32>
    %c1_320 = arith.constant 1 : index
    %c0_321 = arith.constant 0 : index
    %c0_322 = arith.constant 0 : index
    %345 = vector.load %arg8[%c1_320, %c0_321, %c0_322] : memref<4x80x10xf32, #tpu.memory_space<vmem>>, vector<1x80x10xf32>
    %346 = vector.shape_cast %345 : vector<1x80x10xf32> to vector<80x10xf32>
    %cst_323 = arith.constant dense<0.000000e+00> : vector<1x10xf32>
    %347 = tpu.matmul %344, %346, %cst_323 {dimension_numbers = #tpu.dot_dimension_numbers<[1], [0], [0], [1], [0, 0, 1, 1], [], []>} : vector<1x80xf32>, vector<80x10xf32>, vector<1x10xf32> -> vector<1x10xf32>
    %348 = arith.addf %337, %347 : vector<1x10xf32>
    %349 = vector.extract_strided_slice %325 {offsets = [4, 0], sizes = [1, 80], strides = [1, 1]} : vector<8x80xf32> to vector<1x80xf32>
    %350 = vector.extract_strided_slice %325 {offsets = [5, 0], sizes = [1, 80], strides = [1, 1]} : vector<8x80xf32> to vector<1x80xf32>
    %351 = arith.maximumf %349, %350 : vector<1x80xf32>
    %c0_324 = arith.constant 0 : index
    %c0_325 = arith.constant 0 : index
    %352 = vector.load %arg7[%c0_324, %c0_325] : memref<1x80xf32, #tpu.memory_space<vmem>>, vector<1x80xf32>
    %353 = arith.addf %351, %352 : vector<1x80xf32>
    %cst_326 = arith.constant 0.000000e+00 : f32
    %354 = vector.broadcast %cst_326 : f32 to vector<1x80xf32>
    %355 = arith.maximumf %353, %354 : vector<1x80xf32>
    %c2_327 = arith.constant 2 : index
    %c0_328 = arith.constant 0 : index
    %c0_329 = arith.constant 0 : index
    %356 = vector.load %arg8[%c2_327, %c0_328, %c0_329] : memref<4x80x10xf32, #tpu.memory_space<vmem>>, vector<1x80x10xf32>
    %357 = vector.shape_cast %356 : vector<1x80x10xf32> to vector<80x10xf32>
    %cst_330 = arith.constant dense<0.000000e+00> : vector<1x10xf32>
    %358 = tpu.matmul %355, %357, %cst_330 {dimension_numbers = #tpu.dot_dimension_numbers<[1], [0], [0], [1], [0, 0, 1, 1], [], []>} : vector<1x80xf32>, vector<80x10xf32>, vector<1x10xf32> -> vector<1x10xf32>
    %359 = arith.addf %348, %358 : vector<1x10xf32>
    %360 = vector.extract_strided_slice %325 {offsets = [6, 0], sizes = [1, 80], strides = [1, 1]} : vector<8x80xf32> to vector<1x80xf32>
    %361 = vector.extract_strided_slice %325 {offsets = [7, 0], sizes = [1, 80], strides = [1, 1]} : vector<8x80xf32> to vector<1x80xf32>
    %362 = arith.maximumf %360, %361 : vector<1x80xf32>
    %c0_331 = arith.constant 0 : index
    %c0_332 = arith.constant 0 : index
    %363 = vector.load %arg7[%c0_331, %c0_332] : memref<1x80xf32, #tpu.memory_space<vmem>>, vector<1x80xf32>
    %364 = arith.addf %362, %363 : vector<1x80xf32>
    %cst_333 = arith.constant 0.000000e+00 : f32
    %365 = vector.broadcast %cst_333 : f32 to vector<1x80xf32>
    %366 = arith.maximumf %364, %365 : vector<1x80xf32>
    %c3_334 = arith.constant 3 : index
    %c0_335 = arith.constant 0 : index
    %c0_336 = arith.constant 0 : index
    %367 = vector.load %arg8[%c3_334, %c0_335, %c0_336] : memref<4x80x10xf32, #tpu.memory_space<vmem>>, vector<1x80x10xf32>
    %368 = vector.shape_cast %367 : vector<1x80x10xf32> to vector<80x10xf32>
    %cst_337 = arith.constant dense<0.000000e+00> : vector<1x10xf32>
    %369 = tpu.matmul %366, %368, %cst_337 {dimension_numbers = #tpu.dot_dimension_numbers<[1], [0], [0], [1], [0, 0, 1, 1], [], []>} : vector<1x80xf32>, vector<80x10xf32>, vector<1x10xf32> -> vector<1x10xf32>
    %370 = arith.addf %359, %369 : vector<1x10xf32>
    %c1_338 = arith.constant 1 : index
    %c0_339 = arith.constant 0 : index
    %371 = vector.load %arg10[%c1_338, %c0_339] : memref<2x10xf32, #tpu.memory_space<vmem>>, vector<1x10xf32>
    tpu.vector_store %arg10[%c1_338, %c0_339], %370 {strides = array<i32>} : memref<2x10xf32, #tpu.memory_space<vmem>>, vector<1x10xf32>,
    return
  }
}

</mosaic_0001>

<llo_original>
// kernel: net_forward.1
$region0: #{net_forward.1}
  #allocation0 [shape = 'u32[]', space=smem, size = 0x4, offset = 0x4, fixed_abs, tag = 'smem constant byte address 0x4 - core index']
  #allocation1 [shape = 'u32[144,128]{1,0:T(1,128)}', space=vmem, size = 0x12000, scoped, tag = 'internal scratch']
  %s0 = inlined_call_operand.vmem [shape: f32[2,14,28], index: 0, kind: input, shape index: {}]
  %s1 = inlined_call_operand.vmem [shape: f32[2,14,28], index: 1, kind: input, shape index: {}]
  %s2 = inlined_call_operand.vmem [shape: f32[5,28,120], index: 2, kind: input, shape index: {}]
  %s3 = inlined_call_operand.vmem [shape: f32[5,28,120], index: 3, kind: input, shape index: {}]
  %s4 = inlined_call_operand.vmem [shape: f32[1,120], index: 4, kind: input, shape index: {}]
  %s5 = inlined_call_operand.vmem [shape: f32[5,120,80], index: 5, kind: input, shape index: {}]
  %s6 = inlined_call_operand.vmem [shape: f32[5,120,80], index: 6, kind: input, shape index: {}]
  %s7 = inlined_call_operand.vmem [shape: f32[1,80], index: 7, kind: input, shape index: {}]
  %s8 = inlined_call_operand.vmem [shape: f32[4,80,10], index: 8, kind: input, shape index: {}]
  %s9 = inlined_call_operand.vmem [shape: f32[1,10], index: 9, kind: input, shape index: {}]
  %s10 = inlined_call_operand.hbm [shape: f32[2,10], index: 10, kind: output, shape index: {}]
  %s11 = sld [smem:[#allocation0]]
  $region50: #{net_forward.1} parent=0
    _
  %s13 = ssub.s32 1, %s11
  %s14 = scalar_select 0, %s13, %s11
  $region1: #{net_forward.1} parent=0
    #allocation2 [shape = 'u8[1024]{0}', space=vmem, size = 0x400, scoped, tag = 'output window, operand 0, single buffered']
    #allocation3 [shape = 's32[1]{0}', space=sflag, size = 0x4, scoped, tag = 'scoped memory for net_forward.1']
    %15 = vsyncpa [#allocation3], 0
    // Predicated region
    $region2: #{net_forward.1} parent=1 // pred_check
      _
    $region3: #{net_forward.1} parent=1 // pred_check_branch
      %17 = sbr.rel (0) target = $region5
    $region4: #{net_forward.1} parent=1 // pred_region
      _
    $region5: #{net_forward.1} parent=1 // pred_fallthru
      _
    // Predicated region
    $region6: #{net_forward.1} parent=1 // pred_check
      _
    $region7: #{net_forward.1} parent=1 // pred_check_branch
      %19 = sbr.rel (0) target = $region9
    $region8: #{net_forward.1} parent=1 // pred_region
      _
    $region9: #{net_forward.1} parent=1 // pred_fallthru
      _
    // Predicated region
    $region10: #{net_forward.1} parent=1 // pred_check
      _
    $region11: #{net_forward.1} parent=1 // pred_check_branch
      %21 = sbr.rel (0) target = $region13
    $region12: #{net_forward.1} parent=1 // pred_region
      _
    $region13: #{net_forward.1} parent=1 // pred_fallthru
      _
    // Predicated region
    $region14: #{net_forward.1} parent=1 // pred_check
      _
    $region15: #{net_forward.1} parent=1 // pred_check_branch
      %23 = sbr.rel (0) target = $region17
    $region16: #{net_forward.1} parent=1 // pred_region
      _
    $region17: #{net_forward.1} parent=1 // pred_fallthru
      _
    // Predicated region
    $region18: #{net_forward.1} parent=1 // pred_check
      _
    $region19: #{net_forward.1} parent=1 // pred_check_branch
      %25 = sbr.rel (0) target = $region21
    $region20: #{net_forward.1} parent=1 // pred_region
      _
    $region21: #{net_forward.1} parent=1 // pred_fallthru
      _
    // Predicated region
    $region22: #{net_forward.1} parent=1 // pred_check
      _
    $region23: #{net_forward.1} parent=1 // pred_check_branch
      %27 = sbr.rel (0) target = $region25
    $region24: #{net_forward.1} parent=1 // pred_region
      _
    $region25: #{net_forward.1} parent=1 // pred_fallthru
      _
    // Predicated region
    $region26: #{net_forward.1} parent=1 // pred_check
      _
    $region27: #{net_forward.1} parent=1 // pred_check_branch
      %29 = sbr.rel (0) target = $region29
    $region28: #{net_forward.1} parent=1 // pred_region
      _
    $region29: #{net_forward.1} parent=1 // pred_fallthru
      _
    // Predicated region
    $region30: #{net_forward.1} parent=1 // pred_check
      _
    $region31: #{net_forward.1} parent=1 // pred_check_branch
      %31 = sbr.rel (0) target = $region33
    $region32: #{net_forward.1} parent=1 // pred_region
      _
    $region33: #{net_forward.1} parent=1 // pred_fallthru
      _
    // Predicated region
    $region34: #{net_forward.1} parent=1 // pred_check
      _
    $region35: #{net_forward.1} parent=1 // pred_check_branch
      %33 = sbr.rel (0) target = $region37
    $region36: #{net_forward.1} parent=1 // pred_region
      _
    $region37: #{net_forward.1} parent=1 // pred_fallthru
      _
    // Predicated region
    $region38: #{net_forward.1} parent=1 // pred_check
      _
    $region39: #{net_forward.1} parent=1 // pred_check_branch
      %35 = sbr.rel (0) target = $region41
    $region40: #{net_forward.1} parent=1 // pred_region
      _
    $region41: #{net_forward.1} parent=1 // pred_fallthru
      _
    %v36 = vld [vmem:[%s0] sm:$0xff]
    %v37 = vld [vmem:[%s0 + $0x8] sm:$0xf]
    %v38 = vld [vmem:[%s0 + $0x1] sm:$0xff]
    %v39 = vld [vmem:[%s0 + $0x9] sm:$0xf]
    %v40 = vld [vmem:[%s0 + $0x2] sm:$0xff]
    %v41 = vld [vmem:[%s0 + $0xa] sm:$0xf]
    %v42 = vld [vmem:[%s1] sm:$0xff]
    %v43 = vld [vmem:[%s1 + $0x8] sm:$0xf]
    %v44 = vld [vmem:[%s1 + $0x1] sm:$0xff]
    %v45 = vld [vmem:[%s1 + $0x9] sm:$0xf]
    %v46 = vld [vmem:[%s1 + $0x2] sm:$0xff]
    %v47 = vld [vmem:[%s1 + $0xa] sm:$0xf]
    %v48 = vld [vmem:[%s2] sm:$0xff]
    %v49 = vld [vmem:[%s2 + $0x8] sm:$0xff]
    %v50 = vld [vmem:[%s2 + $0x10] sm:$0xff]
    %v51 = vld [vmem:[%s2 + $0x18] sm:$0xf]
    %s52 = scalar_lea.vmem %s2, 32
    %v53 = vld [vmem:[%s52] sm:$0xff]
    %v54 = vld [vmem:[%s52 + $0x8] sm:$0xff]
    %v55 = vld [vmem:[%s52 + $0x10] sm:$0xff]
    %v56 = vld [vmem:[%s52 + $0x18] sm:$0xf]
    %vm57 = vcmask 228352
    %v59 = vsel %vm57, %v42, 0
    %v62 = vsel %vm57, %v43, 0
    %vm64 = vcmask 1043456
    %v66 = vsel %vm64, %v56, 0
    %68 = vmatprep.subr.mxu0 0.0
    %69 = vmatpush1.msra.mxu0 %v53
    %70 = vmatprep.subr.mxu0 0.0
    %71 = vmatpush1.msra.mxu0 %v54
    %72 = vmatprep.subr.mxu0 0.0
    %73 = vmatpush1.msra.mxu0 %v55
    %74 = vmatprep.subr.mxu0 0.0
    %75 = vmatpush1.msra.mxu0 %v66
    %76 = vmatprep.subr.mxu0 0.0
    %77 = vmatpush1.msra.mxu0 0.0
    %78 = vmatprep.subr.mxu0 0.0
    %79 = vmatpush1.msra.mxu0 0.0
    %80 = vmatprep.subr.mxu0 0.0
    %81 = vmatpush1.msra.mxu0 0.0
    %82 = vmatprep.subr.mxu0 0.0
    %83 = vmatpush1.msra.mxu0 0.0
    %84 = vmatprep.subr.mxu0 0.0
    %85 = vmatpush1.msra.mxu0 0.0
    %86 = vmatprep.subr.mxu0 0.0
    %87 = vmatpush1.msra.mxu0 0.0
    %88 = vmatprep.subr.mxu0 0.0
    %89 = vmatpush1.msra.mxu0 0.0
    %90 = vmatprep.subr.mxu0 0.0
    %91 = vmatpush1.msra.mxu0 0.0
    %92 = vmatprep.subr.mxu0 0.0
    %93 = vmatpush1.msra.mxu0 0.0
    %94 = vmatprep.subr.mxu0 0.0
    %95 = vmatpush1.msra.mxu0 0.0
    %96 = vmatprep.subr.mxu0 0.0
    %97 = vmatpush1.msra.mxu0 0.0
    %98 = vmatprep.subr.mxu0 0.0
    %99 = vmatpush1.msra.mxu0 0.0
    %100 = vmatprep.subr.mxu0 0.0
    %101 = vmatpush1.msra.mxu0 0.0
    %102 = vmatprep.subr.mxu0 0.0
    %103 = vmatpush1.msra.mxu0 0.0
    %104 = vmatprep.subr.mxu0 0.0
    %105 = vmatpush1.msra.mxu0 0.0
    %106 = vmatprep.subr.mxu0 0.0
    %107 = vmatpush1.msra.mxu0 0.0
    %108 = vmatprep.subr.mxu0 0.0
    %109 = vmatpush1.msra.mxu0 0.0
    %110 = vmatprep.subr.mxu0 0.0
    %111 = vmatpush1.msra.mxu0 0.0
    %112 = vmatprep.subr.mxu0 0.0
    %113 = vmatpush1.msra.mxu0 0.0
    %114 = vmatprep.subr.mxu0 0.0
    %115 = vmatpush1.msra.mxu0 0.0
    %116 = vmatprep.subr.mxu0 0.0
    %117 = vmatpush1.msra.mxu0 0.0
    %118 = vmatprep.subr.mxu0 0.0
    %119 = vmatpush1.msra.mxu0 0.0
    %120 = vmatprep.subr.mxu0 0.0
    %121 = vmatpush1.msra.mxu0 0.0
    %122 = vmatprep.subr.mxu0 0.0
    %123 = vmatpush1.msra.mxu0 0.0
    %124 = vmatprep.subr.mxu0 0.0
    %125 = vmatpush1.msra.mxu0 0.0
    %126 = vmatprep.subr.mxu0 0.0
    %127 = vmatpush1.msra.mxu0 0.0
    %128 = vmatprep.subr.mxu0 0.0
    %129 = vmatpush1.msra.mxu0 0.0
    %130 = vmatprep.subr.mxu0 0.0
    %131 = vmatpush1.msra.mxu0 0.0
    %132 = vmatprep.mubr.f32.mxu0 0.0
    %133 = vmatmul.mubr.f32.gmra.mrb[0].mxu0 %v59
    %v134 = vpop.f32.mrb[0].mxu0
    %v135 = vadd.f32 0.0, %v134
    %v136 = vpop.f32.mrb[0].mxu0
    %137 = vmatprep.mubr.f32.mxu0 0.0
    %138 = vmatmul.mubr.f32.gmra.mrb[0].mxu0 %v62
    %v139 = vpop.f32.mrb[0].mxu0
    %v140 = vadd.f32 0.0, %v139
    %v141 = vpop.f32.mrb[0].mxu0
    %142 = vdwg.mxu0
    %v144 = vsel %vm57, %v36, 0
    %v147 = vsel %vm57, %v37, 0
    %v150 = vsel %vm64, %v51, 0
    %152 = vmatprep.subr.mxu0 0.0
    %153 = vmatpush1.msra.mxu0 %v48
    %154 = vmatprep.subr.mxu0 0.0
    %155 = vmatpush1.msra.mxu0 %v49
    %156 = vmatprep.subr.mxu0 0.0
    %157 = vmatpush1.msra.mxu0 %v50
    %158 = vmatprep.subr.mxu0 0.0
    %159 = vmatpush1.msra.mxu0 %v150
    %160 = vmatprep.subr.mxu0 0.0
    %161 = vmatpush1.msra.mxu0 0.0
    %162 = vmatprep.subr.mxu0 0.0
    %163 = vmatpush1.msra.mxu0 0.0
    %164 = vmatprep.subr.mxu0 0.0
    %165 = vmatpush1.msra.mxu0 0.0
    %166 = vmatprep.subr.mxu0 0.0
    %167 = vmatpush1.msra.mxu0 0.0
    %168 = vmatprep.subr.mxu0 0.0
    %169 = vmatpush1.msra.mxu0 0.0
    %170 = vmatprep.subr.mxu0 0.0
    %171 = vmatpush1.msra.mxu0 0.0
    %172 = vmatprep.subr.mxu0 0.0
    %173 = vmatpush1.msra.mxu0 0.0
    %174 = vmatprep.subr.mxu0 0.0
    %175 = vmatpush1.msra.mxu0 0.0
    %176 = vmatprep.subr.mxu0 0.0
    %177 = vmatpush1.msra.mxu0 0.0
    %178 = vmatprep.subr.mxu0 0.0
    %179 = vmatpush1.msra.mxu0 0.0
    %180 = vmatprep.subr.mxu0 0.0
    %181 = vmatpush1.msra.mxu0 0.0
    %182 = vmatprep.subr.mxu0 0.0
    %183 = vmatpush1.msra.mxu0 0.0
    %184 = vmatprep.subr.mxu0 0.0
    %185 = vmatpush1.msra.mxu0 0.0
    %186 = vmatprep.subr.mxu0 0.0
    %187 = vmatpush1.msra.mxu0 0.0
    %188 = vmatprep.subr.mxu0 0.0
    %189 = vmatpush1.msra.mxu0 0.0
    %190 = vmatprep.subr.mxu0 0.0
    %191 = vmatpush1.msra.mxu0 0.0
    %192 = vmatprep.subr.mxu0 0.0
    %193 = vmatpush1.msra.mxu0 0.0
    %194 = vmatprep.subr.mxu0 0.0
    %195 = vmatpush1.msra.mxu0 0.0
    %196 = vmatprep.subr.mxu0 0.0
    %197 = vmatpush1.msra.mxu0 0.0
    %198 = vmatprep.subr.mxu0 0.0
    %199 = vmatpush1.msra.mxu0 0.0
    %200 = vmatprep.subr.mxu0 0.0
    %201 = vmatpush1.msra.mxu0 0.0
    %202 = vmatprep.subr.mxu0 0.0
    %203 = vmatpush1.msra.mxu0 0.0
    %204 = vmatprep.subr.mxu0 0.0
    %205 = vmatpush1.msra.mxu0 0.0
    %206 = vmatprep.subr.mxu0 0.0
    %207 = vmatpush1.msra.mxu0 0.0
    %208 = vmatprep.subr.mxu0 0.0
    %209 = vmatpush1.msra.mxu0 0.0
    %210 = vmatprep.subr.mxu0 0.0
    %211 = vmatpush1.msra.mxu0 0.0
    %212 = vmatprep.subr.mxu0 0.0
    %213 = vmatpush1.msra.mxu0 0.0
    %214 = vmatprep.subr.mxu0 0.0
    %215 = vmatpush1.msra.mxu0 0.0
    %216 = vmatprep.mubr.f32.mxu0 0.0
    %217 = vmatmul.mubr.f32.gmra.mrb[0].mxu0 %v144
    %v218 = vpop.f32.mrb[0].mxu0
    %v219 = vadd.f32 %v135, %v218
    %v220 = vpop.f32.mrb[0].mxu0
    %221 = vmatprep.mubr.f32.mxu0 0.0
    %222 = vmatmul.mubr.f32.gmra.mrb[0].mxu0 %v147
    %v223 = vpop.f32.mrb[0].mxu0
    %v224 = vadd.f32 %v140, %v223
    %v225 = vpop.f32.mrb[0].mxu0
    %226 = vdwg.mxu0
    %s227 = scalar_lea.vmem %s2, 64
    %v228 = vld [vmem:[%s227] sm:$0xff]
    %v229 = vld [vmem:[%s227 + $0x8] sm:$0xff]
    %v230 = vld [vmem:[%s227 + $0x10] sm:$0xff]
    %v231 = vld [vmem:[%s227 + $0x18] sm:$0xf]
    %v233 = vsel %vm57, %v38, 0
    %v236 = vsel %vm57, %v39, 0
    %v239 = vsel %vm64, %v231, 0
    %241 = vmatprep.subr.mxu0 0.0
    %242 = vmatpush1.msra.mxu0 %v228
    %243 = vmatprep.subr.mxu0 0.0
    %244 = vmatpush1.msra.mxu0 %v229
    %245 = vmatprep.subr.mxu0 0.0
    %246 = vmatpush1.msra.mxu0 %v230
    %247 = vmatprep.subr.mxu0 0.0
    %248 = vmatpush1.msra.mxu0 %v239
    %249 = vmatprep.subr.mxu0 0.0
    %250 = vmatpush1.msra.mxu0 0.0
    %251 = vmatprep.subr.mxu0 0.0
    %252 = vmatpush1.msra.mxu0 0.0
    %253 = vmatprep.subr.mxu0 0.0
    %254 = vmatpush1.msra.mxu0 0.0
    %255 = vmatprep.subr.mxu0 0.0
    %256 = vmatpush1.msra.mxu0 0.0
    %257 = vmatprep.subr.mxu0 0.0
    %258 = vmatpush1.msra.mxu0 0.0
    %259 = vmatprep.subr.mxu0 0.0
    %260 = vmatpush1.msra.mxu0 0.0
    %261 = vmatprep.subr.mxu0 0.0
    %262 = vmatpush1.msra.mxu0 0.0
    %263 = vmatprep.subr.mxu0 0.0
    %264 = vmatpush1.msra.mxu0 0.0
    %265 = vmatprep.subr.mxu0 0.0
    %266 = vmatpush1.msra.mxu0 0.0
    %267 = vmatprep.subr.mxu0 0.0
    %268 = vmatpush1.msra.mxu0 0.0
    %269 = vmatprep.subr.mxu0 0.0
    %270 = vmatpush1.msra.mxu0 0.0
    %271 = vmatprep.subr.mxu0 0.0
    %272 = vmatpush1.msra.mxu0 0.0
    %273 = vmatprep.subr.mxu0 0.0
    %274 = vmatpush1.msra.mxu0 0.0
    %275 = vmatprep.subr.mxu0 0.0
    %276 = vmatpush1.msra.mxu0 0.0
    %277 = vmatprep.subr.mxu0 0.0
    %278 = vmatpush1.msra.mxu0 0.0
    %279 = vmatprep.subr.mxu0 0.0
    %280 = vmatpush1.msra.mxu0 0.0
    %281 = vmatprep.subr.mxu0 0.0
    %282 = vmatpush1.msra.mxu0 0.0
    %283 = vmatprep.subr.mxu0 0.0
    %284 = vmatpush1.msra.mxu0 0.0
    %285 = vmatprep.subr.mxu0 0.0
    %286 = vmatpush1.msra.mxu0 0.0
    %287 = vmatprep.subr.mxu0 0.0
    %288 = vmatpush1.msra.mxu0 0.0
    %289 = vmatprep.subr.mxu0 0.0
    %290 = vmatpush1.msra.mxu0 0.0
    %291 = vmatprep.subr.mxu0 0.0
    %292 = vmatpush1.msra.mxu0 0.0
    %293 = vmatprep.subr.mxu0 0.0
    %294 = vmatpush1.msra.mxu0 0.0
    %295 = vmatprep.subr.mxu0 0.0
    %296 = vmatpush1.msra.mxu0 0.0
    %297 = vmatprep.subr.mxu0 0.0
    %298 = vmatpush1.msra.mxu0 0.0
    %299 = vmatprep.subr.mxu0 0.0
    %300 = vmatpush1.msra.mxu0 0.0
    %301 = vmatprep.subr.mxu0 0.0
    %302 = vmatpush1.msra.mxu0 0.0
    %303 = vmatprep.subr.mxu0 0.0
    %304 = vmatpush1.msra.mxu0 0.0
    %305 = vmatprep.mubr.f32.mxu0 0.0
    %306 = vmatmul.mubr.f32.gmra.mrb[0].mxu0 %v233
    %v307 = vpop.f32.mrb[0].mxu0
    %v308 = vadd.f32 0.0, %v307
    %v309 = vpop.f32.mrb[0].mxu0
    %310 = vmatprep.mubr.f32.mxu0 0.0
    %311 = vmatmul.mubr.f32.gmra.mrb[0].mxu0 %v236
    %v312 = vpop.f32.mrb[0].mxu0
    %v313 = vadd.f32 0.0, %v312
    %v314 = vpop.f32.mrb[0].mxu0
    %315 = vdwg.mxu0
    %v316 = vadd.f32 %v219, %v308
    %v317 = vadd.f32 %v224, %v313
    %s318 = scalar_lea.vmem %s2, 96
    %v319 = vld [vmem:[%s318] sm:$0xff]
    %v320 = vld [vmem:[%s318 + $0x8] sm:$0xff]
    %v321 = vld [vmem:[%s318 + $0x10] sm:$0xff]
    %v322 = vld [vmem:[%s318 + $0x18] sm:$0xf]
    %v324 = vsel %vm57, %v44, 0
    %v327 = vsel %vm57, %v45, 0
    %v330 = vsel %vm64, %v322, 0
    %332 = vmatprep.subr.mxu0 0.0
    %333 = vmatpush1.msra.mxu0 %v319
    %334 = vmatprep.subr.mxu0 0.0
    %335 = vmatpush1.msra.mxu0 %v320
    %336 = vmatprep.subr.mxu0 0.0
    %337 = vmatpush1.msra.mxu0 %v321
    %338 = vmatprep.subr.mxu0 0.0
    %339 = vmatpush1.msra.mxu0 %v330
    %340 = vmatprep.subr.mxu0 0.0
    %341 = vmatpush1.msra.mxu0 0.0
    %342 = vmatprep.subr.mxu0 0.0
    %343 = vmatpush1.msra.mxu0 0.0
    %344 = vmatprep.subr.mxu0 0.0
    %345 = vmatpush1.msra.mxu0 0.0
    %346 = vmatprep.subr.mxu0 0.0
    %347 = vmatpush1.msra.mxu0 0.0
    %348 = vmatprep.subr.mxu0 0.0
    %349 = vmatpush1.msra.mxu0 0.0
    %350 = vmatprep.subr.mxu0 0.0
    %351 = vmatpush1.msra.mxu0 0.0
    %352 = vmatprep.subr.mxu0 0.0
    %353 = vmatpush1.msra.mxu0 0.0
    %354 = vmatprep.subr.mxu0 0.0
    %355 = vmatpush1.msra.mxu0 0.0
    %356 = vmatprep.subr.mxu0 0.0
    %357 = vmatpush1.msra.mxu0 0.0
    %358 = vmatprep.subr.mxu0 0.0
    %359 = vmatpush1.msra.mxu0 0.0
    %360 = vmatprep.subr.mxu0 0.0
    %361 = vmatpush1.msra.mxu0 0.0
    %362 = vmatprep.subr.mxu0 0.0
    %363 = vmatpush1.msra.mxu0 0.0
    %364 = vmatprep.subr.mxu0 0.0
    %365 = vmatpush1.msra.mxu0 0.0
    %366 = vmatprep.subr.mxu0 0.0
    %367 = vmatpush1.msra.mxu0 0.0
    %368 = vmatprep.subr.mxu0 0.0
    %369 = vmatpush1.msra.mxu0 0.0
    %370 = vmatprep.subr.mxu0 0.0
    %371 = vmatpush1.msra.mxu0 0.0
    %372 = vmatprep.subr.mxu0 0.0
    %373 = vmatpush1.msra.mxu0 0.0
    %374 = vmatprep.subr.mxu0 0.0
    %375 = vmatpush1.msra.mxu0 0.0
    %376 = vmatprep.subr.mxu0 0.0
    %377 = vmatpush1.msra.mxu0 0.0
    %378 = vmatprep.subr.mxu0 0.0
    %379 = vmatpush1.msra.mxu0 0.0
    %380 = vmatprep.subr.mxu0 0.0
    %381 = vmatpush1.msra.mxu0 0.0
    %382 = vmatprep.subr.mxu0 0.0
    %383 = vmatpush1.msra.mxu0 0.0
    %384 = vmatprep.subr.mxu0 0.0
    %385 = vmatpush1.msra.mxu0 0.0
    %386 = vmatprep.subr.mxu0 0.0
    %387 = vmatpush1.msra.mxu0 0.0
    %388 = vmatprep.subr.mxu0 0.0
    %389 = vmatpush1.msra.mxu0 0.0
    %390 = vmatprep.subr.mxu0 0.0
    %391 = vmatpush1.msra.mxu0 0.0
    %392 = vmatprep.subr.mxu0 0.0
    %393 = vmatpush1.msra.mxu0 0.0
    %394 = vmatprep.subr.mxu0 0.0
    %395 = vmatpush1.msra.mxu0 0.0
    %396 = vmatprep.mubr.f32.mxu0 0.0
    %397 = vmatmul.mubr.f32.gmra.mrb[0].mxu0 %v324
    %v398 = vpop.f32.mrb[0].mxu0
    %v399 = vadd.f32 0.0, %v398
    %v400 = vpop.f32.mrb[0].mxu0
    %401 = vmatprep.mubr.f32.mxu0 0.0
    %402 = vmatmul.mubr.f32.gmra.mrb[0].mxu0 %v327
    %v403 = vpop.f32.mrb[0].mxu0
    %v404 = vadd.f32 0.0, %v403
    %v405 = vpop.f32.mrb[0].mxu0
    %406 = vdwg.mxu0
    %v407 = vadd.f32 %v316, %v399
    %v408 = vadd.f32 %v317, %v404
    %s409 = scalar_lea.vmem %s2, 128
    %v410 = vld [vmem:[%s409] sm:$0xff]
    %v411 = vld [vmem:[%s409 + $0x8] sm:$0xff]
    %v412 = vld [vmem:[%s409 + $0x10] sm:$0xff]
    %v413 = vld [vmem:[%s409 + $0x18] sm:$0xf]
    %v415 = vsel %vm57, %v40, 0
    %v418 = vsel %vm57, %v41, 0
    %v421 = vsel %vm64, %v413, 0
    %423 = vmatprep.subr.mxu0 0.0
    %424 = vmatpush1.msra.mxu0 %v410
    %425 = vmatprep.subr.mxu0 0.0
    %426 = vmatpush1.msra.mxu0 %v411
    %427 = vmatprep.subr.mxu0 0.0
    %428 = vmatpush1.msra.mxu0 %v412
    %429 = vmatprep.subr.mxu0 0.0
    %430 = vmatpush1.msra.mxu0 %v421
    %431 = vmatprep.subr.mxu0 0.0
    %432 = vmatpush1.msra.mxu0 0.0
    %433 = vmatprep.subr.mxu0 0.0
    %434 = vmatpush1.msra.mxu0 0.0
    %435 = vmatprep.subr.mxu0 0.0
    %436 = vmatpush1.msra.mxu0 0.0
    %437 = vmatprep.subr.mxu0 0.0
    %438 = vmatpush1.msra.mxu0 0.0
    %439 = vmatprep.subr.mxu0 0.0
    %440 = vmatpush1.msra.mxu0 0.0
    %441 = vmatprep.subr.mxu0 0.0
    %442 = vmatpush1.msra.mxu0 0.0
    %443 = vmatprep.subr.mxu0 0.0
    %444 = vmatpush1.msra.mxu0 0.0
    %445 = vmatprep.subr.mxu0 0.0
    %446 = vmatpush1.msra.mxu0 0.0
    %447 = vmatprep.subr.mxu0 0.0
    %448 = vmatpush1.msra.mxu0 0.0
    %449 = vmatprep.subr.mxu0 0.0
    %450 = vmatpush1.msra.mxu0 0.0
    %451 = vmatprep.subr.mxu0 0.0
    %452 = vmatpush1.msra.mxu0 0.0
    %453 = vmatprep.subr.mxu0 0.0
    %454 = vmatpush1.msra.mxu0 0.0
    %455 = vmatprep.subr.mxu0 0.0
    %456 = vmatpush1.msra.mxu0 0.0
    %457 = vmatprep.subr.mxu0 0.0
    %458 = vmatpush1.msra.mxu0 0.0
    %459 = vmatprep.subr.mxu0 0.0
    %460 = vmatpush1.msra.mxu0 0.0
    %461 = vmatprep.subr.mxu0 0.0
    %462 = vmatpush1.msra.mxu0 0.0
    %463 = vmatprep.subr.mxu0 0.0
    %464 = vmatpush1.msra.mxu0 0.0
    %465 = vmatprep.subr.mxu0 0.0
    %466 = vmatpush1.msra.mxu0 0.0
    %467 = vmatprep.subr.mxu0 0.0
    %468 = vmatpush1.msra.mxu0 0.0
    %469 = vmatprep.subr.mxu0 0.0
    %470 = vmatpush1.msra.mxu0 0.0
    %471 = vmatprep.subr.mxu0 0.0
    %472 = vmatpush1.msra.mxu0 0.0
    %473 = vmatprep.subr.mxu0 0.0
    %474 = vmatpush1.msra.mxu0 0.0
    %475 = vmatprep.subr.mxu0 0.0
    %476 = vmatpush1.msra.mxu0 0.0
    %477 = vmatprep.subr.mxu0 0.0
    %478 = vmatpush1.msra.mxu0 0.0
    %479 = vmatprep.subr.mxu0 0.0
    %480 = vmatpush1.msra.mxu0 0.0
    %481 = vmatprep.subr.mxu0 0.0
    %482 = vmatpush1.msra.mxu0 0.0
    %483 = vmatprep.subr.mxu0 0.0
    %484 = vmatpush1.msra.mxu0 0.0
    %485 = vmatprep.subr.mxu0 0.0
    %486 = vmatpush1.msra.mxu0 0.0
    %487 = vmatprep.mubr.f32.mxu0 0.0
    %488 = vmatmul.mubr.f32.gmra.mrb[0].mxu0 %v415
    %v489 = vpop.f32.mrb[0].mxu0
    %v490 = vadd.f32 0.0, %v489
    %v491 = vpop.f32.mrb[0].mxu0
    %492 = vmatprep.mubr.f32.mxu0 0.0
    %493 = vmatmul.mubr.f32.gmra.mrb[0].mxu0 %v418
    %v494 = vpop.f32.mrb[0].mxu0
    %v495 = vadd.f32 0.0, %v494
    %v496 = vpop.f32.mrb[0].mxu0
    %497 = vdwg.mxu0
    %v498 = vadd.f32 %v407, %v490
    %v499 = vadd.f32 %v408, %v495
    %v500 = vld [vmem:[%s3] sm:$0xff]
    %v501 = vld [vmem:[%s3 + $0x8] sm:$0xff]
    %v502 = vld [vmem:[%s3 + $0x10] sm:$0xff]
    %v503 = vld [vmem:[%s3 + $0x18] sm:$0xf]
    %s504 = scalar_lea.vmem %s3, 32
    %v505 = vld [vmem:[%s504] sm:$0xff]
    %v506 = vld [vmem:[%s504 + $0x8] sm:$0xff]
    %v507 = vld [vmem:[%s504 + $0x10] sm:$0xff]
    %v508 = vld [vmem:[%s504 + $0x18] sm:$0xf]
    %v510 = vsel %vm64, %v508, 0
    %512 = vmatprep.subr.mxu0 0.0
    %513 = vmatpush1.msra.mxu0 %v505
    %514 = vmatprep.subr.mxu0 0.0
    %515 = vmatpush1.msra.mxu0 %v506
    %516 = vmatprep.subr.mxu0 0.0
    %517 = vmatpush1.msra.mxu0 %v507
    %518 = vmatprep.subr.mxu0 0.0
    %519 = vmatpush1.msra.mxu0 %v510
    %520 = vmatprep.subr.mxu0 0.0
    %521 = vmatpush1.msra.mxu0 0.0
    %522 = vmatprep.subr.mxu0 0.0
    %523 = vmatpush1.msra.mxu0 0.0
    %524 = vmatprep.subr.mxu0 0.0
    %525 = vmatpush1.msra.mxu0 0.0
    %526 = vmatprep.subr.mxu0 0.0
    %527 = vmatpush1.msra.mxu0 0.0
    %528 = vmatprep.subr.mxu0 0.0
    %529 = vmatpush1.msra.mxu0 0.0
    %530 = vmatprep.subr.mxu0 0.0
    %531 = vmatpush1.msra.mxu0 0.0
    %532 = vmatprep.subr.mxu0 0.0
    %533 = vmatpush1.msra.mxu0 0.0
    %534 = vmatprep.subr.mxu0 0.0
    %535 = vmatpush1.msra.mxu0 0.0
    %536 = vmatprep.subr.mxu0 0.0
    %537 = vmatpush1.msra.mxu0 0.0
    %538 = vmatprep.subr.mxu0 0.0
    %539 = vmatpush1.msra.mxu0 0.0
    %540 = vmatprep.subr.mxu0 0.0
    %541 = vmatpush1.msra.mxu0 0.0
    %542 = vmatprep.subr.mxu0 0.0
    %543 = vmatpush1.msra.mxu0 0.0
    %544 = vmatprep.subr.mxu0 0.0
    %545 = vmatpush1.msra.mxu0 0.0
    %546 = vmatprep.subr.mxu0 0.0
    %547 = vmatpush1.msra.mxu0 0.0
    %548 = vmatprep.subr.mxu0 0.0
    %549 = vmatpush1.msra.mxu0 0.0
    %550 = vmatprep.subr.mxu0 0.0
    %551 = vmatpush1.msra.mxu0 0.0
    %552 = vmatprep.subr.mxu0 0.0
    %553 = vmatpush1.msra.mxu0 0.0
    %554 = vmatprep.subr.mxu0 0.0
    %555 = vmatpush1.msra.mxu0 0.0
    %556 = vmatprep.subr.mxu0 0.0
    %557 = vmatpush1.msra.mxu0 0.0
    %558 = vmatprep.subr.mxu0 0.0
    %559 = vmatpush1.msra.mxu0 0.0
    %560 = vmatprep.subr.mxu0 0.0
    %561 = vmatpush1.msra.mxu0 0.0
    %562 = vmatprep.subr.mxu0 0.0
    %563 = vmatpush1.msra.mxu0 0.0
    %564 = vmatprep.subr.mxu0 0.0
    %565 = vmatpush1.msra.mxu0 0.0
    %566 = vmatprep.subr.mxu0 0.0
    %567 = vmatpush1.msra.mxu0 0.0
    %568 = vmatprep.subr.mxu0 0.0
    %569 = vmatpush1.msra.mxu0 0.0
    %570 = vmatprep.subr.mxu0 0.0
    %571 = vmatpush1.msra.mxu0 0.0
    %572 = vmatprep.subr.mxu0 0.0
    %573 = vmatpush1.msra.mxu0 0.0
    %574 = vmatprep.subr.mxu0 0.0
    %575 = vmatpush1.msra.mxu0 0.0
    %576 = vmatprep.mubr.f32.mxu0 0.0
    %577 = vmatmul.mubr.f32.gmra.mrb[0].mxu0 %v59
    %v578 = vpop.f32.mrb[0].mxu0
    %v579 = vadd.f32 0.0, %v578
    %v580 = vpop.f32.mrb[0].mxu0
    %581 = vmatprep.mubr.f32.mxu0 0.0
    %582 = vmatmul.mubr.f32.gmra.mrb[0].mxu0 %v62
    %v583 = vpop.f32.mrb[0].mxu0
    %v584 = vadd.f32 0.0, %v583
    %v585 = vpop.f32.mrb[0].mxu0
    %586 = vdwg.mxu0
    %v588 = vsel %vm64, %v503, 0
    %590 = vmatprep.subr.mxu0 0.0
    %591 = vmatpush1.msra.mxu0 %v500
    %592 = vmatprep.subr.mxu0 0.0
    %593 = vmatpush1.msra.mxu0 %v501
    %594 = vmatprep.subr.mxu0 0.0
    %595 = vmatpush1.msra.mxu0 %v502
    %596 = vmatprep.subr.mxu0 0.0
    %597 = vmatpush1.msra.mxu0 %v588
    %598 = vmatprep.subr.mxu0 0.0
    %599 = vmatpush1.msra.mxu0 0.0
    %600 = vmatprep.subr.mxu0 0.0
    %601 = vmatpush1.msra.mxu0 0.0
    %602 = vmatprep.subr.mxu0 0.0
    %603 = vmatpush1.msra.mxu0 0.0
    %604 = vmatprep.subr.mxu0 0.0
    %605 = vmatpush1.msra.mxu0 0.0
    %606 = vmatprep.subr.mxu0 0.0
    %607 = vmatpush1.msra.mxu0 0.0
    %608 = vmatprep.subr.mxu0 0.0
    %609 = vmatpush1.msra.mxu0 0.0
    %610 = vmatprep.subr.mxu0 0.0
    %611 = vmatpush1.msra.mxu0 0.0
    %612 = vmatprep.subr.mxu0 0.0
    %613 = vmatpush1.msra.mxu0 0.0
    %614 = vmatprep.subr.mxu0 0.0
    %615 = vmatpush1.msra.mxu0 0.0
    %616 = vmatprep.subr.mxu0 0.0
    %617 = vmatpush1.msra.mxu0 0.0
    %618 = vmatprep.subr.mxu0 0.0
    %619 = vmatpush1.msra.mxu0 0.0
    %620 = vmatprep.subr.mxu0 0.0
    %621 = vmatpush1.msra.mxu0 0.0
    %622 = vmatprep.subr.mxu0 0.0
    %623 = vmatpush1.msra.mxu0 0.0
    %624 = vmatprep.subr.mxu0 0.0
    %625 = vmatpush1.msra.mxu0 0.0
    %626 = vmatprep.subr.mxu0 0.0
    %627 = vmatpush1.msra.mxu0 0.0
    %628 = vmatprep.subr.mxu0 0.0
    %629 = vmatpush1.msra.mxu0 0.0
    %630 = vmatprep.subr.mxu0 0.0
    %631 = vmatpush1.msra.mxu0 0.0
    %632 = vmatprep.subr.mxu0 0.0
    %633 = vmatpush1.msra.mxu0 0.0
    %634 = vmatprep.subr.mxu0 0.0
    %635 = vmatpush1.msra.mxu0 0.0
    %636 = vmatprep.subr.mxu0 0.0
    %637 = vmatpush1.msra.mxu0 0.0
    %638 = vmatprep.subr.mxu0 0.0
    %639 = vmatpush1.msra.mxu0 0.0
    %640 = vmatprep.subr.mxu0 0.0
    %641 = vmatpush1.msra.mxu0 0.0
    %642 = vmatprep.subr.mxu0 0.0
    %643 = vmatpush1.msra.mxu0 0.0
    %644 = vmatprep.subr.mxu0 0.0
    %645 = vmatpush1.msra.mxu0 0.0
    %646 = vmatprep.subr.mxu0 0.0
    %647 = vmatpush1.msra.mxu0 0.0
    %648 = vmatprep.subr.mxu0 0.0
    %649 = vmatpush1.msra.mxu0 0.0
    %650 = vmatprep.subr.mxu0 0.0
    %651 = vmatpush1.msra.mxu0 0.0
    %652 = vmatprep.subr.mxu0 0.0
    %653 = vmatpush1.msra.mxu0 0.0
    %654 = vmatprep.mubr.f32.mxu0 0.0
    %655 = vmatmul.mubr.f32.gmra.mrb[0].mxu0 %v144
    %v656 = vpop.f32.mrb[0].mxu0
    %v657 = vadd.f32 %v579, %v656
    %v658 = vpop.f32.mrb[0].mxu0
    %659 = vmatprep.mubr.f32.mxu0 0.0
    %660 = vmatmul.mubr.f32.gmra.mrb[0].mxu0 %v147
    %v661 = vpop.f32.mrb[0].mxu0
    %v662 = vadd.f32 %v584, %v661
    %v663 = vpop.f32.mrb[0].mxu0
    %664 = vdwg.mxu0
    %s665 = scalar_lea.vmem %s3, 64
    %v666 = vld [vmem:[%s665] sm:$0xff]
    %v667 = vld [vmem:[%s665 + $0x8] sm:$0xff]
    %v668 = vld [vmem:[%s665 + $0x10] sm:$0xff]
    %v669 = vld [vmem:[%s665 + $0x18] sm:$0xf]
    %v671 = vsel %vm64, %v669, 0
    %673 = vmatprep.subr.mxu0 0.0
    %674 = vmatpush1.msra.mxu0 %v666
    %675 = vmatprep.subr.mxu0 0.0
    %676 = vmatpush1.msra.mxu0 %v667
    %677 = vmatprep.subr.mxu0 0.0
    %678 = vmatpush1.msra.mxu0 %v668
    %679 = vmatprep.subr.mxu0 0.0
    %680 = vmatpush1.msra.mxu0 %v671
    %681 = vmatprep.subr.mxu0 0.0
    %682 = vmatpush1.msra.mxu0 0.0
    %683 = vmatprep.subr.mxu0 0.0
    %684 = vmatpush1.msra.mxu0 0.0
    %685 = vmatprep.subr.mxu0 0.0
    %686 = vmatpush1.msra.mxu0 0.0
    %687 = vmatprep.subr.mxu0 0.0
    %688 = vmatpush1.msra.mxu0 0.0
    %689 = vmatprep.subr.mxu0 0.0
    %690 = vmatpush1.msra.mxu0 0.0
    %691 = vmatprep.subr.mxu0 0.0
    %692 = vmatpush1.msra.mxu0 0.0
    %693 = vmatprep.subr.mxu0 0.0
    %694 = vmatpush1.msra.mxu0 0.0
    %695 = vmatprep.subr.mxu0 0.0
    %696 = vmatpush1.msra.mxu0 0.0
    %697 = vmatprep.subr.mxu0 0.0
    %698 = vmatpush1.msra.mxu0 0.0
    %699 = vmatprep.subr.mxu0 0.0
    %700 = vmatpush1.msra.mxu0 0.0
    %701 = vmatprep.subr.mxu0 0.0
    %702 = vmatpush1.msra.mxu0 0.0
    %703 = vmatprep.subr.mxu0 0.0
    %704 = vmatpush1.msra.mxu0 0.0
    %705 = vmatprep.subr.mxu0 0.0
    %706 = vmatpush1.msra.mxu0 0.0
    %707 = vmatprep.subr.mxu0 0.0
    %708 = vmatpush1.msra.mxu0 0.0
    %709 = vmatprep.subr.mxu0 0.0
    %710 = vmatpush1.msra.mxu0 0.0
    %711 = vmatprep.subr.mxu0 0.0
    %712 = vmatpush1.msra.mxu0 0.0
    %713 = vmatprep.subr.mxu0 0.0
    %714 = vmatpush1.msra.mxu0 0.0
    %715 = vmatprep.subr.mxu0 0.0
    %716 = vmatpush1.msra.mxu0 0.0
    %717 = vmatprep.subr.mxu0 0.0
    %718 = vmatpush1.msra.mxu0 0.0
    %719 = vmatprep.subr.mxu0 0.0
    %720 = vmatpush1.msra.mxu0 0.0
    %721 = vmatprep.subr.mxu0 0.0
    %722 = vmatpush1.msra.mxu0 0.0
    %723 = vmatprep.subr.mxu0 0.0
    %724 = vmatpush1.msra.mxu0 0.0
    %725 = vmatprep.subr.mxu0 0.0
    %726 = vmatpush1.msra.mxu0 0.0
    %727 = vmatprep.subr.mxu0 0.0
    %728 = vmatpush1.msra.mxu0 0.0
    %729 = vmatprep.subr.mxu0 0.0
    %730 = vmatpush1.msra.mxu0 0.0
    %731 = vmatprep.subr.mxu0 0.0
    %732 = vmatpush1.msra.mxu0 0.0
    %733 = vmatprep.subr.mxu0 0.0
    %734 = vmatpush1.msra.mxu0 0.0
    %735 = vmatprep.subr.mxu0 0.0
    %736 = vmatpush1.msra.mxu0 0.0
    %737 = vmatprep.mubr.f32.mxu0 0.0
    %738 = vmatmul.mubr.f32.gmra.mrb[0].mxu0 %v233
    %v739 = vpop.f32.mrb[0].mxu0
    %v740 = vadd.f32 0.0, %v739
    %v741 = vpop.f32.mrb[0].mxu0
    %742 = vmatprep.mubr.f32.mxu0 0.0
    %743 = vmatmul.mubr.f32.gmra.mrb[0].mxu0 %v236
    %v744 = vpop.f32.mrb[0].mxu0
    %v745 = vadd.f32 0.0, %v744
    %v746 = vpop.f32.mrb[0].mxu0
    %747 = vdwg.mxu0
    %v748 = vadd.f32 %v657, %v740
    %v749 = vadd.f32 %v662, %v745
    %s750 = scalar_lea.vmem %s3, 96
    %v751 = vld [vmem:[%s750] sm:$0xff]
    %v752 = vld [vmem:[%s750 + $0x8] sm:$0xff]
    %v753 = vld [vmem:[%s750 + $0x10] sm:$0xff]
    %v754 = vld [vmem:[%s750 + $0x18] sm:$0xf]
    %v756 = vsel %vm64, %v754, 0
    %758 = vmatprep.subr.mxu0 0.0
    %759 = vmatpush1.msra.mxu0 %v751
    %760 = vmatprep.subr.mxu0 0.0
    %761 = vmatpush1.msra.mxu0 %v752
    %762 = vmatprep.subr.mxu0 0.0
    %763 = vmatpush1.msra.mxu0 %v753
    %764 = vmatprep.subr.mxu0 0.0
    %765 = vmatpush1.msra.mxu0 %v756
    %766 = vmatprep.subr.mxu0 0.0
    %767 = vmatpush1.msra.mxu0 0.0
    %768 = vmatprep.subr.mxu0 0.0
    %769 = vmatpush1.msra.mxu0 0.0
    %770 = vmatprep.subr.mxu0 0.0
    %771 = vmatpush1.msra.mxu0 0.0
    %772 = vmatprep.subr.mxu0 0.0
    %773 = vmatpush1.msra.mxu0 0.0
    %774 = vmatprep.subr.mxu0 0.0
    %775 = vmatpush1.msra.mxu0 0.0
    %776 = vmatprep.subr.mxu0 0.0
    %777 = vmatpush1.msra.mxu0 0.0
    %778 = vmatprep.subr.mxu0 0.0
    %779 = vmatpush1.msra.mxu0 0.0
    %780 = vmatprep.subr.mxu0 0.0
    %781 = vmatpush1.msra.mxu0 0.0
    %782 = vmatprep.subr.mxu0 0.0
    %783 = vmatpush1.msra.mxu0 0.0
    %784 = vmatprep.subr.mxu0 0.0
    %785 = vmatpush1.msra.mxu0 0.0
    %786 = vmatprep.subr.mxu0 0.0
    %787 = vmatpush1.msra.mxu0 0.0
    %788 = vmatprep.subr.mxu0 0.0
    %789 = vmatpush1.msra.mxu0 0.0
    %790 = vmatprep.subr.mxu0 0.0
    %791 = vmatpush1.msra.mxu0 0.0
    %792 = vmatprep.subr.mxu0 0.0
    %793 = vmatpush1.msra.mxu0 0.0
    %794 = vmatprep.subr.mxu0 0.0
    %795 = vmatpush1.msra.mxu0 0.0
    %796 = vmatprep.subr.mxu0 0.0
    %797 = vmatpush1.msra.mxu0 0.0
    %798 = vmatprep.subr.mxu0 0.0
    %799 = vmatpush1.msra.mxu0 0.0
    %800 = vmatprep.subr.mxu0 0.0
    %801 = vmatpush1.msra.mxu0 0.0
    %802 = vmatprep.subr.mxu0 0.0
    %803 = vmatpush1.msra.mxu0 0.0
    %804 = vmatprep.subr.mxu0 0.0
    %805 = vmatpush1.msra.mxu0 0.0
    %806 = vmatprep.subr.mxu0 0.0
    %807 = vmatpush1.msra.mxu0 0.0
    %808 = vmatprep.subr.mxu0 0.0
    %809 = vmatpush1.msra.mxu0 0.0
    %810 = vmatprep.subr.mxu0 0.0
    %811 = vmatpush1.msra.mxu0 0.0
    %812 = vmatprep.subr.mxu0 0.0
    %813 = vmatpush1.msra.mxu0 0.0
    %814 = vmatprep.subr.mxu0 0.0
    %815 = vmatpush1.msra.mxu0 0.0
    %816 = vmatprep.subr.mxu0 0.0
    %817 = vmatpush1.msra.mxu0 0.0
    %818 = vmatprep.subr.mxu0 0.0
    %819 = vmatpush1.msra.mxu0 0.0
    %820 = vmatprep.subr.mxu0 0.0
    %821 = vmatpush1.msra.mxu0 0.0
    %822 = vmatprep.mubr.f32.mxu0 0.0
    %823 = vmatmul.mubr.f32.gmra.mrb[0].mxu0 %v324
    %v824 = vpop.f32.mrb[0].mxu0
    %v825 = vadd.f32 0.0, %v824
    %v826 = vpop.f32.mrb[0].mxu0
    %827 = vmatprep.mubr.f32.mxu0 0.0
    %828 = vmatmul.mubr.f32.gmra.mrb[0].mxu0 %v327
    %v829 = vpop.f32.mrb[0].mxu0
    %v830 = vadd.f32 0.0, %v829
    %v831 = vpop.f32.mrb[0].mxu0
    %832 = vdwg.mxu0
    %v833 = vadd.f32 %v748, %v825
    %v834 = vadd.f32 %v749, %v830
    %s835 = scalar_lea.vmem %s3, 128
    %v836 = vld [vmem:[%s835] sm:$0xff]
    %v837 = vld [vmem:[%s835 + $0x8] sm:$0xff]
    %v838 = vld [vmem:[%s835 + $0x10] sm:$0xff]
    %v839 = vld [vmem:[%s835 + $0x18] sm:$0xf]
    %v841 = vsel %vm64, %v839, 0
    %843 = vmatprep.subr.mxu0 0.0
    %844 = vmatpush1.msra.mxu0 %v836
    %845 = vmatprep.subr.mxu0 0.0
    %846 = vmatpush1.msra.mxu0 %v837
    %847 = vmatprep.subr.mxu0 0.0
    %848 = vmatpush1.msra.mxu0 %v838
    %849 = vmatprep.subr.mxu0 0.0
    %850 = vmatpush1.msra.mxu0 %v841
    %851 = vmatprep.subr.mxu0 0.0
    %852 = vmatpush1.msra.mxu0 0.0
    %853 = vmatprep.subr.mxu0 0.0
    %854 = vmatpush1.msra.mxu0 0.0
    %855 = vmatprep.subr.mxu0 0.0
    %856 = vmatpush1.msra.mxu0 0.0
    %857 = vmatprep.subr.mxu0 0.0
    %858 = vmatpush1.msra.mxu0 0.0
    %859 = vmatprep.subr.mxu0 0.0
    %860 = vmatpush1.msra.mxu0 0.0
    %861 = vmatprep.subr.mxu0 0.0
    %862 = vmatpush1.msra.mxu0 0.0
    %863 = vmatprep.subr.mxu0 0.0
    %864 = vmatpush1.msra.mxu0 0.0
    %865 = vmatprep.subr.mxu0 0.0
    %866 = vmatpush1.msra.mxu0 0.0
    %867 = vmatprep.subr.mxu0 0.0
    %868 = vmatpush1.msra.mxu0 0.0
    %869 = vmatprep.subr.mxu0 0.0
    %870 = vmatpush1.msra.mxu0 0.0
    %871 = vmatprep.subr.mxu0 0.0
    %872 = vmatpush1.msra.mxu0 0.0
    %873 = vmatprep.subr.mxu0 0.0
    %874 = vmatpush1.msra.mxu0 0.0
    %875 = vmatprep.subr.mxu0 0.0
    %876 = vmatpush1.msra.mxu0 0.0
    %877 = vmatprep.subr.mxu0 0.0
    %878 = vmatpush1.msra.mxu0 0.0
    %879 = vmatprep.subr.mxu0 0.0
    %880 = vmatpush1.msra.mxu0 0.0
    %881 = vmatprep.subr.mxu0 0.0
    %882 = vmatpush1.msra.mxu0 0.0
    %883 = vmatprep.subr.mxu0 0.0
    %884 = vmatpush1.msra.mxu0 0.0
    %885 = vmatprep.subr.mxu0 0.0
    %886 = vmatpush1.msra.mxu0 0.0
    %887 = vmatprep.subr.mxu0 0.0
    %888 = vmatpush1.msra.mxu0 0.0
    %889 = vmatprep.subr.mxu0 0.0
    %890 = vmatpush1.msra.mxu0 0.0
    %891 = vmatprep.subr.mxu0 0.0
    %892 = vmatpush1.msra.mxu0 0.0
    %893 = vmatprep.subr.mxu0 0.0
    %894 = vmatpush1.msra.mxu0 0.0
    %895 = vmatprep.subr.mxu0 0.0
    %896 = vmatpush1.msra.mxu0 0.0
    %897 = vmatprep.subr.mxu0 0.0
    %898 = vmatpush1.msra.mxu0 0.0
    %899 = vmatprep.subr.mxu0 0.0
    %900 = vmatpush1.msra.mxu0 0.0
    %901 = vmatprep.subr.mxu0 0.0
    %902 = vmatpush1.msra.mxu0 0.0
    %903 = vmatprep.subr.mxu0 0.0
    %904 = vmatpush1.msra.mxu0 0.0
    %905 = vmatprep.subr.mxu0 0.0
    %906 = vmatpush1.msra.mxu0 0.0
    %907 = vmatprep.mubr.f32.mxu0 0.0
    %908 = vmatmul.mubr.f32.gmra.mrb[0].mxu0 %v415
    %v909 = vpop.f32.mrb[0].mxu0
    %v910 = vadd.f32 0.0, %v909
    %v911 = vpop.f32.mrb[0].mxu0
    %912 = vmatprep.mubr.f32.mxu0 0.0
    %913 = vmatmul.mubr.f32.gmra.mrb[0].mxu0 %v418
    %v914 = vpop.f32.mrb[0].mxu0
    %v915 = vadd.f32 0.0, %v914
    %v916 = vpop.f32.mrb[0].mxu0
    %917 = vdwg.mxu0
    %v918 = vadd.f32 %v833, %v910
    %v919 = vadd.f32 %v834, %v915
    %920 = vmatprep.subr.mxu0 0.0
    %921 = vmatpush1.msra.mxu0 %v53
    %922 = vmatprep.subr.mxu0 0.0
    %923 = vmatpush1.msra.mxu0 %v54
    %924 = vmatprep.subr.mxu0 0.0
    %925 = vmatpush1.msra.mxu0 %v55
    %926 = vmatprep.subr.mxu0 0.0
    %927 = vmatpush1.msra.mxu0 %v66
    %928 = vmatprep.subr.mxu0 0.0
    %929 = vmatpush1.msra.mxu0 0.0
    %930 = vmatprep.subr.mxu0 0.0
    %931 = vmatpush1.msra.mxu0 0.0
    %932 = vmatprep.subr.mxu0 0.0
    %933 = vmatpush1.msra.mxu0 0.0
    %934 = vmatprep.subr.mxu0 0.0
    %935 = vmatpush1.msra.mxu0 0.0
    %936 = vmatprep.subr.mxu0 0.0
    %937 = vmatpush1.msra.mxu0 0.0
    %938 = vmatprep.subr.mxu0 0.0
    %939 = vmatpush1.msra.mxu0 0.0
    %940 = vmatprep.subr.mxu0 0.0
    %941 = vmatpush1.msra.mxu0 0.0
    %942 = vmatprep.subr.mxu0 0.0
    %943 = vmatpush1.msra.mxu0 0.0
    %944 = vmatprep.subr.mxu0 0.0
    %945 = vmatpush1.msra.mxu0 0.0
    %946 = vmatprep.subr.mxu0 0.0
    %947 = vmatpush1.msra.mxu0 0.0
    %948 = vmatprep.subr.mxu0 0.0
    %949 = vmatpush1.msra.mxu0 0.0
    %950 = vmatprep.subr.mxu0 0.0
    %951 = vmatpush1.msra.mxu0 0.0
    %952 = vmatprep.subr.mxu0 0.0
    %953 = vmatpush1.msra.mxu0 0.0
    %954 = vmatprep.subr.mxu0 0.0
    %955 = vmatpush1.msra.mxu0 0.0
    %956 = vmatprep.subr.mxu0 0.0
    %957 = vmatpush1.msra.mxu0 0.0
    %958 = vmatprep.subr.mxu0 0.0
    %959 = vmatpush1.msra.mxu0 0.0
    %960 = vmatprep.subr.mxu0 0.0
    %961 = vmatpush1.msra.mxu0 0.0
    %962 = vmatprep.subr.mxu0 0.0
    %963 = vmatpush1.msra.mxu0 0.0
    %964 = vmatprep.subr.mxu0 0.0
    %965 = vmatpush1.msra.mxu0 0.0
    %966 = vmatprep.subr.mxu0 0.0
    %967 = vmatpush1.msra.mxu0 0.0
    %968 = vmatprep.subr.mxu0 0.0
    %969 = vmatpush1.msra.mxu0 0.0
    %970 = vmatprep.subr.mxu0 0.0
    %971 = vmatpush1.msra.mxu0 0.0
    %972 = vmatprep.subr.mxu0 0.0
    %973 = vmatpush1.msra.mxu0 0.0
    %974 = vmatprep.subr.mxu0 0.0
    %975 = vmatpush1.msra.mxu0 0.0
    %976 = vmatprep.subr.mxu0 0.0
    %977 = vmatpush1.msra.mxu0 0.0
    %978 = vmatprep.subr.mxu0 0.0
    %979 = vmatpush1.msra.mxu0 0.0
    %980 = vmatprep.subr.mxu0 0.0
    %981 = vmatpush1.msra.mxu0 0.0
    %982 = vmatprep.subr.mxu0 0.0
    %983 = vmatpush1.msra.mxu0 0.0
    %984 = vmatprep.mubr.f32.mxu0 0.0
    %985 = vmatmul.mubr.f32.gmra.mrb[0].mxu0 %v233
    %v986 = vpop.f32.mrb[0].mxu0
    %v987 = vadd.f32 0.0, %v986
    %v988 = vpop.f32.mrb[0].mxu0
    %989 = vmatprep.mubr.f32.mxu0 0.0
    %990 = vmatmul.mubr.f32.gmra.mrb[0].mxu0 %v236
    %v991 = vpop.f32.mrb[0].mxu0
    %v992 = vadd.f32 0.0, %v991
    %v993 = vpop.f32.mrb[0].mxu0
    %994 = vdwg.mxu0
    %995 = vmatprep.subr.mxu0 0.0
    %996 = vmatpush1.msra.mxu0 %v48
    %997 = vmatprep.subr.mxu0 0.0
    %998 = vmatpush1.msra.mxu0 %v49
    %999 = vmatprep.subr.mxu0 0.0
    %1000 = vmatpush1.msra.mxu0 %v50
    %1001 = vmatprep.subr.mxu0 0.0
    %1002 = vmatpush1.msra.mxu0 %v150
    %1003 = vmatprep.subr.mxu0 0.0
    %1004 = vmatpush1.msra.mxu0 0.0
    %1005 = vmatprep.subr.mxu0 0.0
    %1006 = vmatpush1.msra.mxu0 0.0
    %1007 = vmatprep.subr.mxu0 0.0
    %1008 = vmatpush1.msra.mxu0 0.0
    %1009 = vmatprep.subr.mxu0 0.0
    %1010 = vmatpush1.msra.mxu0 0.0
    %1011 = vmatprep.subr.mxu0 0.0
    %1012 = vmatpush1.msra.mxu0 0.0
    %1013 = vmatprep.subr.mxu0 0.0
    %1014 = vmatpush1.msra.mxu0 0.0
    %1015 = vmatprep.subr.mxu0 0.0
    %1016 = vmatpush1.msra.mxu0 0.0
    %1017 = vmatprep.subr.mxu0 0.0
    %1018 = vmatpush1.msra.mxu0 0.0
    %1019 = vmatprep.subr.mxu0 0.0
    %1020 = vmatpush1.msra.mxu0 0.0
    %1021 = vmatprep.subr.mxu0 0.0
    %1022 = vmatpush1.msra.mxu0 0.0
    %1023 = vmatprep.subr.mxu0 0.0
    %1024 = vmatpush1.msra.mxu0 0.0
    %1025 = vmatprep.subr.mxu0 0.0
    %1026 = vmatpush1.msra.mxu0 0.0
    %1027 = vmatprep.subr.mxu0 0.0
    %1028 = vmatpush1.msra.mxu0 0.0
    %1029 = vmatprep.subr.mxu0 0.0
    %1030 = vmatpush1.msra.mxu0 0.0
    %1031 = vmatprep.subr.mxu0 0.0
    %1032 = vmatpush1.msra.mxu0 0.0
    %1033 = vmatprep.subr.mxu0 0.0
    %1034 = vmatpush1.msra.mxu0 0.0
    %1035 = vmatprep.subr.mxu0 0.0
    %1036 = vmatpush1.msra.mxu0 0.0
    %1037 = vmatprep.subr.mxu0 0.0
    %1038 = vmatpush1.msra.mxu0 0.0
    %1039 = vmatprep.subr.mxu0 0.0
    %1040 = vmatpush1.msra.mxu0 0.0
    %1041 = vmatprep.subr.mxu0 0.0
    %1042 = vmatpush1.msra.mxu0 0.0
    %1043 = vmatprep.subr.mxu0 0.0
    %1044 = vmatpush1.msra.mxu0 0.0
    %1045 = vmatprep.subr.mxu0 0.0
    %1046 = vmatpush1.msra.mxu0 0.0
    %1047 = vmatprep.subr.mxu0 0.0
    %1048 = vmatpush1.msra.mxu0 0.0
    %1049 = vmatprep.subr.mxu0 0.0
    %1050 = vmatpush1.msra.mxu0 0.0
    %1051 = vmatprep.subr.mxu0 0.0
    %1052 = vmatpush1.msra.mxu0 0.0
    %1053 = vmatprep.subr.mxu0 0.0
    %1054 = vmatpush1.msra.mxu0 0.0
    %1055 = vmatprep.subr.mxu0 0.0
    %1056 = vmatpush1.msra.mxu0 0.0
    %1057 = vmatprep.subr.mxu0 0.0
    %1058 = vmatpush1.msra.mxu0 0.0
    %1059 = vmatprep.mubr.f32.mxu0 0.0
    %1060 = vmatmul.mubr.f32.gmra.mrb[0].mxu0 %v59
    %v1061 = vpop.f32.mrb[0].mxu0
    %v1062 = vadd.f32 %v987, %v1061
    %v1063 = vpop.f32.mrb[0].mxu0
    %1064 = vmatprep.mubr.f32.mxu0 0.0
    %1065 = vmatmul.mubr.f32.gmra.mrb[0].mxu0 %v62
    %v1066 = vpop.f32.mrb[0].mxu0
    %v1067 = vadd.f32 %v992, %v1066
    %v1068 = vpop.f32.mrb[0].mxu0
    %1069 = vdwg.mxu0
    %1070 = vmatprep.subr.mxu0 0.0
    %1071 = vmatpush1.msra.mxu0 %v228
    %1072 = vmatprep.subr.mxu0 0.0
    %1073 = vmatpush1.msra.mxu0 %v229
    %1074 = vmatprep.subr.mxu0 0.0
    %1075 = vmatpush1.msra.mxu0 %v230
    %1076 = vmatprep.subr.mxu0 0.0
    %1077 = vmatpush1.msra.mxu0 %v239
    %1078 = vmatprep.subr.mxu0 0.0
    %1079 = vmatpush1.msra.mxu0 0.0
    %1080 = vmatprep.subr.mxu0 0.0
    %1081 = vmatpush1.msra.mxu0 0.0
    %1082 = vmatprep.subr.mxu0 0.0
    %1083 = vmatpush1.msra.mxu0 0.0
    %1084 = vmatprep.subr.mxu0 0.0
    %1085 = vmatpush1.msra.mxu0 0.0
    %1086 = vmatprep.subr.mxu0 0.0
    %1087 = vmatpush1.msra.mxu0 0.0
    %1088 = vmatprep.subr.mxu0 0.0
    %1089 = vmatpush1.msra.mxu0 0.0
    %1090 = vmatprep.subr.mxu0 0.0
    %1091 = vmatpush1.msra.mxu0 0.0
    %1092 = vmatprep.subr.mxu0 0.0
    %1093 = vmatpush1.msra.mxu0 0.0
    %1094 = vmatprep.subr.mxu0 0.0
    %1095 = vmatpush1.msra.mxu0 0.0
    %1096 = vmatprep.subr.mxu0 0.0
    %1097 = vmatpush1.msra.mxu0 0.0
    %1098 = vmatprep.subr.mxu0 0.0
    %1099 = vmatpush1.msra.mxu0 0.0
    %1100 = vmatprep.subr.mxu0 0.0
    %1101 = vmatpush1.msra.mxu0 0.0
    %1102 = vmatprep.subr.mxu0 0.0
    %1103 = vmatpush1.msra.mxu0 0.0
    %1104 = vmatprep.subr.mxu0 0.0
    %1105 = vmatpush1.msra.mxu0 0.0
    %1106 = vmatprep.subr.mxu0 0.0
    %1107 = vmatpush1.msra.mxu0 0.0
    %1108 = vmatprep.subr.mxu0 0.0
    %1109 = vmatpush1.msra.mxu0 0.0
    %1110 = vmatprep.subr.mxu0 0.0
    %1111 = vmatpush1.msra.mxu0 0.0
    %1112 = vmatprep.subr.mxu0 0.0
    %1113 = vmatpush1.msra.mxu0 0.0
    %1114 = vmatprep.subr.mxu0 0.0
    %1115 = vmatpush1.msra.mxu0 0.0
    %1116 = vmatprep.subr.mxu0 0.0
    %1117 = vmatpush1.msra.mxu0 0.0
    %1118 = vmatprep.subr.mxu0 0.0
    %1119 = vmatpush1.msra.mxu0 0.0
    %1120 = vmatprep.subr.mxu0 0.0
    %1121 = vmatpush1.msra.mxu0 0.0
    %1122 = vmatprep.subr.mxu0 0.0
    %1123 = vmatpush1.msra.mxu0 0.0
    %1124 = vmatprep.subr.mxu0 0.0
    %1125 = vmatpush1.msra.mxu0 0.0
    %1126 = vmatprep.subr.mxu0 0.0
    %1127 = vmatpush1.msra.mxu0 0.0
    %1128 = vmatprep.subr.mxu0 0.0
    %1129 = vmatpush1.msra.mxu0 0.0
    %1130 = vmatprep.subr.mxu0 0.0
    %1131 = vmatpush1.msra.mxu0 0.0
    %1132 = vmatprep.subr.mxu0 0.0
    %1133 = vmatpush1.msra.mxu0 0.0
    %1134 = vmatprep.mubr.f32.mxu0 0.0
    %1135 = vmatmul.mubr.f32.gmra.mrb[0].mxu0 %v324
    %v1136 = vpop.f32.mrb[0].mxu0
    %v1137 = vadd.f32 0.0, %v1136
    %v1138 = vpop.f32.mrb[0].mxu0
    %1139 = vmatprep.mubr.f32.mxu0 0.0
    %1140 = vmatmul.mubr.f32.gmra.mrb[0].mxu0 %v327
    %v1141 = vpop.f32.mrb[0].mxu0
    %v1142 = vadd.f32 0.0, %v1141
    %v1143 = vpop.f32.mrb[0].mxu0
    %1144 = vdwg.mxu0
    %v1145 = vadd.f32 %v1062, %v1137
    %v1146 = vadd.f32 %v1067, %v1142
    %1147 = vmatprep.subr.mxu0 0.0
    %1148 = vmatpush1.msra.mxu0 %v319
    %1149 = vmatprep.subr.mxu0 0.0
    %1150 = vmatpush1.msra.mxu0 %v320
    %1151 = vmatprep.subr.mxu0 0.0
    %1152 = vmatpush1.msra.mxu0 %v321
    %1153 = vmatprep.subr.mxu0 0.0
    %1154 = vmatpush1.msra.mxu0 %v330
    %1155 = vmatprep.subr.mxu0 0.0
    %1156 = vmatpush1.msra.mxu0 0.0
    %1157 = vmatprep.subr.mxu0 0.0
    %1158 = vmatpush1.msra.mxu0 0.0
    %1159 = vmatprep.subr.mxu0 0.0
    %1160 = vmatpush1.msra.mxu0 0.0
    %1161 = vmatprep.subr.mxu0 0.0
    %1162 = vmatpush1.msra.mxu0 0.0
    %1163 = vmatprep.subr.mxu0 0.0
    %1164 = vmatpush1.msra.mxu0 0.0
    %1165 = vmatprep.subr.mxu0 0.0
    %1166 = vmatpush1.msra.mxu0 0.0
    %1167 = vmatprep.subr.mxu0 0.0
    %1168 = vmatpush1.msra.mxu0 0.0
    %1169 = vmatprep.subr.mxu0 0.0
    %1170 = vmatpush1.msra.mxu0 0.0
    %1171 = vmatprep.subr.mxu0 0.0
    %1172 = vmatpush1.msra.mxu0 0.0
    %1173 = vmatprep.subr.mxu0 0.0
    %1174 = vmatpush1.msra.mxu0 0.0
    %1175 = vmatprep.subr.mxu0 0.0
    %1176 = vmatpush1.msra.mxu0 0.0
    %1177 = vmatprep.subr.mxu0 0.0
    %1178 = vmatpush1.msra.mxu0 0.0
    %1179 = vmatprep.subr.mxu0 0.0
    %1180 = vmatpush1.msra.mxu0 0.0
    %1181 = vmatprep.subr.mxu0 0.0
    %1182 = vmatpush1.msra.mxu0 0.0
    %1183 = vmatprep.subr.mxu0 0.0
    %1184 = vmatpush1.msra.mxu0 0.0
    %1185 = vmatprep.subr.mxu0 0.0
    %1186 = vmatpush1.msra.mxu0 0.0
    %1187 = vmatprep.subr.mxu0 0.0
    %1188 = vmatpush1.msra.mxu0 0.0
    %1189 = vmatprep.subr.mxu0 0.0
    %1190 = vmatpush1.msra.mxu0 0.0
    %1191 = vmatprep.subr.mxu0 0.0
    %1192 = vmatpush1.msra.mxu0 0.0
    %1193 = vmatprep.subr.mxu0 0.0
    %1194 = vmatpush1.msra.mxu0 0.0
    %1195 = vmatprep.subr.mxu0 0.0
    %1196 = vmatpush1.msra.mxu0 0.0
    %1197 = vmatprep.subr.mxu0 0.0
    %1198 = vmatpush1.msra.mxu0 0.0
    %1199 = vmatprep.subr.mxu0 0.0
    %1200 = vmatpush1.msra.mxu0 0.0
    %1201 = vmatprep.subr.mxu0 0.0
    %1202 = vmatpush1.msra.mxu0 0.0
    %1203 = vmatprep.subr.mxu0 0.0
    %1204 = vmatpush1.msra.mxu0 0.0
    %1205 = vmatprep.subr.mxu0 0.0
    %1206 = vmatpush1.msra.mxu0 0.0
    %1207 = vmatprep.subr.mxu0 0.0
    %1208 = vmatpush1.msra.mxu0 0.0
    %1209 = vmatprep.subr.mxu0 0.0
    %1210 = vmatpush1.msra.mxu0 0.0
    %1211 = vmatprep.mubr.f32.mxu0 0.0
    %1212 = vmatmul.mubr.f32.gmra.mrb[0].mxu0 %v415
    %v1213 = vpop.f32.mrb[0].mxu0
    %v1214 = vadd.f32 0.0, %v1213
    %v1215 = vpop.f32.mrb[0].mxu0
    %1216 = vmatprep.mubr.f32.mxu0 0.0
    %1217 = vmatmul.mubr.f32.gmra.mrb[0].mxu0 %v418
    %v1218 = vpop.f32.mrb[0].mxu0
    %v1219 = vadd.f32 0.0, %v1218
    %v1220 = vpop.f32.mrb[0].mxu0
    %1221 = vdwg.mxu0
    %v1222 = vadd.f32 %v1145, %v1214
    %v1223 = vadd.f32 %v1146, %v1219
    %v1225 = vsel %vm57, %v46, 0
    %v1228 = vsel %vm57, %v47, 0
    %1230 = vmatprep.subr.mxu0 0.0
    %1231 = vmatpush1.msra.mxu0 %v410
    %1232 = vmatprep.subr.mxu0 0.0
    %1233 = vmatpush1.msra.mxu0 %v411
    %1234 = vmatprep.subr.mxu0 0.0
    %1235 = vmatpush1.msra.mxu0 %v412
    %1236 = vmatprep.subr.mxu0 0.0
    %1237 = vmatpush1.msra.mxu0 %v421
    %1238 = vmatprep.subr.mxu0 0.0
    %1239 = vmatpush1.msra.mxu0 0.0
    %1240 = vmatprep.subr.mxu0 0.0
    %1241 = vmatpush1.msra.mxu0 0.0
    %1242 = vmatprep.subr.mxu0 0.0
    %1243 = vmatpush1.msra.mxu0 0.0
    %1244 = vmatprep.subr.mxu0 0.0
    %1245 = vmatpush1.msra.mxu0 0.0
    %1246 = vmatprep.subr.mxu0 0.0
    %1247 = vmatpush1.msra.mxu0 0.0
    %1248 = vmatprep.subr.mxu0 0.0
    %1249 = vmatpush1.msra.mxu0 0.0
    %1250 = vmatprep.subr.mxu0 0.0
    %1251 = vmatpush1.msra.mxu0 0.0
    %1252 = vmatprep.subr.mxu0 0.0
    %1253 = vmatpush1.msra.mxu0 0.0
    %1254 = vmatprep.subr.mxu0 0.0
    %1255 = vmatpush1.msra.mxu0 0.0
    %1256 = vmatprep.subr.mxu0 0.0
    %1257 = vmatpush1.msra.mxu0 0.0
    %1258 = vmatprep.subr.mxu0 0.0
    %1259 = vmatpush1.msra.mxu0 0.0
    %1260 = vmatprep.subr.mxu0 0.0
    %1261 = vmatpush1.msra.mxu0 0.0
    %1262 = vmatprep.subr.mxu0 0.0
    %1263 = vmatpush1.msra.mxu0 0.0
    %1264 = vmatprep.subr.mxu0 0.0
    %1265 = vmatpush1.msra.mxu0 0.0
    %1266 = vmatprep.subr.mxu0 0.0
    %1267 = vmatpush1.msra.mxu0 0.0
    %1268 = vmatprep.subr.mxu0 0.0
    %1269 = vmatpush1.msra.mxu0 0.0
    %1270 = vmatprep.subr.mxu0 0.0
    %1271 = vmatpush1.msra.mxu0 0.0
    %1272 = vmatprep.subr.mxu0 0.0
    %1273 = vmatpush1.msra.mxu0 0.0
    %1274 = vmatprep.subr.mxu0 0.0
    %1275 = vmatpush1.msra.mxu0 0.0
    %1276 = vmatprep.subr.mxu0 0.0
    %1277 = vmatpush1.msra.mxu0 0.0
    %1278 = vmatprep.subr.mxu0 0.0
    %1279 = vmatpush1.msra.mxu0 0.0
    %1280 = vmatprep.subr.mxu0 0.0
    %1281 = vmatpush1.msra.mxu0 0.0
    %1282 = vmatprep.subr.mxu0 0.0
    %1283 = vmatpush1.msra.mxu0 0.0
    %1284 = vmatprep.subr.mxu0 0.0
    %1285 = vmatpush1.msra.mxu0 0.0
    %1286 = vmatprep.subr.mxu0 0.0
    %1287 = vmatpush1.msra.mxu0 0.0
    %1288 = vmatprep.subr.mxu0 0.0
    %1289 = vmatpush1.msra.mxu0 0.0
    %1290 = vmatprep.subr.mxu0 0.0
    %1291 = vmatpush1.msra.mxu0 0.0
    %1292 = vmatprep.subr.mxu0 0.0
    %1293 = vmatpush1.msra.mxu0 0.0
    %1294 = vmatprep.mubr.f32.mxu0 0.0
    %1295 = vmatmul.mubr.f32.gmra.mrb[0].mxu0 %v1225
    %v1296 = vpop.f32.mrb[0].mxu0
    %v1297 = vadd.f32 0.0, %v1296
    %v1298 = vpop.f32.mrb[0].mxu0
    %1299 = vmatprep.mubr.f32.mxu0 0.0
    %1300 = vmatmul.mubr.f32.gmra.mrb[0].mxu0 %v1228
    %v1301 = vpop.f32.mrb[0].mxu0
    %v1302 = vadd.f32 0.0, %v1301
    %v1303 = vpop.f32.mrb[0].mxu0
    %1304 = vdwg.mxu0
    %v1305 = vadd.f32 %v1222, %v1297
    %v1306 = vadd.f32 %v1223, %v1302
    %1307 = vmatprep.subr.mxu0 0.0
    %1308 = vmatpush1.msra.mxu0 %v505
    %1309 = vmatprep.subr.mxu0 0.0
    %1310 = vmatpush1.msra.mxu0 %v506
    %1311 = vmatprep.subr.mxu0 0.0
    %1312 = vmatpush1.msra.mxu0 %v507
    %1313 = vmatprep.subr.mxu0 0.0
    %1314 = vmatpush1.msra.mxu0 %v510
    %1315 = vmatprep.subr.mxu0 0.0
    %1316 = vmatpush1.msra.mxu0 0.0
    %1317 = vmatprep.subr.mxu0 0.0
    %1318 = vmatpush1.msra.mxu0 0.0
    %1319 = vmatprep.subr.mxu0 0.0
    %1320 = vmatpush1.msra.mxu0 0.0
    %1321 = vmatprep.subr.mxu0 0.0
    %1322 = vmatpush1.msra.mxu0 0.0
    %1323 = vmatprep.subr.mxu0 0.0
    %1324 = vmatpush1.msra.mxu0 0.0
    %1325 = vmatprep.subr.mxu0 0.0
    %1326 = vmatpush1.msra.mxu0 0.0
    %1327 = vmatprep.subr.mxu0 0.0
    %1328 = vmatpush1.msra.mxu0 0.0
    %1329 = vmatprep.subr.mxu0 0.0
    %1330 = vmatpush1.msra.mxu0 0.0
    %1331 = vmatprep.subr.mxu0 0.0
    %1332 = vmatpush1.msra.mxu0 0.0
    %1333 = vmatprep.subr.mxu0 0.0
    %1334 = vmatpush1.msra.mxu0 0.0
    %1335 = vmatprep.subr.mxu0 0.0
    %1336 = vmatpush1.msra.mxu0 0.0
    %1337 = vmatprep.subr.mxu0 0.0
    %1338 = vmatpush1.msra.mxu0 0.0
    %1339 = vmatprep.subr.mxu0 0.0
    %1340 = vmatpush1.msra.mxu0 0.0
    %1341 = vmatprep.subr.mxu0 0.0
    %1342 = vmatpush1.msra.mxu0 0.0
    %1343 = vmatprep.subr.mxu0 0.0
    %1344 = vmatpush1.msra.mxu0 0.0
    %1345 = vmatprep.subr.mxu0 0.0
    %1346 = vmatpush1.msra.mxu0 0.0
    %1347 = vmatprep.subr.mxu0 0.0
    %1348 = vmatpush1.msra.mxu0 0.0
    %1349 = vmatprep.subr.mxu0 0.0
    %1350 = vmatpush1.msra.mxu0 0.0
    %1351 = vmatprep.subr.mxu0 0.0
    %1352 = vmatpush1.msra.mxu0 0.0
    %1353 = vmatprep.subr.mxu0 0.0
    %1354 = vmatpush1.msra.mxu0 0.0
    %1355 = vmatprep.subr.mxu0 0.0
    %1356 = vmatpush1.msra.mxu0 0.0
    %1357 = vmatprep.subr.mxu0 0.0
    %1358 = vmatpush1.msra.mxu0 0.0
    %1359 = vmatprep.subr.mxu0 0.0
    %1360 = vmatpush1.msra.mxu0 0.0
    %1361 = vmatprep.subr.mxu0 0.0
    %1362 = vmatpush1.msra.mxu0 0.0
    %1363 = vmatprep.subr.mxu0 0.0
    %1364 = vmatpush1.msra.mxu0 0.0
    %1365 = vmatprep.subr.mxu0 0.0
    %1366 = vmatpush1.msra.mxu0 0.0
    %1367 = vmatprep.subr.mxu0 0.0
    %1368 = vmatpush1.msra.mxu0 0.0
    %1369 = vmatprep.subr.mxu0 0.0
    %1370 = vmatpush1.msra.mxu0 0.0
    %1371 = vmatprep.mubr.f32.mxu0 0.0
    %1372 = vmatmul.mubr.f32.gmra.mrb[0].mxu0 %v233
    %v1373 = vpop.f32.mrb[0].mxu0
    %v1374 = vadd.f32 0.0, %v1373
    %v1375 = vpop.f32.mrb[0].mxu0
    %1376 = vmatprep.mubr.f32.mxu0 0.0
    %1377 = vmatmul.mubr.f32.gmra.mrb[0].mxu0 %v236
    %v1378 = vpop.f32.mrb[0].mxu0
    %v1379 = vadd.f32 0.0, %v1378
    %v1380 = vpop.f32.mrb[0].mxu0
    %1381 = vdwg.mxu0
    %1382 = vmatprep.subr.mxu0 0.0
    %1383 = vmatpush1.msra.mxu0 %v500
    %1384 = vmatprep.subr.mxu0 0.0
    %1385 = vmatpush1.msra.mxu0 %v501
    %1386 = vmatprep.subr.mxu0 0.0
    %1387 = vmatpush1.msra.mxu0 %v502
    %1388 = vmatprep.subr.mxu0 0.0
    %1389 = vmatpush1.msra.mxu0 %v588
    %1390 = vmatprep.subr.mxu0 0.0
    %1391 = vmatpush1.msra.mxu0 0.0
    %1392 = vmatprep.subr.mxu0 0.0
    %1393 = vmatpush1.msra.mxu0 0.0
    %1394 = vmatprep.subr.mxu0 0.0
    %1395 = vmatpush1.msra.mxu0 0.0
    %1396 = vmatprep.subr.mxu0 0.0
    %1397 = vmatpush1.msra.mxu0 0.0
    %1398 = vmatprep.subr.mxu0 0.0
    %1399 = vmatpush1.msra.mxu0 0.0
    %1400 = vmatprep.subr.mxu0 0.0
    %1401 = vmatpush1.msra.mxu0 0.0
    %1402 = vmatprep.subr.mxu0 0.0
    %1403 = vmatpush1.msra.mxu0 0.0
    %1404 = vmatprep.subr.mxu0 0.0
    %1405 = vmatpush1.msra.mxu0 0.0
    %1406 = vmatprep.subr.mxu0 0.0
    %1407 = vmatpush1.msra.mxu0 0.0
    %1408 = vmatprep.subr.mxu0 0.0
    %1409 = vmatpush1.msra.mxu0 0.0
    %1410 = vmatprep.subr.mxu0 0.0
    %1411 = vmatpush1.msra.mxu0 0.0
    %1412 = vmatprep.subr.mxu0 0.0
    %1413 = vmatpush1.msra.mxu0 0.0
    %1414 = vmatprep.subr.mxu0 0.0
    %1415 = vmatpush1.msra.mxu0 0.0
    %1416 = vmatprep.subr.mxu0 0.0
    %1417 = vmatpush1.msra.mxu0 0.0
    %1418 = vmatprep.subr.mxu0 0.0
    %1419 = vmatpush1.msra.mxu0 0.0
    %1420 = vmatprep.subr.mxu0 0.0
    %1421 = vmatpush1.msra.mxu0 0.0
    %1422 = vmatprep.subr.mxu0 0.0
    %1423 = vmatpush1.msra.mxu0 0.0
    %1424 = vmatprep.subr.mxu0 0.0
    %1425 = vmatpush1.msra.mxu0 0.0
    %1426 = vmatprep.subr.mxu0 0.0
    %1427 = vmatpush1.msra.mxu0 0.0
    %1428 = vmatprep.subr.mxu0 0.0
    %1429 = vmatpush1.msra.mxu0 0.0
    %1430 = vmatprep.subr.mxu0 0.0
    %1431 = vmatpush1.msra.mxu0 0.0
    %1432 = vmatprep.subr.mxu0 0.0
    %1433 = vmatpush1.msra.mxu0 0.0
    %1434 = vmatprep.subr.mxu0 0.0
    %1435 = vmatpush1.msra.mxu0 0.0
    %1436 = vmatprep.subr.mxu0 0.0
    %1437 = vmatpush1.msra.mxu0 0.0
    %1438 = vmatprep.subr.mxu0 0.0
    %1439 = vmatpush1.msra.mxu0 0.0
    %1440 = vmatprep.subr.mxu0 0.0
    %1441 = vmatpush1.msra.mxu0 0.0
    %1442 = vmatprep.subr.mxu0 0.0
    %1443 = vmatpush1.msra.mxu0 0.0
    %1444 = vmatprep.subr.mxu0 0.0
    %1445 = vmatpush1.msra.mxu0 0.0
    %1446 = vmatprep.mubr.f32.mxu0 0.0
    %1447 = vmatmul.mubr.f32.gmra.mrb[0].mxu0 %v59
    %v1448 = vpop.f32.mrb[0].mxu0
    %v1449 = vadd.f32 %v1374, %v1448
    %v1450 = vpop.f32.mrb[0].mxu0
    %1451 = vmatprep.mubr.f32.mxu0 0.0
    %1452 = vmatmul.mubr.f32.gmra.mrb[0].mxu0 %v62
    %v1453 = vpop.f32.mrb[0].mxu0
    %v1454 = vadd.f32 %v1379, %v1453
    %v1455 = vpop.f32.mrb[0].mxu0
    %1456 = vdwg.mxu0
    %1457 = vmatprep.subr.mxu0 0.0
    %1458 = vmatpush1.msra.mxu0 %v666
    %1459 = vmatprep.subr.mxu0 0.0
    %1460 = vmatpush1.msra.mxu0 %v667
    %1461 = vmatprep.subr.mxu0 0.0
    %1462 = vmatpush1.msra.mxu0 %v668
    %1463 = vmatprep.subr.mxu0 0.0
    %1464 = vmatpush1.msra.mxu0 %v671
    %1465 = vmatprep.subr.mxu0 0.0
    %1466 = vmatpush1.msra.mxu0 0.0
    %1467 = vmatprep.subr.mxu0 0.0
    %1468 = vmatpush1.msra.mxu0 0.0
    %1469 = vmatprep.subr.mxu0 0.0
    %1470 = vmatpush1.msra.mxu0 0.0
    %1471 = vmatprep.subr.mxu0 0.0
    %1472 = vmatpush1.msra.mxu0 0.0
    %1473 = vmatprep.subr.mxu0 0.0
    %1474 = vmatpush1.msra.mxu0 0.0
    %1475 = vmatprep.subr.mxu0 0.0
    %1476 = vmatpush1.msra.mxu0 0.0
    %1477 = vmatprep.subr.mxu0 0.0
    %1478 = vmatpush1.msra.mxu0 0.0
    %1479 = vmatprep.subr.mxu0 0.0
    %1480 = vmatpush1.msra.mxu0 0.0
    %1481 = vmatprep.subr.mxu0 0.0
    %1482 = vmatpush1.msra.mxu0 0.0
    %1483 = vmatprep.subr.mxu0 0.0
    %1484 = vmatpush1.msra.mxu0 0.0
    %1485 = vmatprep.subr.mxu0 0.0
    %1486 = vmatpush1.msra.mxu0 0.0
    %1487 = vmatprep.subr.mxu0 0.0
    %1488 = vmatpush1.msra.mxu0 0.0
    %1489 = vmatprep.subr.mxu0 0.0
    %1490 = vmatpush1.msra.mxu0 0.0
    %1491 = vmatprep.subr.mxu0 0.0
    %1492 = vmatpush1.msra.mxu0 0.0
    %1493 = vmatprep.subr.mxu0 0.0
    %1494 = vmatpush1.msra.mxu0 0.0
    %1495 = vmatprep.subr.mxu0 0.0
    %1496 = vmatpush1.msra.mxu0 0.0
    %1497 = vmatprep.subr.mxu0 0.0
    %1498 = vmatpush1.msra.mxu0 0.0
    %1499 = vmatprep.subr.mxu0 0.0
    %1500 = vmatpush1.msra.mxu0 0.0
    %1501 = vmatprep.subr.mxu0 0.0
    %1502 = vmatpush1.msra.mxu0 0.0
    %1503 = vmatprep.subr.mxu0 0.0
    %1504 = vmatpush1.msra.mxu0 0.0
    %1505 = vmatprep.subr.mxu0 0.0
    %1506 = vmatpush1.msra.mxu0 0.0
    %1507 = vmatprep.subr.mxu0 0.0
    %1508 = vmatpush1.msra.mxu0 0.0
    %1509 = vmatprep.subr.mxu0 0.0
    %1510 = vmatpush1.msra.mxu0 0.0
    %1511 = vmatprep.subr.mxu0 0.0
    %1512 = vmatpush1.msra.mxu0 0.0
    %1513 = vmatprep.subr.mxu0 0.0
    %1514 = vmatpush1.msra.mxu0 0.0
    %1515 = vmatprep.subr.mxu0 0.0
    %1516 = vmatpush1.msra.mxu0 0.0
    %1517 = vmatprep.subr.mxu0 0.0
    %1518 = vmatpush1.msra.mxu0 0.0
    %1519 = vmatprep.subr.mxu0 0.0
    %1520 = vmatpush1.msra.mxu0 0.0
    %1521 = vmatprep.mubr.f32.mxu0 0.0
    %1522 = vmatmul.mubr.f32.gmra.mrb[0].mxu0 %v324
    %v1523 = vpop.f32.mrb[0].mxu0
    %v1524 = vadd.f32 0.0, %v1523
    %v1525 = vpop.f32.mrb[0].mxu0
    %1526 = vmatprep.mubr.f32.mxu0 0.0
    %1527 = vmatmul.mubr.f32.gmra.mrb[0].mxu0 %v327
    %v1528 = vpop.f32.mrb[0].mxu0
    %v1529 = vadd.f32 0.0, %v1528
    %v1530 = vpop.f32.mrb[0].mxu0
    %1531 = vdwg.mxu0
    %v1532 = vadd.f32 %v1449, %v1524
    %v1533 = vadd.f32 %v1454, %v1529
    %1534 = vmatprep.subr.mxu0 0.0
    %1535 = vmatpush1.msra.mxu0 %v751
    %1536 = vmatprep.subr.mxu0 0.0
    %1537 = vmatpush1.msra.mxu0 %v752
    %1538 = vmatprep.subr.mxu0 0.0
    %1539 = vmatpush1.msra.mxu0 %v753
    %1540 = vmatprep.subr.mxu0 0.0
    %1541 = vmatpush1.msra.mxu0 %v756
    %1542 = vmatprep.subr.mxu0 0.0
    %1543 = vmatpush1.msra.mxu0 0.0
    %1544 = vmatprep.subr.mxu0 0.0
    %1545 = vmatpush1.msra.mxu0 0.0
    %1546 = vmatprep.subr.mxu0 0.0
    %1547 = vmatpush1.msra.mxu0 0.0
    %1548 = vmatprep.subr.mxu0 0.0
    %1549 = vmatpush1.msra.mxu0 0.0
    %1550 = vmatprep.subr.mxu0 0.0
    %1551 = vmatpush1.msra.mxu0 0.0
    %1552 = vmatprep.subr.mxu0 0.0
    %1553 = vmatpush1.msra.mxu0 0.0
    %1554 = vmatprep.subr.mxu0 0.0
    %1555 = vmatpush1.msra.mxu0 0.0
    %1556 = vmatprep.subr.mxu0 0.0
    %1557 = vmatpush1.msra.mxu0 0.0
    %1558 = vmatprep.subr.mxu0 0.0
    %1559 = vmatpush1.msra.mxu0 0.0
    %1560 = vmatprep.subr.mxu0 0.0
    %1561 = vmatpush1.msra.mxu0 0.0
    %1562 = vmatprep.subr.mxu0 0.0
    %1563 = vmatpush1.msra.mxu0 0.0
    %1564 = vmatprep.subr.mxu0 0.0
    %1565 = vmatpush1.msra.mxu0 0.0
    %1566 = vmatprep.subr.mxu0 0.0
    %1567 = vmatpush1.msra.mxu0 0.0
    %1568 = vmatprep.subr.mxu0 0.0
    %1569 = vmatpush1.msra.mxu0 0.0
    %1570 = vmatprep.subr.mxu0 0.0
    %1571 = vmatpush1.msra.mxu0 0.0
    %1572 = vmatprep.subr.mxu0 0.0
    %1573 = vmatpush1.msra.mxu0 0.0
    %1574 = vmatprep.subr.mxu0 0.0
    %1575 = vmatpush1.msra.mxu0 0.0
    %1576 = vmatprep.subr.mxu0 0.0
    %1577 = vmatpush1.msra.mxu0 0.0
    %1578 = vmatprep.subr.mxu0 0.0
    %1579 = vmatpush1.msra.mxu0 0.0
    %1580 = vmatprep.subr.mxu0 0.0
    %1581 = vmatpush1.msra.mxu0 0.0
    %1582 = vmatprep.subr.mxu0 0.0
    %1583 = vmatpush1.msra.mxu0 0.0
    %1584 = vmatprep.subr.mxu0 0.0
    %1585 = vmatpush1.msra.mxu0 0.0
    %1586 = vmatprep.subr.mxu0 0.0
    %1587 = vmatpush1.msra.mxu0 0.0
    %1588 = vmatprep.subr.mxu0 0.0
    %1589 = vmatpush1.msra.mxu0 0.0
    %1590 = vmatprep.subr.mxu0 0.0
    %1591 = vmatpush1.msra.mxu0 0.0
    %1592 = vmatprep.subr.mxu0 0.0
    %1593 = vmatpush1.msra.mxu0 0.0
    %1594 = vmatprep.subr.mxu0 0.0
    %1595 = vmatpush1.msra.mxu0 0.0
    %1596 = vmatprep.subr.mxu0 0.0
    %1597 = vmatpush1.msra.mxu0 0.0
    %1598 = vmatprep.mubr.f32.mxu0 0.0
    %1599 = vmatmul.mubr.f32.gmra.mrb[0].mxu0 %v415
    %v1600 = vpop.f32.mrb[0].mxu0
    %v1601 = vadd.f32 0.0, %v1600
    %v1602 = vpop.f32.mrb[0].mxu0
    %1603 = vmatprep.mubr.f32.mxu0 0.0
    %1604 = vmatmul.mubr.f32.gmra.mrb[0].mxu0 %v418
    %v1605 = vpop.f32.mrb[0].mxu0
    %v1606 = vadd.f32 0.0, %v1605
    %v1607 = vpop.f32.mrb[0].mxu0
    %1608 = vdwg.mxu0
    %v1609 = vadd.f32 %v1532, %v1601
    %v1610 = vadd.f32 %v1533, %v1606
    %1611 = vmatprep.subr.mxu0 0.0
    %1612 = vmatpush1.msra.mxu0 %v836
    %1613 = vmatprep.subr.mxu0 0.0
    %1614 = vmatpush1.msra.mxu0 %v837
    %1615 = vmatprep.subr.mxu0 0.0
    %1616 = vmatpush1.msra.mxu0 %v838
    %1617 = vmatprep.subr.mxu0 0.0
    %1618 = vmatpush1.msra.mxu0 %v841
    %1619 = vmatprep.subr.mxu0 0.0
    %1620 = vmatpush1.msra.mxu0 0.0
    %1621 = vmatprep.subr.mxu0 0.0
    %1622 = vmatpush1.msra.mxu0 0.0
    %1623 = vmatprep.subr.mxu0 0.0
    %1624 = vmatpush1.msra.mxu0 0.0
    %1625 = vmatprep.subr.mxu0 0.0
    %1626 = vmatpush1.msra.mxu0 0.0
    %1627 = vmatprep.subr.mxu0 0.0
    %1628 = vmatpush1.msra.mxu0 0.0
    %1629 = vmatprep.subr.mxu0 0.0
    %1630 = vmatpush1.msra.mxu0 0.0
    %1631 = vmatprep.subr.mxu0 0.0
    %1632 = vmatpush1.msra.mxu0 0.0
    %1633 = vmatprep.subr.mxu0 0.0
    %1634 = vmatpush1.msra.mxu0 0.0
    %1635 = vmatprep.subr.mxu0 0.0
    %1636 = vmatpush1.msra.mxu0 0.0
    %1637 = vmatprep.subr.mxu0 0.0
    %1638 = vmatpush1.msra.mxu0 0.0
    %1639 = vmatprep.subr.mxu0 0.0
    %1640 = vmatpush1.msra.mxu0 0.0
    %1641 = vmatprep.subr.mxu0 0.0
    %1642 = vmatpush1.msra.mxu0 0.0
    %1643 = vmatprep.subr.mxu0 0.0
    %1644 = vmatpush1.msra.mxu0 0.0
    %1645 = vmatprep.subr.mxu0 0.0
    %1646 = vmatpush1.msra.mxu0 0.0
    %1647 = vmatprep.subr.mxu0 0.0
    %1648 = vmatpush1.msra.mxu0 0.0
    %1649 = vmatprep.subr.mxu0 0.0
    %1650 = vmatpush1.msra.mxu0 0.0
    %1651 = vmatprep.subr.mxu0 0.0
    %1652 = vmatpush1.msra.mxu0 0.0
    %1653 = vmatprep.subr.mxu0 0.0
    %1654 = vmatpush1.msra.mxu0 0.0
    %1655 = vmatprep.subr.mxu0 0.0
    %1656 = vmatpush1.msra.mxu0 0.0
    %1657 = vmatprep.subr.mxu0 0.0
    %1658 = vmatpush1.msra.mxu0 0.0
    %1659 = vmatprep.subr.mxu0 0.0
    %1660 = vmatpush1.msra.mxu0 0.0
    %1661 = vmatprep.subr.mxu0 0.0
    %1662 = vmatpush1.msra.mxu0 0.0
    %1663 = vmatprep.subr.mxu0 0.0
    %1664 = vmatpush1.msra.mxu0 0.0
    %1665 = vmatprep.subr.mxu0 0.0
    %1666 = vmatpush1.msra.mxu0 0.0
    %1667 = vmatprep.subr.mxu0 0.0
    %1668 = vmatpush1.msra.mxu0 0.0
    %1669 = vmatprep.subr.mxu0 0.0
    %1670 = vmatpush1.msra.mxu0 0.0
    %1671 = vmatprep.subr.mxu0 0.0
    %1672 = vmatpush1.msra.mxu0 0.0
    %1673 = vmatprep.subr.mxu0 0.0
    %1674 = vmatpush1.msra.mxu0 0.0
    %1675 = vmatprep.mubr.f32.mxu0 0.0
    %1676 = vmatmul.mubr.f32.gmra.mrb[0].mxu0 %v1225
    %v1677 = vpop.f32.mrb[0].mxu0
    %v1678 = vadd.f32 0.0, %v1677
    %v1679 = vpop.f32.mrb[0].mxu0
    %1680 = vmatprep.mubr.f32.mxu0 0.0
    %1681 = vmatmul.mubr.f32.gmra.mrb[0].mxu0 %v1228
    %v1682 = vpop.f32.mrb[0].mxu0
    %v1683 = vadd.f32 0.0, %v1682
    %v1684 = vpop.f32.mrb[0].mxu0
    %1685 = vdwg.mxu0
    %v1686 = vadd.f32 %v1609, %v1678
    %v1687 = vadd.f32 %v1610, %v1683
    %v1688 = vmax.f32 %v498, %v918
    %v1689 = vmax.f32 %v499, %v919
    %v1690 = vmax.f32 %v1305, %v1686
    %v1691 = vmax.f32 %v1306, %v1687
    %v1692 = vmax.f32 %v1688, %v1690
    %v1693 = vmax.f32 %v1689, %v1691
    %v1694 = vld [vmem:[%s4] sm:$0x1]
    %v1696 = vlaneseq
    %v1697 = vshrl.u32 %v1696, 7
    %v1698 = vsub.s32 0, %v1697
    %v1699 = vrot.slane %v1694, %v1698
    %v1701 = vadd.f32 %v1692, %v1699
    %v1702 = vadd.f32 %v1693, %v1699
    %v1703 = vmax.f32 %v1701, 0.0
    %v1704 = vmax.f32 %v1702, 0.0
    %v1705 = vld [vmem:[%s5] sm:$0xff]
    %v1706 = vld [vmem:[%s5 + $0x8] sm:$0xff]
    %v1707 = vld [vmem:[%s5 + $0x10] sm:$0xff]
    %v1708 = vld [vmem:[%s5 + $0x18] sm:$0xff]
    %v1709 = vld [vmem:[%s5 + $0x20] sm:$0xff]
    %v1710 = vld [vmem:[%s5 + $0x28] sm:$0xff]
    %v1711 = vld [vmem:[%s5 + $0x30] sm:$0xff]
    %v1712 = vld [vmem:[%s5 + $0x38] sm:$0xff]
    %v1713 = vld [vmem:[%s5 + $0x40] sm:$0xff]
    %v1714 = vld [vmem:[%s5 + $0x48] sm:$0xff]
    %v1715 = vld [vmem:[%s5 + $0x50] sm:$0xff]
    %v1716 = vld [vmem:[%s5 + $0x58] sm:$0xff]
    %v1717 = vld [vmem:[%s5 + $0x60] sm:$0xff]
    %v1718 = vld [vmem:[%s5 + $0x68] sm:$0xff]
    %v1719 = vld [vmem:[%s5 + $0x70] sm:$0xff]
    %s1720 = scalar_lea.vmem %s5, 120
    %v1721 = vld [vmem:[%s1720] sm:$0xff]
    %v1722 = vld [vmem:[%s1720 + $0x8] sm:$0xff]
    %v1723 = vld [vmem:[%s1720 + $0x10] sm:$0xff]
    %v1724 = vld [vmem:[%s1720 + $0x18] sm:$0xff]
    %v1725 = vld [vmem:[%s1720 + $0x20] sm:$0xff]
    %v1726 = vld [vmem:[%s1720 + $0x28] sm:$0xff]
    %v1727 = vld [vmem:[%s1720 + $0x30] sm:$0xff]
    %v1728 = vld [vmem:[%s1720 + $0x38] sm:$0xff]
    %v1729 = vld [vmem:[%s1720 + $0x40] sm:$0xff]
    %v1730 = vld [vmem:[%s1720 + $0x48] sm:$0xff]
    %v1731 = vld [vmem:[%s1720 + $0x50] sm:$0xff]
    %v1732 = vld [vmem:[%s1720 + $0x58] sm:$0xff]
    %v1733 = vld [vmem:[%s1720 + $0x60] sm:$0xff]
    %v1734 = vld [vmem:[%s1720 + $0x68] sm:$0xff]
    %v1735 = vld [vmem:[%s1720 + $0x70] sm:$0xff]
    %vm1738 = vcmask 1046528
    %v1739 = vrot.slane %v1703, 1
    %v1740 = vrot.slane %v1704, 1
    %v1741 = vsel %vm1738, %v1739, %v1740
    %vm1742 = vcmask 982016
    %v1743 = vsel %vm1742, %v1741, 0
    %1745 = vmatprep.subr.mxu0 0.0
    %1746 = vmatpush1.msra.mxu0 %v1721
    %1747 = vmatprep.subr.mxu0 0.0
    %1748 = vmatpush1.msra.mxu0 %v1722
    %1749 = vmatprep.subr.mxu0 0.0
    %1750 = vmatpush1.msra.mxu0 %v1723
    %1751 = vmatprep.subr.mxu0 0.0
    %1752 = vmatpush1.msra.mxu0 %v1724
    %1753 = vmatprep.subr.mxu0 0.0
    %1754 = vmatpush1.msra.mxu0 %v1725
    %1755 = vmatprep.subr.mxu0 0.0
    %1756 = vmatpush1.msra.mxu0 %v1726
    %1757 = vmatprep.subr.mxu0 0.0
    %1758 = vmatpush1.msra.mxu0 %v1727
    %1759 = vmatprep.subr.mxu0 0.0
    %1760 = vmatpush1.msra.mxu0 %v1728
    %1761 = vmatprep.subr.mxu0 0.0
    %1762 = vmatpush1.msra.mxu0 %v1729
    %1763 = vmatprep.subr.mxu0 0.0
    %1764 = vmatpush1.msra.mxu0 %v1730
    %1765 = vmatprep.subr.mxu0 0.0
    %1766 = vmatpush1.msra.mxu0 %v1731
    %1767 = vmatprep.subr.mxu0 0.0
    %1768 = vmatpush1.msra.mxu0 %v1732
    %1769 = vmatprep.subr.mxu0 0.0
    %1770 = vmatpush1.msra.mxu0 %v1733
    %1771 = vmatprep.subr.mxu0 0.0
    %1772 = vmatpush1.msra.mxu0 %v1734
    %1773 = vmatprep.subr.mxu0 0.0
    %1774 = vmatpush1.msra.mxu0 %v1735
    %1775 = vmatprep.subr.mxu0 0.0
    %1776 = vmatpush1.msra.mxu0 0.0
    %1777 = vmatprep.subr.mxu0 0.0
    %1778 = vmatpush1.msra.mxu0 0.0
    %1779 = vmatprep.subr.mxu0 0.0
    %1780 = vmatpush1.msra.mxu0 0.0
    %1781 = vmatprep.subr.mxu0 0.0
    %1782 = vmatpush1.msra.mxu0 0.0
    %1783 = vmatprep.subr.mxu0 0.0
    %1784 = vmatpush1.msra.mxu0 0.0
    %1785 = vmatprep.subr.mxu0 0.0
    %1786 = vmatpush1.msra.mxu0 0.0
    %1787 = vmatprep.subr.mxu0 0.0
    %1788 = vmatpush1.msra.mxu0 0.0
    %1789 = vmatprep.subr.mxu0 0.0
    %1790 = vmatpush1.msra.mxu0 0.0
    %1791 = vmatprep.subr.mxu0 0.0
    %1792 = vmatpush1.msra.mxu0 0.0
    %1793 = vmatprep.subr.mxu0 0.0
    %1794 = vmatpush1.msra.mxu0 0.0
    %1795 = vmatprep.subr.mxu0 0.0
    %1796 = vmatpush1.msra.mxu0 0.0
    %1797 = vmatprep.subr.mxu0 0.0
    %1798 = vmatpush1.msra.mxu0 0.0
    %1799 = vmatprep.subr.mxu0 0.0
    %1800 = vmatpush1.msra.mxu0 0.0
    %1801 = vmatprep.subr.mxu0 0.0
    %1802 = vmatpush1.msra.mxu0 0.0
    %1803 = vmatprep.subr.mxu0 0.0
    %1804 = vmatpush1.msra.mxu0 0.0
    %1805 = vmatprep.subr.mxu0 0.0
    %1806 = vmatpush1.msra.mxu0 0.0
    %1807 = vmatprep.subr.mxu0 0.0
    %1808 = vmatpush1.msra.mxu0 0.0
    %1809 = vmatprep.mubr.f32.mxu0 0.0
    %1810 = vmatmul.mubr.f32.gmra.mrb[0].mxu0 %v1743
    %v1811 = vpop.f32.mrb[0].mxu0
    %v1812 = vadd.f32 0.0, %v1811
    %v1813 = vpop.f32.mrb[0].mxu0
    %1814 = vdwg.mxu0
    %v1815 = vsel %vm1742, %v1703, 0
    %1817 = vmatprep.subr.mxu0 0.0
    %1818 = vmatpush1.msra.mxu0 %v1705
    %1819 = vmatprep.subr.mxu0 0.0
    %1820 = vmatpush1.msra.mxu0 %v1706
    %1821 = vmatprep.subr.mxu0 0.0
    %1822 = vmatpush1.msra.mxu0 %v1707
    %1823 = vmatprep.subr.mxu0 0.0
    %1824 = vmatpush1.msra.mxu0 %v1708
    %1825 = vmatprep.subr.mxu0 0.0
    %1826 = vmatpush1.msra.mxu0 %v1709
    %1827 = vmatprep.subr.mxu0 0.0
    %1828 = vmatpush1.msra.mxu0 %v1710
    %1829 = vmatprep.subr.mxu0 0.0
    %1830 = vmatpush1.msra.mxu0 %v1711
    %1831 = vmatprep.subr.mxu0 0.0
    %1832 = vmatpush1.msra.mxu0 %v1712
    %1833 = vmatprep.subr.mxu0 0.0
    %1834 = vmatpush1.msra.mxu0 %v1713
    %1835 = vmatprep.subr.mxu0 0.0
    %1836 = vmatpush1.msra.mxu0 %v1714
    %1837 = vmatprep.subr.mxu0 0.0
    %1838 = vmatpush1.msra.mxu0 %v1715
    %1839 = vmatprep.subr.mxu0 0.0
    %1840 = vmatpush1.msra.mxu0 %v1716
    %1841 = vmatprep.subr.mxu0 0.0
    %1842 = vmatpush1.msra.mxu0 %v1717
    %1843 = vmatprep.subr.mxu0 0.0
    %1844 = vmatpush1.msra.mxu0 %v1718
    %1845 = vmatprep.subr.mxu0 0.0
    %1846 = vmatpush1.msra.mxu0 %v1719
    %1847 = vmatprep.subr.mxu0 0.0
    %1848 = vmatpush1.msra.mxu0 0.0
    %1849 = vmatprep.subr.mxu0 0.0
    %1850 = vmatpush1.msra.mxu0 0.0
    %1851 = vmatprep.subr.mxu0 0.0
    %1852 = vmatpush1.msra.mxu0 0.0
    %1853 = vmatprep.subr.mxu0 0.0
    %1854 = vmatpush1.msra.mxu0 0.0
    %1855 = vmatprep.subr.mxu0 0.0
    %1856 = vmatpush1.msra.mxu0 0.0
    %1857 = vmatprep.subr.mxu0 0.0
    %1858 = vmatpush1.msra.mxu0 0.0
    %1859 = vmatprep.subr.mxu0 0.0
    %1860 = vmatpush1.msra.mxu0 0.0
    %1861 = vmatprep.subr.mxu0 0.0
    %1862 = vmatpush1.msra.mxu0 0.0
    %1863 = vmatprep.subr.mxu0 0.0
    %1864 = vmatpush1.msra.mxu0 0.0
    %1865 = vmatprep.subr.mxu0 0.0
    %1866 = vmatpush1.msra.mxu0 0.0
    %1867 = vmatprep.subr.mxu0 0.0
    %1868 = vmatpush1.msra.mxu0 0.0
    %1869 = vmatprep.subr.mxu0 0.0
    %1870 = vmatpush1.msra.mxu0 0.0
    %1871 = vmatprep.subr.mxu0 0.0
    %1872 = vmatpush1.msra.mxu0 0.0
    %1873 = vmatprep.subr.mxu0 0.0
    %1874 = vmatpush1.msra.mxu0 0.0
    %1875 = vmatprep.subr.mxu0 0.0
    %1876 = vmatpush1.msra.mxu0 0.0
    %1877 = vmatprep.subr.mxu0 0.0
    %1878 = vmatpush1.msra.mxu0 0.0
    %1879 = vmatprep.subr.mxu0 0.0
    %1880 = vmatpush1.msra.mxu0 0.0
    %1881 = vmatprep.mubr.f32.mxu0 0.0
    %1882 = vmatmul.mubr.f32.gmra.mrb[0].mxu0 %v1815
    %v1883 = vpop.f32.mrb[0].mxu0
    %v1884 = vadd.f32 %v1812, %v1883
    %v1885 = vpop.f32.mrb[0].mxu0
    %1886 = vdwg.mxu0
    %s1887 = scalar_lea.vmem %s5, 240
    %v1888 = vld [vmem:[%s1887] sm:$0xff]
    %v1889 = vld [vmem:[%s1887 + $0x8] sm:$0xff]
    %v1890 = vld [vmem:[%s1887 + $0x10] sm:$0xff]
    %v1891 = vld [vmem:[%s1887 + $0x18] sm:$0xff]
    %v1892 = vld [vmem:[%s1887 + $0x20] sm:$0xff]
    %v1893 = vld [vmem:[%s1887 + $0x28] sm:$0xff]
    %v1894 = vld [vmem:[%s1887 + $0x30] sm:$0xff]
    %v1895 = vld [vmem:[%s1887 + $0x38] sm:$0xff]
    %v1896 = vld [vmem:[%s1887 + $0x40] sm:$0xff]
    %v1897 = vld [vmem:[%s1887 + $0x48] sm:$0xff]
    %v1898 = vld [vmem:[%s1887 + $0x50] sm:$0xff]
    %v1899 = vld [vmem:[%s1887 + $0x58] sm:$0xff]
    %v1900 = vld [vmem:[%s1887 + $0x60] sm:$0xff]
    %v1901 = vld [vmem:[%s1887 + $0x68] sm:$0xff]
    %v1902 = vld [vmem:[%s1887 + $0x70] sm:$0xff]
    %vm1903 = vcmask 1045504
    %v1904 = vrot.slane %v1703, 2
    %v1905 = vrot.slane %v1704, 2
    %v1906 = vsel %vm1903, %v1904, %v1905
    %v1907 = vsel %vm1742, %v1906, 0
    %1909 = vmatprep.subr.mxu0 0.0
    %1910 = vmatpush1.msra.mxu0 %v1888
    %1911 = vmatprep.subr.mxu0 0.0
    %1912 = vmatpush1.msra.mxu0 %v1889
    %1913 = vmatprep.subr.mxu0 0.0
    %1914 = vmatpush1.msra.mxu0 %v1890
    %1915 = vmatprep.subr.mxu0 0.0
    %1916 = vmatpush1.msra.mxu0 %v1891
    %1917 = vmatprep.subr.mxu0 0.0
    %1918 = vmatpush1.msra.mxu0 %v1892
    %1919 = vmatprep.subr.mxu0 0.0
    %1920 = vmatpush1.msra.mxu0 %v1893
    %1921 = vmatprep.subr.mxu0 0.0
    %1922 = vmatpush1.msra.mxu0 %v1894
    %1923 = vmatprep.subr.mxu0 0.0
    %1924 = vmatpush1.msra.mxu0 %v1895
    %1925 = vmatprep.subr.mxu0 0.0
    %1926 = vmatpush1.msra.mxu0 %v1896
    %1927 = vmatprep.subr.mxu0 0.0
    %1928 = vmatpush1.msra.mxu0 %v1897
    %1929 = vmatprep.subr.mxu0 0.0
    %1930 = vmatpush1.msra.mxu0 %v1898
    %1931 = vmatprep.subr.mxu0 0.0
    %1932 = vmatpush1.msra.mxu0 %v1899
    %1933 = vmatprep.subr.mxu0 0.0
    %1934 = vmatpush1.msra.mxu0 %v1900
    %1935 = vmatprep.subr.mxu0 0.0
    %1936 = vmatpush1.msra.mxu0 %v1901
    %1937 = vmatprep.subr.mxu0 0.0
    %1938 = vmatpush1.msra.mxu0 %v1902
    %1939 = vmatprep.subr.mxu0 0.0
    %1940 = vmatpush1.msra.mxu0 0.0
    %1941 = vmatprep.subr.mxu0 0.0
    %1942 = vmatpush1.msra.mxu0 0.0
    %1943 = vmatprep.subr.mxu0 0.0
    %1944 = vmatpush1.msra.mxu0 0.0
    %1945 = vmatprep.subr.mxu0 0.0
    %1946 = vmatpush1.msra.mxu0 0.0
    %1947 = vmatprep.subr.mxu0 0.0
    %1948 = vmatpush1.msra.mxu0 0.0
    %1949 = vmatprep.subr.mxu0 0.0
    %1950 = vmatpush1.msra.mxu0 0.0
    %1951 = vmatprep.subr.mxu0 0.0
    %1952 = vmatpush1.msra.mxu0 0.0
    %1953 = vmatprep.subr.mxu0 0.0
    %1954 = vmatpush1.msra.mxu0 0.0
    %1955 = vmatprep.subr.mxu0 0.0
    %1956 = vmatpush1.msra.mxu0 0.0
    %1957 = vmatprep.subr.mxu0 0.0
    %1958 = vmatpush1.msra.mxu0 0.0
    %1959 = vmatprep.subr.mxu0 0.0
    %1960 = vmatpush1.msra.mxu0 0.0
    %1961 = vmatprep.subr.mxu0 0.0
    %1962 = vmatpush1.msra.mxu0 0.0
    %1963 = vmatprep.subr.mxu0 0.0
    %1964 = vmatpush1.msra.mxu0 0.0
    %1965 = vmatprep.subr.mxu0 0.0
    %1966 = vmatpush1.msra.mxu0 0.0
    %1967 = vmatprep.subr.mxu0 0.0
    %1968 = vmatpush1.msra.mxu0 0.0
    %1969 = vmatprep.subr.mxu0 0.0
    %1970 = vmatpush1.msra.mxu0 0.0
    %1971 = vmatprep.subr.mxu0 0.0
    %1972 = vmatpush1.msra.mxu0 0.0
    %1973 = vmatprep.mubr.f32.mxu0 0.0
    %1974 = vmatmul.mubr.f32.gmra.mrb[0].mxu0 %v1907
    %v1975 = vpop.f32.mrb[0].mxu0
    %v1976 = vadd.f32 0.0, %v1975
    %v1977 = vpop.f32.mrb[0].mxu0
    %1978 = vdwg.mxu0
    %v1979 = vadd.f32 %v1884, %v1976
    %s1980 = scalar_lea.vmem %s5, 360
    %v1981 = vld [vmem:[%s1980] sm:$0xff]
    %v1982 = vld [vmem:[%s1980 + $0x8] sm:$0xff]
    %v1983 = vld [vmem:[%s1980 + $0x10] sm:$0xff]
    %v1984 = vld [vmem:[%s1980 + $0x18] sm:$0xff]
    %v1985 = vld [vmem:[%s1980 + $0x20] sm:$0xff]
    %v1986 = vld [vmem:[%s1980 + $0x28] sm:$0xff]
    %v1987 = vld [vmem:[%s1980 + $0x30] sm:$0xff]
    %v1988 = vld [vmem:[%s1980 + $0x38] sm:$0xff]
    %v1989 = vld [vmem:[%s1980 + $0x40] sm:$0xff]
    %v1990 = vld [vmem:[%s1980 + $0x48] sm:$0xff]
    %v1991 = vld [vmem:[%s1980 + $0x50] sm:$0xff]
    %v1992 = vld [vmem:[%s1980 + $0x58] sm:$0xff]
    %v1993 = vld [vmem:[%s1980 + $0x60] sm:$0xff]
    %v1994 = vld [vmem:[%s1980 + $0x68] sm:$0xff]
    %v1995 = vld [vmem:[%s1980 + $0x70] sm:$0xff]
    %vm1996 = vcmask 1044480
    %v1997 = vrot.slane %v1703, 3
    %v1998 = vrot.slane %v1704, 3
    %v1999 = vsel %vm1996, %v1997, %v1998
    %v2000 = vsel %vm1742, %v1999, 0
    %2002 = vmatprep.subr.mxu0 0.0
    %2003 = vmatpush1.msra.mxu0 %v1981
    %2004 = vmatprep.subr.mxu0 0.0
    %2005 = vmatpush1.msra.mxu0 %v1982
    %2006 = vmatprep.subr.mxu0 0.0
    %2007 = vmatpush1.msra.mxu0 %v1983
    %2008 = vmatprep.subr.mxu0 0.0
    %2009 = vmatpush1.msra.mxu0 %v1984
    %2010 = vmatprep.subr.mxu0 0.0
    %2011 = vmatpush1.msra.mxu0 %v1985
    %2012 = vmatprep.subr.mxu0 0.0
    %2013 = vmatpush1.msra.mxu0 %v1986
    %2014 = vmatprep.subr.mxu0 0.0
    %2015 = vmatpush1.msra.mxu0 %v1987
    %2016 = vmatprep.subr.mxu0 0.0
    %2017 = vmatpush1.msra.mxu0 %v1988
    %2018 = vmatprep.subr.mxu0 0.0
    %2019 = vmatpush1.msra.mxu0 %v1989
    %2020 = vmatprep.subr.mxu0 0.0
    %2021 = vmatpush1.msra.mxu0 %v1990
    %2022 = vmatprep.subr.mxu0 0.0
    %2023 = vmatpush1.msra.mxu0 %v1991
    %2024 = vmatprep.subr.mxu0 0.0
    %2025 = vmatpush1.msra.mxu0 %v1992
    %2026 = vmatprep.subr.mxu0 0.0
    %2027 = vmatpush1.msra.mxu0 %v1993
    %2028 = vmatprep.subr.mxu0 0.0
    %2029 = vmatpush1.msra.mxu0 %v1994
    %2030 = vmatprep.subr.mxu0 0.0
    %2031 = vmatpush1.msra.mxu0 %v1995
    %2032 = vmatprep.subr.mxu0 0.0
    %2033 = vmatpush1.msra.mxu0 0.0
    %2034 = vmatprep.subr.mxu0 0.0
    %2035 = vmatpush1.msra.mxu0 0.0
    %2036 = vmatprep.subr.mxu0 0.0
    %2037 = vmatpush1.msra.mxu0 0.0
    %2038 = vmatprep.subr.mxu0 0.0
    %2039 = vmatpush1.msra.mxu0 0.0
    %2040 = vmatprep.subr.mxu0 0.0
    %2041 = vmatpush1.msra.mxu0 0.0
    %2042 = vmatprep.subr.mxu0 0.0
    %2043 = vmatpush1.msra.mxu0 0.0
    %2044 = vmatprep.subr.mxu0 0.0
    %2045 = vmatpush1.msra.mxu0 0.0
    %2046 = vmatprep.subr.mxu0 0.0
    %2047 = vmatpush1.msra.mxu0 0.0
    %2048 = vmatprep.subr.mxu0 0.0
    %2049 = vmatpush1.msra.mxu0 0.0
    %2050 = vmatprep.subr.mxu0 0.0
    %2051 = vmatpush1.msra.mxu0 0.0
    %2052 = vmatprep.subr.mxu0 0.0
    %2053 = vmatpush1.msra.mxu0 0.0
    %2054 = vmatprep.subr.mxu0 0.0
    %2055 = vmatpush1.msra.mxu0 0.0
    %2056 = vmatprep.subr.mxu0 0.0
    %2057 = vmatpush1.msra.mxu0 0.0
    %2058 = vmatprep.subr.mxu0 0.0
    %2059 = vmatpush1.msra.mxu0 0.0
    %2060 = vmatprep.subr.mxu0 0.0
    %2061 = vmatpush1.msra.mxu0 0.0
    %2062 = vmatprep.subr.mxu0 0.0
    %2063 = vmatpush1.msra.mxu0 0.0
    %2064 = vmatprep.subr.mxu0 0.0
    %2065 = vmatpush1.msra.mxu0 0.0
    %2066 = vmatprep.mubr.f32.mxu0 0.0
    %2067 = vmatmul.mubr.f32.gmra.mrb[0].mxu0 %v2000
    %v2068 = vpop.f32.mrb[0].mxu0
    %v2069 = vadd.f32 0.0, %v2068
    %v2070 = vpop.f32.mrb[0].mxu0
    %2071 = vdwg.mxu0
    %v2072 = vadd.f32 %v1979, %v2069
    %s2073 = scalar_lea.vmem %s5, 480
    %v2074 = vld [vmem:[%s2073] sm:$0xff]
    %v2075 = vld [vmem:[%s2073 + $0x8] sm:$0xff]
    %v2076 = vld [vmem:[%s2073 + $0x10] sm:$0xff]
    %v2077 = vld [vmem:[%s2073 + $0x18] sm:$0xff]
    %v2078 = vld [vmem:[%s2073 + $0x20] sm:$0xff]
    %v2079 = vld [vmem:[%s2073 + $0x28] sm:$0xff]
    %v2080 = vld [vmem:[%s2073 + $0x30] sm:$0xff]
    %v2081 = vld [vmem:[%s2073 + $0x38] sm:$0xff]
    %v2082 = vld [vmem:[%s2073 + $0x40] sm:$0xff]
    %v2083 = vld [vmem:[%s2073 + $0x48] sm:$0xff]
    %v2084 = vld [vmem:[%s2073 + $0x50] sm:$0xff]
    %v2085 = vld [vmem:[%s2073 + $0x58] sm:$0xff]
    %v2086 = vld [vmem:[%s2073 + $0x60] sm:$0xff]
    %v2087 = vld [vmem:[%s2073 + $0x68] sm:$0xff]
    %v2088 = vld [vmem:[%s2073 + $0x70] sm:$0xff]
    %v2089 = vrot.slane %v1703, 4
    %v2090 = vrot.slane %v1704, 4
    %v2091 = vsel %vm64, %v2089, %v2090
    %v2092 = vsel %vm1742, %v2091, 0
    %2094 = vmatprep.subr.mxu0 0.0
    %2095 = vmatpush1.msra.mxu0 %v2074
    %2096 = vmatprep.subr.mxu0 0.0
    %2097 = vmatpush1.msra.mxu0 %v2075
    %2098 = vmatprep.subr.mxu0 0.0
    %2099 = vmatpush1.msra.mxu0 %v2076
    %2100 = vmatprep.subr.mxu0 0.0
    %2101 = vmatpush1.msra.mxu0 %v2077
    %2102 = vmatprep.subr.mxu0 0.0
    %2103 = vmatpush1.msra.mxu0 %v2078
    %2104 = vmatprep.subr.mxu0 0.0
    %2105 = vmatpush1.msra.mxu0 %v2079
    %2106 = vmatprep.subr.mxu0 0.0
    %2107 = vmatpush1.msra.mxu0 %v2080
    %2108 = vmatprep.subr.mxu0 0.0
    %2109 = vmatpush1.msra.mxu0 %v2081
    %2110 = vmatprep.subr.mxu0 0.0
    %2111 = vmatpush1.msra.mxu0 %v2082
    %2112 = vmatprep.subr.mxu0 0.0
    %2113 = vmatpush1.msra.mxu0 %v2083
    %2114 = vmatprep.subr.mxu0 0.0
    %2115 = vmatpush1.msra.mxu0 %v2084
    %2116 = vmatprep.subr.mxu0 0.0
    %2117 = vmatpush1.msra.mxu0 %v2085
    %2118 = vmatprep.subr.mxu0 0.0
    %2119 = vmatpush1.msra.mxu0 %v2086
    %2120 = vmatprep.subr.mxu0 0.0
    %2121 = vmatpush1.msra.mxu0 %v2087
    %2122 = vmatprep.subr.mxu0 0.0
    %2123 = vmatpush1.msra.mxu0 %v2088
    %2124 = vmatprep.subr.mxu0 0.0
    %2125 = vmatpush1.msra.mxu0 0.0
    %2126 = vmatprep.subr.mxu0 0.0
    %2127 = vmatpush1.msra.mxu0 0.0
    %2128 = vmatprep.subr.mxu0 0.0
    %2129 = vmatpush1.msra.mxu0 0.0
    %2130 = vmatprep.subr.mxu0 0.0
    %2131 = vmatpush1.msra.mxu0 0.0
    %2132 = vmatprep.subr.mxu0 0.0
    %2133 = vmatpush1.msra.mxu0 0.0
    %2134 = vmatprep.subr.mxu0 0.0
    %2135 = vmatpush1.msra.mxu0 0.0
    %2136 = vmatprep.subr.mxu0 0.0
    %2137 = vmatpush1.msra.mxu0 0.0
    %2138 = vmatprep.subr.mxu0 0.0
    %2139 = vmatpush1.msra.mxu0 0.0
    %2140 = vmatprep.subr.mxu0 0.0
    %2141 = vmatpush1.msra.mxu0 0.0
    %2142 = vmatprep.subr.mxu0 0.0
    %2143 = vmatpush1.msra.mxu0 0.0
    %2144 = vmatprep.subr.mxu0 0.0
    %2145 = vmatpush1.msra.mxu0 0.0
    %2146 = vmatprep.subr.mxu0 0.0
    %2147 = vmatpush1.msra.mxu0 0.0
    %2148 = vmatprep.subr.mxu0 0.0
    %2149 = vmatpush1.msra.mxu0 0.0
    %2150 = vmatprep.subr.mxu0 0.0
    %2151 = vmatpush1.msra.mxu0 0.0
    %2152 = vmatprep.subr.mxu0 0.0
    %2153 = vmatpush1.msra.mxu0 0.0
    %2154 = vmatprep.subr.mxu0 0.0
    %2155 = vmatpush1.msra.mxu0 0.0
    %2156 = vmatprep.subr.mxu0 0.0
    %2157 = vmatpush1.msra.mxu0 0.0
    %2158 = vmatprep.mubr.f32.mxu0 0.0
    %2159 = vmatmul.mubr.f32.gmra.mrb[0].mxu0 %v2092
    %v2160 = vpop.f32.mrb[0].mxu0
    %v2161 = vadd.f32 0.0, %v2160
    %v2162 = vpop.f32.mrb[0].mxu0
    %2163 = vdwg.mxu0
    %v2164 = vadd.f32 %v2072, %v2161
    %v2165 = vld [vmem:[%s6] sm:$0xff]
    %v2166 = vld [vmem:[%s6 + $0x8] sm:$0xff]
    %v2167 = vld [vmem:[%s6 + $0x10] sm:$0xff]
    %v2168 = vld [vmem:[%s6 + $0x18] sm:$0xff]
    %v2169 = vld [vmem:[%s6 + $0x20] sm:$0xff]
    %v2170 = vld [vmem:[%s6 + $0x28] sm:$0xff]
    %v2171 = vld [vmem:[%s6 + $0x30] sm:$0xff]
    %v2172 = vld [vmem:[%s6 + $0x38] sm:$0xff]
    %v2173 = vld [vmem:[%s6 + $0x40] sm:$0xff]
    %v2174 = vld [vmem:[%s6 + $0x48] sm:$0xff]
    %v2175 = vld [vmem:[%s6 + $0x50] sm:$0xff]
    %v2176 = vld [vmem:[%s6 + $0x58] sm:$0xff]
    %v2177 = vld [vmem:[%s6 + $0x60] sm:$0xff]
    %v2178 = vld [vmem:[%s6 + $0x68] sm:$0xff]
    %v2179 = vld [vmem:[%s6 + $0x70] sm:$0xff]
    %s2180 = scalar_lea.vmem %s6, 120
    %v2181 = vld [vmem:[%s2180] sm:$0xff]
    %v2182 = vld [vmem:[%s2180 + $0x8] sm:$0xff]
    %v2183 = vld [vmem:[%s2180 + $0x10] sm:$0xff]
    %v2184 = vld [vmem:[%s2180 + $0x18] sm:$0xff]
    %v2185 = vld [vmem:[%s2180 + $0x20] sm:$0xff]
    %v2186 = vld [vmem:[%s2180 + $0x28] sm:$0xff]
    %v2187 = vld [vmem:[%s2180 + $0x30] sm:$0xff]
    %v2188 = vld [vmem:[%s2180 + $0x38] sm:$0xff]
    %v2189 = vld [vmem:[%s2180 + $0x40] sm:$0xff]
    %v2190 = vld [vmem:[%s2180 + $0x48] sm:$0xff]
    %v2191 = vld [vmem:[%s2180 + $0x50] sm:$0xff]
    %v2192 = vld [vmem:[%s2180 + $0x58] sm:$0xff]
    %v2193 = vld [vmem:[%s2180 + $0x60] sm:$0xff]
    %v2194 = vld [vmem:[%s2180 + $0x68] sm:$0xff]
    %v2195 = vld [vmem:[%s2180 + $0x70] sm:$0xff]
    %2196 = vmatprep.subr.mxu0 0.0
    %2197 = vmatpush1.msra.mxu0 %v2181
    %2198 = vmatprep.subr.mxu0 0.0
    %2199 = vmatpush1.msra.mxu0 %v2182
    %2200 = vmatprep.subr.mxu0 0.0
    %2201 = vmatpush1.msra.mxu0 %v2183
    %2202 = vmatprep.subr.mxu0 0.0
    %2203 = vmatpush1.msra.mxu0 %v2184
    %2204 = vmatprep.subr.mxu0 0.0
    %2205 = vmatpush1.msra.mxu0 %v2185
    %2206 = vmatprep.subr.mxu0 0.0
    %2207 = vmatpush1.msra.mxu0 %v2186
    %2208 = vmatprep.subr.mxu0 0.0
    %2209 = vmatpush1.msra.mxu0 %v2187
    %2210 = vmatprep.subr.mxu0 0.0
    %2211 = vmatpush1.msra.mxu0 %v2188
    %2212 = vmatprep.subr.mxu0 0.0
    %2213 = vmatpush1.msra.mxu0 %v2189
    %2214 = vmatprep.subr.mxu0 0.0
    %2215 = vmatpush1.msra.mxu0 %v2190
    %2216 = vmatprep.subr.mxu0 0.0
    %2217 = vmatpush1.msra.mxu0 %v2191
    %2218 = vmatprep.subr.mxu0 0.0
    %2219 = vmatpush1.msra.mxu0 %v2192
    %2220 = vmatprep.subr.mxu0 0.0
    %2221 = vmatpush1.msra.mxu0 %v2193
    %2222 = vmatprep.subr.mxu0 0.0
    %2223 = vmatpush1.msra.mxu0 %v2194
    %2224 = vmatprep.subr.mxu0 0.0
    %2225 = vmatpush1.msra.mxu0 %v2195
    %2226 = vmatprep.subr.mxu0 0.0
    %2227 = vmatpush1.msra.mxu0 0.0
    %2228 = vmatprep.subr.mxu0 0.0
    %2229 = vmatpush1.msra.mxu0 0.0
    %2230 = vmatprep.subr.mxu0 0.0
    %2231 = vmatpush1.msra.mxu0 0.0
    %2232 = vmatprep.subr.mxu0 0.0
    %2233 = vmatpush1.msra.mxu0 0.0
    %2234 = vmatprep.subr.mxu0 0.0
    %2235 = vmatpush1.msra.mxu0 0.0
    %2236 = vmatprep.subr.mxu0 0.0
    %2237 = vmatpush1.msra.mxu0 0.0
    %2238 = vmatprep.subr.mxu0 0.0
    %2239 = vmatpush1.msra.mxu0 0.0
    %2240 = vmatprep.subr.mxu0 0.0
    %2241 = vmatpush1.msra.mxu0 0.0
    %2242 = vmatprep.subr.mxu0 0.0
    %2243 = vmatpush1.msra.mxu0 0.0
    %2244 = vmatprep.subr.mxu0 0.0
    %2245 = vmatpush1.msra.mxu0 0.0
    %2246 = vmatprep.subr.mxu0 0.0
    %2247 = vmatpush1.msra.mxu0 0.0
    %2248 = vmatprep.subr.mxu0 0.0
    %2249 = vmatpush1.msra.mxu0 0.0
    %2250 = vmatprep.subr.mxu0 0.0
    %2251 = vmatpush1.msra.mxu0 0.0
    %2252 = vmatprep.subr.mxu0 0.0
    %2253 = vmatpush1.msra.mxu0 0.0
    %2254 = vmatprep.subr.mxu0 0.0
    %2255 = vmatpush1.msra.mxu0 0.0
    %2256 = vmatprep.subr.mxu0 0.0
    %2257 = vmatpush1.msra.mxu0 0.0
    %2258 = vmatprep.subr.mxu0 0.0
    %2259 = vmatpush1.msra.mxu0 0.0
    %2260 = vmatprep.mubr.f32.mxu0 0.0
    %2261 = vmatmul.mubr.f32.gmra.mrb[0].mxu0 %v1743
    %v2262 = vpop.f32.mrb[0].mxu0
    %v2263 = vadd.f32 0.0, %v2262
    %v2264 = vpop.f32.mrb[0].mxu0
    %2265 = vdwg.mxu0
    %2266 = vmatprep.subr.mxu0 0.0
    %2267 = vmatpush1.msra.mxu0 %v2165
    %2268 = vmatprep.subr.mxu0 0.0
    %2269 = vmatpush1.msra.mxu0 %v2166
    %2270 = vmatprep.subr.mxu0 0.0
    %2271 = vmatpush1.msra.mxu0 %v2167
    %2272 = vmatprep.subr.mxu0 0.0
    %2273 = vmatpush1.msra.mxu0 %v2168
    %2274 = vmatprep.subr.mxu0 0.0
    %2275 = vmatpush1.msra.mxu0 %v2169
    %2276 = vmatprep.subr.mxu0 0.0
    %2277 = vmatpush1.msra.mxu0 %v2170
    %2278 = vmatprep.subr.mxu0 0.0
    %2279 = vmatpush1.msra.mxu0 %v2171
    %2280 = vmatprep.subr.mxu0 0.0
    %2281 = vmatpush1.msra.mxu0 %v2172
    %2282 = vmatprep.subr.mxu0 0.0
    %2283 = vmatpush1.msra.mxu0 %v2173
    %2284 = vmatprep.subr.mxu0 0.0
    %2285 = vmatpush1.msra.mxu0 %v2174
    %2286 = vmatprep.subr.mxu0 0.0
    %2287 = vmatpush1.msra.mxu0 %v2175
    %2288 = vmatprep.subr.mxu0 0.0
    %2289 = vmatpush1.msra.mxu0 %v2176
    %2290 = vmatprep.subr.mxu0 0.0
    %2291 = vmatpush1.msra.mxu0 %v2177
    %2292 = vmatprep.subr.mxu0 0.0
    %2293 = vmatpush1.msra.mxu0 %v2178
    %2294 = vmatprep.subr.mxu0 0.0
    %2295 = vmatpush1.msra.mxu0 %v2179
    %2296 = vmatprep.subr.mxu0 0.0
    %2297 = vmatpush1.msra.mxu0 0.0
    %2298 = vmatprep.subr.mxu0 0.0
    %2299 = vmatpush1.msra.mxu0 0.0
    %2300 = vmatprep.subr.mxu0 0.0
    %2301 = vmatpush1.msra.mxu0 0.0
    %2302 = vmatprep.subr.mxu0 0.0
    %2303 = vmatpush1.msra.mxu0 0.0
    %2304 = vmatprep.subr.mxu0 0.0
    %2305 = vmatpush1.msra.mxu0 0.0
    %2306 = vmatprep.subr.mxu0 0.0
    %2307 = vmatpush1.msra.mxu0 0.0
    %2308 = vmatprep.subr.mxu0 0.0
    %2309 = vmatpush1.msra.mxu0 0.0
    %2310 = vmatprep.subr.mxu0 0.0
    %2311 = vmatpush1.msra.mxu0 0.0
    %2312 = vmatprep.subr.mxu0 0.0
    %2313 = vmatpush1.msra.mxu0 0.0
    %2314 = vmatprep.subr.mxu0 0.0
    %2315 = vmatpush1.msra.mxu0 0.0
    %2316 = vmatprep.subr.mxu0 0.0
    %2317 = vmatpush1.msra.mxu0 0.0
    %2318 = vmatprep.subr.mxu0 0.0
    %2319 = vmatpush1.msra.mxu0 0.0
    %2320 = vmatprep.subr.mxu0 0.0
    %2321 = vmatpush1.msra.mxu0 0.0
    %2322 = vmatprep.subr.mxu0 0.0
    %2323 = vmatpush1.msra.mxu0 0.0
    %2324 = vmatprep.subr.mxu0 0.0
    %2325 = vmatpush1.msra.mxu0 0.0
    %2326 = vmatprep.subr.mxu0 0.0
    %2327 = vmatpush1.msra.mxu0 0.0
    %2328 = vmatprep.subr.mxu0 0.0
    %2329 = vmatpush1.msra.mxu0 0.0
    %2330 = vmatprep.mubr.f32.mxu0 0.0
    %2331 = vmatmul.mubr.f32.gmra.mrb[0].mxu0 %v1815
    %v2332 = vpop.f32.mrb[0].mxu0
    %v2333 = vadd.f32 %v2263, %v2332
    %v2334 = vpop.f32.mrb[0].mxu0
    %2335 = vdwg.mxu0
    %s2336 = scalar_lea.vmem %s6, 240
    %v2337 = vld [vmem:[%s2336] sm:$0xff]
    %v2338 = vld [vmem:[%s2336 + $0x8] sm:$0xff]
    %v2339 = vld [vmem:[%s2336 + $0x10] sm:$0xff]
    %v2340 = vld [vmem:[%s2336 + $0x18] sm:$0xff]
    %v2341 = vld [vmem:[%s2336 + $0x20] sm:$0xff]
    %v2342 = vld [vmem:[%s2336 + $0x28] sm:$0xff]
    %v2343 = vld [vmem:[%s2336 + $0x30] sm:$0xff]
    %v2344 = vld [vmem:[%s2336 + $0x38] sm:$0xff]
    %v2345 = vld [vmem:[%s2336 + $0x40] sm:$0xff]
    %v2346 = vld [vmem:[%s2336 + $0x48] sm:$0xff]
    %v2347 = vld [vmem:[%s2336 + $0x50] sm:$0xff]
    %v2348 = vld [vmem:[%s2336 + $0x58] sm:$0xff]
    %v2349 = vld [vmem:[%s2336 + $0x60] sm:$0xff]
    %v2350 = vld [vmem:[%s2336 + $0x68] sm:$0xff]
    %v2351 = vld [vmem:[%s2336 + $0x70] sm:$0xff]
    %2352 = vmatprep.subr.mxu0 0.0
    %2353 = vmatpush1.msra.mxu0 %v2337
    %2354 = vmatprep.subr.mxu0 0.0
    %2355 = vmatpush1.msra.mxu0 %v2338
    %2356 = vmatprep.subr.mxu0 0.0
    %2357 = vmatpush1.msra.mxu0 %v2339
    %2358 = vmatprep.subr.mxu0 0.0
    %2359 = vmatpush1.msra.mxu0 %v2340
    %2360 = vmatprep.subr.mxu0 0.0
    %2361 = vmatpush1.msra.mxu0 %v2341
    %2362 = vmatprep.subr.mxu0 0.0
    %2363 = vmatpush1.msra.mxu0 %v2342
    %2364 = vmatprep.subr.mxu0 0.0
    %2365 = vmatpush1.msra.mxu0 %v2343
    %2366 = vmatprep.subr.mxu0 0.0
    %2367 = vmatpush1.msra.mxu0 %v2344
    %2368 = vmatprep.subr.mxu0 0.0
    %2369 = vmatpush1.msra.mxu0 %v2345
    %2370 = vmatprep.subr.mxu0 0.0
    %2371 = vmatpush1.msra.mxu0 %v2346
    %2372 = vmatprep.subr.mxu0 0.0
    %2373 = vmatpush1.msra.mxu0 %v2347
    %2374 = vmatprep.subr.mxu0 0.0
    %2375 = vmatpush1.msra.mxu0 %v2348
    %2376 = vmatprep.subr.mxu0 0.0
    %2377 = vmatpush1.msra.mxu0 %v2349
    %2378 = vmatprep.subr.mxu0 0.0
    %2379 = vmatpush1.msra.mxu0 %v2350
    %2380 = vmatprep.subr.mxu0 0.0
    %2381 = vmatpush1.msra.mxu0 %v2351
    %2382 = vmatprep.subr.mxu0 0.0
    %2383 = vmatpush1.msra.mxu0 0.0
    %2384 = vmatprep.subr.mxu0 0.0
    %2385 = vmatpush1.msra.mxu0 0.0
    %2386 = vmatprep.subr.mxu0 0.0
    %2387 = vmatpush1.msra.mxu0 0.0
    %2388 = vmatprep.subr.mxu0 0.0
    %2389 = vmatpush1.msra.mxu0 0.0
    %2390 = vmatprep.subr.mxu0 0.0
    %2391 = vmatpush1.msra.mxu0 0.0
    %2392 = vmatprep.subr.mxu0 0.0
    %2393 = vmatpush1.msra.mxu0 0.0
    %2394 = vmatprep.subr.mxu0 0.0
    %2395 = vmatpush1.msra.mxu0 0.0
    %2396 = vmatprep.subr.mxu0 0.0
    %2397 = vmatpush1.msra.mxu0 0.0
    %2398 = vmatprep.subr.mxu0 0.0
    %2399 = vmatpush1.msra.mxu0 0.0
    %2400 = vmatprep.subr.mxu0 0.0
    %2401 = vmatpush1.msra.mxu0 0.0
    %2402 = vmatprep.subr.mxu0 0.0
    %2403 = vmatpush1.msra.mxu0 0.0
    %2404 = vmatprep.subr.mxu0 0.0
    %2405 = vmatpush1.msra.mxu0 0.0
    %2406 = vmatprep.subr.mxu0 0.0
    %2407 = vmatpush1.msra.mxu0 0.0
    %2408 = vmatprep.subr.mxu0 0.0
    %2409 = vmatpush1.msra.mxu0 0.0
    %2410 = vmatprep.subr.mxu0 0.0
    %2411 = vmatpush1.msra.mxu0 0.0
    %2412 = vmatprep.subr.mxu0 0.0
    %2413 = vmatpush1.msra.mxu0 0.0
    %2414 = vmatprep.subr.mxu0 0.0
    %2415 = vmatpush1.msra.mxu0 0.0
    %2416 = vmatprep.mubr.f32.mxu0 0.0
    %2417 = vmatmul.mubr.f32.gmra.mrb[0].mxu0 %v1907
    %v2418 = vpop.f32.mrb[0].mxu0
    %v2419 = vadd.f32 0.0, %v2418
    %v2420 = vpop.f32.mrb[0].mxu0
    %2421 = vdwg.mxu0
    %v2422 = vadd.f32 %v2333, %v2419
    %s2423 = scalar_lea.vmem %s6, 360
    %v2424 = vld [vmem:[%s2423] sm:$0xff]
    %v2425 = vld [vmem:[%s2423 + $0x8] sm:$0xff]
    %v2426 = vld [vmem:[%s2423 + $0x10] sm:$0xff]
    %v2427 = vld [vmem:[%s2423 + $0x18] sm:$0xff]
    %v2428 = vld [vmem:[%s2423 + $0x20] sm:$0xff]
    %v2429 = vld [vmem:[%s2423 + $0x28] sm:$0xff]
    %v2430 = vld [vmem:[%s2423 + $0x30] sm:$0xff]
    %v2431 = vld [vmem:[%s2423 + $0x38] sm:$0xff]
    %v2432 = vld [vmem:[%s2423 + $0x40] sm:$0xff]
    %v2433 = vld [vmem:[%s2423 + $0x48] sm:$0xff]
    %v2434 = vld [vmem:[%s2423 + $0x50] sm:$0xff]
    %v2435 = vld [vmem:[%s2423 + $0x58] sm:$0xff]
    %v2436 = vld [vmem:[%s2423 + $0x60] sm:$0xff]
    %v2437 = vld [vmem:[%s2423 + $0x68] sm:$0xff]
    %v2438 = vld [vmem:[%s2423 + $0x70] sm:$0xff]
    %2439 = vmatprep.subr.mxu0 0.0
    %2440 = vmatpush1.msra.mxu0 %v2424
    %2441 = vmatprep.subr.mxu0 0.0
    %2442 = vmatpush1.msra.mxu0 %v2425
    %2443 = vmatprep.subr.mxu0 0.0
    %2444 = vmatpush1.msra.mxu0 %v2426
    %2445 = vmatprep.subr.mxu0 0.0
    %2446 = vmatpush1.msra.mxu0 %v2427
    %2447 = vmatprep.subr.mxu0 0.0
    %2448 = vmatpush1.msra.mxu0 %v2428
    %2449 = vmatprep.subr.mxu0 0.0
    %2450 = vmatpush1.msra.mxu0 %v2429
    %2451 = vmatprep.subr.mxu0 0.0
    %2452 = vmatpush1.msra.mxu0 %v2430
    %2453 = vmatprep.subr.mxu0 0.0
    %2454 = vmatpush1.msra.mxu0 %v2431
    %2455 = vmatprep.subr.mxu0 0.0
    %2456 = vmatpush1.msra.mxu0 %v2432
    %2457 = vmatprep.subr.mxu0 0.0
    %2458 = vmatpush1.msra.mxu0 %v2433
    %2459 = vmatprep.subr.mxu0 0.0
    %2460 = vmatpush1.msra.mxu0 %v2434
    %2461 = vmatprep.subr.mxu0 0.0
    %2462 = vmatpush1.msra.mxu0 %v2435
    %2463 = vmatprep.subr.mxu0 0.0
    %2464 = vmatpush1.msra.mxu0 %v2436
    %2465 = vmatprep.subr.mxu0 0.0
    %2466 = vmatpush1.msra.mxu0 %v2437
    %2467 = vmatprep.subr.mxu0 0.0
    %2468 = vmatpush1.msra.mxu0 %v2438
    %2469 = vmatprep.subr.mxu0 0.0
    %2470 = vmatpush1.msra.mxu0 0.0
    %2471 = vmatprep.subr.mxu0 0.0
    %2472 = vmatpush1.msra.mxu0 0.0
    %2473 = vmatprep.subr.mxu0 0.0
    %2474 = vmatpush1.msra.mxu0 0.0
    %2475 = vmatprep.subr.mxu0 0.0
    %2476 = vmatpush1.msra.mxu0 0.0
    %2477 = vmatprep.subr.mxu0 0.0
    %2478 = vmatpush1.msra.mxu0 0.0
    %2479 = vmatprep.subr.mxu0 0.0
    %2480 = vmatpush1.msra.mxu0 0.0
    %2481 = vmatprep.subr.mxu0 0.0
    %2482 = vmatpush1.msra.mxu0 0.0
    %2483 = vmatprep.subr.mxu0 0.0
    %2484 = vmatpush1.msra.mxu0 0.0
    %2485 = vmatprep.subr.mxu0 0.0
    %2486 = vmatpush1.msra.mxu0 0.0
    %2487 = vmatprep.subr.mxu0 0.0
    %2488 = vmatpush1.msra.mxu0 0.0
    %2489 = vmatprep.subr.mxu0 0.0
    %2490 = vmatpush1.msra.mxu0 0.0
    %2491 = vmatprep.subr.mxu0 0.0
    %2492 = vmatpush1.msra.mxu0 0.0
    %2493 = vmatprep.subr.mxu0 0.0
    %2494 = vmatpush1.msra.mxu0 0.0
    %2495 = vmatprep.subr.mxu0 0.0
    %2496 = vmatpush1.msra.mxu0 0.0
    %2497 = vmatprep.subr.mxu0 0.0
    %2498 = vmatpush1.msra.mxu0 0.0
    %2499 = vmatprep.subr.mxu0 0.0
    %2500 = vmatpush1.msra.mxu0 0.0
    %2501 = vmatprep.subr.mxu0 0.0
    %2502 = vmatpush1.msra.mxu0 0.0
    %2503 = vmatprep.mubr.f32.mxu0 0.0
    %2504 = vmatmul.mubr.f32.gmra.mrb[0].mxu0 %v2000
    %v2505 = vpop.f32.mrb[0].mxu0
    %v2506 = vadd.f32 0.0, %v2505
    %v2507 = vpop.f32.mrb[0].mxu0
    %2508 = vdwg.mxu0
    %v2509 = vadd.f32 %v2422, %v2506
    %s2510 = scalar_lea.vmem %s6, 480
    %v2511 = vld [vmem:[%s2510] sm:$0xff]
    %v2512 = vld [vmem:[%s2510 + $0x8] sm:$0xff]
    %v2513 = vld [vmem:[%s2510 + $0x10] sm:$0xff]
    %v2514 = vld [vmem:[%s2510 + $0x18] sm:$0xff]
    %v2515 = vld [vmem:[%s2510 + $0x20] sm:$0xff]
    %v2516 = vld [vmem:[%s2510 + $0x28] sm:$0xff]
    %v2517 = vld [vmem:[%s2510 + $0x30] sm:$0xff]
    %v2518 = vld [vmem:[%s2510 + $0x38] sm:$0xff]
    %v2519 = vld [vmem:[%s2510 + $0x40] sm:$0xff]
    %v2520 = vld [vmem:[%s2510 + $0x48] sm:$0xff]
    %v2521 = vld [vmem:[%s2510 + $0x50] sm:$0xff]
    %v2522 = vld [vmem:[%s2510 + $0x58] sm:$0xff]
    %v2523 = vld [vmem:[%s2510 + $0x60] sm:$0xff]
    %v2524 = vld [vmem:[%s2510 + $0x68] sm:$0xff]
    %v2525 = vld [vmem:[%s2510 + $0x70] sm:$0xff]
    %2526 = vmatprep.subr.mxu0 0.0
    %2527 = vmatpush1.msra.mxu0 %v2511
    %2528 = vmatprep.subr.mxu0 0.0
    %2529 = vmatpush1.msra.mxu0 %v2512
    %2530 = vmatprep.subr.mxu0 0.0
    %2531 = vmatpush1.msra.mxu0 %v2513
    %2532 = vmatprep.subr.mxu0 0.0
    %2533 = vmatpush1.msra.mxu0 %v2514
    %2534 = vmatprep.subr.mxu0 0.0
    %2535 = vmatpush1.msra.mxu0 %v2515
    %2536 = vmatprep.subr.mxu0 0.0
    %2537 = vmatpush1.msra.mxu0 %v2516
    %2538 = vmatprep.subr.mxu0 0.0
    %2539 = vmatpush1.msra.mxu0 %v2517
    %2540 = vmatprep.subr.mxu0 0.0
    %2541 = vmatpush1.msra.mxu0 %v2518
    %2542 = vmatprep.subr.mxu0 0.0
    %2543 = vmatpush1.msra.mxu0 %v2519
    %2544 = vmatprep.subr.mxu0 0.0
    %2545 = vmatpush1.msra.mxu0 %v2520
    %2546 = vmatprep.subr.mxu0 0.0
    %2547 = vmatpush1.msra.mxu0 %v2521
    %2548 = vmatprep.subr.mxu0 0.0
    %2549 = vmatpush1.msra.mxu0 %v2522
    %2550 = vmatprep.subr.mxu0 0.0
    %2551 = vmatpush1.msra.mxu0 %v2523
    %2552 = vmatprep.subr.mxu0 0.0
    %2553 = vmatpush1.msra.mxu0 %v2524
    %2554 = vmatprep.subr.mxu0 0.0
    %2555 = vmatpush1.msra.mxu0 %v2525
    %2556 = vmatprep.subr.mxu0 0.0
    %2557 = vmatpush1.msra.mxu0 0.0
    %2558 = vmatprep.subr.mxu0 0.0
    %2559 = vmatpush1.msra.mxu0 0.0
    %2560 = vmatprep.subr.mxu0 0.0
    %2561 = vmatpush1.msra.mxu0 0.0
    %2562 = vmatprep.subr.mxu0 0.0
    %2563 = vmatpush1.msra.mxu0 0.0
    %2564 = vmatprep.subr.mxu0 0.0
    %2565 = vmatpush1.msra.mxu0 0.0
    %2566 = vmatprep.subr.mxu0 0.0
    %2567 = vmatpush1.msra.mxu0 0.0
    %2568 = vmatprep.subr.mxu0 0.0
    %2569 = vmatpush1.msra.mxu0 0.0
    %2570 = vmatprep.subr.mxu0 0.0
    %2571 = vmatpush1.msra.mxu0 0.0
    %2572 = vmatprep.subr.mxu0 0.0
    %2573 = vmatpush1.msra.mxu0 0.0
    %2574 = vmatprep.subr.mxu0 0.0
    %2575 = vmatpush1.msra.mxu0 0.0
    %2576 = vmatprep.subr.mxu0 0.0
    %2577 = vmatpush1.msra.mxu0 0.0
    %2578 = vmatprep.subr.mxu0 0.0
    %2579 = vmatpush1.msra.mxu0 0.0
    %2580 = vmatprep.subr.mxu0 0.0
    %2581 = vmatpush1.msra.mxu0 0.0
    %2582 = vmatprep.subr.mxu0 0.0
    %2583 = vmatpush1.msra.mxu0 0.0
    %2584 = vmatprep.subr.mxu0 0.0
    %2585 = vmatpush1.msra.mxu0 0.0
    %2586 = vmatprep.subr.mxu0 0.0
    %2587 = vmatpush1.msra.mxu0 0.0
    %2588 = vmatprep.subr.mxu0 0.0
    %2589 = vmatpush1.msra.mxu0 0.0
    %2590 = vmatprep.mubr.f32.mxu0 0.0
    %2591 = vmatmul.mubr.f32.gmra.mrb[0].mxu0 %v2092
    %v2592 = vpop.f32.mrb[0].mxu0
    %v2593 = vadd.f32 0.0, %v2592
    %v2594 = vpop.f32.mrb[0].mxu0
    %2595 = vdwg.mxu0
    %v2596 = vadd.f32 %v2509, %v2593
    %v2597 = vmax.f32 %v2164, %v2596
    %v2598 = vld [vmem:[%s9] sm:$0x1]
    %v2600 = vrot.slane %v2597, 1
    %v2602 = vmax.f32 %v2597, %v2600
    %v2603 = vld [vmem:[%s7] sm:$0x1]
    %v2604 = vadd.f32 %v2602, %v2603
    %v2605 = vmax.f32 %v2604, 0.0
    %v2606 = vld [vmem:[%s8] sm:$0xff]
    %v2607 = vld [vmem:[%s8 + $0x8] sm:$0xff]
    %v2608 = vld [vmem:[%s8 + $0x10] sm:$0xff]
    %v2609 = vld [vmem:[%s8 + $0x18] sm:$0xff]
    %v2610 = vld [vmem:[%s8 + $0x20] sm:$0xff]
    %v2611 = vld [vmem:[%s8 + $0x28] sm:$0xff]
    %v2612 = vld [vmem:[%s8 + $0x30] sm:$0xff]
    %v2613 = vld [vmem:[%s8 + $0x38] sm:$0xff]
    %v2614 = vld [vmem:[%s8 + $0x40] sm:$0xff]
    %v2615 = vld [vmem:[%s8 + $0x48] sm:$0xff]
    %vm2616 = vcmask 654336
    %v2618 = vsel %vm2616, %v2605, 0
    %2620 = vmatprep.subr.mxu0 0.0
    %2621 = vmatpush1.msra.mxu0 %v2606
    %2622 = vmatprep.subr.mxu0 0.0
    %2623 = vmatpush1.msra.mxu0 %v2607
    %2624 = vmatprep.subr.mxu0 0.0
    %2625 = vmatpush1.msra.mxu0 %v2608
    %2626 = vmatprep.subr.mxu0 0.0
    %2627 = vmatpush1.msra.mxu0 %v2609
    %2628 = vmatprep.subr.mxu0 0.0
    %2629 = vmatpush1.msra.mxu0 %v2610
    %2630 = vmatprep.subr.mxu0 0.0
    %2631 = vmatpush1.msra.mxu0 %v2611
    %2632 = vmatprep.subr.mxu0 0.0
    %2633 = vmatpush1.msra.mxu0 %v2612
    %2634 = vmatprep.subr.mxu0 0.0
    %2635 = vmatpush1.msra.mxu0 %v2613
    %2636 = vmatprep.subr.mxu0 0.0
    %2637 = vmatpush1.msra.mxu0 %v2614
    %2638 = vmatprep.subr.mxu0 0.0
    %2639 = vmatpush1.msra.mxu0 %v2615
    %2640 = vmatprep.subr.mxu0 0.0
    %2641 = vmatpush1.msra.mxu0 0.0
    %2642 = vmatprep.subr.mxu0 0.0
    %2643 = vmatpush1.msra.mxu0 0.0
    %2644 = vmatprep.subr.mxu0 0.0
    %2645 = vmatpush1.msra.mxu0 0.0
    %2646 = vmatprep.subr.mxu0 0.0
    %2647 = vmatpush1.msra.mxu0 0.0
    %2648 = vmatprep.subr.mxu0 0.0
    %2649 = vmatpush1.msra.mxu0 0.0
    %2650 = vmatprep.subr.mxu0 0.0
    %2651 = vmatpush1.msra.mxu0 0.0
    %2652 = vmatprep.subr.mxu0 0.0
    %2653 = vmatpush1.msra.mxu0 0.0
    %2654 = vmatprep.subr.mxu0 0.0
    %2655 = vmatpush1.msra.mxu0 0.0
    %2656 = vmatprep.subr.mxu0 0.0
    %2657 = vmatpush1.msra.mxu0 0.0
    %2658 = vmatprep.subr.mxu0 0.0
    %2659 = vmatpush1.msra.mxu0 0.0
    %2660 = vmatprep.subr.mxu0 0.0
    %2661 = vmatpush1.msra.mxu0 0.0
    %2662 = vmatprep.subr.mxu0 0.0
    %2663 = vmatpush1.msra.mxu0 0.0
    %2664 = vmatprep.subr.mxu0 0.0
    %2665 = vmatpush1.msra.mxu0 0.0
    %2666 = vmatprep.subr.mxu0 0.0
    %2667 = vmatpush1.msra.mxu0 0.0
    %2668 = vmatprep.subr.mxu0 0.0
    %2669 = vmatpush1.msra.mxu0 0.0
    %2670 = vmatprep.subr.mxu0 0.0
    %2671 = vmatpush1.msra.mxu0 0.0
    %2672 = vmatprep.subr.mxu0 0.0
    %2673 = vmatpush1.msra.mxu0 0.0
    %2674 = vmatprep.subr.mxu0 0.0
    %2675 = vmatpush1.msra.mxu0 0.0
    %2676 = vmatprep.subr.mxu0 0.0
    %2677 = vmatpush1.msra.mxu0 0.0
    %2678 = vmatprep.subr.mxu0 0.0
    %2679 = vmatpush1.msra.mxu0 0.0
    %2680 = vmatprep.subr.mxu0 0.0
    %2681 = vmatpush1.msra.mxu0 0.0
    %2682 = vmatprep.subr.mxu0 0.0
    %2683 = vmatpush1.msra.mxu0 0.0
    %2684 = vmatprep.mubr.f32.mxu0 0.0
    %2685 = vmatmul.mubr.f32.gmra.mrb[0].mxu0 %v2618
    %v2686 = vpop.f32.mrb[0].mxu0
    %v2687 = vadd.f32 0.0, %v2686
    %v2688 = vpop.f32.mrb[0].mxu0
    %2689 = vdwg.mxu0
    %v2690 = vadd.f32 %v2598, %v2687
    %v2692 = vlaneseq
    %v2693 = vshrl.u32 %v2692, 7
    %v2694 = vsub.s32 0, %v2693
    %v2695 = vrot.slane %v2603, %v2694
    %v2697 = vadd.f32 %v2602, %v2695
    %v2698 = vmax.f32 %v2697, 0.0
    %s2699 = scalar_lea.vmem %s8, 80
    %v2700 = vld [vmem:[%s2699] sm:$0xff]
    %v2701 = vld [vmem:[%s2699 + $0x8] sm:$0xff]
    %v2702 = vld [vmem:[%s2699 + $0x10] sm:$0xff]
    %v2703 = vld [vmem:[%s2699 + $0x18] sm:$0xff]
    %v2704 = vld [vmem:[%s2699 + $0x20] sm:$0xff]
    %v2705 = vld [vmem:[%s2699 + $0x28] sm:$0xff]
    %v2706 = vld [vmem:[%s2699 + $0x30] sm:$0xff]
    %v2707 = vld [vmem:[%s2699 + $0x38] sm:$0xff]
    %v2708 = vld [vmem:[%s2699 + $0x40] sm:$0xff]
    %v2709 = vld [vmem:[%s2699 + $0x48] sm:$0xff]
    %v2711 = vrot.slane %v2698, 2
    %v2712 = vsel %vm2616, %v2711, 0
    %2714 = vmatprep.subr.mxu0 0.0
    %2715 = vmatpush1.msra.mxu0 %v2700
    %2716 = vmatprep.subr.mxu0 0.0
    %2717 = vmatpush1.msra.mxu0 %v2701
    %2718 = vmatprep.subr.mxu0 0.0
    %2719 = vmatpush1.msra.mxu0 %v2702
    %2720 = vmatprep.subr.mxu0 0.0
    %2721 = vmatpush1.msra.mxu0 %v2703
    %2722 = vmatprep.subr.mxu0 0.0
    %2723 = vmatpush1.msra.mxu0 %v2704
    %2724 = vmatprep.subr.mxu0 0.0
    %2725 = vmatpush1.msra.mxu0 %v2705
    %2726 = vmatprep.subr.mxu0 0.0
    %2727 = vmatpush1.msra.mxu0 %v2706
    %2728 = vmatprep.subr.mxu0 0.0
    %2729 = vmatpush1.msra.mxu0 %v2707
    %2730 = vmatprep.subr.mxu0 0.0
    %2731 = vmatpush1.msra.mxu0 %v2708
    %2732 = vmatprep.subr.mxu0 0.0
    %2733 = vmatpush1.msra.mxu0 %v2709
    %2734 = vmatprep.subr.mxu0 0.0
    %2735 = vmatpush1.msra.mxu0 0.0
    %2736 = vmatprep.subr.mxu0 0.0
    %2737 = vmatpush1.msra.mxu0 0.0
    %2738 = vmatprep.subr.mxu0 0.0
    %2739 = vmatpush1.msra.mxu0 0.0
    %2740 = vmatprep.subr.mxu0 0.0
    %2741 = vmatpush1.msra.mxu0 0.0
    %2742 = vmatprep.subr.mxu0 0.0
    %2743 = vmatpush1.msra.mxu0 0.0
    %2744 = vmatprep.subr.mxu0 0.0
    %2745 = vmatpush1.msra.mxu0 0.0
    %2746 = vmatprep.subr.mxu0 0.0
    %2747 = vmatpush1.msra.mxu0 0.0
    %2748 = vmatprep.subr.mxu0 0.0
    %2749 = vmatpush1.msra.mxu0 0.0
    %2750 = vmatprep.subr.mxu0 0.0
    %2751 = vmatpush1.msra.mxu0 0.0
    %2752 = vmatprep.subr.mxu0 0.0
    %2753 = vmatpush1.msra.mxu0 0.0
    %2754 = vmatprep.subr.mxu0 0.0
    %2755 = vmatpush1.msra.mxu0 0.0
    %2756 = vmatprep.subr.mxu0 0.0
    %2757 = vmatpush1.msra.mxu0 0.0
    %2758 = vmatprep.subr.mxu0 0.0
    %2759 = vmatpush1.msra.mxu0 0.0
    %2760 = vmatprep.subr.mxu0 0.0
    %2761 = vmatpush1.msra.mxu0 0.0
    %2762 = vmatprep.subr.mxu0 0.0
    %2763 = vmatpush1.msra.mxu0 0.0
    %2764 = vmatprep.subr.mxu0 0.0
    %2765 = vmatpush1.msra.mxu0 0.0
    %2766 = vmatprep.subr.mxu0 0.0
    %2767 = vmatpush1.msra.mxu0 0.0
    %2768 = vmatprep.subr.mxu0 0.0
    %2769 = vmatpush1.msra.mxu0 0.0
    %2770 = vmatprep.subr.mxu0 0.0
    %2771 = vmatpush1.msra.mxu0 0.0
    %2772 = vmatprep.subr.mxu0 0.0
    %2773 = vmatpush1.msra.mxu0 0.0
    %2774 = vmatprep.subr.mxu0 0.0
    %2775 = vmatpush1.msra.mxu0 0.0
    %2776 = vmatprep.subr.mxu0 0.0
    %2777 = vmatpush1.msra.mxu0 0.0
    %2778 = vmatprep.mubr.f32.mxu0 0.0
    %2779 = vmatmul.mubr.f32.gmra.mrb[0].mxu0 %v2712
    %v2780 = vpop.f32.mrb[0].mxu0
    %v2781 = vadd.f32 0.0, %v2780
    %v2782 = vpop.f32.mrb[0].mxu0
    %2783 = vdwg.mxu0
    %v2784 = vadd.f32 %v2690, %v2781
    %s2785 = scalar_lea.vmem %s8, 160
    %v2786 = vld [vmem:[%s2785] sm:$0xff]
    %v2787 = vld [vmem:[%s2785 + $0x8] sm:$0xff]
    %v2788 = vld [vmem:[%s2785 + $0x10] sm:$0xff]
    %v2789 = vld [vmem:[%s2785 + $0x18] sm:$0xff]
    %v2790 = vld [vmem:[%s2785 + $0x20] sm:$0xff]
    %v2791 = vld [vmem:[%s2785 + $0x28] sm:$0xff]
    %v2792 = vld [vmem:[%s2785 + $0x30] sm:$0xff]
    %v2793 = vld [vmem:[%s2785 + $0x38] sm:$0xff]
    %v2794 = vld [vmem:[%s2785 + $0x40] sm:$0xff]
    %v2795 = vld [vmem:[%s2785 + $0x48] sm:$0xff]
    %v2796 = vrot.slane %v2698, 4
    %v2797 = vsel %vm2616, %v2796, 0
    %2799 = vmatprep.subr.mxu0 0.0
    %2800 = vmatpush1.msra.mxu0 %v2786
    %2801 = vmatprep.subr.mxu0 0.0
    %2802 = vmatpush1.msra.mxu0 %v2787
    %2803 = vmatprep.subr.mxu0 0.0
    %2804 = vmatpush1.msra.mxu0 %v2788
    %2805 = vmatprep.subr.mxu0 0.0
    %2806 = vmatpush1.msra.mxu0 %v2789
    %2807 = vmatprep.subr.mxu0 0.0
    %2808 = vmatpush1.msra.mxu0 %v2790
    %2809 = vmatprep.subr.mxu0 0.0
    %2810 = vmatpush1.msra.mxu0 %v2791
    %2811 = vmatprep.subr.mxu0 0.0
    %2812 = vmatpush1.msra.mxu0 %v2792
    %2813 = vmatprep.subr.mxu0 0.0
    %2814 = vmatpush1.msra.mxu0 %v2793
    %2815 = vmatprep.subr.mxu0 0.0
    %2816 = vmatpush1.msra.mxu0 %v2794
    %2817 = vmatprep.subr.mxu0 0.0
    %2818 = vmatpush1.msra.mxu0 %v2795
    %2819 = vmatprep.subr.mxu0 0.0
    %2820 = vmatpush1.msra.mxu0 0.0
    %2821 = vmatprep.subr.mxu0 0.0
    %2822 = vmatpush1.msra.mxu0 0.0
    %2823 = vmatprep.subr.mxu0 0.0
    %2824 = vmatpush1.msra.mxu0 0.0
    %2825 = vmatprep.subr.mxu0 0.0
    %2826 = vmatpush1.msra.mxu0 0.0
    %2827 = vmatprep.subr.mxu0 0.0
    %2828 = vmatpush1.msra.mxu0 0.0
    %2829 = vmatprep.subr.mxu0 0.0
    %2830 = vmatpush1.msra.mxu0 0.0
    %2831 = vmatprep.subr.mxu0 0.0
    %2832 = vmatpush1.msra.mxu0 0.0
    %2833 = vmatprep.subr.mxu0 0.0
    %2834 = vmatpush1.msra.mxu0 0.0
    %2835 = vmatprep.subr.mxu0 0.0
    %2836 = vmatpush1.msra.mxu0 0.0
    %2837 = vmatprep.subr.mxu0 0.0
    %2838 = vmatpush1.msra.mxu0 0.0
    %2839 = vmatprep.subr.mxu0 0.0
    %2840 = vmatpush1.msra.mxu0 0.0
    %2841 = vmatprep.subr.mxu0 0.0
    %2842 = vmatpush1.msra.mxu0 0.0
    %2843 = vmatprep.subr.mxu0 0.0
    %2844 = vmatpush1.msra.mxu0 0.0
    %2845 = vmatprep.subr.mxu0 0.0
    %2846 = vmatpush1.msra.mxu0 0.0
    %2847 = vmatprep.subr.mxu0 0.0
    %2848 = vmatpush1.msra.mxu0 0.0
    %2849 = vmatprep.subr.mxu0 0.0
    %2850 = vmatpush1.msra.mxu0 0.0
    %2851 = vmatprep.subr.mxu0 0.0
    %2852 = vmatpush1.msra.mxu0 0.0
    %2853 = vmatprep.subr.mxu0 0.0
    %2854 = vmatpush1.msra.mxu0 0.0
    %2855 = vmatprep.subr.mxu0 0.0
    %2856 = vmatpush1.msra.mxu0 0.0
    %2857 = vmatprep.subr.mxu0 0.0
    %2858 = vmatpush1.msra.mxu0 0.0
    %2859 = vmatprep.subr.mxu0 0.0
    %2860 = vmatpush1.msra.mxu0 0.0
    %2861 = vmatprep.subr.mxu0 0.0
    %2862 = vmatpush1.msra.mxu0 0.0
    %2863 = vmatprep.mubr.f32.mxu0 0.0
    %2864 = vmatmul.mubr.f32.gmra.mrb[0].mxu0 %v2797
    %v2865 = vpop.f32.mrb[0].mxu0
    %v2866 = vadd.f32 0.0, %v2865
    %v2867 = vpop.f32.mrb[0].mxu0
    %2868 = vdwg.mxu0
    %v2869 = vadd.f32 %v2784, %v2866
    %s2870 = scalar_lea.vmem %s8, 240
    %v2871 = vld [vmem:[%s2870] sm:$0xff]
    %v2872 = vld [vmem:[%s2870 + $0x8] sm:$0xff]
    %v2873 = vld [vmem:[%s2870 + $0x10] sm:$0xff]
    %v2874 = vld [vmem:[%s2870 + $0x18] sm:$0xff]
    %v2875 = vld [vmem:[%s2870 + $0x20] sm:$0xff]
    %v2876 = vld [vmem:[%s2870 + $0x28] sm:$0xff]
    %v2877 = vld [vmem:[%s2870 + $0x30] sm:$0xff]
    %v2878 = vld [vmem:[%s2870 + $0x38] sm:$0xff]
    %v2879 = vld [vmem:[%s2870 + $0x40] sm:$0xff]
    %v2880 = vld [vmem:[%s2870 + $0x48] sm:$0xff]
    %v2881 = vrot.slane %v2698, 6
    %v2882 = vsel %vm2616, %v2881, 0
    %2884 = vmatprep.subr.mxu0 0.0
    %2885 = vmatpush1.msra.mxu0 %v2871
    %2886 = vmatprep.subr.mxu0 0.0
    %2887 = vmatpush1.msra.mxu0 %v2872
    %2888 = vmatprep.subr.mxu0 0.0
    %2889 = vmatpush1.msra.mxu0 %v2873
    %2890 = vmatprep.subr.mxu0 0.0
    %2891 = vmatpush1.msra.mxu0 %v2874
    %2892 = vmatprep.subr.mxu0 0.0
    %2893 = vmatpush1.msra.mxu0 %v2875
    %2894 = vmatprep.subr.mxu0 0.0
    %2895 = vmatpush1.msra.mxu0 %v2876
    %2896 = vmatprep.subr.mxu0 0.0
    %2897 = vmatpush1.msra.mxu0 %v2877
    %2898 = vmatprep.subr.mxu0 0.0
    %2899 = vmatpush1.msra.mxu0 %v2878
    %2900 = vmatprep.subr.mxu0 0.0
    %2901 = vmatpush1.msra.mxu0 %v2879
    %2902 = vmatprep.subr.mxu0 0.0
    %2903 = vmatpush1.msra.mxu0 %v2880
    %2904 = vmatprep.subr.mxu0 0.0
    %2905 = vmatpush1.msra.mxu0 0.0
    %2906 = vmatprep.subr.mxu0 0.0
    %2907 = vmatpush1.msra.mxu0 0.0
    %2908 = vmatprep.subr.mxu0 0.0
    %2909 = vmatpush1.msra.mxu0 0.0
    %2910 = vmatprep.subr.mxu0 0.0
    %2911 = vmatpush1.msra.mxu0 0.0
    %2912 = vmatprep.subr.mxu0 0.0
    %2913 = vmatpush1.msra.mxu0 0.0
    %2914 = vmatprep.subr.mxu0 0.0
    %2915 = vmatpush1.msra.mxu0 0.0
    %2916 = vmatprep.subr.mxu0 0.0
    %2917 = vmatpush1.msra.mxu0 0.0
    %2918 = vmatprep.subr.mxu0 0.0
    %2919 = vmatpush1.msra.mxu0 0.0
    %2920 = vmatprep.subr.mxu0 0.0
    %2921 = vmatpush1.msra.mxu0 0.0
    %2922 = vmatprep.subr.mxu0 0.0
    %2923 = vmatpush1.msra.mxu0 0.0
    %2924 = vmatprep.subr.mxu0 0.0
    %2925 = vmatpush1.msra.mxu0 0.0
    %2926 = vmatprep.subr.mxu0 0.0
    %2927 = vmatpush1.msra.mxu0 0.0
    %2928 = vmatprep.subr.mxu0 0.0
    %2929 = vmatpush1.msra.mxu0 0.0
    %2930 = vmatprep.subr.mxu0 0.0
    %2931 = vmatpush1.msra.mxu0 0.0
    %2932 = vmatprep.subr.mxu0 0.0
    %2933 = vmatpush1.msra.mxu0 0.0
    %2934 = vmatprep.subr.mxu0 0.0
    %2935 = vmatpush1.msra.mxu0 0.0
    %2936 = vmatprep.subr.mxu0 0.0
    %2937 = vmatpush1.msra.mxu0 0.0
    %2938 = vmatprep.subr.mxu0 0.0
    %2939 = vmatpush1.msra.mxu0 0.0
    %2940 = vmatprep.subr.mxu0 0.0
    %2941 = vmatpush1.msra.mxu0 0.0
    %2942 = vmatprep.subr.mxu0 0.0
    %2943 = vmatpush1.msra.mxu0 0.0
    %2944 = vmatprep.subr.mxu0 0.0
    %2945 = vmatpush1.msra.mxu0 0.0
    %2946 = vmatprep.subr.mxu0 0.0
    %2947 = vmatpush1.msra.mxu0 0.0
    %2948 = vmatprep.mubr.f32.mxu0 0.0
    %2949 = vmatmul.mubr.f32.gmra.mrb[0].mxu0 %v2882
    %v2950 = vpop.f32.mrb[0].mxu0
    %v2951 = vadd.f32 0.0, %v2950
    %v2952 = vpop.f32.mrb[0].mxu0
    %2953 = vdwg.mxu0
    %v2954 = vadd.f32 %v2869, %v2951
    %vm2955 = vcmask 73728
    %2956 = vst.msk [vmem:[#allocation2] sm:$0x1] %vm2955, %v2954
    %s2957 = scalar_lea.vmem %s0, 16
    %v2958 = vld [vmem:[%s2957] sm:$0xff]
    %v2959 = vld [vmem:[%s2957 + $0x8] sm:$0xf]
    %v2960 = vld [vmem:[%s2957 + $0x1] sm:$0xff]
    %v2961 = vld [vmem:[%s2957 + $0x9] sm:$0xf]
    %v2962 = vld [vmem:[%s2957 + $0x2] sm:$0xff]
    %v2963 = vld [vmem:[%s2957 + $0xa] sm:$0xf]
    %s2964 = scalar_lea.vmem %s1, 16
    %v2965 = vld [vmem:[%s2964] sm:$0xff]
    %v2966 = vld [vmem:[%s2964 + $0x8] sm:$0xf]
    %v2967 = vld [vmem:[%s2964 + $0x1] sm:$0xff]
    %v2968 = vld [vmem:[%s2964 + $0x9] sm:$0xf]
    %v2969 = vld [vmem:[%s2964 + $0x2] sm:$0xff]
    %v2970 = vld [vmem:[%s2964 + $0xa] sm:$0xf]
    %v2971 = vld [vmem:[%s2] sm:$0xff]
    %v2972 = vld [vmem:[%s2 + $0x8] sm:$0xff]
    %v2973 = vld [vmem:[%s2 + $0x10] sm:$0xff]
    %v2974 = vld [vmem:[%s2 + $0x18] sm:$0xf]
    %v2975 = vld [vmem:[%s52] sm:$0xff]
    %v2976 = vld [vmem:[%s52 + $0x8] sm:$0xff]
    %v2977 = vld [vmem:[%s52 + $0x10] sm:$0xff]
    %v2978 = vld [vmem:[%s52 + $0x18] sm:$0xf]
    %v2980 = vsel %vm57, %v2965, 0
    %v2983 = vsel %vm57, %v2966, 0
    %v2986 = vsel %vm64, %v2978, 0
    %2988 = vmatprep.subr.mxu0 0.0
    %2989 = vmatpush1.msra.mxu0 %v2975
    %2990 = vmatprep.subr.mxu0 0.0
    %2991 = vmatpush1.msra.mxu0 %v2976
    %2992 = vmatprep.subr.mxu0 0.0
    %2993 = vmatpush1.msra.mxu0 %v2977
    %2994 = vmatprep.subr.mxu0 0.0
    %2995 = vmatpush1.msra.mxu0 %v2986
    %2996 = vmatprep.subr.mxu0 0.0
    %2997 = vmatpush1.msra.mxu0 0.0
    %2998 = vmatprep.subr.mxu0 0.0
    %2999 = vmatpush1.msra.mxu0 0.0
    %3000 = vmatprep.subr.mxu0 0.0
    %3001 = vmatpush1.msra.mxu0 0.0
    %3002 = vmatprep.subr.mxu0 0.0
    %3003 = vmatpush1.msra.mxu0 0.0
    %3004 = vmatprep.subr.mxu0 0.0
    %3005 = vmatpush1.msra.mxu0 0.0
    %3006 = vmatprep.subr.mxu0 0.0
    %3007 = vmatpush1.msra.mxu0 0.0
    %3008 = vmatprep.subr.mxu0 0.0
    %3009 = vmatpush1.msra.mxu0 0.0
    %3010 = vmatprep.subr.mxu0 0.0
    %3011 = vmatpush1.msra.mxu0 0.0
    %3012 = vmatprep.subr.mxu0 0.0
    %3013 = vmatpush1.msra.mxu0 0.0
    %3014 = vmatprep.subr.mxu0 0.0
    %3015 = vmatpush1.msra.mxu0 0.0
    %3016 = vmatprep.subr.mxu0 0.0
    %3017 = vmatpush1.msra.mxu0 0.0
    %3018 = vmatprep.subr.mxu0 0.0
    %3019 = vmatpush1.msra.mxu0 0.0
    %3020 = vmatprep.subr.mxu0 0.0
    %3021 = vmatpush1.msra.mxu0 0.0
    %3022 = vmatprep.subr.mxu0 0.0
    %3023 = vmatpush1.msra.mxu0 0.0
    %3024 = vmatprep.subr.mxu0 0.0
    %3025 = vmatpush1.msra.mxu0 0.0
    %3026 = vmatprep.subr.mxu0 0.0
    %3027 = vmatpush1.msra.mxu0 0.0
    %3028 = vmatprep.subr.mxu0 0.0
    %3029 = vmatpush1.msra.mxu0 0.0
    %3030 = vmatprep.subr.mxu0 0.0
    %3031 = vmatpush1.msra.mxu0 0.0
    %3032 = vmatprep.subr.mxu0 0.0
    %3033 = vmatpush1.msra.mxu0 0.0
    %3034 = vmatprep.subr.mxu0 0.0
    %3035 = vmatpush1.msra.mxu0 0.0
    %3036 = vmatprep.subr.mxu0 0.0
    %3037 = vmatpush1.msra.mxu0 0.0
    %3038 = vmatprep.subr.mxu0 0.0
    %3039 = vmatpush1.msra.mxu0 0.0
    %3040 = vmatprep.subr.mxu0 0.0
    %3041 = vmatpush1.msra.mxu0 0.0
    %3042 = vmatprep.subr.mxu0 0.0
    %3043 = vmatpush1.msra.mxu0 0.0
    %3044 = vmatprep.subr.mxu0 0.0
    %3045 = vmatpush1.msra.mxu0 0.0
    %3046 = vmatprep.subr.mxu0 0.0
    %3047 = vmatpush1.msra.mxu0 0.0
    %3048 = vmatprep.subr.mxu0 0.0
    %3049 = vmatpush1.msra.mxu0 0.0
    %3050 = vmatprep.subr.mxu0 0.0
    %3051 = vmatpush1.msra.mxu0 0.0
    %3052 = vmatprep.mubr.f32.mxu0 0.0
    %3053 = vmatmul.mubr.f32.gmra.mrb[0].mxu0 %v2980
    %v3054 = vpop.f32.mrb[0].mxu0
    %v3055 = vadd.f32 0.0, %v3054
    %v3056 = vpop.f32.mrb[0].mxu0
    %3057 = vmatprep.mubr.f32.mxu0 0.0
    %3058 = vmatmul.mubr.f32.gmra.mrb[0].mxu0 %v2983
    %v3059 = vpop.f32.mrb[0].mxu0
    %v3060 = vadd.f32 0.0, %v3059
    %v3061 = vpop.f32.mrb[0].mxu0
    %3062 = vdwg.mxu0
    %v3064 = vsel %vm57, %v2958, 0
    %v3067 = vsel %vm57, %v2959, 0
    %v3070 = vsel %vm64, %v2974, 0
    %3072 = vmatprep.subr.mxu0 0.0
    %3073 = vmatpush1.msra.mxu0 %v2971
    %3074 = vmatprep.subr.mxu0 0.0
    %3075 = vmatpush1.msra.mxu0 %v2972
    %3076 = vmatprep.subr.mxu0 0.0
    %3077 = vmatpush1.msra.mxu0 %v2973
    %3078 = vmatprep.subr.mxu0 0.0
    %3079 = vmatpush1.msra.mxu0 %v3070
    %3080 = vmatprep.subr.mxu0 0.0
    %3081 = vmatpush1.msra.mxu0 0.0
    %3082 = vmatprep.subr.mxu0 0.0
    %3083 = vmatpush1.msra.mxu0 0.0
    %3084 = vmatprep.subr.mxu0 0.0
    %3085 = vmatpush1.msra.mxu0 0.0
    %3086 = vmatprep.subr.mxu0 0.0
    %3087 = vmatpush1.msra.mxu0 0.0
    %3088 = vmatprep.subr.mxu0 0.0
    %3089 = vmatpush1.msra.mxu0 0.0
    %3090 = vmatprep.subr.mxu0 0.0
    %3091 = vmatpush1.msra.mxu0 0.0
    %3092 = vmatprep.subr.mxu0 0.0
    %3093 = vmatpush1.msra.mxu0 0.0
    %3094 = vmatprep.subr.mxu0 0.0
    %3095 = vmatpush1.msra.mxu0 0.0
    %3096 = vmatprep.subr.mxu0 0.0
    %3097 = vmatpush1.msra.mxu0 0.0
    %3098 = vmatprep.subr.mxu0 0.0
    %3099 = vmatpush1.msra.mxu0 0.0
    %3100 = vmatprep.subr.mxu0 0.0
    %3101 = vmatpush1.msra.mxu0 0.0
    %3102 = vmatprep.subr.mxu0 0.0
    %3103 = vmatpush1.msra.mxu0 0.0
    %3104 = vmatprep.subr.mxu0 0.0
    %3105 = vmatpush1.msra.mxu0 0.0
    %3106 = vmatprep.subr.mxu0 0.0
    %3107 = vmatpush1.msra.mxu0 0.0
    %3108 = vmatprep.subr.mxu0 0.0
    %3109 = vmatpush1.msra.mxu0 0.0
    %3110 = vmatprep.subr.mxu0 0.0
    %3111 = vmatpush1.msra.mxu0 0.0
    %3112 = vmatprep.subr.mxu0 0.0
    %3113 = vmatpush1.msra.mxu0 0.0
    %3114 = vmatprep.subr.mxu0 0.0
    %3115 = vmatpush1.msra.mxu0 0.0
    %3116 = vmatprep.subr.mxu0 0.0
    %3117 = vmatpush1.msra.mxu0 0.0
    %3118 = vmatprep.subr.mxu0 0.0
    %3119 = vmatpush1.msra.mxu0 0.0
    %3120 = vmatprep.subr.mxu0 0.0
    %3121 = vmatpush1.msra.mxu0 0.0
    %3122 = vmatprep.subr.mxu0 0.0
    %3123 = vmatpush1.msra.mxu0 0.0
    %3124 = vmatprep.subr.mxu0 0.0
    %3125 = vmatpush1.msra.mxu0 0.0
    %3126 = vmatprep.subr.mxu0 0.0
    %3127 = vmatpush1.msra.mxu0 0.0
    %3128 = vmatprep.subr.mxu0 0.0
    %3129 = vmatpush1.msra.mxu0 0.0
    %3130 = vmatprep.subr.mxu0 0.0
    %3131 = vmatpush1.msra.mxu0 0.0
    %3132 = vmatprep.subr.mxu0 0.0
    %3133 = vmatpush1.msra.mxu0 0.0
    %3134 = vmatprep.subr.mxu0 0.0
    %3135 = vmatpush1.msra.mxu0 0.0
    %3136 = vmatprep.mubr.f32.mxu0 0.0
    %3137 = vmatmul.mubr.f32.gmra.mrb[0].mxu0 %v3064
    %v3138 = vpop.f32.mrb[0].mxu0
    %v3139 = vadd.f32 %v3055, %v3138
    %v3140 = vpop.f32.mrb[0].mxu0
    %3141 = vmatprep.mubr.f32.mxu0 0.0
    %3142 = vmatmul.mubr.f32.gmra.mrb[0].mxu0 %v3067
    %v3143 = vpop.f32.mrb[0].mxu0
    %v3144 = vadd.f32 %v3060, %v3143
    %v3145 = vpop.f32.mrb[0].mxu0
    %3146 = vdwg.mxu0
    %v3147 = vld [vmem:[%s227] sm:$0xff]
    %v3148 = vld [vmem:[%s227 + $0x8] sm:$0xff]
    %v3149 = vld [vmem:[%s227 + $0x10] sm:$0xff]
    %v3150 = vld [vmem:[%s227 + $0x18] sm:$0xf]
    %v3152 = vsel %vm57, %v2960, 0
    %v3155 = vsel %vm57, %v2961, 0
    %v3158 = vsel %vm64, %v3150, 0
    %3160 = vmatprep.subr.mxu0 0.0
    %3161 = vmatpush1.msra.mxu0 %v3147
    %3162 = vmatprep.subr.mxu0 0.0
    %3163 = vmatpush1.msra.mxu0 %v3148
    %3164 = vmatprep.subr.mxu0 0.0
    %3165 = vmatpush1.msra.mxu0 %v3149
    %3166 = vmatprep.subr.mxu0 0.0
    %3167 = vmatpush1.msra.mxu0 %v3158
    %3168 = vmatprep.subr.mxu0 0.0
    %3169 = vmatpush1.msra.mxu0 0.0
    %3170 = vmatprep.subr.mxu0 0.0
    %3171 = vmatpush1.msra.mxu0 0.0
    %3172 = vmatprep.subr.mxu0 0.0
    %3173 = vmatpush1.msra.mxu0 0.0
    %3174 = vmatprep.subr.mxu0 0.0
    %3175 = vmatpush1.msra.mxu0 0.0
    %3176 = vmatprep.subr.mxu0 0.0
    %3177 = vmatpush1.msra.mxu0 0.0
    %3178 = vmatprep.subr.mxu0 0.0
    %3179 = vmatpush1.msra.mxu0 0.0
    %3180 = vmatprep.subr.mxu0 0.0
    %3181 = vmatpush1.msra.mxu0 0.0
    %3182 = vmatprep.subr.mxu0 0.0
    %3183 = vmatpush1.msra.mxu0 0.0
    %3184 = vmatprep.subr.mxu0 0.0
    %3185 = vmatpush1.msra.mxu0 0.0
    %3186 = vmatprep.subr.mxu0 0.0
    %3187 = vmatpush1.msra.mxu0 0.0
    %3188 = vmatprep.subr.mxu0 0.0
    %3189 = vmatpush1.msra.mxu0 0.0
    %3190 = vmatprep.subr.mxu0 0.0
    %3191 = vmatpush1.msra.mxu0 0.0
    %3192 = vmatprep.subr.mxu0 0.0
    %3193 = vmatpush1.msra.mxu0 0.0
    %3194 = vmatprep.subr.mxu0 0.0
    %3195 = vmatpush1.msra.mxu0 0.0
    %3196 = vmatprep.subr.mxu0 0.0
    %3197 = vmatpush1.msra.mxu0 0.0
    %3198 = vmatprep.subr.mxu0 0.0
    %3199 = vmatpush1.msra.mxu0 0.0
    %3200 = vmatprep.subr.mxu0 0.0
    %3201 = vmatpush1.msra.mxu0 0.0
    %3202 = vmatprep.subr.mxu0 0.0
    %3203 = vmatpush1.msra.mxu0 0.0
    %3204 = vmatprep.subr.mxu0 0.0
    %3205 = vmatpush1.msra.mxu0 0.0
    %3206 = vmatprep.subr.mxu0 0.0
    %3207 = vmatpush1.msra.mxu0 0.0
    %3208 = vmatprep.subr.mxu0 0.0
    %3209 = vmatpush1.msra.mxu0 0.0
    %3210 = vmatprep.subr.mxu0 0.0
    %3211 = vmatpush1.msra.mxu0 0.0
    %3212 = vmatprep.subr.mxu0 0.0
    %3213 = vmatpush1.msra.mxu0 0.0
    %3214 = vmatprep.subr.mxu0 0.0
    %3215 = vmatpush1.msra.mxu0 0.0
    %3216 = vmatprep.subr.mxu0 0.0
    %3217 = vmatpush1.msra.mxu0 0.0
    %3218 = vmatprep.subr.mxu0 0.0
    %3219 = vmatpush1.msra.mxu0 0.0
    %3220 = vmatprep.subr.mxu0 0.0
    %3221 = vmatpush1.msra.mxu0 0.0
    %3222 = vmatprep.subr.mxu0 0.0
    %3223 = vmatpush1.msra.mxu0 0.0
    %3224 = vmatprep.mubr.f32.mxu0 0.0
    %3225 = vmatmul.mubr.f32.gmra.mrb[0].mxu0 %v3152
    %v3226 = vpop.f32.mrb[0].mxu0
    %v3227 = vadd.f32 0.0, %v3226
    %v3228 = vpop.f32.mrb[0].mxu0
    %3229 = vmatprep.mubr.f32.mxu0 0.0
    %3230 = vmatmul.mubr.f32.gmra.mrb[0].mxu0 %v3155
    %v3231 = vpop.f32.mrb[0].mxu0
    %v3232 = vadd.f32 0.0, %v3231
    %v3233 = vpop.f32.mrb[0].mxu0
    %3234 = vdwg.mxu0
    %v3235 = vadd.f32 %v3139, %v3227
    %v3236 = vadd.f32 %v3144, %v3232
    %v3237 = vld [vmem:[%s318] sm:$0xff]
    %v3238 = vld [vmem:[%s318 + $0x8] sm:$0xff]
    %v3239 = vld [vmem:[%s318 + $0x10] sm:$0xff]
    %v3240 = vld [vmem:[%s318 + $0x18] sm:$0xf]
    %v3242 = vsel %vm57, %v2967, 0
    %v3245 = vsel %vm57, %v2968, 0
    %v3248 = vsel %vm64, %v3240, 0
    %3250 = vmatprep.subr.mxu0 0.0
    %3251 = vmatpush1.msra.mxu0 %v3237
    %3252 = vmatprep.subr.mxu0 0.0
    %3253 = vmatpush1.msra.mxu0 %v3238
    %3254 = vmatprep.subr.mxu0 0.0
    %3255 = vmatpush1.msra.mxu0 %v3239
    %3256 = vmatprep.subr.mxu0 0.0
    %3257 = vmatpush1.msra.mxu0 %v3248
    %3258 = vmatprep.subr.mxu0 0.0
    %3259 = vmatpush1.msra.mxu0 0.0
    %3260 = vmatprep.subr.mxu0 0.0
    %3261 = vmatpush1.msra.mxu0 0.0
    %3262 = vmatprep.subr.mxu0 0.0
    %3263 = vmatpush1.msra.mxu0 0.0
    %3264 = vmatprep.subr.mxu0 0.0
    %3265 = vmatpush1.msra.mxu0 0.0
    %3266 = vmatprep.subr.mxu0 0.0
    %3267 = vmatpush1.msra.mxu0 0.0
    %3268 = vmatprep.subr.mxu0 0.0
    %3269 = vmatpush1.msra.mxu0 0.0
    %3270 = vmatprep.subr.mxu0 0.0
    %3271 = vmatpush1.msra.mxu0 0.0
    %3272 = vmatprep.subr.mxu0 0.0
    %3273 = vmatpush1.msra.mxu0 0.0
    %3274 = vmatprep.subr.mxu0 0.0
    %3275 = vmatpush1.msra.mxu0 0.0
    %3276 = vmatprep.subr.mxu0 0.0
    %3277 = vmatpush1.msra.mxu0 0.0
    %3278 = vmatprep.subr.mxu0 0.0
    %3279 = vmatpush1.msra.mxu0 0.0
    %3280 = vmatprep.subr.mxu0 0.0
    %3281 = vmatpush1.msra.mxu0 0.0
    %3282 = vmatprep.subr.mxu0 0.0
    %3283 = vmatpush1.msra.mxu0 0.0
    %3284 = vmatprep.subr.mxu0 0.0
    %3285 = vmatpush1.msra.mxu0 0.0
    %3286 = vmatprep.subr.mxu0 0.0
    %3287 = vmatpush1.msra.mxu0 0.0
    %3288 = vmatprep.subr.mxu0 0.0
    %3289 = vmatpush1.msra.mxu0 0.0
    %3290 = vmatprep.subr.mxu0 0.0
    %3291 = vmatpush1.msra.mxu0 0.0
    %3292 = vmatprep.subr.mxu0 0.0
    %3293 = vmatpush1.msra.mxu0 0.0
    %3294 = vmatprep.subr.mxu0 0.0
    %3295 = vmatpush1.msra.mxu0 0.0
    %3296 = vmatprep.subr.mxu0 0.0
    %3297 = vmatpush1.msra.mxu0 0.0
    %3298 = vmatprep.subr.mxu0 0.0
    %3299 = vmatpush1.msra.mxu0 0.0
    %3300 = vmatprep.subr.mxu0 0.0
    %3301 = vmatpush1.msra.mxu0 0.0
    %3302 = vmatprep.subr.mxu0 0.0
    %3303 = vmatpush1.msra.mxu0 0.0
    %3304 = vmatprep.subr.mxu0 0.0
    %3305 = vmatpush1.msra.mxu0 0.0
    %3306 = vmatprep.subr.mxu0 0.0
    %3307 = vmatpush1.msra.mxu0 0.0
    %3308 = vmatprep.subr.mxu0 0.0
    %3309 = vmatpush1.msra.mxu0 0.0
    %3310 = vmatprep.subr.mxu0 0.0
    %3311 = vmatpush1.msra.mxu0 0.0
    %3312 = vmatprep.subr.mxu0 0.0
    %3313 = vmatpush1.msra.mxu0 0.0
    %3314 = vmatprep.mubr.f32.mxu0 0.0
    %3315 = vmatmul.mubr.f32.gmra.mrb[0].mxu0 %v3242
    %v3316 = vpop.f32.mrb[0].mxu0
    %v3317 = vadd.f32 0.0, %v3316
    %v3318 = vpop.f32.mrb[0].mxu0
    %3319 = vmatprep.mubr.f32.mxu0 0.0
    %3320 = vmatmul.mubr.f32.gmra.mrb[0].mxu0 %v3245
    %v3321 = vpop.f32.mrb[0].mxu0
    %v3322 = vadd.f32 0.0, %v3321
    %v3323 = vpop.f32.mrb[0].mxu0
    %3324 = vdwg.mxu0
    %v3325 = vadd.f32 %v3235, %v3317
    %v3326 = vadd.f32 %v3236, %v3322
    %v3327 = vld [vmem:[%s409] sm:$0xff]
    %v3328 = vld [vmem:[%s409 + $0x8] sm:$0xff]
    %v3329 = vld [vmem:[%s409 + $0x10] sm:$0xff]
    %v3330 = vld [vmem:[%s409 + $0x18] sm:$0xf]
    %v3332 = vsel %vm57, %v2962, 0
    %v3335 = vsel %vm57, %v2963, 0
    %v3338 = vsel %vm64, %v3330, 0
    %3340 = vmatprep.subr.mxu0 0.0
    %3341 = vmatpush1.msra.mxu0 %v3327
    %3342 = vmatprep.subr.mxu0 0.0
    %3343 = vmatpush1.msra.mxu0 %v3328
    %3344 = vmatprep.subr.mxu0 0.0
    %3345 = vmatpush1.msra.mxu0 %v3329
    %3346 = vmatprep.subr.mxu0 0.0
    %3347 = vmatpush1.msra.mxu0 %v3338
    %3348 = vmatprep.subr.mxu0 0.0
    %3349 = vmatpush1.msra.mxu0 0.0
    %3350 = vmatprep.subr.mxu0 0.0
    %3351 = vmatpush1.msra.mxu0 0.0
    %3352 = vmatprep.subr.mxu0 0.0
    %3353 = vmatpush1.msra.mxu0 0.0
    %3354 = vmatprep.subr.mxu0 0.0
    %3355 = vmatpush1.msra.mxu0 0.0
    %3356 = vmatprep.subr.mxu0 0.0
    %3357 = vmatpush1.msra.mxu0 0.0
    %3358 = vmatprep.subr.mxu0 0.0
    %3359 = vmatpush1.msra.mxu0 0.0
    %3360 = vmatprep.subr.mxu0 0.0
    %3361 = vmatpush1.msra.mxu0 0.0
    %3362 = vmatprep.subr.mxu0 0.0
    %3363 = vmatpush1.msra.mxu0 0.0
    %3364 = vmatprep.subr.mxu0 0.0
    %3365 = vmatpush1.msra.mxu0 0.0
    %3366 = vmatprep.subr.mxu0 0.0
    %3367 = vmatpush1.msra.mxu0 0.0
    %3368 = vmatprep.subr.mxu0 0.0
    %3369 = vmatpush1.msra.mxu0 0.0
    %3370 = vmatprep.subr.mxu0 0.0
    %3371 = vmatpush1.msra.mxu0 0.0
    %3372 = vmatprep.subr.mxu0 0.0
    %3373 = vmatpush1.msra.mxu0 0.0
    %3374 = vmatprep.subr.mxu0 0.0
    %3375 = vmatpush1.msra.mxu0 0.0
    %3376 = vmatprep.subr.mxu0 0.0
    %3377 = vmatpush1.msra.mxu0 0.0
    %3378 = vmatprep.subr.mxu0 0.0
    %3379 = vmatpush1.msra.mxu0 0.0
    %3380 = vmatprep.subr.mxu0 0.0
    %3381 = vmatpush1.msra.mxu0 0.0
    %3382 = vmatprep.subr.mxu0 0.0
    %3383 = vmatpush1.msra.mxu0 0.0
    %3384 = vmatprep.subr.mxu0 0.0
    %3385 = vmatpush1.msra.mxu0 0.0
    %3386 = vmatprep.subr.mxu0 0.0
    %3387 = vmatpush1.msra.mxu0 0.0
    %3388 = vmatprep.subr.mxu0 0.0
    %3389 = vmatpush1.msra.mxu0 0.0
    %3390 = vmatprep.subr.mxu0 0.0
    %3391 = vmatpush1.msra.mxu0 0.0
    %3392 = vmatprep.subr.mxu0 0.0
    %3393 = vmatpush1.msra.mxu0 0.0
    %3394 = vmatprep.subr.mxu0 0.0
    %3395 = vmatpush1.msra.mxu0 0.0
    %3396 = vmatprep.subr.mxu0 0.0
    %3397 = vmatpush1.msra.mxu0 0.0
    %3398 = vmatprep.subr.mxu0 0.0
    %3399 = vmatpush1.msra.mxu0 0.0
    %3400 = vmatprep.subr.mxu0 0.0
    %3401 = vmatpush1.msra.mxu0 0.0
    %3402 = vmatprep.subr.mxu0 0.0
    %3403 = vmatpush1.msra.mxu0 0.0
    %3404 = vmatprep.mubr.f32.mxu0 0.0
    %3405 = vmatmul.mubr.f32.gmra.mrb[0].mxu0 %v3332
    %v3406 = vpop.f32.mrb[0].mxu0
    %v3407 = vadd.f32 0.0, %v3406
    %v3408 = vpop.f32.mrb[0].mxu0
    %3409 = vmatprep.mubr.f32.mxu0 0.0
    %3410 = vmatmul.mubr.f32.gmra.mrb[0].mxu0 %v3335
    %v3411 = vpop.f32.mrb[0].mxu0
    %v3412 = vadd.f32 0.0, %v3411
    %v3413 = vpop.f32.mrb[0].mxu0
    %3414 = vdwg.mxu0
    %v3415 = vadd.f32 %v3325, %v3407
    %v3416 = vadd.f32 %v3326, %v3412
    %v3417 = vld [vmem:[%s3] sm:$0xff]
    %v3418 = vld [vmem:[%s3 + $0x8] sm:$0xff]
    %v3419 = vld [vmem:[%s3 + $0x10] sm:$0xff]
    %v3420 = vld [vmem:[%s3 + $0x18] sm:$0xf]
    %v3421 = vld [vmem:[%s504] sm:$0xff]
    %v3422 = vld [vmem:[%s504 + $0x8] sm:$0xff]
    %v3423 = vld [vmem:[%s504 + $0x10] sm:$0xff]
    %v3424 = vld [vmem:[%s504 + $0x18] sm:$0xf]
    %v3426 = vsel %vm64, %v3424, 0
    %3428 = vmatprep.subr.mxu0 0.0
    %3429 = vmatpush1.msra.mxu0 %v3421
    %3430 = vmatprep.subr.mxu0 0.0
    %3431 = vmatpush1.msra.mxu0 %v3422
    %3432 = vmatprep.subr.mxu0 0.0
    %3433 = vmatpush1.msra.mxu0 %v3423
    %3434 = vmatprep.subr.mxu0 0.0
    %3435 = vmatpush1.msra.mxu0 %v3426
    %3436 = vmatprep.subr.mxu0 0.0
    %3437 = vmatpush1.msra.mxu0 0.0
    %3438 = vmatprep.subr.mxu0 0.0
    %3439 = vmatpush1.msra.mxu0 0.0
    %3440 = vmatprep.subr.mxu0 0.0
    %3441 = vmatpush1.msra.mxu0 0.0
    %3442 = vmatprep.subr.mxu0 0.0
    %3443 = vmatpush1.msra.mxu0 0.0
    %3444 = vmatprep.subr.mxu0 0.0
    %3445 = vmatpush1.msra.mxu0 0.0
    %3446 = vmatprep.subr.mxu0 0.0
    %3447 = vmatpush1.msra.mxu0 0.0
    %3448 = vmatprep.subr.mxu0 0.0
    %3449 = vmatpush1.msra.mxu0 0.0
    %3450 = vmatprep.subr.mxu0 0.0
    %3451 = vmatpush1.msra.mxu0 0.0
    %3452 = vmatprep.subr.mxu0 0.0
    %3453 = vmatpush1.msra.mxu0 0.0
    %3454 = vmatprep.subr.mxu0 0.0
    %3455 = vmatpush1.msra.mxu0 0.0
    %3456 = vmatprep.subr.mxu0 0.0
    %3457 = vmatpush1.msra.mxu0 0.0
    %3458 = vmatprep.subr.mxu0 0.0
    %3459 = vmatpush1.msra.mxu0 0.0
    %3460 = vmatprep.subr.mxu0 0.0
    %3461 = vmatpush1.msra.mxu0 0.0
    %3462 = vmatprep.subr.mxu0 0.0
    %3463 = vmatpush1.msra.mxu0 0.0
    %3464 = vmatprep.subr.mxu0 0.0
    %3465 = vmatpush1.msra.mxu0 0.0
    %3466 = vmatprep.subr.mxu0 0.0
    %3467 = vmatpush1.msra.mxu0 0.0
    %3468 = vmatprep.subr.mxu0 0.0
    %3469 = vmatpush1.msra.mxu0 0.0
    %3470 = vmatprep.subr.mxu0 0.0
    %3471 = vmatpush1.msra.mxu0 0.0
    %3472 = vmatprep.subr.mxu0 0.0
    %3473 = vmatpush1.msra.mxu0 0.0
    %3474 = vmatprep.subr.mxu0 0.0
    %3475 = vmatpush1.msra.mxu0 0.0
    %3476 = vmatprep.subr.mxu0 0.0
    %3477 = vmatpush1.msra.mxu0 0.0
    %3478 = vmatprep.subr.mxu0 0.0
    %3479 = vmatpush1.msra.mxu0 0.0
    %3480 = vmatprep.subr.mxu0 0.0
    %3481 = vmatpush1.msra.mxu0 0.0
    %3482 = vmatprep.subr.mxu0 0.0
    %3483 = vmatpush1.msra.mxu0 0.0
    %3484 = vmatprep.subr.mxu0 0.0
    %3485 = vmatpush1.msra.mxu0 0.0
    %3486 = vmatprep.subr.mxu0 0.0
    %3487 = vmatpush1.msra.mxu0 0.0
    %3488 = vmatprep.subr.mxu0 0.0
    %3489 = vmatpush1.msra.mxu0 0.0
    %3490 = vmatprep.subr.mxu0 0.0
    %3491 = vmatpush1.msra.mxu0 0.0
    %3492 = vmatprep.mubr.f32.mxu0 0.0
    %3493 = vmatmul.mubr.f32.gmra.mrb[0].mxu0 %v2980
    %v3494 = vpop.f32.mrb[0].mxu0
    %v3495 = vadd.f32 0.0, %v3494
    %v3496 = vpop.f32.mrb[0].mxu0
    %3497 = vmatprep.mubr.f32.mxu0 0.0
    %3498 = vmatmul.mubr.f32.gmra.mrb[0].mxu0 %v2983
    %v3499 = vpop.f32.mrb[0].mxu0
    %v3500 = vadd.f32 0.0, %v3499
    %v3501 = vpop.f32.mrb[0].mxu0
    %3502 = vdwg.mxu0
    %v3504 = vsel %vm64, %v3420, 0
    %3506 = vmatprep.subr.mxu0 0.0
    %3507 = vmatpush1.msra.mxu0 %v3417
    %3508 = vmatprep.subr.mxu0 0.0
    %3509 = vmatpush1.msra.mxu0 %v3418
    %3510 = vmatprep.subr.mxu0 0.0
    %3511 = vmatpush1.msra.mxu0 %v3419
    %3512 = vmatprep.subr.mxu0 0.0
    %3513 = vmatpush1.msra.mxu0 %v3504
    %3514 = vmatprep.subr.mxu0 0.0
    %3515 = vmatpush1.msra.mxu0 0.0
    %3516 = vmatprep.subr.mxu0 0.0
    %3517 = vmatpush1.msra.mxu0 0.0
    %3518 = vmatprep.subr.mxu0 0.0
    %3519 = vmatpush1.msra.mxu0 0.0
    %3520 = vmatprep.subr.mxu0 0.0
    %3521 = vmatpush1.msra.mxu0 0.0
    %3522 = vmatprep.subr.mxu0 0.0
    %3523 = vmatpush1.msra.mxu0 0.0
    %3524 = vmatprep.subr.mxu0 0.0
    %3525 = vmatpush1.msra.mxu0 0.0
    %3526 = vmatprep.subr.mxu0 0.0
    %3527 = vmatpush1.msra.mxu0 0.0
    %3528 = vmatprep.subr.mxu0 0.0
    %3529 = vmatpush1.msra.mxu0 0.0
    %3530 = vmatprep.subr.mxu0 0.0
    %3531 = vmatpush1.msra.mxu0 0.0
    %3532 = vmatprep.subr.mxu0 0.0
    %3533 = vmatpush1.msra.mxu0 0.0
    %3534 = vmatprep.subr.mxu0 0.0
    %3535 = vmatpush1.msra.mxu0 0.0
    %3536 = vmatprep.subr.mxu0 0.0
    %3537 = vmatpush1.msra.mxu0 0.0
    %3538 = vmatprep.subr.mxu0 0.0
    %3539 = vmatpush1.msra.mxu0 0.0
    %3540 = vmatprep.subr.mxu0 0.0
    %3541 = vmatpush1.msra.mxu0 0.0
    %3542 = vmatprep.subr.mxu0 0.0
    %3543 = vmatpush1.msra.mxu0 0.0
    %3544 = vmatprep.subr.mxu0 0.0
    %3545 = vmatpush1.msra.mxu0 0.0
    %3546 = vmatprep.subr.mxu0 0.0
    %3547 = vmatpush1.msra.mxu0 0.0
    %3548 = vmatprep.subr.mxu0 0.0
    %3549 = vmatpush1.msra.mxu0 0.0
    %3550 = vmatprep.subr.mxu0 0.0
    %3551 = vmatpush1.msra.mxu0 0.0
    %3552 = vmatprep.subr.mxu0 0.0
    %3553 = vmatpush1.msra.mxu0 0.0
    %3554 = vmatprep.subr.mxu0 0.0
    %3555 = vmatpush1.msra.mxu0 0.0
    %3556 = vmatprep.subr.mxu0 0.0
    %3557 = vmatpush1.msra.mxu0 0.0
    %3558 = vmatprep.subr.mxu0 0.0
    %3559 = vmatpush1.msra.mxu0 0.0
    %3560 = vmatprep.subr.mxu0 0.0
    %3561 = vmatpush1.msra.mxu0 0.0
    %3562 = vmatprep.subr.mxu0 0.0
    %3563 = vmatpush1.msra.mxu0 0.0
    %3564 = vmatprep.subr.mxu0 0.0
    %3565 = vmatpush1.msra.mxu0 0.0
    %3566 = vmatprep.subr.mxu0 0.0
    %3567 = vmatpush1.msra.mxu0 0.0
    %3568 = vmatprep.subr.mxu0 0.0
    %3569 = vmatpush1.msra.mxu0 0.0
    %3570 = vmatprep.mubr.f32.mxu0 0.0
    %3571 = vmatmul.mubr.f32.gmra.mrb[0].mxu0 %v3064
    %v3572 = vpop.f32.mrb[0].mxu0
    %v3573 = vadd.f32 %v3495, %v3572
    %v3574 = vpop.f32.mrb[0].mxu0
    %3575 = vmatprep.mubr.f32.mxu0 0.0
    %3576 = vmatmul.mubr.f32.gmra.mrb[0].mxu0 %v3067
    %v3577 = vpop.f32.mrb[0].mxu0
    %v3578 = vadd.f32 %v3500, %v3577
    %v3579 = vpop.f32.mrb[0].mxu0
    %3580 = vdwg.mxu0
    %v3581 = vld [vmem:[%s665] sm:$0xff]
    %v3582 = vld [vmem:[%s665 + $0x8] sm:$0xff]
    %v3583 = vld [vmem:[%s665 + $0x10] sm:$0xff]
    %v3584 = vld [vmem:[%s665 + $0x18] sm:$0xf]
    %v3586 = vsel %vm64, %v3584, 0
    %3588 = vmatprep.subr.mxu0 0.0
    %3589 = vmatpush1.msra.mxu0 %v3581
    %3590 = vmatprep.subr.mxu0 0.0
    %3591 = vmatpush1.msra.mxu0 %v3582
    %3592 = vmatprep.subr.mxu0 0.0
    %3593 = vmatpush1.msra.mxu0 %v3583
    %3594 = vmatprep.subr.mxu0 0.0
    %3595 = vmatpush1.msra.mxu0 %v3586
    %3596 = vmatprep.subr.mxu0 0.0
    %3597 = vmatpush1.msra.mxu0 0.0
    %3598 = vmatprep.subr.mxu0 0.0
    %3599 = vmatpush1.msra.mxu0 0.0
    %3600 = vmatprep.subr.mxu0 0.0
    %3601 = vmatpush1.msra.mxu0 0.0
    %3602 = vmatprep.subr.mxu0 0.0
    %3603 = vmatpush1.msra.mxu0 0.0
    %3604 = vmatprep.subr.mxu0 0.0
    %3605 = vmatpush1.msra.mxu0 0.0
    %3606 = vmatprep.subr.mxu0 0.0
    %3607 = vmatpush1.msra.mxu0 0.0
    %3608 = vmatprep.subr.mxu0 0.0
    %3609 = vmatpush1.msra.mxu0 0.0
    %3610 = vmatprep.subr.mxu0 0.0
    %3611 = vmatpush1.msra.mxu0 0.0
    %3612 = vmatprep.subr.mxu0 0.0
    %3613 = vmatpush1.msra.mxu0 0.0
    %3614 = vmatprep.subr.mxu0 0.0
    %3615 = vmatpush1.msra.mxu0 0.0
    %3616 = vmatprep.subr.mxu0 0.0
    %3617 = vmatpush1.msra.mxu0 0.0
    %3618 = vmatprep.subr.mxu0 0.0
    %3619 = vmatpush1.msra.mxu0 0.0
    %3620 = vmatprep.subr.mxu0 0.0
    %3621 = vmatpush1.msra.mxu0 0.0
    %3622 = vmatprep.subr.mxu0 0.0
    %3623 = vmatpush1.msra.mxu0 0.0
    %3624 = vmatprep.subr.mxu0 0.0
    %3625 = vmatpush1.msra.mxu0 0.0
    %3626 = vmatprep.subr.mxu0 0.0
    %3627 = vmatpush1.msra.mxu0 0.0
    %3628 = vmatprep.subr.mxu0 0.0
    %3629 = vmatpush1.msra.mxu0 0.0
    %3630 = vmatprep.subr.mxu0 0.0
    %3631 = vmatpush1.msra.mxu0 0.0
    %3632 = vmatprep.subr.mxu0 0.0
    %3633 = vmatpush1.msra.mxu0 0.0
    %3634 = vmatprep.subr.mxu0 0.0
    %3635 = vmatpush1.msra.mxu0 0.0
    %3636 = vmatprep.subr.mxu0 0.0
    %3637 = vmatpush1.msra.mxu0 0.0
    %3638 = vmatprep.subr.mxu0 0.0
    %3639 = vmatpush1.msra.mxu0 0.0
    %3640 = vmatprep.subr.mxu0 0.0
    %3641 = vmatpush1.msra.mxu0 0.0
    %3642 = vmatprep.subr.mxu0 0.0
    %3643 = vmatpush1.msra.mxu0 0.0
    %3644 = vmatprep.subr.mxu0 0.0
    %3645 = vmatpush1.msra.mxu0 0.0
    %3646 = vmatprep.subr.mxu0 0.0
    %3647 = vmatpush1.msra.mxu0 0.0
    %3648 = vmatprep.subr.mxu0 0.0
    %3649 = vmatpush1.msra.mxu0 0.0
    %3650 = vmatprep.subr.mxu0 0.0
    %3651 = vmatpush1.msra.mxu0 0.0
    %3652 = vmatprep.mubr.f32.mxu0 0.0
    %3653 = vmatmul.mubr.f32.gmra.mrb[0].mxu0 %v3152
    %v3654 = vpop.f32.mrb[0].mxu0
    %v3655 = vadd.f32 0.0, %v3654
    %v3656 = vpop.f32.mrb[0].mxu0
    %3657 = vmatprep.mubr.f32.mxu0 0.0
    %3658 = vmatmul.mubr.f32.gmra.mrb[0].mxu0 %v3155
    %v3659 = vpop.f32.mrb[0].mxu0
    %v3660 = vadd.f32 0.0, %v3659
    %v3661 = vpop.f32.mrb[0].mxu0
    %3662 = vdwg.mxu0
    %v3663 = vadd.f32 %v3573, %v3655
    %v3664 = vadd.f32 %v3578, %v3660
    %v3665 = vld [vmem:[%s750] sm:$0xff]
    %v3666 = vld [vmem:[%s750 + $0x8] sm:$0xff]
    %v3667 = vld [vmem:[%s750 + $0x10] sm:$0xff]
    %v3668 = vld [vmem:[%s750 + $0x18] sm:$0xf]
    %v3670 = vsel %vm64, %v3668, 0
    %3672 = vmatprep.subr.mxu0 0.0
    %3673 = vmatpush1.msra.mxu0 %v3665
    %3674 = vmatprep.subr.mxu0 0.0
    %3675 = vmatpush1.msra.mxu0 %v3666
    %3676 = vmatprep.subr.mxu0 0.0
    %3677 = vmatpush1.msra.mxu0 %v3667
    %3678 = vmatprep.subr.mxu0 0.0
    %3679 = vmatpush1.msra.mxu0 %v3670
    %3680 = vmatprep.subr.mxu0 0.0
    %3681 = vmatpush1.msra.mxu0 0.0
    %3682 = vmatprep.subr.mxu0 0.0
    %3683 = vmatpush1.msra.mxu0 0.0
    %3684 = vmatprep.subr.mxu0 0.0
    %3685 = vmatpush1.msra.mxu0 0.0
    %3686 = vmatprep.subr.mxu0 0.0
    %3687 = vmatpush1.msra.mxu0 0.0
    %3688 = vmatprep.subr.mxu0 0.0
    %3689 = vmatpush1.msra.mxu0 0.0
    %3690 = vmatprep.subr.mxu0 0.0
    %3691 = vmatpush1.msra.mxu0 0.0
    %3692 = vmatprep.subr.mxu0 0.0
    %3693 = vmatpush1.msra.mxu0 0.0
    %3694 = vmatprep.subr.mxu0 0.0
    %3695 = vmatpush1.msra.mxu0 0.0
    %3696 = vmatprep.subr.mxu0 0.0
    %3697 = vmatpush1.msra.mxu0 0.0
    %3698 = vmatprep.subr.mxu0 0.0
    %3699 = vmatpush1.msra.mxu0 0.0
    %3700 = vmatprep.subr.mxu0 0.0
    %3701 = vmatpush1.msra.mxu0 0.0
    %3702 = vmatprep.subr.mxu0 0.0
    %3703 = vmatpush1.msra.mxu0 0.0
    %3704 = vmatprep.subr.mxu0 0.0
    %3705 = vmatpush1.msra.mxu0 0.0
    %3706 = vmatprep.subr.mxu0 0.0
    %3707 = vmatpush1.msra.mxu0 0.0
    %3708 = vmatprep.subr.mxu0 0.0
    %3709 = vmatpush1.msra.mxu0 0.0
    %3710 = vmatprep.subr.mxu0 0.0
    %3711 = vmatpush1.msra.mxu0 0.0
    %3712 = vmatprep.subr.mxu0 0.0
    %3713 = vmatpush1.msra.mxu0 0.0
    %3714 = vmatprep.subr.mxu0 0.0
    %3715 = vmatpush1.msra.mxu0 0.0
    %3716 = vmatprep.subr.mxu0 0.0
    %3717 = vmatpush1.msra.mxu0 0.0
    %3718 = vmatprep.subr.mxu0 0.0
    %3719 = vmatpush1.msra.mxu0 0.0
    %3720 = vmatprep.subr.mxu0 0.0
    %3721 = vmatpush1.msra.mxu0 0.0
    %3722 = vmatprep.subr.mxu0 0.0
    %3723 = vmatpush1.msra.mxu0 0.0
    %3724 = vmatprep.subr.mxu0 0.0
    %3725 = vmatpush1.msra.mxu0 0.0
    %3726 = vmatprep.subr.mxu0 0.0
    %3727 = vmatpush1.msra.mxu0 0.0
    %3728 = vmatprep.subr.mxu0 0.0
    %3729 = vmatpush1.msra.mxu0 0.0
    %3730 = vmatprep.subr.mxu0 0.0
    %3731 = vmatpush1.msra.mxu0 0.0
    %3732 = vmatprep.subr.mxu0 0.0
    %3733 = vmatpush1.msra.mxu0 0.0
    %3734 = vmatprep.subr.mxu0 0.0
    %3735 = vmatpush1.msra.mxu0 0.0
    %3736 = vmatprep.mubr.f32.mxu0 0.0
    %3737 = vmatmul.mubr.f32.gmra.mrb[0].mxu0 %v3242
    %v3738 = vpop.f32.mrb[0].mxu0
    %v3739 = vadd.f32 0.0, %v3738
    %v3740 = vpop.f32.mrb[0].mxu0
    %3741 = vmatprep.mubr.f32.mxu0 0.0
    %3742 = vmatmul.mubr.f32.gmra.mrb[0].mxu0 %v3245
    %v3743 = vpop.f32.mrb[0].mxu0
    %v3744 = vadd.f32 0.0, %v3743
    %v3745 = vpop.f32.mrb[0].mxu0
    %3746 = vdwg.mxu0
    %v3747 = vadd.f32 %v3663, %v3739
    %v3748 = vadd.f32 %v3664, %v3744
    %v3749 = vld [vmem:[%s835] sm:$0xff]
    %v3750 = vld [vmem:[%s835 + $0x8] sm:$0xff]
    %v3751 = vld [vmem:[%s835 + $0x10] sm:$0xff]
    %v3752 = vld [vmem:[%s835 + $0x18] sm:$0xf]
    %v3754 = vsel %vm64, %v3752, 0
    %3756 = vmatprep.subr.mxu0 0.0
    %3757 = vmatpush1.msra.mxu0 %v3749
    %3758 = vmatprep.subr.mxu0 0.0
    %3759 = vmatpush1.msra.mxu0 %v3750
    %3760 = vmatprep.subr.mxu0 0.0
    %3761 = vmatpush1.msra.mxu0 %v3751
    %3762 = vmatprep.subr.mxu0 0.0
    %3763 = vmatpush1.msra.mxu0 %v3754
    %3764 = vmatprep.subr.mxu0 0.0
    %3765 = vmatpush1.msra.mxu0 0.0
    %3766 = vmatprep.subr.mxu0 0.0
    %3767 = vmatpush1.msra.mxu0 0.0
    %3768 = vmatprep.subr.mxu0 0.0
    %3769 = vmatpush1.msra.mxu0 0.0
    %3770 = vmatprep.subr.mxu0 0.0
    %3771 = vmatpush1.msra.mxu0 0.0
    %3772 = vmatprep.subr.mxu0 0.0
    %3773 = vmatpush1.msra.mxu0 0.0
    %3774 = vmatprep.subr.mxu0 0.0
    %3775 = vmatpush1.msra.mxu0 0.0
    %3776 = vmatprep.subr.mxu0 0.0
    %3777 = vmatpush1.msra.mxu0 0.0
    %3778 = vmatprep.subr.mxu0 0.0
    %3779 = vmatpush1.msra.mxu0 0.0
    %3780 = vmatprep.subr.mxu0 0.0
    %3781 = vmatpush1.msra.mxu0 0.0
    %3782 = vmatprep.subr.mxu0 0.0
    %3783 = vmatpush1.msra.mxu0 0.0
    %3784 = vmatprep.subr.mxu0 0.0
    %3785 = vmatpush1.msra.mxu0 0.0
    %3786 = vmatprep.subr.mxu0 0.0
    %3787 = vmatpush1.msra.mxu0 0.0
    %3788 = vmatprep.subr.mxu0 0.0
    %3789 = vmatpush1.msra.mxu0 0.0
    %3790 = vmatprep.subr.mxu0 0.0
    %3791 = vmatpush1.msra.mxu0 0.0
    %3792 = vmatprep.subr.mxu0 0.0
    %3793 = vmatpush1.msra.mxu0 0.0
    %3794 = vmatprep.subr.mxu0 0.0
    %3795 = vmatpush1.msra.mxu0 0.0
    %3796 = vmatprep.subr.mxu0 0.0
    %3797 = vmatpush1.msra.mxu0 0.0
    %3798 = vmatprep.subr.mxu0 0.0
    %3799 = vmatpush1.msra.mxu0 0.0
    %3800 = vmatprep.subr.mxu0 0.0
    %3801 = vmatpush1.msra.mxu0 0.0
    %3802 = vmatprep.subr.mxu0 0.0
    %3803 = vmatpush1.msra.mxu0 0.0
    %3804 = vmatprep.subr.mxu0 0.0
    %3805 = vmatpush1.msra.mxu0 0.0
    %3806 = vmatprep.subr.mxu0 0.0
    %3807 = vmatpush1.msra.mxu0 0.0
    %3808 = vmatprep.subr.mxu0 0.0
    %3809 = vmatpush1.msra.mxu0 0.0
    %3810 = vmatprep.subr.mxu0 0.0
    %3811 = vmatpush1.msra.mxu0 0.0
    %3812 = vmatprep.subr.mxu0 0.0
    %3813 = vmatpush1.msra.mxu0 0.0
    %3814 = vmatprep.subr.mxu0 0.0
    %3815 = vmatpush1.msra.mxu0 0.0
    %3816 = vmatprep.subr.mxu0 0.0
    %3817 = vmatpush1.msra.mxu0 0.0
    %3818 = vmatprep.subr.mxu0 0.0
    %3819 = vmatpush1.msra.mxu0 0.0
    %3820 = vmatprep.mubr.f32.mxu0 0.0
    %3821 = vmatmul.mubr.f32.gmra.mrb[0].mxu0 %v3332
    %v3822 = vpop.f32.mrb[0].mxu0
    %v3823 = vadd.f32 0.0, %v3822
    %v3824 = vpop.f32.mrb[0].mxu0
    %3825 = vmatprep.mubr.f32.mxu0 0.0
    %3826 = vmatmul.mubr.f32.gmra.mrb[0].mxu0 %v3335
    %v3827 = vpop.f32.mrb[0].mxu0
    %v3828 = vadd.f32 0.0, %v3827
    %v3829 = vpop.f32.mrb[0].mxu0
    %3830 = vdwg.mxu0
    %v3831 = vadd.f32 %v3747, %v3823
    %v3832 = vadd.f32 %v3748, %v3828
    %3833 = vmatprep.subr.mxu0 0.0
    %3834 = vmatpush1.msra.mxu0 %v2975
    %3835 = vmatprep.subr.mxu0 0.0
    %3836 = vmatpush1.msra.mxu0 %v2976
    %3837 = vmatprep.subr.mxu0 0.0
    %3838 = vmatpush1.msra.mxu0 %v2977
    %3839 = vmatprep.subr.mxu0 0.0
    %3840 = vmatpush1.msra.mxu0 %v2986
    %3841 = vmatprep.subr.mxu0 0.0
    %3842 = vmatpush1.msra.mxu0 0.0
    %3843 = vmatprep.subr.mxu0 0.0
    %3844 = vmatpush1.msra.mxu0 0.0
    %3845 = vmatprep.subr.mxu0 0.0
    %3846 = vmatpush1.msra.mxu0 0.0
    %3847 = vmatprep.subr.mxu0 0.0
    %3848 = vmatpush1.msra.mxu0 0.0
    %3849 = vmatprep.subr.mxu0 0.0
    %3850 = vmatpush1.msra.mxu0 0.0
    %3851 = vmatprep.subr.mxu0 0.0
    %3852 = vmatpush1.msra.mxu0 0.0
    %3853 = vmatprep.subr.mxu0 0.0
    %3854 = vmatpush1.msra.mxu0 0.0
    %3855 = vmatprep.subr.mxu0 0.0
    %3856 = vmatpush1.msra.mxu0 0.0
    %3857 = vmatprep.subr.mxu0 0.0
    %3858 = vmatpush1.msra.mxu0 0.0
    %3859 = vmatprep.subr.mxu0 0.0
    %3860 = vmatpush1.msra.mxu0 0.0
    %3861 = vmatprep.subr.mxu0 0.0
    %3862 = vmatpush1.msra.mxu0 0.0
    %3863 = vmatprep.subr.mxu0 0.0
    %3864 = vmatpush1.msra.mxu0 0.0
    %3865 = vmatprep.subr.mxu0 0.0
    %3866 = vmatpush1.msra.mxu0 0.0
    %3867 = vmatprep.subr.mxu0 0.0
    %3868 = vmatpush1.msra.mxu0 0.0
    %3869 = vmatprep.subr.mxu0 0.0
    %3870 = vmatpush1.msra.mxu0 0.0
    %3871 = vmatprep.subr.mxu0 0.0
    %3872 = vmatpush1.msra.mxu0 0.0
    %3873 = vmatprep.subr.mxu0 0.0
    %3874 = vmatpush1.msra.mxu0 0.0
    %3875 = vmatprep.subr.mxu0 0.0
    %3876 = vmatpush1.msra.mxu0 0.0
    %3877 = vmatprep.subr.mxu0 0.0
    %3878 = vmatpush1.msra.mxu0 0.0
    %3879 = vmatprep.subr.mxu0 0.0
    %3880 = vmatpush1.msra.mxu0 0.0
    %3881 = vmatprep.subr.mxu0 0.0
    %3882 = vmatpush1.msra.mxu0 0.0
    %3883 = vmatprep.subr.mxu0 0.0
    %3884 = vmatpush1.msra.mxu0 0.0
    %3885 = vmatprep.subr.mxu0 0.0
    %3886 = vmatpush1.msra.mxu0 0.0
    %3887 = vmatprep.subr.mxu0 0.0
    %3888 = vmatpush1.msra.mxu0 0.0
    %3889 = vmatprep.subr.mxu0 0.0
    %3890 = vmatpush1.msra.mxu0 0.0
    %3891 = vmatprep.subr.mxu0 0.0
    %3892 = vmatpush1.msra.mxu0 0.0
    %3893 = vmatprep.subr.mxu0 0.0
    %3894 = vmatpush1.msra.mxu0 0.0
    %3895 = vmatprep.subr.mxu0 0.0
    %3896 = vmatpush1.msra.mxu0 0.0
    %3897 = vmatprep.mubr.f32.mxu0 0.0
    %3898 = vmatmul.mubr.f32.gmra.mrb[0].mxu0 %v3152
    %v3899 = vpop.f32.mrb[0].mxu0
    %v3900 = vadd.f32 0.0, %v3899
    %v3901 = vpop.f32.mrb[0].mxu0
    %3902 = vmatprep.mubr.f32.mxu0 0.0
    %3903 = vmatmul.mubr.f32.gmra.mrb[0].mxu0 %v3155
    %v3904 = vpop.f32.mrb[0].mxu0
    %v3905 = vadd.f32 0.0, %v3904
    %v3906 = vpop.f32.mrb[0].mxu0
    %3907 = vdwg.mxu0
    %3908 = vmatprep.subr.mxu0 0.0
    %3909 = vmatpush1.msra.mxu0 %v2971
    %3910 = vmatprep.subr.mxu0 0.0
    %3911 = vmatpush1.msra.mxu0 %v2972
    %3912 = vmatprep.subr.mxu0 0.0
    %3913 = vmatpush1.msra.mxu0 %v2973
    %3914 = vmatprep.subr.mxu0 0.0
    %3915 = vmatpush1.msra.mxu0 %v3070
    %3916 = vmatprep.subr.mxu0 0.0
    %3917 = vmatpush1.msra.mxu0 0.0
    %3918 = vmatprep.subr.mxu0 0.0
    %3919 = vmatpush1.msra.mxu0 0.0
    %3920 = vmatprep.subr.mxu0 0.0
    %3921 = vmatpush1.msra.mxu0 0.0
    %3922 = vmatprep.subr.mxu0 0.0
    %3923 = vmatpush1.msra.mxu0 0.0
    %3924 = vmatprep.subr.mxu0 0.0
    %3925 = vmatpush1.msra.mxu0 0.0
    %3926 = vmatprep.subr.mxu0 0.0
    %3927 = vmatpush1.msra.mxu0 0.0
    %3928 = vmatprep.subr.mxu0 0.0
    %3929 = vmatpush1.msra.mxu0 0.0
    %3930 = vmatprep.subr.mxu0 0.0
    %3931 = vmatpush1.msra.mxu0 0.0
    %3932 = vmatprep.subr.mxu0 0.0
    %3933 = vmatpush1.msra.mxu0 0.0
    %3934 = vmatprep.subr.mxu0 0.0
    %3935 = vmatpush1.msra.mxu0 0.0
    %3936 = vmatprep.subr.mxu0 0.0
    %3937 = vmatpush1.msra.mxu0 0.0
    %3938 = vmatprep.subr.mxu0 0.0
    %3939 = vmatpush1.msra.mxu0 0.0
    %3940 = vmatprep.subr.mxu0 0.0
    %3941 = vmatpush1.msra.mxu0 0.0
    %3942 = vmatprep.subr.mxu0 0.0
    %3943 = vmatpush1.msra.mxu0 0.0
    %3944 = vmatprep.subr.mxu0 0.0
    %3945 = vmatpush1.msra.mxu0 0.0
    %3946 = vmatprep.subr.mxu0 0.0
    %3947 = vmatpush1.msra.mxu0 0.0
    %3948 = vmatprep.subr.mxu0 0.0
    %3949 = vmatpush1.msra.mxu0 0.0
    %3950 = vmatprep.subr.mxu0 0.0
    %3951 = vmatpush1.msra.mxu0 0.0
    %3952 = vmatprep.subr.mxu0 0.0
    %3953 = vmatpush1.msra.mxu0 0.0
    %3954 = vmatprep.subr.mxu0 0.0
    %3955 = vmatpush1.msra.mxu0 0.0
    %3956 = vmatprep.subr.mxu0 0.0
    %3957 = vmatpush1.msra.mxu0 0.0
    %3958 = vmatprep.subr.mxu0 0.0
    %3959 = vmatpush1.msra.mxu0 0.0
    %3960 = vmatprep.subr.mxu0 0.0
    %3961 = vmatpush1.msra.mxu0 0.0
    %3962 = vmatprep.subr.mxu0 0.0
    %3963 = vmatpush1.msra.mxu0 0.0
    %3964 = vmatprep.subr.mxu0 0.0
    %3965 = vmatpush1.msra.mxu0 0.0
    %3966 = vmatprep.subr.mxu0 0.0
    %3967 = vmatpush1.msra.mxu0 0.0
    %3968 = vmatprep.subr.mxu0 0.0
    %3969 = vmatpush1.msra.mxu0 0.0
    %3970 = vmatprep.subr.mxu0 0.0
    %3971 = vmatpush1.msra.mxu0 0.0
    %3972 = vmatprep.mubr.f32.mxu0 0.0
    %3973 = vmatmul.mubr.f32.gmra.mrb[0].mxu0 %v2980
    %v3974 = vpop.f32.mrb[0].mxu0
    %v3975 = vadd.f32 %v3900, %v3974
    %v3976 = vpop.f32.mrb[0].mxu0
    %3977 = vmatprep.mubr.f32.mxu0 0.0
    %3978 = vmatmul.mubr.f32.gmra.mrb[0].mxu0 %v2983
    %v3979 = vpop.f32.mrb[0].mxu0
    %v3980 = vadd.f32 %v3905, %v3979
    %v3981 = vpop.f32.mrb[0].mxu0
    %3982 = vdwg.mxu0
    %3983 = vmatprep.subr.mxu0 0.0
    %3984 = vmatpush1.msra.mxu0 %v3147
    %3985 = vmatprep.subr.mxu0 0.0
    %3986 = vmatpush1.msra.mxu0 %v3148
    %3987 = vmatprep.subr.mxu0 0.0
    %3988 = vmatpush1.msra.mxu0 %v3149
    %3989 = vmatprep.subr.mxu0 0.0
    %3990 = vmatpush1.msra.mxu0 %v3158
    %3991 = vmatprep.subr.mxu0 0.0
    %3992 = vmatpush1.msra.mxu0 0.0
    %3993 = vmatprep.subr.mxu0 0.0
    %3994 = vmatpush1.msra.mxu0 0.0
    %3995 = vmatprep.subr.mxu0 0.0
    %3996 = vmatpush1.msra.mxu0 0.0
    %3997 = vmatprep.subr.mxu0 0.0
    %3998 = vmatpush1.msra.mxu0 0.0
    %3999 = vmatprep.subr.mxu0 0.0
    %4000 = vmatpush1.msra.mxu0 0.0
    %4001 = vmatprep.subr.mxu0 0.0
    %4002 = vmatpush1.msra.mxu0 0.0
    %4003 = vmatprep.subr.mxu0 0.0
    %4004 = vmatpush1.msra.mxu0 0.0
    %4005 = vmatprep.subr.mxu0 0.0
    %4006 = vmatpush1.msra.mxu0 0.0
    %4007 = vmatprep.subr.mxu0 0.0
    %4008 = vmatpush1.msra.mxu0 0.0
    %4009 = vmatprep.subr.mxu0 0.0
    %4010 = vmatpush1.msra.mxu0 0.0
    %4011 = vmatprep.subr.mxu0 0.0
    %4012 = vmatpush1.msra.mxu0 0.0
    %4013 = vmatprep.subr.mxu0 0.0
    %4014 = vmatpush1.msra.mxu0 0.0
    %4015 = vmatprep.subr.mxu0 0.0
    %4016 = vmatpush1.msra.mxu0 0.0
    %4017 = vmatprep.subr.mxu0 0.0
    %4018 = vmatpush1.msra.mxu0 0.0
    %4019 = vmatprep.subr.mxu0 0.0
    %4020 = vmatpush1.msra.mxu0 0.0
    %4021 = vmatprep.subr.mxu0 0.0
    %4022 = vmatpush1.msra.mxu0 0.0
    %4023 = vmatprep.subr.mxu0 0.0
    %4024 = vmatpush1.msra.mxu0 0.0
    %4025 = vmatprep.subr.mxu0 0.0
    %4026 = vmatpush1.msra.mxu0 0.0
    %4027 = vmatprep.subr.mxu0 0.0
    %4028 = vmatpush1.msra.mxu0 0.0
    %4029 = vmatprep.subr.mxu0 0.0
    %4030 = vmatpush1.msra.mxu0 0.0
    %4031 = vmatprep.subr.mxu0 0.0
    %4032 = vmatpush1.msra.mxu0 0.0
    %4033 = vmatprep.subr.mxu0 0.0
    %4034 = vmatpush1.msra.mxu0 0.0
    %4035 = vmatprep.subr.mxu0 0.0
    %4036 = vmatpush1.msra.mxu0 0.0
    %4037 = vmatprep.subr.mxu0 0.0
    %4038 = vmatpush1.msra.mxu0 0.0
    %4039 = vmatprep.subr.mxu0 0.0
    %4040 = vmatpush1.msra.mxu0 0.0
    %4041 = vmatprep.subr.mxu0 0.0
    %4042 = vmatpush1.msra.mxu0 0.0
    %4043 = vmatprep.subr.mxu0 0.0
    %4044 = vmatpush1.msra.mxu0 0.0
    %4045 = vmatprep.subr.mxu0 0.0
    %4046 = vmatpush1.msra.mxu0 0.0
    %4047 = vmatprep.mubr.f32.mxu0 0.0
    %4048 = vmatmul.mubr.f32.gmra.mrb[0].mxu0 %v3242
    %v4049 = vpop.f32.mrb[0].mxu0
    %v4050 = vadd.f32 0.0, %v4049
    %v4051 = vpop.f32.mrb[0].mxu0
    %4052 = vmatprep.mubr.f32.mxu0 0.0
    %4053 = vmatmul.mubr.f32.gmra.mrb[0].mxu0 %v3245
    %v4054 = vpop.f32.mrb[0].mxu0
    %v4055 = vadd.f32 0.0, %v4054
    %v4056 = vpop.f32.mrb[0].mxu0
    %4057 = vdwg.mxu0
    %v4058 = vadd.f32 %v3975, %v4050
    %v4059 = vadd.f32 %v3980, %v4055
    %4060 = vmatprep.subr.mxu0 0.0
    %4061 = vmatpush1.msra.mxu0 %v3237
    %4062 = vmatprep.subr.mxu0 0.0
    %4063 = vmatpush1.msra.mxu0 %v3238
    %4064 = vmatprep.subr.mxu0 0.0
    %4065 = vmatpush1.msra.mxu0 %v3239
    %4066 = vmatprep.subr.mxu0 0.0
    %4067 = vmatpush1.msra.mxu0 %v3248
    %4068 = vmatprep.subr.mxu0 0.0
    %4069 = vmatpush1.msra.mxu0 0.0
    %4070 = vmatprep.subr.mxu0 0.0
    %4071 = vmatpush1.msra.mxu0 0.0
    %4072 = vmatprep.subr.mxu0 0.0
    %4073 = vmatpush1.msra.mxu0 0.0
    %4074 = vmatprep.subr.mxu0 0.0
    %4075 = vmatpush1.msra.mxu0 0.0
    %4076 = vmatprep.subr.mxu0 0.0
    %4077 = vmatpush1.msra.mxu0 0.0
    %4078 = vmatprep.subr.mxu0 0.0
    %4079 = vmatpush1.msra.mxu0 0.0
    %4080 = vmatprep.subr.mxu0 0.0
    %4081 = vmatpush1.msra.mxu0 0.0
    %4082 = vmatprep.subr.mxu0 0.0
    %4083 = vmatpush1.msra.mxu0 0.0
    %4084 = vmatprep.subr.mxu0 0.0
    %4085 = vmatpush1.msra.mxu0 0.0
    %4086 = vmatprep.subr.mxu0 0.0
    %4087 = vmatpush1.msra.mxu0 0.0
    %4088 = vmatprep.subr.mxu0 0.0
    %4089 = vmatpush1.msra.mxu0 0.0
    %4090 = vmatprep.subr.mxu0 0.0
    %4091 = vmatpush1.msra.mxu0 0.0
    %4092 = vmatprep.subr.mxu0 0.0
    %4093 = vmatpush1.msra.mxu0 0.0
    %4094 = vmatprep.subr.mxu0 0.0
    %4095 = vmatpush1.msra.mxu0 0.0
    %4096 = vmatprep.subr.mxu0 0.0
    %4097 = vmatpush1.msra.mxu0 0.0
    %4098 = vmatprep.subr.mxu0 0.0
    %4099 = vmatpush1.msra.mxu0 0.0
    %4100 = vmatprep.subr.mxu0 0.0
    %4101 = vmatpush1.msra.mxu0 0.0
    %4102 = vmatprep.subr.mxu0 0.0
    %4103 = vmatpush1.msra.mxu0 0.0
    %4104 = vmatprep.subr.mxu0 0.0
    %4105 = vmatpush1.msra.mxu0 0.0
    %4106 = vmatprep.subr.mxu0 0.0
    %4107 = vmatpush1.msra.mxu0 0.0
    %4108 = vmatprep.subr.mxu0 0.0
    %4109 = vmatpush1.msra.mxu0 0.0
    %4110 = vmatprep.subr.mxu0 0.0
    %4111 = vmatpush1.msra.mxu0 0.0
    %4112 = vmatprep.subr.mxu0 0.0
    %4113 = vmatpush1.msra.mxu0 0.0
    %4114 = vmatprep.subr.mxu0 0.0
    %4115 = vmatpush1.msra.mxu0 0.0
    %4116 = vmatprep.subr.mxu0 0.0
    %4117 = vmatpush1.msra.mxu0 0.0
    %4118 = vmatprep.subr.mxu0 0.0
    %4119 = vmatpush1.msra.mxu0 0.0
    %4120 = vmatprep.subr.mxu0 0.0
    %4121 = vmatpush1.msra.mxu0 0.0
    %4122 = vmatprep.subr.mxu0 0.0
    %4123 = vmatpush1.msra.mxu0 0.0
    %4124 = vmatprep.mubr.f32.mxu0 0.0
    %4125 = vmatmul.mubr.f32.gmra.mrb[0].mxu0 %v3332
    %v4126 = vpop.f32.mrb[0].mxu0
    %v4127 = vadd.f32 0.0, %v4126
    %v4128 = vpop.f32.mrb[0].mxu0
    %4129 = vmatprep.mubr.f32.mxu0 0.0
    %4130 = vmatmul.mubr.f32.gmra.mrb[0].mxu0 %v3335
    %v4131 = vpop.f32.mrb[0].mxu0
    %v4132 = vadd.f32 0.0, %v4131
    %v4133 = vpop.f32.mrb[0].mxu0
    %4134 = vdwg.mxu0
    %v4135 = vadd.f32 %v4058, %v4127
    %v4136 = vadd.f32 %v4059, %v4132
    %v4138 = vsel %vm57, %v2969, 0
    %v4141 = vsel %vm57, %v2970, 0
    %4143 = vmatprep.subr.mxu0 0.0
    %4144 = vmatpush1.msra.mxu0 %v3327
    %4145 = vmatprep.subr.mxu0 0.0
    %4146 = vmatpush1.msra.mxu0 %v3328
    %4147 = vmatprep.subr.mxu0 0.0
    %4148 = vmatpush1.msra.mxu0 %v3329
    %4149 = vmatprep.subr.mxu0 0.0
    %4150 = vmatpush1.msra.mxu0 %v3338
    %4151 = vmatprep.subr.mxu0 0.0
    %4152 = vmatpush1.msra.mxu0 0.0
    %4153 = vmatprep.subr.mxu0 0.0
    %4154 = vmatpush1.msra.mxu0 0.0
    %4155 = vmatprep.subr.mxu0 0.0
    %4156 = vmatpush1.msra.mxu0 0.0
    %4157 = vmatprep.subr.mxu0 0.0
    %4158 = vmatpush1.msra.mxu0 0.0
    %4159 = vmatprep.subr.mxu0 0.0
    %4160 = vmatpush1.msra.mxu0 0.0
    %4161 = vmatprep.subr.mxu0 0.0
    %4162 = vmatpush1.msra.mxu0 0.0
    %4163 = vmatprep.subr.mxu0 0.0
    %4164 = vmatpush1.msra.mxu0 0.0
    %4165 = vmatprep.subr.mxu0 0.0
    %4166 = vmatpush1.msra.mxu0 0.0
    %4167 = vmatprep.subr.mxu0 0.0
    %4168 = vmatpush1.msra.mxu0 0.0
    %4169 = vmatprep.subr.mxu0 0.0
    %4170 = vmatpush1.msra.mxu0 0.0
    %4171 = vmatprep.subr.mxu0 0.0
    %4172 = vmatpush1.msra.mxu0 0.0
    %4173 = vmatprep.subr.mxu0 0.0
    %4174 = vmatpush1.msra.mxu0 0.0
    %4175 = vmatprep.subr.mxu0 0.0
    %4176 = vmatpush1.msra.mxu0 0.0
    %4177 = vmatprep.subr.mxu0 0.0
    %4178 = vmatpush1.msra.mxu0 0.0
    %4179 = vmatprep.subr.mxu0 0.0
    %4180 = vmatpush1.msra.mxu0 0.0
    %4181 = vmatprep.subr.mxu0 0.0
    %4182 = vmatpush1.msra.mxu0 0.0
    %4183 = vmatprep.subr.mxu0 0.0
    %4184 = vmatpush1.msra.mxu0 0.0
    %4185 = vmatprep.subr.mxu0 0.0
    %4186 = vmatpush1.msra.mxu0 0.0
    %4187 = vmatprep.subr.mxu0 0.0
    %4188 = vmatpush1.msra.mxu0 0.0
    %4189 = vmatprep.subr.mxu0 0.0
    %4190 = vmatpush1.msra.mxu0 0.0
    %4191 = vmatprep.subr.mxu0 0.0
    %4192 = vmatpush1.msra.mxu0 0.0
    %4193 = vmatprep.subr.mxu0 0.0
    %4194 = vmatpush1.msra.mxu0 0.0
    %4195 = vmatprep.subr.mxu0 0.0
    %4196 = vmatpush1.msra.mxu0 0.0
    %4197 = vmatprep.subr.mxu0 0.0
    %4198 = vmatpush1.msra.mxu0 0.0
    %4199 = vmatprep.subr.mxu0 0.0
    %4200 = vmatpush1.msra.mxu0 0.0
    %4201 = vmatprep.subr.mxu0 0.0
    %4202 = vmatpush1.msra.mxu0 0.0
    %4203 = vmatprep.subr.mxu0 0.0
    %4204 = vmatpush1.msra.mxu0 0.0
    %4205 = vmatprep.subr.mxu0 0.0
    %4206 = vmatpush1.msra.mxu0 0.0
    %4207 = vmatprep.mubr.f32.mxu0 0.0
    %4208 = vmatmul.mubr.f32.gmra.mrb[0].mxu0 %v4138
    %v4209 = vpop.f32.mrb[0].mxu0
    %v4210 = vadd.f32 0.0, %v4209
    %v4211 = vpop.f32.mrb[0].mxu0
    %4212 = vmatprep.mubr.f32.mxu0 0.0
    %4213 = vmatmul.mubr.f32.gmra.mrb[0].mxu0 %v4141
    %v4214 = vpop.f32.mrb[0].mxu0
    %v4215 = vadd.f32 0.0, %v4214
    %v4216 = vpop.f32.mrb[0].mxu0
    %4217 = vdwg.mxu0
    %v4218 = vadd.f32 %v4135, %v4210
    %v4219 = vadd.f32 %v4136, %v4215
    %4220 = vmatprep.subr.mxu0 0.0
    %4221 = vmatpush1.msra.mxu0 %v3421
    %4222 = vmatprep.subr.mxu0 0.0
    %4223 = vmatpush1.msra.mxu0 %v3422
    %4224 = vmatprep.subr.mxu0 0.0
    %4225 = vmatpush1.msra.mxu0 %v3423
    %4226 = vmatprep.subr.mxu0 0.0
    %4227 = vmatpush1.msra.mxu0 %v3426
    %4228 = vmatprep.subr.mxu0 0.0
    %4229 = vmatpush1.msra.mxu0 0.0
    %4230 = vmatprep.subr.mxu0 0.0
    %4231 = vmatpush1.msra.mxu0 0.0
    %4232 = vmatprep.subr.mxu0 0.0
    %4233 = vmatpush1.msra.mxu0 0.0
    %4234 = vmatprep.subr.mxu0 0.0
    %4235 = vmatpush1.msra.mxu0 0.0
    %4236 = vmatprep.subr.mxu0 0.0
    %4237 = vmatpush1.msra.mxu0 0.0
    %4238 = vmatprep.subr.mxu0 0.0
    %4239 = vmatpush1.msra.mxu0 0.0
    %4240 = vmatprep.subr.mxu0 0.0
    %4241 = vmatpush1.msra.mxu0 0.0
    %4242 = vmatprep.subr.mxu0 0.0
    %4243 = vmatpush1.msra.mxu0 0.0
    %4244 = vmatprep.subr.mxu0 0.0
    %4245 = vmatpush1.msra.mxu0 0.0
    %4246 = vmatprep.subr.mxu0 0.0
    %4247 = vmatpush1.msra.mxu0 0.0
    %4248 = vmatprep.subr.mxu0 0.0
    %4249 = vmatpush1.msra.mxu0 0.0
    %4250 = vmatprep.subr.mxu0 0.0
    %4251 = vmatpush1.msra.mxu0 0.0
    %4252 = vmatprep.subr.mxu0 0.0
    %4253 = vmatpush1.msra.mxu0 0.0
    %4254 = vmatprep.subr.mxu0 0.0
    %4255 = vmatpush1.msra.mxu0 0.0
    %4256 = vmatprep.subr.mxu0 0.0
    %4257 = vmatpush1.msra.mxu0 0.0
    %4258 = vmatprep.subr.mxu0 0.0
    %4259 = vmatpush1.msra.mxu0 0.0
    %4260 = vmatprep.subr.mxu0 0.0
    %4261 = vmatpush1.msra.mxu0 0.0
    %4262 = vmatprep.subr.mxu0 0.0
    %4263 = vmatpush1.msra.mxu0 0.0
    %4264 = vmatprep.subr.mxu0 0.0
    %4265 = vmatpush1.msra.mxu0 0.0
    %4266 = vmatprep.subr.mxu0 0.0
    %4267 = vmatpush1.msra.mxu0 0.0
    %4268 = vmatprep.subr.mxu0 0.0
    %4269 = vmatpush1.msra.mxu0 0.0
    %4270 = vmatprep.subr.mxu0 0.0
    %4271 = vmatpush1.msra.mxu0 0.0
    %4272 = vmatprep.subr.mxu0 0.0
    %4273 = vmatpush1.msra.mxu0 0.0
    %4274 = vmatprep.subr.mxu0 0.0
    %4275 = vmatpush1.msra.mxu0 0.0
    %4276 = vmatprep.subr.mxu0 0.0
    %4277 = vmatpush1.msra.mxu0 0.0
    %4278 = vmatprep.subr.mxu0 0.0
    %4279 = vmatpush1.msra.mxu0 0.0
    %4280 = vmatprep.subr.mxu0 0.0
    %4281 = vmatpush1.msra.mxu0 0.0
    %4282 = vmatprep.subr.mxu0 0.0
    %4283 = vmatpush1.msra.mxu0 0.0
    %4284 = vmatprep.mubr.f32.mxu0 0.0
    %4285 = vmatmul.mubr.f32.gmra.mrb[0].mxu0 %v3152
    %v4286 = vpop.f32.mrb[0].mxu0
    %v4287 = vadd.f32 0.0, %v4286
    %v4288 = vpop.f32.mrb[0].mxu0
    %4289 = vmatprep.mubr.f32.mxu0 0.0
    %4290 = vmatmul.mubr.f32.gmra.mrb[0].mxu0 %v3155
    %v4291 = vpop.f32.mrb[0].mxu0
    %v4292 = vadd.f32 0.0, %v4291
    %v4293 = vpop.f32.mrb[0].mxu0
    %4294 = vdwg.mxu0
    %4295 = vmatprep.subr.mxu0 0.0
    %4296 = vmatpush1.msra.mxu0 %v3417
    %4297 = vmatprep.subr.mxu0 0.0
    %4298 = vmatpush1.msra.mxu0 %v3418
    %4299 = vmatprep.subr.mxu0 0.0
    %4300 = vmatpush1.msra.mxu0 %v3419
    %4301 = vmatprep.subr.mxu0 0.0
    %4302 = vmatpush1.msra.mxu0 %v3504
    %4303 = vmatprep.subr.mxu0 0.0
    %4304 = vmatpush1.msra.mxu0 0.0
    %4305 = vmatprep.subr.mxu0 0.0
    %4306 = vmatpush1.msra.mxu0 0.0
    %4307 = vmatprep.subr.mxu0 0.0
    %4308 = vmatpush1.msra.mxu0 0.0
    %4309 = vmatprep.subr.mxu0 0.0
    %4310 = vmatpush1.msra.mxu0 0.0
    %4311 = vmatprep.subr.mxu0 0.0
    %4312 = vmatpush1.msra.mxu0 0.0
    %4313 = vmatprep.subr.mxu0 0.0
    %4314 = vmatpush1.msra.mxu0 0.0
    %4315 = vmatprep.subr.mxu0 0.0
    %4316 = vmatpush1.msra.mxu0 0.0
    %4317 = vmatprep.subr.mxu0 0.0
    %4318 = vmatpush1.msra.mxu0 0.0
    %4319 = vmatprep.subr.mxu0 0.0
    %4320 = vmatpush1.msra.mxu0 0.0
    %4321 = vmatprep.subr.mxu0 0.0
    %4322 = vmatpush1.msra.mxu0 0.0
    %4323 = vmatprep.subr.mxu0 0.0
    %4324 = vmatpush1.msra.mxu0 0.0
    %4325 = vmatprep.subr.mxu0 0.0
    %4326 = vmatpush1.msra.mxu0 0.0
    %4327 = vmatprep.subr.mxu0 0.0
    %4328 = vmatpush1.msra.mxu0 0.0
    %4329 = vmatprep.subr.mxu0 0.0
    %4330 = vmatpush1.msra.mxu0 0.0
    %4331 = vmatprep.subr.mxu0 0.0
    %4332 = vmatpush1.msra.mxu0 0.0
    %4333 = vmatprep.subr.mxu0 0.0
    %4334 = vmatpush1.msra.mxu0 0.0
    %4335 = vmatprep.subr.mxu0 0.0
    %4336 = vmatpush1.msra.mxu0 0.0
    %4337 = vmatprep.subr.mxu0 0.0
    %4338 = vmatpush1.msra.mxu0 0.0
    %4339 = vmatprep.subr.mxu0 0.0
    %4340 = vmatpush1.msra.mxu0 0.0
    %4341 = vmatprep.subr.mxu0 0.0
    %4342 = vmatpush1.msra.mxu0 0.0
    %4343 = vmatprep.subr.mxu0 0.0
    %4344 = vmatpush1.msra.mxu0 0.0
    %4345 = vmatprep.subr.mxu0 0.0
    %4346 = vmatpush1.msra.mxu0 0.0
    %4347 = vmatprep.subr.mxu0 0.0
    %4348 = vmatpush1.msra.mxu0 0.0
    %4349 = vmatprep.subr.mxu0 0.0
    %4350 = vmatpush1.msra.mxu0 0.0
    %4351 = vmatprep.subr.mxu0 0.0
    %4352 = vmatpush1.msra.mxu0 0.0
    %4353 = vmatprep.subr.mxu0 0.0
    %4354 = vmatpush1.msra.mxu0 0.0
    %4355 = vmatprep.subr.mxu0 0.0
    %4356 = vmatpush1.msra.mxu0 0.0
    %4357 = vmatprep.subr.mxu0 0.0
    %4358 = vmatpush1.msra.mxu0 0.0
    %4359 = vmatprep.mubr.f32.mxu0 0.0
    %4360 = vmatmul.mubr.f32.gmra.mrb[0].mxu0 %v2980
    %v4361 = vpop.f32.mrb[0].mxu0
    %v4362 = vadd.f32 %v4287, %v4361
    %v4363 = vpop.f32.mrb[0].mxu0
    %4364 = vmatprep.mubr.f32.mxu0 0.0
    %4365 = vmatmul.mubr.f32.gmra.mrb[0].mxu0 %v2983
    %v4366 = vpop.f32.mrb[0].mxu0
    %v4367 = vadd.f32 %v4292, %v4366
    %v4368 = vpop.f32.mrb[0].mxu0
    %4369 = vdwg.mxu0
    %4370 = vmatprep.subr.mxu0 0.0
    %4371 = vmatpush1.msra.mxu0 %v3581
    %4372 = vmatprep.subr.mxu0 0.0
    %4373 = vmatpush1.msra.mxu0 %v3582
    %4374 = vmatprep.subr.mxu0 0.0
    %4375 = vmatpush1.msra.mxu0 %v3583
    %4376 = vmatprep.subr.mxu0 0.0
    %4377 = vmatpush1.msra.mxu0 %v3586
    %4378 = vmatprep.subr.mxu0 0.0
    %4379 = vmatpush1.msra.mxu0 0.0
    %4380 = vmatprep.subr.mxu0 0.0
    %4381 = vmatpush1.msra.mxu0 0.0
    %4382 = vmatprep.subr.mxu0 0.0
    %4383 = vmatpush1.msra.mxu0 0.0
    %4384 = vmatprep.subr.mxu0 0.0
    %4385 = vmatpush1.msra.mxu0 0.0
    %4386 = vmatprep.subr.mxu0 0.0
    %4387 = vmatpush1.msra.mxu0 0.0
    %4388 = vmatprep.subr.mxu0 0.0
    %4389 = vmatpush1.msra.mxu0 0.0
    %4390 = vmatprep.subr.mxu0 0.0
    %4391 = vmatpush1.msra.mxu0 0.0
    %4392 = vmatprep.subr.mxu0 0.0
    %4393 = vmatpush1.msra.mxu0 0.0
    %4394 = vmatprep.subr.mxu0 0.0
    %4395 = vmatpush1.msra.mxu0 0.0
    %4396 = vmatprep.subr.mxu0 0.0
    %4397 = vmatpush1.msra.mxu0 0.0
    %4398 = vmatprep.subr.mxu0 0.0
    %4399 = vmatpush1.msra.mxu0 0.0
    %4400 = vmatprep.subr.mxu0 0.0
    %4401 = vmatpush1.msra.mxu0 0.0
    %4402 = vmatprep.subr.mxu0 0.0
    %4403 = vmatpush1.msra.mxu0 0.0
    %4404 = vmatprep.subr.mxu0 0.0
    %4405 = vmatpush1.msra.mxu0 0.0
    %4406 = vmatprep.subr.mxu0 0.0
    %4407 = vmatpush1.msra.mxu0 0.0
    %4408 = vmatprep.subr.mxu0 0.0
    %4409 = vmatpush1.msra.mxu0 0.0
    %4410 = vmatprep.subr.mxu0 0.0
    %4411 = vmatpush1.msra.mxu0 0.0
    %4412 = vmatprep.subr.mxu0 0.0
    %4413 = vmatpush1.msra.mxu0 0.0
    %4414 = vmatprep.subr.mxu0 0.0
    %4415 = vmatpush1.msra.mxu0 0.0
    %4416 = vmatprep.subr.mxu0 0.0
    %4417 = vmatpush1.msra.mxu0 0.0
    %4418 = vmatprep.subr.mxu0 0.0
    %4419 = vmatpush1.msra.mxu0 0.0
    %4420 = vmatprep.subr.mxu0 0.0
    %4421 = vmatpush1.msra.mxu0 0.0
    %4422 = vmatprep.subr.mxu0 0.0
    %4423 = vmatpush1.msra.mxu0 0.0
    %4424 = vmatprep.subr.mxu0 0.0
    %4425 = vmatpush1.msra.mxu0 0.0
    %4426 = vmatprep.subr.mxu0 0.0
    %4427 = vmatpush1.msra.mxu0 0.0
    %4428 = vmatprep.subr.mxu0 0.0
    %4429 = vmatpush1.msra.mxu0 0.0
    %4430 = vmatprep.subr.mxu0 0.0
    %4431 = vmatpush1.msra.mxu0 0.0
    %4432 = vmatprep.subr.mxu0 0.0
    %4433 = vmatpush1.msra.mxu0 0.0
    %4434 = vmatprep.mubr.f32.mxu0 0.0
    %4435 = vmatmul.mubr.f32.gmra.mrb[0].mxu0 %v3242
    %v4436 = vpop.f32.mrb[0].mxu0
    %v4437 = vadd.f32 0.0, %v4436
    %v4438 = vpop.f32.mrb[0].mxu0
    %4439 = vmatprep.mubr.f32.mxu0 0.0
    %4440 = vmatmul.mubr.f32.gmra.mrb[0].mxu0 %v3245
    %v4441 = vpop.f32.mrb[0].mxu0
    %v4442 = vadd.f32 0.0, %v4441
    %v4443 = vpop.f32.mrb[0].mxu0
    %4444 = vdwg.mxu0
    %v4445 = vadd.f32 %v4362, %v4437
    %v4446 = vadd.f32 %v4367, %v4442
    %4447 = vmatprep.subr.mxu0 0.0
    %4448 = vmatpush1.msra.mxu0 %v3665
    %4449 = vmatprep.subr.mxu0 0.0
    %4450 = vmatpush1.msra.mxu0 %v3666
    %4451 = vmatprep.subr.mxu0 0.0
    %4452 = vmatpush1.msra.mxu0 %v3667
    %4453 = vmatprep.subr.mxu0 0.0
    %4454 = vmatpush1.msra.mxu0 %v3670
    %4455 = vmatprep.subr.mxu0 0.0
    %4456 = vmatpush1.msra.mxu0 0.0
    %4457 = vmatprep.subr.mxu0 0.0
    %4458 = vmatpush1.msra.mxu0 0.0
    %4459 = vmatprep.subr.mxu0 0.0
    %4460 = vmatpush1.msra.mxu0 0.0
    %4461 = vmatprep.subr.mxu0 0.0
    %4462 = vmatpush1.msra.mxu0 0.0
    %4463 = vmatprep.subr.mxu0 0.0
    %4464 = vmatpush1.msra.mxu0 0.0
    %4465 = vmatprep.subr.mxu0 0.0
    %4466 = vmatpush1.msra.mxu0 0.0
    %4467 = vmatprep.subr.mxu0 0.0
    %4468 = vmatpush1.msra.mxu0 0.0
    %4469 = vmatprep.subr.mxu0 0.0
    %4470 = vmatpush1.msra.mxu0 0.0
    %4471 = vmatprep.subr.mxu0 0.0
    %4472 = vmatpush1.msra.mxu0 0.0
    %4473 = vmatprep.subr.mxu0 0.0
    %4474 = vmatpush1.msra.mxu0 0.0
    %4475 = vmatprep.subr.mxu0 0.0
    %4476 = vmatpush1.msra.mxu0 0.0
    %4477 = vmatprep.subr.mxu0 0.0
    %4478 = vmatpush1.msra.mxu0 0.0
    %4479 = vmatprep.subr.mxu0 0.0
    %4480 = vmatpush1.msra.mxu0 0.0
    %4481 = vmatprep.subr.mxu0 0.0
    %4482 = vmatpush1.msra.mxu0 0.0
    %4483 = vmatprep.subr.mxu0 0.0
    %4484 = vmatpush1.msra.mxu0 0.0
    %4485 = vmatprep.subr.mxu0 0.0
    %4486 = vmatpush1.msra.mxu0 0.0
    %4487 = vmatprep.subr.mxu0 0.0
    %4488 = vmatpush1.msra.mxu0 0.0
    %4489 = vmatprep.subr.mxu0 0.0
    %4490 = vmatpush1.msra.mxu0 0.0
    %4491 = vmatprep.subr.mxu0 0.0
    %4492 = vmatpush1.msra.mxu0 0.0
    %4493 = vmatprep.subr.mxu0 0.0
    %4494 = vmatpush1.msra.mxu0 0.0
    %4495 = vmatprep.subr.mxu0 0.0
    %4496 = vmatpush1.msra.mxu0 0.0
    %4497 = vmatprep.subr.mxu0 0.0
    %4498 = vmatpush1.msra.mxu0 0.0
    %4499 = vmatprep.subr.mxu0 0.0
    %4500 = vmatpush1.msra.mxu0 0.0
    %4501 = vmatprep.subr.mxu0 0.0
    %4502 = vmatpush1.msra.mxu0 0.0
    %4503 = vmatprep.subr.mxu0 0.0
    %4504 = vmatpush1.msra.mxu0 0.0
    %4505 = vmatprep.subr.mxu0 0.0
    %4506 = vmatpush1.msra.mxu0 0.0
    %4507 = vmatprep.subr.mxu0 0.0
    %4508 = vmatpush1.msra.mxu0 0.0
    %4509 = vmatprep.subr.mxu0 0.0
    %4510 = vmatpush1.msra.mxu0 0.0
    %4511 = vmatprep.mubr.f32.mxu0 0.0
    %4512 = vmatmul.mubr.f32.gmra.mrb[0].mxu0 %v3332
    %v4513 = vpop.f32.mrb[0].mxu0
    %v4514 = vadd.f32 0.0, %v4513
    %v4515 = vpop.f32.mrb[0].mxu0
    %4516 = vmatprep.mubr.f32.mxu0 0.0
    %4517 = vmatmul.mubr.f32.gmra.mrb[0].mxu0 %v3335
    %v4518 = vpop.f32.mrb[0].mxu0
    %v4519 = vadd.f32 0.0, %v4518
    %v4520 = vpop.f32.mrb[0].mxu0
    %4521 = vdwg.mxu0
    %v4522 = vadd.f32 %v4445, %v4514
    %v4523 = vadd.f32 %v4446, %v4519
    %4524 = vmatprep.subr.mxu0 0.0
    %4525 = vmatpush1.msra.mxu0 %v3749
    %4526 = vmatprep.subr.mxu0 0.0
    %4527 = vmatpush1.msra.mxu0 %v3750
    %4528 = vmatprep.subr.mxu0 0.0
    %4529 = vmatpush1.msra.mxu0 %v3751
    %4530 = vmatprep.subr.mxu0 0.0
    %4531 = vmatpush1.msra.mxu0 %v3754
    %4532 = vmatprep.subr.mxu0 0.0
    %4533 = vmatpush1.msra.mxu0 0.0
    %4534 = vmatprep.subr.mxu0 0.0
    %4535 = vmatpush1.msra.mxu0 0.0
    %4536 = vmatprep.subr.mxu0 0.0
    %4537 = vmatpush1.msra.mxu0 0.0
    %4538 = vmatprep.subr.mxu0 0.0
    %4539 = vmatpush1.msra.mxu0 0.0
    %4540 = vmatprep.subr.mxu0 0.0
    %4541 = vmatpush1.msra.mxu0 0.0
    %4542 = vmatprep.subr.mxu0 0.0
    %4543 = vmatpush1.msra.mxu0 0.0
    %4544 = vmatprep.subr.mxu0 0.0
    %4545 = vmatpush1.msra.mxu0 0.0
    %4546 = vmatprep.subr.mxu0 0.0
    %4547 = vmatpush1.msra.mxu0 0.0
    %4548 = vmatprep.subr.mxu0 0.0
    %4549 = vmatpush1.msra.mxu0 0.0
    %4550 = vmatprep.subr.mxu0 0.0
    %4551 = vmatpush1.msra.mxu0 0.0
    %4552 = vmatprep.subr.mxu0 0.0
    %4553 = vmatpush1.msra.mxu0 0.0
    %4554 = vmatprep.subr.mxu0 0.0
    %4555 = vmatpush1.msra.mxu0 0.0
    %4556 = vmatprep.subr.mxu0 0.0
    %4557 = vmatpush1.msra.mxu0 0.0
    %4558 = vmatprep.subr.mxu0 0.0
    %4559 = vmatpush1.msra.mxu0 0.0
    %4560 = vmatprep.subr.mxu0 0.0
    %4561 = vmatpush1.msra.mxu0 0.0
    %4562 = vmatprep.subr.mxu0 0.0
    %4563 = vmatpush1.msra.mxu0 0.0
    %4564 = vmatprep.subr.mxu0 0.0
    %4565 = vmatpush1.msra.mxu0 0.0
    %4566 = vmatprep.subr.mxu0 0.0
    %4567 = vmatpush1.msra.mxu0 0.0
    %4568 = vmatprep.subr.mxu0 0.0
    %4569 = vmatpush1.msra.mxu0 0.0
    %4570 = vmatprep.subr.mxu0 0.0
    %4571 = vmatpush1.msra.mxu0 0.0
    %4572 = vmatprep.subr.mxu0 0.0
    %4573 = vmatpush1.msra.mxu0 0.0
    %4574 = vmatprep.subr.mxu0 0.0
    %4575 = vmatpush1.msra.mxu0 0.0
    %4576 = vmatprep.subr.mxu0 0.0
    %4577 = vmatpush1.msra.mxu0 0.0
    %4578 = vmatprep.subr.mxu0 0.0
    %4579 = vmatpush1.msra.mxu0 0.0
    %4580 = vmatprep.subr.mxu0 0.0
    %4581 = vmatpush1.msra.mxu0 0.0
    %4582 = vmatprep.subr.mxu0 0.0
    %4583 = vmatpush1.msra.mxu0 0.0
    %4584 = vmatprep.subr.mxu0 0.0
    %4585 = vmatpush1.msra.mxu0 0.0
    %4586 = vmatprep.subr.mxu0 0.0
    %4587 = vmatpush1.msra.mxu0 0.0
    %4588 = vmatprep.mubr.f32.mxu0 0.0
    %4589 = vmatmul.mubr.f32.gmra.mrb[0].mxu0 %v4138
    %v4590 = vpop.f32.mrb[0].mxu0
    %v4591 = vadd.f32 0.0, %v4590
    %v4592 = vpop.f32.mrb[0].mxu0
    %4593 = vmatprep.mubr.f32.mxu0 0.0
    %4594 = vmatmul.mubr.f32.gmra.mrb[0].mxu0 %v4141
    %v4595 = vpop.f32.mrb[0].mxu0
    %v4596 = vadd.f32 0.0, %v4595
    %v4597 = vpop.f32.mrb[0].mxu0
    %4598 = vdwg.mxu0
    %v4599 = vadd.f32 %v4522, %v4591
    %v4600 = vadd.f32 %v4523, %v4596
    %v4601 = vmax.f32 %v3415, %v3831
    %v4602 = vmax.f32 %v3416, %v3832
    %v4603 = vmax.f32 %v4218, %v4599
    %v4604 = vmax.f32 %v4219, %v4600
    %v4605 = vmax.f32 %v4601, %v4603
    %v4606 = vmax.f32 %v4602, %v4604
    %v4607 = vld [vmem:[%s4] sm:$0x1]
    %v4609 = vlaneseq
    %v4610 = vshrl.u32 %v4609, 7
    %v4611 = vsub.s32 0, %v4610
    %v4612 = vrot.slane %v4607, %v4611
    %v4614 = vadd.f32 %v4605, %v4612
    %v4615 = vadd.f32 %v4606, %v4612
    %v4616 = vmax.f32 %v4614, 0.0
    %v4617 = vmax.f32 %v4615, 0.0
    %v4618 = vld [vmem:[%s5] sm:$0xff]
    %v4619 = vld [vmem:[%s5 + $0x8] sm:$0xff]
    %v4620 = vld [vmem:[%s5 + $0x10] sm:$0xff]
    %v4621 = vld [vmem:[%s5 + $0x18] sm:$0xff]
    %v4622 = vld [vmem:[%s5 + $0x20] sm:$0xff]
    %v4623 = vld [vmem:[%s5 + $0x28] sm:$0xff]
    %v4624 = vld [vmem:[%s5 + $0x30] sm:$0xff]
    %v4625 = vld [vmem:[%s5 + $0x38] sm:$0xff]
    %v4626 = vld [vmem:[%s5 + $0x40] sm:$0xff]
    %v4627 = vld [vmem:[%s5 + $0x48] sm:$0xff]
    %v4628 = vld [vmem:[%s5 + $0x50] sm:$0xff]
    %v4629 = vld [vmem:[%s5 + $0x58] sm:$0xff]
    %v4630 = vld [vmem:[%s5 + $0x60] sm:$0xff]
    %v4631 = vld [vmem:[%s5 + $0x68] sm:$0xff]
    %v4632 = vld [vmem:[%s5 + $0x70] sm:$0xff]
    %v4633 = vld [vmem:[%s1720] sm:$0xff]
    %v4634 = vld [vmem:[%s1720 + $0x8] sm:$0xff]
    %v4635 = vld [vmem:[%s1720 + $0x10] sm:$0xff]
    %v4636 = vld [vmem:[%s1720 + $0x18] sm:$0xff]
    %v4637 = vld [vmem:[%s1720 + $0x20] sm:$0xff]
    %v4638 = vld [vmem:[%s1720 + $0x28] sm:$0xff]
    %v4639 = vld [vmem:[%s1720 + $0x30] sm:$0xff]
    %v4640 = vld [vmem:[%s1720 + $0x38] sm:$0xff]
    %v4641 = vld [vmem:[%s1720 + $0x40] sm:$0xff]
    %v4642 = vld [vmem:[%s1720 + $0x48] sm:$0xff]
    %v4643 = vld [vmem:[%s1720 + $0x50] sm:$0xff]
    %v4644 = vld [vmem:[%s1720 + $0x58] sm:$0xff]
    %v4645 = vld [vmem:[%s1720 + $0x60] sm:$0xff]
    %v4646 = vld [vmem:[%s1720 + $0x68] sm:$0xff]
    %v4647 = vld [vmem:[%s1720 + $0x70] sm:$0xff]
    %v4650 = vrot.slane %v4616, 1
    %v4651 = vrot.slane %v4617, 1
    %v4652 = vsel %vm1738, %v4650, %v4651
    %v4653 = vsel %vm1742, %v4652, 0
    %4655 = vmatprep.subr.mxu0 0.0
    %4656 = vmatpush1.msra.mxu0 %v4633
    %4657 = vmatprep.subr.mxu0 0.0
    %4658 = vmatpush1.msra.mxu0 %v4634
    %4659 = vmatprep.subr.mxu0 0.0
    %4660 = vmatpush1.msra.mxu0 %v4635
    %4661 = vmatprep.subr.mxu0 0.0
    %4662 = vmatpush1.msra.mxu0 %v4636
    %4663 = vmatprep.subr.mxu0 0.0
    %4664 = vmatpush1.msra.mxu0 %v4637
    %4665 = vmatprep.subr.mxu0 0.0
    %4666 = vmatpush1.msra.mxu0 %v4638
    %4667 = vmatprep.subr.mxu0 0.0
    %4668 = vmatpush1.msra.mxu0 %v4639
    %4669 = vmatprep.subr.mxu0 0.0
    %4670 = vmatpush1.msra.mxu0 %v4640
    %4671 = vmatprep.subr.mxu0 0.0
    %4672 = vmatpush1.msra.mxu0 %v4641
    %4673 = vmatprep.subr.mxu0 0.0
    %4674 = vmatpush1.msra.mxu0 %v4642
    %4675 = vmatprep.subr.mxu0 0.0
    %4676 = vmatpush1.msra.mxu0 %v4643
    %4677 = vmatprep.subr.mxu0 0.0
    %4678 = vmatpush1.msra.mxu0 %v4644
    %4679 = vmatprep.subr.mxu0 0.0
    %4680 = vmatpush1.msra.mxu0 %v4645
    %4681 = vmatprep.subr.mxu0 0.0
    %4682 = vmatpush1.msra.mxu0 %v4646
    %4683 = vmatprep.subr.mxu0 0.0
    %4684 = vmatpush1.msra.mxu0 %v4647
    %4685 = vmatprep.subr.mxu0 0.0
    %4686 = vmatpush1.msra.mxu0 0.0
    %4687 = vmatprep.subr.mxu0 0.0
    %4688 = vmatpush1.msra.mxu0 0.0
    %4689 = vmatprep.subr.mxu0 0.0
    %4690 = vmatpush1.msra.mxu0 0.0
    %4691 = vmatprep.subr.mxu0 0.0
    %4692 = vmatpush1.msra.mxu0 0.0
    %4693 = vmatprep.subr.mxu0 0.0
    %4694 = vmatpush1.msra.mxu0 0.0
    %4695 = vmatprep.subr.mxu0 0.0
    %4696 = vmatpush1.msra.mxu0 0.0
    %4697 = vmatprep.subr.mxu0 0.0
    %4698 = vmatpush1.msra.mxu0 0.0
    %4699 = vmatprep.subr.mxu0 0.0
    %4700 = vmatpush1.msra.mxu0 0.0
    %4701 = vmatprep.subr.mxu0 0.0
    %4702 = vmatpush1.msra.mxu0 0.0
    %4703 = vmatprep.subr.mxu0 0.0
    %4704 = vmatpush1.msra.mxu0 0.0
    %4705 = vmatprep.subr.mxu0 0.0
    %4706 = vmatpush1.msra.mxu0 0.0
    %4707 = vmatprep.subr.mxu0 0.0
    %4708 = vmatpush1.msra.mxu0 0.0
    %4709 = vmatprep.subr.mxu0 0.0
    %4710 = vmatpush1.msra.mxu0 0.0
    %4711 = vmatprep.subr.mxu0 0.0
    %4712 = vmatpush1.msra.mxu0 0.0
    %4713 = vmatprep.subr.mxu0 0.0
    %4714 = vmatpush1.msra.mxu0 0.0
    %4715 = vmatprep.subr.mxu0 0.0
    %4716 = vmatpush1.msra.mxu0 0.0
    %4717 = vmatprep.subr.mxu0 0.0
    %4718 = vmatpush1.msra.mxu0 0.0
    %4719 = vmatprep.mubr.f32.mxu0 0.0
    %4720 = vmatmul.mubr.f32.gmra.mrb[0].mxu0 %v4653
    %v4721 = vpop.f32.mrb[0].mxu0
    %v4722 = vadd.f32 0.0, %v4721
    %v4723 = vpop.f32.mrb[0].mxu0
    %4724 = vdwg.mxu0
    %v4725 = vsel %vm1742, %v4616, 0
    %4727 = vmatprep.subr.mxu0 0.0
    %4728 = vmatpush1.msra.mxu0 %v4618
    %4729 = vmatprep.subr.mxu0 0.0
    %4730 = vmatpush1.msra.mxu0 %v4619
    %4731 = vmatprep.subr.mxu0 0.0
    %4732 = vmatpush1.msra.mxu0 %v4620
    %4733 = vmatprep.subr.mxu0 0.0
    %4734 = vmatpush1.msra.mxu0 %v4621
    %4735 = vmatprep.subr.mxu0 0.0
    %4736 = vmatpush1.msra.mxu0 %v4622
    %4737 = vmatprep.subr.mxu0 0.0
    %4738 = vmatpush1.msra.mxu0 %v4623
    %4739 = vmatprep.subr.mxu0 0.0
    %4740 = vmatpush1.msra.mxu0 %v4624
    %4741 = vmatprep.subr.mxu0 0.0
    %4742 = vmatpush1.msra.mxu0 %v4625
    %4743 = vmatprep.subr.mxu0 0.0
    %4744 = vmatpush1.msra.mxu0 %v4626
    %4745 = vmatprep.subr.mxu0 0.0
    %4746 = vmatpush1.msra.mxu0 %v4627
    %4747 = vmatprep.subr.mxu0 0.0
    %4748 = vmatpush1.msra.mxu0 %v4628
    %4749 = vmatprep.subr.mxu0 0.0
    %4750 = vmatpush1.msra.mxu0 %v4629
    %4751 = vmatprep.subr.mxu0 0.0
    %4752 = vmatpush1.msra.mxu0 %v4630
    %4753 = vmatprep.subr.mxu0 0.0
    %4754 = vmatpush1.msra.mxu0 %v4631
    %4755 = vmatprep.subr.mxu0 0.0
    %4756 = vmatpush1.msra.mxu0 %v4632
    %4757 = vmatprep.subr.mxu0 0.0
    %4758 = vmatpush1.msra.mxu0 0.0
    %4759 = vmatprep.subr.mxu0 0.0
    %4760 = vmatpush1.msra.mxu0 0.0
    %4761 = vmatprep.subr.mxu0 0.0
    %4762 = vmatpush1.msra.mxu0 0.0
    %4763 = vmatprep.subr.mxu0 0.0
    %4764 = vmatpush1.msra.mxu0 0.0
    %4765 = vmatprep.subr.mxu0 0.0
    %4766 = vmatpush1.msra.mxu0 0.0
    %4767 = vmatprep.subr.mxu0 0.0
    %4768 = vmatpush1.msra.mxu0 0.0
    %4769 = vmatprep.subr.mxu0 0.0
    %4770 = vmatpush1.msra.mxu0 0.0
    %4771 = vmatprep.subr.mxu0 0.0
    %4772 = vmatpush1.msra.mxu0 0.0
    %4773 = vmatprep.subr.mxu0 0.0
    %4774 = vmatpush1.msra.mxu0 0.0
    %4775 = vmatprep.subr.mxu0 0.0
    %4776 = vmatpush1.msra.mxu0 0.0
    %4777 = vmatprep.subr.mxu0 0.0
    %4778 = vmatpush1.msra.mxu0 0.0
    %4779 = vmatprep.subr.mxu0 0.0
    %4780 = vmatpush1.msra.mxu0 0.0
    %4781 = vmatprep.subr.mxu0 0.0
    %4782 = vmatpush1.msra.mxu0 0.0
    %4783 = vmatprep.subr.mxu0 0.0
    %4784 = vmatpush1.msra.mxu0 0.0
    %4785 = vmatprep.subr.mxu0 0.0
    %4786 = vmatpush1.msra.mxu0 0.0
    %4787 = vmatprep.subr.mxu0 0.0
    %4788 = vmatpush1.msra.mxu0 0.0
    %4789 = vmatprep.subr.mxu0 0.0
    %4790 = vmatpush1.msra.mxu0 0.0
    %4791 = vmatprep.mubr.f32.mxu0 0.0
    %4792 = vmatmul.mubr.f32.gmra.mrb[0].mxu0 %v4725
    %v4793 = vpop.f32.mrb[0].mxu0
    %v4794 = vadd.f32 %v4722, %v4793
    %v4795 = vpop.f32.mrb[0].mxu0
    %4796 = vdwg.mxu0
    %v4797 = vld [vmem:[%s1887] sm:$0xff]
    %v4798 = vld [vmem:[%s1887 + $0x8] sm:$0xff]
    %v4799 = vld [vmem:[%s1887 + $0x10] sm:$0xff]
    %v4800 = vld [vmem:[%s1887 + $0x18] sm:$0xff]
    %v4801 = vld [vmem:[%s1887 + $0x20] sm:$0xff]
    %v4802 = vld [vmem:[%s1887 + $0x28] sm:$0xff]
    %v4803 = vld [vmem:[%s1887 + $0x30] sm:$0xff]
    %v4804 = vld [vmem:[%s1887 + $0x38] sm:$0xff]
    %v4805 = vld [vmem:[%s1887 + $0x40] sm:$0xff]
    %v4806 = vld [vmem:[%s1887 + $0x48] sm:$0xff]
    %v4807 = vld [vmem:[%s1887 + $0x50] sm:$0xff]
    %v4808 = vld [vmem:[%s1887 + $0x58] sm:$0xff]
    %v4809 = vld [vmem:[%s1887 + $0x60] sm:$0xff]
    %v4810 = vld [vmem:[%s1887 + $0x68] sm:$0xff]
    %v4811 = vld [vmem:[%s1887 + $0x70] sm:$0xff]
    %v4812 = vrot.slane %v4616, 2
    %v4813 = vrot.slane %v4617, 2
    %v4814 = vsel %vm1903, %v4812, %v4813
    %v4815 = vsel %vm1742, %v4814, 0
    %4817 = vmatprep.subr.mxu0 0.0
    %4818 = vmatpush1.msra.mxu0 %v4797
    %4819 = vmatprep.subr.mxu0 0.0
    %4820 = vmatpush1.msra.mxu0 %v4798
    %4821 = vmatprep.subr.mxu0 0.0
    %4822 = vmatpush1.msra.mxu0 %v4799
    %4823 = vmatprep.subr.mxu0 0.0
    %4824 = vmatpush1.msra.mxu0 %v4800
    %4825 = vmatprep.subr.mxu0 0.0
    %4826 = vmatpush1.msra.mxu0 %v4801
    %4827 = vmatprep.subr.mxu0 0.0
    %4828 = vmatpush1.msra.mxu0 %v4802
    %4829 = vmatprep.subr.mxu0 0.0
    %4830 = vmatpush1.msra.mxu0 %v4803
    %4831 = vmatprep.subr.mxu0 0.0
    %4832 = vmatpush1.msra.mxu0 %v4804
    %4833 = vmatprep.subr.mxu0 0.0
    %4834 = vmatpush1.msra.mxu0 %v4805
    %4835 = vmatprep.subr.mxu0 0.0
    %4836 = vmatpush1.msra.mxu0 %v4806
    %4837 = vmatprep.subr.mxu0 0.0
    %4838 = vmatpush1.msra.mxu0 %v4807
    %4839 = vmatprep.subr.mxu0 0.0
    %4840 = vmatpush1.msra.mxu0 %v4808
    %4841 = vmatprep.subr.mxu0 0.0
    %4842 = vmatpush1.msra.mxu0 %v4809
    %4843 = vmatprep.subr.mxu0 0.0
    %4844 = vmatpush1.msra.mxu0 %v4810
    %4845 = vmatprep.subr.mxu0 0.0
    %4846 = vmatpush1.msra.mxu0 %v4811
    %4847 = vmatprep.subr.mxu0 0.0
    %4848 = vmatpush1.msra.mxu0 0.0
    %4849 = vmatprep.subr.mxu0 0.0
    %4850 = vmatpush1.msra.mxu0 0.0
    %4851 = vmatprep.subr.mxu0 0.0
    %4852 = vmatpush1.msra.mxu0 0.0
    %4853 = vmatprep.subr.mxu0 0.0
    %4854 = vmatpush1.msra.mxu0 0.0
    %4855 = vmatprep.subr.mxu0 0.0
    %4856 = vmatpush1.msra.mxu0 0.0
    %4857 = vmatprep.subr.mxu0 0.0
    %4858 = vmatpush1.msra.mxu0 0.0
    %4859 = vmatprep.subr.mxu0 0.0
    %4860 = vmatpush1.msra.mxu0 0.0
    %4861 = vmatprep.subr.mxu0 0.0
    %4862 = vmatpush1.msra.mxu0 0.0
    %4863 = vmatprep.subr.mxu0 0.0
    %4864 = vmatpush1.msra.mxu0 0.0
    %4865 = vmatprep.subr.mxu0 0.0
    %4866 = vmatpush1.msra.mxu0 0.0
    %4867 = vmatprep.subr.mxu0 0.0
    %4868 = vmatpush1.msra.mxu0 0.0
    %4869 = vmatprep.subr.mxu0 0.0
    %4870 = vmatpush1.msra.mxu0 0.0
    %4871 = vmatprep.subr.mxu0 0.0
    %4872 = vmatpush1.msra.mxu0 0.0
    %4873 = vmatprep.subr.mxu0 0.0
    %4874 = vmatpush1.msra.mxu0 0.0
    %4875 = vmatprep.subr.mxu0 0.0
    %4876 = vmatpush1.msra.mxu0 0.0
    %4877 = vmatprep.subr.mxu0 0.0
    %4878 = vmatpush1.msra.mxu0 0.0
    %4879 = vmatprep.subr.mxu0 0.0
    %4880 = vmatpush1.msra.mxu0 0.0
    %4881 = vmatprep.mubr.f32.mxu0 0.0
    %4882 = vmatmul.mubr.f32.gmra.mrb[0].mxu0 %v4815
    %v4883 = vpop.f32.mrb[0].mxu0
    %v4884 = vadd.f32 0.0, %v4883
    %v4885 = vpop.f32.mrb[0].mxu0
    %4886 = vdwg.mxu0
    %v4887 = vadd.f32 %v4794, %v4884
    %v4888 = vld [vmem:[%s1980] sm:$0xff]
    %v4889 = vld [vmem:[%s1980 + $0x8] sm:$0xff]
    %v4890 = vld [vmem:[%s1980 + $0x10] sm:$0xff]
    %v4891 = vld [vmem:[%s1980 + $0x18] sm:$0xff]
    %v4892 = vld [vmem:[%s1980 + $0x20] sm:$0xff]
    %v4893 = vld [vmem:[%s1980 + $0x28] sm:$0xff]
    %v4894 = vld [vmem:[%s1980 + $0x30] sm:$0xff]
    %v4895 = vld [vmem:[%s1980 + $0x38] sm:$0xff]
    %v4896 = vld [vmem:[%s1980 + $0x40] sm:$0xff]
    %v4897 = vld [vmem:[%s1980 + $0x48] sm:$0xff]
    %v4898 = vld [vmem:[%s1980 + $0x50] sm:$0xff]
    %v4899 = vld [vmem:[%s1980 + $0x58] sm:$0xff]
    %v4900 = vld [vmem:[%s1980 + $0x60] sm:$0xff]
    %v4901 = vld [vmem:[%s1980 + $0x68] sm:$0xff]
    %v4902 = vld [vmem:[%s1980 + $0x70] sm:$0xff]
    %v4903 = vrot.slane %v4616, 3
    %v4904 = vrot.slane %v4617, 3
    %v4905 = vsel %vm1996, %v4903, %v4904
    %v4906 = vsel %vm1742, %v4905, 0
    %4908 = vmatprep.subr.mxu0 0.0
    %4909 = vmatpush1.msra.mxu0 %v4888
    %4910 = vmatprep.subr.mxu0 0.0
    %4911 = vmatpush1.msra.mxu0 %v4889
    %4912 = vmatprep.subr.mxu0 0.0
    %4913 = vmatpush1.msra.mxu0 %v4890
    %4914 = vmatprep.subr.mxu0 0.0
    %4915 = vmatpush1.msra.mxu0 %v4891
    %4916 = vmatprep.subr.mxu0 0.0
    %4917 = vmatpush1.msra.mxu0 %v4892
    %4918 = vmatprep.subr.mxu0 0.0
    %4919 = vmatpush1.msra.mxu0 %v4893
    %4920 = vmatprep.subr.mxu0 0.0
    %4921 = vmatpush1.msra.mxu0 %v4894
    %4922 = vmatprep.subr.mxu0 0.0
    %4923 = vmatpush1.msra.mxu0 %v4895
    %4924 = vmatprep.subr.mxu0 0.0
    %4925 = vmatpush1.msra.mxu0 %v4896
    %4926 = vmatprep.subr.mxu0 0.0
    %4927 = vmatpush1.msra.mxu0 %v4897
    %4928 = vmatprep.subr.mxu0 0.0
    %4929 = vmatpush1.msra.mxu0 %v4898
    %4930 = vmatprep.subr.mxu0 0.0
    %4931 = vmatpush1.msra.mxu0 %v4899
    %4932 = vmatprep.subr.mxu0 0.0
    %4933 = vmatpush1.msra.mxu0 %v4900
    %4934 = vmatprep.subr.mxu0 0.0
    %4935 = vmatpush1.msra.mxu0 %v4901
    %4936 = vmatprep.subr.mxu0 0.0
    %4937 = vmatpush1.msra.mxu0 %v4902
    %4938 = vmatprep.subr.mxu0 0.0
    %4939 = vmatpush1.msra.mxu0 0.0
    %4940 = vmatprep.subr.mxu0 0.0
    %4941 = vmatpush1.msra.mxu0 0.0
    %4942 = vmatprep.subr.mxu0 0.0
    %4943 = vmatpush1.msra.mxu0 0.0
    %4944 = vmatprep.subr.mxu0 0.0
    %4945 = vmatpush1.msra.mxu0 0.0
    %4946 = vmatprep.subr.mxu0 0.0
    %4947 = vmatpush1.msra.mxu0 0.0
    %4948 = vmatprep.subr.mxu0 0.0
    %4949 = vmatpush1.msra.mxu0 0.0
    %4950 = vmatprep.subr.mxu0 0.0
    %4951 = vmatpush1.msra.mxu0 0.0
    %4952 = vmatprep.subr.mxu0 0.0
    %4953 = vmatpush1.msra.mxu0 0.0
    %4954 = vmatprep.subr.mxu0 0.0
    %4955 = vmatpush1.msra.mxu0 0.0
    %4956 = vmatprep.subr.mxu0 0.0
    %4957 = vmatpush1.msra.mxu0 0.0
    %4958 = vmatprep.subr.mxu0 0.0
    %4959 = vmatpush1.msra.mxu0 0.0
    %4960 = vmatprep.subr.mxu0 0.0
    %4961 = vmatpush1.msra.mxu0 0.0
    %4962 = vmatprep.subr.mxu0 0.0
    %4963 = vmatpush1.msra.mxu0 0.0
    %4964 = vmatprep.subr.mxu0 0.0
    %4965 = vmatpush1.msra.mxu0 0.0
    %4966 = vmatprep.subr.mxu0 0.0
    %4967 = vmatpush1.msra.mxu0 0.0
    %4968 = vmatprep.subr.mxu0 0.0
    %4969 = vmatpush1.msra.mxu0 0.0
    %4970 = vmatprep.subr.mxu0 0.0
    %4971 = vmatpush1.msra.mxu0 0.0
    %4972 = vmatprep.mubr.f32.mxu0 0.0
    %4973 = vmatmul.mubr.f32.gmra.mrb[0].mxu0 %v4906
    %v4974 = vpop.f32.mrb[0].mxu0
    %v4975 = vadd.f32 0.0, %v4974
    %v4976 = vpop.f32.mrb[0].mxu0
    %4977 = vdwg.mxu0
    %v4978 = vadd.f32 %v4887, %v4975
    %v4979 = vld [vmem:[%s2073] sm:$0xff]
    %v4980 = vld [vmem:[%s2073 + $0x8] sm:$0xff]
    %v4981 = vld [vmem:[%s2073 + $0x10] sm:$0xff]
    %v4982 = vld [vmem:[%s2073 + $0x18] sm:$0xff]
    %v4983 = vld [vmem:[%s2073 + $0x20] sm:$0xff]
    %v4984 = vld [vmem:[%s2073 + $0x28] sm:$0xff]
    %v4985 = vld [vmem:[%s2073 + $0x30] sm:$0xff]
    %v4986 = vld [vmem:[%s2073 + $0x38] sm:$0xff]
    %v4987 = vld [vmem:[%s2073 + $0x40] sm:$0xff]
    %v4988 = vld [vmem:[%s2073 + $0x48] sm:$0xff]
    %v4989 = vld [vmem:[%s2073 + $0x50] sm:$0xff]
    %v4990 = vld [vmem:[%s2073 + $0x58] sm:$0xff]
    %v4991 = vld [vmem:[%s2073 + $0x60] sm:$0xff]
    %v4992 = vld [vmem:[%s2073 + $0x68] sm:$0xff]
    %v4993 = vld [vmem:[%s2073 + $0x70] sm:$0xff]
    %v4994 = vrot.slane %v4616, 4
    %v4995 = vrot.slane %v4617, 4
    %v4996 = vsel %vm64, %v4994, %v4995
    %v4997 = vsel %vm1742, %v4996, 0
    %4999 = vmatprep.subr.mxu0 0.0
    %5000 = vmatpush1.msra.mxu0 %v4979
    %5001 = vmatprep.subr.mxu0 0.0
    %5002 = vmatpush1.msra.mxu0 %v4980
    %5003 = vmatprep.subr.mxu0 0.0
    %5004 = vmatpush1.msra.mxu0 %v4981
    %5005 = vmatprep.subr.mxu0 0.0
    %5006 = vmatpush1.msra.mxu0 %v4982
    %5007 = vmatprep.subr.mxu0 0.0
    %5008 = vmatpush1.msra.mxu0 %v4983
    %5009 = vmatprep.subr.mxu0 0.0
    %5010 = vmatpush1.msra.mxu0 %v4984
    %5011 = vmatprep.subr.mxu0 0.0
    %5012 = vmatpush1.msra.mxu0 %v4985
    %5013 = vmatprep.subr.mxu0 0.0
    %5014 = vmatpush1.msra.mxu0 %v4986
    %5015 = vmatprep.subr.mxu0 0.0
    %5016 = vmatpush1.msra.mxu0 %v4987
    %5017 = vmatprep.subr.mxu0 0.0
    %5018 = vmatpush1.msra.mxu0 %v4988
    %5019 = vmatprep.subr.mxu0 0.0
    %5020 = vmatpush1.msra.mxu0 %v4989
    %5021 = vmatprep.subr.mxu0 0.0
    %5022 = vmatpush1.msra.mxu0 %v4990
    %5023 = vmatprep.subr.mxu0 0.0
    %5024 = vmatpush1.msra.mxu0 %v4991
    %5025 = vmatprep.subr.mxu0 0.0
    %5026 = vmatpush1.msra.mxu0 %v4992
    %5027 = vmatprep.subr.mxu0 0.0
    %5028 = vmatpush1.msra.mxu0 %v4993
    %5029 = vmatprep.subr.mxu0 0.0
    %5030 = vmatpush1.msra.mxu0 0.0
    %5031 = vmatprep.subr.mxu0 0.0
    %5032 = vmatpush1.msra.mxu0 0.0
    %5033 = vmatprep.subr.mxu0 0.0
    %5034 = vmatpush1.msra.mxu0 0.0
    %5035 = vmatprep.subr.mxu0 0.0
    %5036 = vmatpush1.msra.mxu0 0.0
    %5037 = vmatprep.subr.mxu0 0.0
    %5038 = vmatpush1.msra.mxu0 0.0
    %5039 = vmatprep.subr.mxu0 0.0
    %5040 = vmatpush1.msra.mxu0 0.0
    %5041 = vmatprep.subr.mxu0 0.0
    %5042 = vmatpush1.msra.mxu0 0.0
    %5043 = vmatprep.subr.mxu0 0.0
    %5044 = vmatpush1.msra.mxu0 0.0
    %5045 = vmatprep.subr.mxu0 0.0
    %5046 = vmatpush1.msra.mxu0 0.0
    %5047 = vmatprep.subr.mxu0 0.0
    %5048 = vmatpush1.msra.mxu0 0.0
    %5049 = vmatprep.subr.mxu0 0.0
    %5050 = vmatpush1.msra.mxu0 0.0
    %5051 = vmatprep.subr.mxu0 0.0
    %5052 = vmatpush1.msra.mxu0 0.0
    %5053 = vmatprep.subr.mxu0 0.0
    %5054 = vmatpush1.msra.mxu0 0.0
    %5055 = vmatprep.subr.mxu0 0.0
    %5056 = vmatpush1.msra.mxu0 0.0
    %5057 = vmatprep.subr.mxu0 0.0
    %5058 = vmatpush1.msra.mxu0 0.0
    %5059 = vmatprep.subr.mxu0 0.0
    %5060 = vmatpush1.msra.mxu0 0.0
    %5061 = vmatprep.subr.mxu0 0.0
    %5062 = vmatpush1.msra.mxu0 0.0
    %5063 = vmatprep.mubr.f32.mxu0 0.0
    %5064 = vmatmul.mubr.f32.gmra.mrb[0].mxu0 %v4997
    %v5065 = vpop.f32.mrb[0].mxu0
    %v5066 = vadd.f32 0.0, %v5065
    %v5067 = vpop.f32.mrb[0].mxu0
    %5068 = vdwg.mxu0
    %v5069 = vadd.f32 %v4978, %v5066
    %v5070 = vld [vmem:[%s6] sm:$0xff]
    %v5071 = vld [vmem:[%s6 + $0x8] sm:$0xff]
    %v5072 = vld [vmem:[%s6 + $0x10] sm:$0xff]
    %v5073 = vld [vmem:[%s6 + $0x18] sm:$0xff]
    %v5074 = vld [vmem:[%s6 + $0x20] sm:$0xff]
    %v5075 = vld [vmem:[%s6 + $0x28] sm:$0xff]
    %v5076 = vld [vmem:[%s6 + $0x30] sm:$0xff]
    %v5077 = vld [vmem:[%s6 + $0x38] sm:$0xff]
    %v5078 = vld [vmem:[%s6 + $0x40] sm:$0xff]
    %v5079 = vld [vmem:[%s6 + $0x48] sm:$0xff]
    %v5080 = vld [vmem:[%s6 + $0x50] sm:$0xff]
    %v5081 = vld [vmem:[%s6 + $0x58] sm:$0xff]
    %v5082 = vld [vmem:[%s6 + $0x60] sm:$0xff]
    %v5083 = vld [vmem:[%s6 + $0x68] sm:$0xff]
    %v5084 = vld [vmem:[%s6 + $0x70] sm:$0xff]
    %v5085 = vld [vmem:[%s2180] sm:$0xff]
    %v5086 = vld [vmem:[%s2180 + $0x8] sm:$0xff]
    %v5087 = vld [vmem:[%s2180 + $0x10] sm:$0xff]
    %v5088 = vld [vmem:[%s2180 + $0x18] sm:$0xff]
    %v5089 = vld [vmem:[%s2180 + $0x20] sm:$0xff]
    %v5090 = vld [vmem:[%s2180 + $0x28] sm:$0xff]
    %v5091 = vld [vmem:[%s2180 + $0x30] sm:$0xff]
    %v5092 = vld [vmem:[%s2180 + $0x38] sm:$0xff]
    %v5093 = vld [vmem:[%s2180 + $0x40] sm:$0xff]
    %v5094 = vld [vmem:[%s2180 + $0x48] sm:$0xff]
    %v5095 = vld [vmem:[%s2180 + $0x50] sm:$0xff]
    %v5096 = vld [vmem:[%s2180 + $0x58] sm:$0xff]
    %v5097 = vld [vmem:[%s2180 + $0x60] sm:$0xff]
    %v5098 = vld [vmem:[%s2180 + $0x68] sm:$0xff]
    %v5099 = vld [vmem:[%s2180 + $0x70] sm:$0xff]
    %5100 = vmatprep.subr.mxu0 0.0
    %5101 = vmatpush1.msra.mxu0 %v5085
    %5102 = vmatprep.subr.mxu0 0.0
    %5103 = vmatpush1.msra.mxu0 %v5086
    %5104 = vmatprep.subr.mxu0 0.0
    %5105 = vmatpush1.msra.mxu0 %v5087
    %5106 = vmatprep.subr.mxu0 0.0
    %5107 = vmatpush1.msra.mxu0 %v5088
    %5108 = vmatprep.subr.mxu0 0.0
    %5109 = vmatpush1.msra.mxu0 %v5089
    %5110 = vmatprep.subr.mxu0 0.0
    %5111 = vmatpush1.msra.mxu0 %v5090
    %5112 = vmatprep.subr.mxu0 0.0
    %5113 = vmatpush1.msra.mxu0 %v5091
    %5114 = vmatprep.subr.mxu0 0.0
    %5115 = vmatpush1.msra.mxu0 %v5092
    %5116 = vmatprep.subr.mxu0 0.0
    %5117 = vmatpush1.msra.mxu0 %v5093
    %5118 = vmatprep.subr.mxu0 0.0
    %5119 = vmatpush1.msra.mxu0 %v5094
    %5120 = vmatprep.subr.mxu0 0.0
    %5121 = vmatpush1.msra.mxu0 %v5095
    %5122 = vmatprep.subr.mxu0 0.0
    %5123 = vmatpush1.msra.mxu0 %v5096
    %5124 = vmatprep.subr.mxu0 0.0
    %5125 = vmatpush1.msra.mxu0 %v5097
    %5126 = vmatprep.subr.mxu0 0.0
    %5127 = vmatpush1.msra.mxu0 %v5098
    %5128 = vmatprep.subr.mxu0 0.0
    %5129 = vmatpush1.msra.mxu0 %v5099
    %5130 = vmatprep.subr.mxu0 0.0
    %5131 = vmatpush1.msra.mxu0 0.0
    %5132 = vmatprep.subr.mxu0 0.0
    %5133 = vmatpush1.msra.mxu0 0.0
    %5134 = vmatprep.subr.mxu0 0.0
    %5135 = vmatpush1.msra.mxu0 0.0
    %5136 = vmatprep.subr.mxu0 0.0
    %5137 = vmatpush1.msra.mxu0 0.0
    %5138 = vmatprep.subr.mxu0 0.0
    %5139 = vmatpush1.msra.mxu0 0.0
    %5140 = vmatprep.subr.mxu0 0.0
    %5141 = vmatpush1.msra.mxu0 0.0
    %5142 = vmatprep.subr.mxu0 0.0
    %5143 = vmatpush1.msra.mxu0 0.0
    %5144 = vmatprep.subr.mxu0 0.0
    %5145 = vmatpush1.msra.mxu0 0.0
    %5146 = vmatprep.subr.mxu0 0.0
    %5147 = vmatpush1.msra.mxu0 0.0
    %5148 = vmatprep.subr.mxu0 0.0
    %5149 = vmatpush1.msra.mxu0 0.0
    %5150 = vmatprep.subr.mxu0 0.0
    %5151 = vmatpush1.msra.mxu0 0.0
    %5152 = vmatprep.subr.mxu0 0.0
    %5153 = vmatpush1.msra.mxu0 0.0
    %5154 = vmatprep.subr.mxu0 0.0
    %5155 = vmatpush1.msra.mxu0 0.0
    %5156 = vmatprep.subr.mxu0 0.0
    %5157 = vmatpush1.msra.mxu0 0.0
    %5158 = vmatprep.subr.mxu0 0.0
    %5159 = vmatpush1.msra.mxu0 0.0
    %5160 = vmatprep.subr.mxu0 0.0
    %5161 = vmatpush1.msra.mxu0 0.0
    %5162 = vmatprep.subr.mxu0 0.0
    %5163 = vmatpush1.msra.mxu0 0.0
    %5164 = vmatprep.mubr.f32.mxu0 0.0
    %5165 = vmatmul.mubr.f32.gmra.mrb[0].mxu0 %v4653
    %v5166 = vpop.f32.mrb[0].mxu0
    %v5167 = vadd.f32 0.0, %v5166
    %v5168 = vpop.f32.mrb[0].mxu0
    %5169 = vdwg.mxu0
    %5170 = vmatprep.subr.mxu0 0.0
    %5171 = vmatpush1.msra.mxu0 %v5070
    %5172 = vmatprep.subr.mxu0 0.0
    %5173 = vmatpush1.msra.mxu0 %v5071
    %5174 = vmatprep.subr.mxu0 0.0
    %5175 = vmatpush1.msra.mxu0 %v5072
    %5176 = vmatprep.subr.mxu0 0.0
    %5177 = vmatpush1.msra.mxu0 %v5073
    %5178 = vmatprep.subr.mxu0 0.0
    %5179 = vmatpush1.msra.mxu0 %v5074
    %5180 = vmatprep.subr.mxu0 0.0
    %5181 = vmatpush1.msra.mxu0 %v5075
    %5182 = vmatprep.subr.mxu0 0.0
    %5183 = vmatpush1.msra.mxu0 %v5076
    %5184 = vmatprep.subr.mxu0 0.0
    %5185 = vmatpush1.msra.mxu0 %v5077
    %5186 = vmatprep.subr.mxu0 0.0
    %5187 = vmatpush1.msra.mxu0 %v5078
    %5188 = vmatprep.subr.mxu0 0.0
    %5189 = vmatpush1.msra.mxu0 %v5079
    %5190 = vmatprep.subr.mxu0 0.0
    %5191 = vmatpush1.msra.mxu0 %v5080
    %5192 = vmatprep.subr.mxu0 0.0
    %5193 = vmatpush1.msra.mxu0 %v5081
    %5194 = vmatprep.subr.mxu0 0.0
    %5195 = vmatpush1.msra.mxu0 %v5082
    %5196 = vmatprep.subr.mxu0 0.0
    %5197 = vmatpush1.msra.mxu0 %v5083
    %5198 = vmatprep.subr.mxu0 0.0
    %5199 = vmatpush1.msra.mxu0 %v5084
    %5200 = vmatprep.subr.mxu0 0.0
    %5201 = vmatpush1.msra.mxu0 0.0
    %5202 = vmatprep.subr.mxu0 0.0
    %5203 = vmatpush1.msra.mxu0 0.0
    %5204 = vmatprep.subr.mxu0 0.0
    %5205 = vmatpush1.msra.mxu0 0.0
    %5206 = vmatprep.subr.mxu0 0.0
    %5207 = vmatpush1.msra.mxu0 0.0
    %5208 = vmatprep.subr.mxu0 0.0
    %5209 = vmatpush1.msra.mxu0 0.0
    %5210 = vmatprep.subr.mxu0 0.0
    %5211 = vmatpush1.msra.mxu0 0.0
    %5212 = vmatprep.subr.mxu0 0.0
    %5213 = vmatpush1.msra.mxu0 0.0
    %5214 = vmatprep.subr.mxu0 0.0
    %5215 = vmatpush1.msra.mxu0 0.0
    %5216 = vmatprep.subr.mxu0 0.0
    %5217 = vmatpush1.msra.mxu0 0.0
    %5218 = vmatprep.subr.mxu0 0.0
    %5219 = vmatpush1.msra.mxu0 0.0
    %5220 = vmatprep.subr.mxu0 0.0
    %5221 = vmatpush1.msra.mxu0 0.0
    %5222 = vmatprep.subr.mxu0 0.0
    %5223 = vmatpush1.msra.mxu0 0.0
    %5224 = vmatprep.subr.mxu0 0.0
    %5225 = vmatpush1.msra.mxu0 0.0
    %5226 = vmatprep.subr.mxu0 0.0
    %5227 = vmatpush1.msra.mxu0 0.0
    %5228 = vmatprep.subr.mxu0 0.0
    %5229 = vmatpush1.msra.mxu0 0.0
    %5230 = vmatprep.subr.mxu0 0.0
    %5231 = vmatpush1.msra.mxu0 0.0
    %5232 = vmatprep.subr.mxu0 0.0
    %5233 = vmatpush1.msra.mxu0 0.0
    %5234 = vmatprep.mubr.f32.mxu0 0.0
    %5235 = vmatmul.mubr.f32.gmra.mrb[0].mxu0 %v4725
    %v5236 = vpop.f32.mrb[0].mxu0
    %v5237 = vadd.f32 %v5167, %v5236
    %v5238 = vpop.f32.mrb[0].mxu0
    %5239 = vdwg.mxu0
    %v5240 = vld [vmem:[%s2336] sm:$0xff]
    %v5241 = vld [vmem:[%s2336 + $0x8] sm:$0xff]
    %v5242 = vld [vmem:[%s2336 + $0x10] sm:$0xff]
    %v5243 = vld [vmem:[%s2336 + $0x18] sm:$0xff]
    %v5244 = vld [vmem:[%s2336 + $0x20] sm:$0xff]
    %v5245 = vld [vmem:[%s2336 + $0x28] sm:$0xff]
    %v5246 = vld [vmem:[%s2336 + $0x30] sm:$0xff]
    %v5247 = vld [vmem:[%s2336 + $0x38] sm:$0xff]
    %v5248 = vld [vmem:[%s2336 + $0x40] sm:$0xff]
    %v5249 = vld [vmem:[%s2336 + $0x48] sm:$0xff]
    %v5250 = vld [vmem:[%s2336 + $0x50] sm:$0xff]
    %v5251 = vld [vmem:[%s2336 + $0x58] sm:$0xff]
    %v5252 = vld [vmem:[%s2336 + $0x60] sm:$0xff]
    %v5253 = vld [vmem:[%s2336 + $0x68] sm:$0xff]
    %v5254 = vld [vmem:[%s2336 + $0x70] sm:$0xff]
    %5255 = vmatprep.subr.mxu0 0.0
    %5256 = vmatpush1.msra.mxu0 %v5240
    %5257 = vmatprep.subr.mxu0 0.0
    %5258 = vmatpush1.msra.mxu0 %v5241
    %5259 = vmatprep.subr.mxu0 0.0
    %5260 = vmatpush1.msra.mxu0 %v5242
    %5261 = vmatprep.subr.mxu0 0.0
    %5262 = vmatpush1.msra.mxu0 %v5243
    %5263 = vmatprep.subr.mxu0 0.0
    %5264 = vmatpush1.msra.mxu0 %v5244
    %5265 = vmatprep.subr.mxu0 0.0
    %5266 = vmatpush1.msra.mxu0 %v5245
    %5267 = vmatprep.subr.mxu0 0.0
    %5268 = vmatpush1.msra.mxu0 %v5246
    %5269 = vmatprep.subr.mxu0 0.0
    %5270 = vmatpush1.msra.mxu0 %v5247
    %5271 = vmatprep.subr.mxu0 0.0
    %5272 = vmatpush1.msra.mxu0 %v5248
    %5273 = vmatprep.subr.mxu0 0.0
    %5274 = vmatpush1.msra.mxu0 %v5249
    %5275 = vmatprep.subr.mxu0 0.0
    %5276 = vmatpush1.msra.mxu0 %v5250
    %5277 = vmatprep.subr.mxu0 0.0
    %5278 = vmatpush1.msra.mxu0 %v5251
    %5279 = vmatprep.subr.mxu0 0.0
    %5280 = vmatpush1.msra.mxu0 %v5252
    %5281 = vmatprep.subr.mxu0 0.0
    %5282 = vmatpush1.msra.mxu0 %v5253
    %5283 = vmatprep.subr.mxu0 0.0
    %5284 = vmatpush1.msra.mxu0 %v5254
    %5285 = vmatprep.subr.mxu0 0.0
    %5286 = vmatpush1.msra.mxu0 0.0
    %5287 = vmatprep.subr.mxu0 0.0
    %5288 = vmatpush1.msra.mxu0 0.0
    %5289 = vmatprep.subr.mxu0 0.0
    %5290 = vmatpush1.msra.mxu0 0.0
    %5291 = vmatprep.subr.mxu0 0.0
    %5292 = vmatpush1.msra.mxu0 0.0
    %5293 = vmatprep.subr.mxu0 0.0
    %5294 = vmatpush1.msra.mxu0 0.0
    %5295 = vmatprep.subr.mxu0 0.0
    %5296 = vmatpush1.msra.mxu0 0.0
    %5297 = vmatprep.subr.mxu0 0.0
    %5298 = vmatpush1.msra.mxu0 0.0
    %5299 = vmatprep.subr.mxu0 0.0
    %5300 = vmatpush1.msra.mxu0 0.0
    %5301 = vmatprep.subr.mxu0 0.0
    %5302 = vmatpush1.msra.mxu0 0.0
    %5303 = vmatprep.subr.mxu0 0.0
    %5304 = vmatpush1.msra.mxu0 0.0
    %5305 = vmatprep.subr.mxu0 0.0
    %5306 = vmatpush1.msra.mxu0 0.0
    %5307 = vmatprep.subr.mxu0 0.0
    %5308 = vmatpush1.msra.mxu0 0.0
    %5309 = vmatprep.subr.mxu0 0.0
    %5310 = vmatpush1.msra.mxu0 0.0
    %5311 = vmatprep.subr.mxu0 0.0
    %5312 = vmatpush1.msra.mxu0 0.0
    %5313 = vmatprep.subr.mxu0 0.0
    %5314 = vmatpush1.msra.mxu0 0.0
    %5315 = vmatprep.subr.mxu0 0.0
    %5316 = vmatpush1.msra.mxu0 0.0
    %5317 = vmatprep.subr.mxu0 0.0
    %5318 = vmatpush1.msra.mxu0 0.0
    %5319 = vmatprep.mubr.f32.mxu0 0.0
    %5320 = vmatmul.mubr.f32.gmra.mrb[0].mxu0 %v4815
    %v5321 = vpop.f32.mrb[0].mxu0
    %v5322 = vadd.f32 0.0, %v5321
    %v5323 = vpop.f32.mrb[0].mxu0
    %5324 = vdwg.mxu0
    %v5325 = vadd.f32 %v5237, %v5322
    %v5326 = vld [vmem:[%s2423] sm:$0xff]
    %v5327 = vld [vmem:[%s2423 + $0x8] sm:$0xff]
    %v5328 = vld [vmem:[%s2423 + $0x10] sm:$0xff]
    %v5329 = vld [vmem:[%s2423 + $0x18] sm:$0xff]
    %v5330 = vld [vmem:[%s2423 + $0x20] sm:$0xff]
    %v5331 = vld [vmem:[%s2423 + $0x28] sm:$0xff]
    %v5332 = vld [vmem:[%s2423 + $0x30] sm:$0xff]
    %v5333 = vld [vmem:[%s2423 + $0x38] sm:$0xff]
    %v5334 = vld [vmem:[%s2423 + $0x40] sm:$0xff]
    %v5335 = vld [vmem:[%s2423 + $0x48] sm:$0xff]
    %v5336 = vld [vmem:[%s2423 + $0x50] sm:$0xff]
    %v5337 = vld [vmem:[%s2423 + $0x58] sm:$0xff]
    %v5338 = vld [vmem:[%s2423 + $0x60] sm:$0xff]
    %v5339 = vld [vmem:[%s2423 + $0x68] sm:$0xff]
    %v5340 = vld [vmem:[%s2423 + $0x70] sm:$0xff]
    %5341 = vmatprep.subr.mxu0 0.0
    %5342 = vmatpush1.msra.mxu0 %v5326
    %5343 = vmatprep.subr.mxu0 0.0
    %5344 = vmatpush1.msra.mxu0 %v5327
    %5345 = vmatprep.subr.mxu0 0.0
    %5346 = vmatpush1.msra.mxu0 %v5328
    %5347 = vmatprep.subr.mxu0 0.0
    %5348 = vmatpush1.msra.mxu0 %v5329
    %5349 = vmatprep.subr.mxu0 0.0
    %5350 = vmatpush1.msra.mxu0 %v5330
    %5351 = vmatprep.subr.mxu0 0.0
    %5352 = vmatpush1.msra.mxu0 %v5331
    %5353 = vmatprep.subr.mxu0 0.0
    %5354 = vmatpush1.msra.mxu0 %v5332
    %5355 = vmatprep.subr.mxu0 0.0
    %5356 = vmatpush1.msra.mxu0 %v5333
    %5357 = vmatprep.subr.mxu0 0.0
    %5358 = vmatpush1.msra.mxu0 %v5334
    %5359 = vmatprep.subr.mxu0 0.0
    %5360 = vmatpush1.msra.mxu0 %v5335
    %5361 = vmatprep.subr.mxu0 0.0
    %5362 = vmatpush1.msra.mxu0 %v5336
    %5363 = vmatprep.subr.mxu0 0.0
    %5364 = vmatpush1.msra.mxu0 %v5337
    %5365 = vmatprep.subr.mxu0 0.0
    %5366 = vmatpush1.msra.mxu0 %v5338
    %5367 = vmatprep.subr.mxu0 0.0
    %5368 = vmatpush1.msra.mxu0 %v5339
    %5369 = vmatprep.subr.mxu0 0.0
    %5370 = vmatpush1.msra.mxu0 %v5340
    %5371 = vmatprep.subr.mxu0 0.0
    %5372 = vmatpush1.msra.mxu0 0.0
    %5373 = vmatprep.subr.mxu0 0.0
    %5374 = vmatpush1.msra.mxu0 0.0
    %5375 = vmatprep.subr.mxu0 0.0
    %5376 = vmatpush1.msra.mxu0 0.0
    %5377 = vmatprep.subr.mxu0 0.0
    %5378 = vmatpush1.msra.mxu0 0.0
    %5379 = vmatprep.subr.mxu0 0.0
    %5380 = vmatpush1.msra.mxu0 0.0
    %5381 = vmatprep.subr.mxu0 0.0
    %5382 = vmatpush1.msra.mxu0 0.0
    %5383 = vmatprep.subr.mxu0 0.0
    %5384 = vmatpush1.msra.mxu0 0.0
    %5385 = vmatprep.subr.mxu0 0.0
    %5386 = vmatpush1.msra.mxu0 0.0
    %5387 = vmatprep.subr.mxu0 0.0
    %5388 = vmatpush1.msra.mxu0 0.0
    %5389 = vmatprep.subr.mxu0 0.0
    %5390 = vmatpush1.msra.mxu0 0.0
    %5391 = vmatprep.subr.mxu0 0.0
    %5392 = vmatpush1.msra.mxu0 0.0
    %5393 = vmatprep.subr.mxu0 0.0
    %5394 = vmatpush1.msra.mxu0 0.0
    %5395 = vmatprep.subr.mxu0 0.0
    %5396 = vmatpush1.msra.mxu0 0.0
    %5397 = vmatprep.subr.mxu0 0.0
    %5398 = vmatpush1.msra.mxu0 0.0
    %5399 = vmatprep.subr.mxu0 0.0
    %5400 = vmatpush1.msra.mxu0 0.0
    %5401 = vmatprep.subr.mxu0 0.0
    %5402 = vmatpush1.msra.mxu0 0.0
    %5403 = vmatprep.subr.mxu0 0.0
    %5404 = vmatpush1.msra.mxu0 0.0
    %5405 = vmatprep.mubr.f32.mxu0 0.0
    %5406 = vmatmul.mubr.f32.gmra.mrb[0].mxu0 %v4906
    %v5407 = vpop.f32.mrb[0].mxu0
    %v5408 = vadd.f32 0.0, %v5407
    %v5409 = vpop.f32.mrb[0].mxu0
    %5410 = vdwg.mxu0
    %v5411 = vadd.f32 %v5325, %v5408
    %v5412 = vld [vmem:[%s2510] sm:$0xff]
    %v5413 = vld [vmem:[%s2510 + $0x8] sm:$0xff]
    %v5414 = vld [vmem:[%s2510 + $0x10] sm:$0xff]
    %v5415 = vld [vmem:[%s2510 + $0x18] sm:$0xff]
    %v5416 = vld [vmem:[%s2510 + $0x20] sm:$0xff]
    %v5417 = vld [vmem:[%s2510 + $0x28] sm:$0xff]
    %v5418 = vld [vmem:[%s2510 + $0x30] sm:$0xff]
    %v5419 = vld [vmem:[%s2510 + $0x38] sm:$0xff]
    %v5420 = vld [vmem:[%s2510 + $0x40] sm:$0xff]
    %v5421 = vld [vmem:[%s2510 + $0x48] sm:$0xff]
    %v5422 = vld [vmem:[%s2510 + $0x50] sm:$0xff]
    %v5423 = vld [vmem:[%s2510 + $0x58] sm:$0xff]
    %v5424 = vld [vmem:[%s2510 + $0x60] sm:$0xff]
    %v5425 = vld [vmem:[%s2510 + $0x68] sm:$0xff]
    %v5426 = vld [vmem:[%s2510 + $0x70] sm:$0xff]
    %5427 = vmatprep.subr.mxu0 0.0
    %5428 = vmatpush1.msra.mxu0 %v5412
    %5429 = vmatprep.subr.mxu0 0.0
    %5430 = vmatpush1.msra.mxu0 %v5413
    %5431 = vmatprep.subr.mxu0 0.0
    %5432 = vmatpush1.msra.mxu0 %v5414
    %5433 = vmatprep.subr.mxu0 0.0
    %5434 = vmatpush1.msra.mxu0 %v5415
    %5435 = vmatprep.subr.mxu0 0.0
    %5436 = vmatpush1.msra.mxu0 %v5416
    %5437 = vmatprep.subr.mxu0 0.0
    %5438 = vmatpush1.msra.mxu0 %v5417
    %5439 = vmatprep.subr.mxu0 0.0
    %5440 = vmatpush1.msra.mxu0 %v5418
    %5441 = vmatprep.subr.mxu0 0.0
    %5442 = vmatpush1.msra.mxu0 %v5419
    %5443 = vmatprep.subr.mxu0 0.0
    %5444 = vmatpush1.msra.mxu0 %v5420
    %5445 = vmatprep.subr.mxu0 0.0
    %5446 = vmatpush1.msra.mxu0 %v5421
    %5447 = vmatprep.subr.mxu0 0.0
    %5448 = vmatpush1.msra.mxu0 %v5422
    %5449 = vmatprep.subr.mxu0 0.0
    %5450 = vmatpush1.msra.mxu0 %v5423
    %5451 = vmatprep.subr.mxu0 0.0
    %5452 = vmatpush1.msra.mxu0 %v5424
    %5453 = vmatprep.subr.mxu0 0.0
    %5454 = vmatpush1.msra.mxu0 %v5425
    %5455 = vmatprep.subr.mxu0 0.0
    %5456 = vmatpush1.msra.mxu0 %v5426
    %5457 = vmatprep.subr.mxu0 0.0
    %5458 = vmatpush1.msra.mxu0 0.0
    %5459 = vmatprep.subr.mxu0 0.0
    %5460 = vmatpush1.msra.mxu0 0.0
    %5461 = vmatprep.subr.mxu0 0.0
    %5462 = vmatpush1.msra.mxu0 0.0
    %5463 = vmatprep.subr.mxu0 0.0
    %5464 = vmatpush1.msra.mxu0 0.0
    %5465 = vmatprep.subr.mxu0 0.0
    %5466 = vmatpush1.msra.mxu0 0.0
    %5467 = vmatprep.subr.mxu0 0.0
    %5468 = vmatpush1.msra.mxu0 0.0
    %5469 = vmatprep.subr.mxu0 0.0
    %5470 = vmatpush1.msra.mxu0 0.0
    %5471 = vmatprep.subr.mxu0 0.0
    %5472 = vmatpush1.msra.mxu0 0.0
    %5473 = vmatprep.subr.mxu0 0.0
    %5474 = vmatpush1.msra.mxu0 0.0
    %5475 = vmatprep.subr.mxu0 0.0
    %5476 = vmatpush1.msra.mxu0 0.0
    %5477 = vmatprep.subr.mxu0 0.0
    %5478 = vmatpush1.msra.mxu0 0.0
    %5479 = vmatprep.subr.mxu0 0.0
    %5480 = vmatpush1.msra.mxu0 0.0
    %5481 = vmatprep.subr.mxu0 0.0
    %5482 = vmatpush1.msra.mxu0 0.0
    %5483 = vmatprep.subr.mxu0 0.0
    %5484 = vmatpush1.msra.mxu0 0.0
    %5485 = vmatprep.subr.mxu0 0.0
    %5486 = vmatpush1.msra.mxu0 0.0
    %5487 = vmatprep.subr.mxu0 0.0
    %5488 = vmatpush1.msra.mxu0 0.0
    %5489 = vmatprep.subr.mxu0 0.0
    %5490 = vmatpush1.msra.mxu0 0.0
    %5491 = vmatprep.mubr.f32.mxu0 0.0
    %5492 = vmatmul.mubr.f32.gmra.mrb[0].mxu0 %v4997
    %v5493 = vpop.f32.mrb[0].mxu0
    %v5494 = vadd.f32 0.0, %v5493
    %v5495 = vpop.f32.mrb[0].mxu0
    %5496 = vdwg.mxu0
    %v5497 = vadd.f32 %v5411, %v5494
    %v5498 = vmax.f32 %v5069, %v5497
    %v5499 = vld [vmem:[%s9] sm:$0x1]
    %v5501 = vrot.slane %v5498, 1
    %v5503 = vmax.f32 %v5498, %v5501
    %v5504 = vld [vmem:[%s7] sm:$0x1]
    %v5505 = vadd.f32 %v5503, %v5504
    %v5506 = vmax.f32 %v5505, 0.0
    %v5507 = vld [vmem:[%s8] sm:$0xff]
    %v5508 = vld [vmem:[%s8 + $0x8] sm:$0xff]
    %v5509 = vld [vmem:[%s8 + $0x10] sm:$0xff]
    %v5510 = vld [vmem:[%s8 + $0x18] sm:$0xff]
    %v5511 = vld [vmem:[%s8 + $0x20] sm:$0xff]
    %v5512 = vld [vmem:[%s8 + $0x28] sm:$0xff]
    %v5513 = vld [vmem:[%s8 + $0x30] sm:$0xff]
    %v5514 = vld [vmem:[%s8 + $0x38] sm:$0xff]
    %v5515 = vld [vmem:[%s8 + $0x40] sm:$0xff]
    %v5516 = vld [vmem:[%s8 + $0x48] sm:$0xff]
    %v5518 = vsel %vm2616, %v5506, 0
    %5520 = vmatprep.subr.mxu0 0.0
    %5521 = vmatpush1.msra.mxu0 %v5507
    %5522 = vmatprep.subr.mxu0 0.0
    %5523 = vmatpush1.msra.mxu0 %v5508
    %5524 = vmatprep.subr.mxu0 0.0
    %5525 = vmatpush1.msra.mxu0 %v5509
    %5526 = vmatprep.subr.mxu0 0.0
    %5527 = vmatpush1.msra.mxu0 %v5510
    %5528 = vmatprep.subr.mxu0 0.0
    %5529 = vmatpush1.msra.mxu0 %v5511
    %5530 = vmatprep.subr.mxu0 0.0
    %5531 = vmatpush1.msra.mxu0 %v5512
    %5532 = vmatprep.subr.mxu0 0.0
    %5533 = vmatpush1.msra.mxu0 %v5513
    %5534 = vmatprep.subr.mxu0 0.0
    %5535 = vmatpush1.msra.mxu0 %v5514
    %5536 = vmatprep.subr.mxu0 0.0
    %5537 = vmatpush1.msra.mxu0 %v5515
    %5538 = vmatprep.subr.mxu0 0.0
    %5539 = vmatpush1.msra.mxu0 %v5516
    %5540 = vmatprep.subr.mxu0 0.0
    %5541 = vmatpush1.msra.mxu0 0.0
    %5542 = vmatprep.subr.mxu0 0.0
    %5543 = vmatpush1.msra.mxu0 0.0
    %5544 = vmatprep.subr.mxu0 0.0
    %5545 = vmatpush1.msra.mxu0 0.0
    %5546 = vmatprep.subr.mxu0 0.0
    %5547 = vmatpush1.msra.mxu0 0.0
    %5548 = vmatprep.subr.mxu0 0.0
    %5549 = vmatpush1.msra.mxu0 0.0
    %5550 = vmatprep.subr.mxu0 0.0
    %5551 = vmatpush1.msra.mxu0 0.0
    %5552 = vmatprep.subr.mxu0 0.0
    %5553 = vmatpush1.msra.mxu0 0.0
    %5554 = vmatprep.subr.mxu0 0.0
    %5555 = vmatpush1.msra.mxu0 0.0
    %5556 = vmatprep.subr.mxu0 0.0
    %5557 = vmatpush1.msra.mxu0 0.0
    %5558 = vmatprep.subr.mxu0 0.0
    %5559 = vmatpush1.msra.mxu0 0.0
    %5560 = vmatprep.subr.mxu0 0.0
    %5561 = vmatpush1.msra.mxu0 0.0
    %5562 = vmatprep.subr.mxu0 0.0
    %5563 = vmatpush1.msra.mxu0 0.0
    %5564 = vmatprep.subr.mxu0 0.0
    %5565 = vmatpush1.msra.mxu0 0.0
    %5566 = vmatprep.subr.mxu0 0.0
    %5567 = vmatpush1.msra.mxu0 0.0
    %5568 = vmatprep.subr.mxu0 0.0
    %5569 = vmatpush1.msra.mxu0 0.0
    %5570 = vmatprep.subr.mxu0 0.0
    %5571 = vmatpush1.msra.mxu0 0.0
    %5572 = vmatprep.subr.mxu0 0.0
    %5573 = vmatpush1.msra.mxu0 0.0
    %5574 = vmatprep.subr.mxu0 0.0
    %5575 = vmatpush1.msra.mxu0 0.0
    %5576 = vmatprep.subr.mxu0 0.0
    %5577 = vmatpush1.msra.mxu0 0.0
    %5578 = vmatprep.subr.mxu0 0.0
    %5579 = vmatpush1.msra.mxu0 0.0
    %5580 = vmatprep.subr.mxu0 0.0
    %5581 = vmatpush1.msra.mxu0 0.0
    %5582 = vmatprep.subr.mxu0 0.0
    %5583 = vmatpush1.msra.mxu0 0.0
    %5584 = vmatprep.mubr.f32.mxu0 0.0
    %5585 = vmatmul.mubr.f32.gmra.mrb[0].mxu0 %v5518
    %v5586 = vpop.f32.mrb[0].mxu0
    %v5587 = vadd.f32 0.0, %v5586
    %v5588 = vpop.f32.mrb[0].mxu0
    %5589 = vdwg.mxu0
    %v5590 = vadd.f32 %v5499, %v5587
    %v5592 = vlaneseq
    %v5593 = vshrl.u32 %v5592, 7
    %v5594 = vsub.s32 0, %v5593
    %v5595 = vrot.slane %v5504, %v5594
    %v5597 = vadd.f32 %v5503, %v5595
    %v5598 = vmax.f32 %v5597, 0.0
    %v5599 = vld [vmem:[%s2699] sm:$0xff]
    %v5600 = vld [vmem:[%s2699 + $0x8] sm:$0xff]
    %v5601 = vld [vmem:[%s2699 + $0x10] sm:$0xff]
    %v5602 = vld [vmem:[%s2699 + $0x18] sm:$0xff]
    %v5603 = vld [vmem:[%s2699 + $0x20] sm:$0xff]
    %v5604 = vld [vmem:[%s2699 + $0x28] sm:$0xff]
    %v5605 = vld [vmem:[%s2699 + $0x30] sm:$0xff]
    %v5606 = vld [vmem:[%s2699 + $0x38] sm:$0xff]
    %v5607 = vld [vmem:[%s2699 + $0x40] sm:$0xff]
    %v5608 = vld [vmem:[%s2699 + $0x48] sm:$0xff]
    %v5610 = vrot.slane %v5598, 2
    %v5611 = vsel %vm2616, %v5610, 0
    %5613 = vmatprep.subr.mxu0 0.0
    %5614 = vmatpush1.msra.mxu0 %v5599
    %5615 = vmatprep.subr.mxu0 0.0
    %5616 = vmatpush1.msra.mxu0 %v5600
    %5617 = vmatprep.subr.mxu0 0.0
    %5618 = vmatpush1.msra.mxu0 %v5601
    %5619 = vmatprep.subr.mxu0 0.0
    %5620 = vmatpush1.msra.mxu0 %v5602
    %5621 = vmatprep.subr.mxu0 0.0
    %5622 = vmatpush1.msra.mxu0 %v5603
    %5623 = vmatprep.subr.mxu0 0.0
    %5624 = vmatpush1.msra.mxu0 %v5604
    %5625 = vmatprep.subr.mxu0 0.0
    %5626 = vmatpush1.msra.mxu0 %v5605
    %5627 = vmatprep.subr.mxu0 0.0
    %5628 = vmatpush1.msra.mxu0 %v5606
    %5629 = vmatprep.subr.mxu0 0.0
    %5630 = vmatpush1.msra.mxu0 %v5607
    %5631 = vmatprep.subr.mxu0 0.0
    %5632 = vmatpush1.msra.mxu0 %v5608
    %5633 = vmatprep.subr.mxu0 0.0
    %5634 = vmatpush1.msra.mxu0 0.0
    %5635 = vmatprep.subr.mxu0 0.0
    %5636 = vmatpush1.msra.mxu0 0.0
    %5637 = vmatprep.subr.mxu0 0.0
    %5638 = vmatpush1.msra.mxu0 0.0
    %5639 = vmatprep.subr.mxu0 0.0
    %5640 = vmatpush1.msra.mxu0 0.0
    %5641 = vmatprep.subr.mxu0 0.0
    %5642 = vmatpush1.msra.mxu0 0.0
    %5643 = vmatprep.subr.mxu0 0.0
    %5644 = vmatpush1.msra.mxu0 0.0
    %5645 = vmatprep.subr.mxu0 0.0
    %5646 = vmatpush1.msra.mxu0 0.0
    %5647 = vmatprep.subr.mxu0 0.0
    %5648 = vmatpush1.msra.mxu0 0.0
    %5649 = vmatprep.subr.mxu0 0.0
    %5650 = vmatpush1.msra.mxu0 0.0
    %5651 = vmatprep.subr.mxu0 0.0
    %5652 = vmatpush1.msra.mxu0 0.0
    %5653 = vmatprep.subr.mxu0 0.0
    %5654 = vmatpush1.msra.mxu0 0.0
    %5655 = vmatprep.subr.mxu0 0.0
    %5656 = vmatpush1.msra.mxu0 0.0
    %5657 = vmatprep.subr.mxu0 0.0
    %5658 = vmatpush1.msra.mxu0 0.0
    %5659 = vmatprep.subr.mxu0 0.0
    %5660 = vmatpush1.msra.mxu0 0.0
    %5661 = vmatprep.subr.mxu0 0.0
    %5662 = vmatpush1.msra.mxu0 0.0
    %5663 = vmatprep.subr.mxu0 0.0
    %5664 = vmatpush1.msra.mxu0 0.0
    %5665 = vmatprep.subr.mxu0 0.0
    %5666 = vmatpush1.msra.mxu0 0.0
    %5667 = vmatprep.subr.mxu0 0.0
    %5668 = vmatpush1.msra.mxu0 0.0
    %5669 = vmatprep.subr.mxu0 0.0
    %5670 = vmatpush1.msra.mxu0 0.0
    %5671 = vmatprep.subr.mxu0 0.0
    %5672 = vmatpush1.msra.mxu0 0.0
    %5673 = vmatprep.subr.mxu0 0.0
    %5674 = vmatpush1.msra.mxu0 0.0
    %5675 = vmatprep.subr.mxu0 0.0
    %5676 = vmatpush1.msra.mxu0 0.0
    %5677 = vmatprep.mubr.f32.mxu0 0.0
    %5678 = vmatmul.mubr.f32.gmra.mrb[0].mxu0 %v5611
    %v5679 = vpop.f32.mrb[0].mxu0
    %v5680 = vadd.f32 0.0, %v5679
    %v5681 = vpop.f32.mrb[0].mxu0
    %5682 = vdwg.mxu0
    %v5683 = vadd.f32 %v5590, %v5680
    %v5684 = vld [vmem:[%s2785] sm:$0xff]
    %v5685 = vld [vmem:[%s2785 + $0x8] sm:$0xff]
    %v5686 = vld [vmem:[%s2785 + $0x10] sm:$0xff]
    %v5687 = vld [vmem:[%s2785 + $0x18] sm:$0xff]
    %v5688 = vld [vmem:[%s2785 + $0x20] sm:$0xff]
    %v5689 = vld [vmem:[%s2785 + $0x28] sm:$0xff]
    %v5690 = vld [vmem:[%s2785 + $0x30] sm:$0xff]
    %v5691 = vld [vmem:[%s2785 + $0x38] sm:$0xff]
    %v5692 = vld [vmem:[%s2785 + $0x40] sm:$0xff]
    %v5693 = vld [vmem:[%s2785 + $0x48] sm:$0xff]
    %v5694 = vrot.slane %v5598, 4
    %v5695 = vsel %vm2616, %v5694, 0
    %5697 = vmatprep.subr.mxu0 0.0
    %5698 = vmatpush1.msra.mxu0 %v5684
    %5699 = vmatprep.subr.mxu0 0.0
    %5700 = vmatpush1.msra.mxu0 %v5685
    %5701 = vmatprep.subr.mxu0 0.0
    %5702 = vmatpush1.msra.mxu0 %v5686
    %5703 = vmatprep.subr.mxu0 0.0
    %5704 = vmatpush1.msra.mxu0 %v5687
    %5705 = vmatprep.subr.mxu0 0.0
    %5706 = vmatpush1.msra.mxu0 %v5688
    %5707 = vmatprep.subr.mxu0 0.0
    %5708 = vmatpush1.msra.mxu0 %v5689
    %5709 = vmatprep.subr.mxu0 0.0
    %5710 = vmatpush1.msra.mxu0 %v5690
    %5711 = vmatprep.subr.mxu0 0.0
    %5712 = vmatpush1.msra.mxu0 %v5691
    %5713 = vmatprep.subr.mxu0 0.0
    %5714 = vmatpush1.msra.mxu0 %v5692
    %5715 = vmatprep.subr.mxu0 0.0
    %5716 = vmatpush1.msra.mxu0 %v5693
    %5717 = vmatprep.subr.mxu0 0.0
    %5718 = vmatpush1.msra.mxu0 0.0
    %5719 = vmatprep.subr.mxu0 0.0
    %5720 = vmatpush1.msra.mxu0 0.0
    %5721 = vmatprep.subr.mxu0 0.0
    %5722 = vmatpush1.msra.mxu0 0.0
    %5723 = vmatprep.subr.mxu0 0.0
    %5724 = vmatpush1.msra.mxu0 0.0
    %5725 = vmatprep.subr.mxu0 0.0
    %5726 = vmatpush1.msra.mxu0 0.0
    %5727 = vmatprep.subr.mxu0 0.0
    %5728 = vmatpush1.msra.mxu0 0.0
    %5729 = vmatprep.subr.mxu0 0.0
    %5730 = vmatpush1.msra.mxu0 0.0
    %5731 = vmatprep.subr.mxu0 0.0
    %5732 = vmatpush1.msra.mxu0 0.0
    %5733 = vmatprep.subr.mxu0 0.0
    %5734 = vmatpush1.msra.mxu0 0.0
    %5735 = vmatprep.subr.mxu0 0.0
    %5736 = vmatpush1.msra.mxu0 0.0
    %5737 = vmatprep.subr.mxu0 0.0
    %5738 = vmatpush1.msra.mxu0 0.0
    %5739 = vmatprep.subr.mxu0 0.0
    %5740 = vmatpush1.msra.mxu0 0.0
    %5741 = vmatprep.subr.mxu0 0.0
    %5742 = vmatpush1.msra.mxu0 0.0
    %5743 = vmatprep.subr.mxu0 0.0
    %5744 = vmatpush1.msra.mxu0 0.0
    %5745 = vmatprep.subr.mxu0 0.0
    %5746 = vmatpush1.msra.mxu0 0.0
    %5747 = vmatprep.subr.mxu0 0.0
    %5748 = vmatpush1.msra.mxu0 0.0
    %5749 = vmatprep.subr.mxu0 0.0
    %5750 = vmatpush1.msra.mxu0 0.0
    %5751 = vmatprep.subr.mxu0 0.0
    %5752 = vmatpush1.msra.mxu0 0.0
    %5753 = vmatprep.subr.mxu0 0.0
    %5754 = vmatpush1.msra.mxu0 0.0
    %5755 = vmatprep.subr.mxu0 0.0
    %5756 = vmatpush1.msra.mxu0 0.0
    %5757 = vmatprep.subr.mxu0 0.0
    %5758 = vmatpush1.msra.mxu0 0.0
    %5759 = vmatprep.subr.mxu0 0.0
    %5760 = vmatpush1.msra.mxu0 0.0
    %5761 = vmatprep.mubr.f32.mxu0 0.0
    %5762 = vmatmul.mubr.f32.gmra.mrb[0].mxu0 %v5695
    %v5763 = vpop.f32.mrb[0].mxu0
    %v5764 = vadd.f32 0.0, %v5763
    %v5765 = vpop.f32.mrb[0].mxu0
    %5766 = vdwg.mxu0
    %v5767 = vadd.f32 %v5683, %v5764
    %v5768 = vld [vmem:[%s2870] sm:$0xff]
    %v5769 = vld [vmem:[%s2870 + $0x8] sm:$0xff]
    %v5770 = vld [vmem:[%s2870 + $0x10] sm:$0xff]
    %v5771 = vld [vmem:[%s2870 + $0x18] sm:$0xff]
    %v5772 = vld [vmem:[%s2870 + $0x20] sm:$0xff]
    %v5773 = vld [vmem:[%s2870 + $0x28] sm:$0xff]
    %v5774 = vld [vmem:[%s2870 + $0x30] sm:$0xff]
    %v5775 = vld [vmem:[%s2870 + $0x38] sm:$0xff]
    %v5776 = vld [vmem:[%s2870 + $0x40] sm:$0xff]
    %v5777 = vld [vmem:[%s2870 + $0x48] sm:$0xff]
    %v5778 = vrot.slane %v5598, 6
    %v5779 = vsel %vm2616, %v5778, 0
    %5781 = vmatprep.subr.mxu0 0.0
    %5782 = vmatpush1.msra.mxu0 %v5768
    %5783 = vmatprep.subr.mxu0 0.0
    %5784 = vmatpush1.msra.mxu0 %v5769
    %5785 = vmatprep.subr.mxu0 0.0
    %5786 = vmatpush1.msra.mxu0 %v5770
    %5787 = vmatprep.subr.mxu0 0.0
    %5788 = vmatpush1.msra.mxu0 %v5771
    %5789 = vmatprep.subr.mxu0 0.0
    %5790 = vmatpush1.msra.mxu0 %v5772
    %5791 = vmatprep.subr.mxu0 0.0
    %5792 = vmatpush1.msra.mxu0 %v5773
    %5793 = vmatprep.subr.mxu0 0.0
    %5794 = vmatpush1.msra.mxu0 %v5774
    %5795 = vmatprep.subr.mxu0 0.0
    %5796 = vmatpush1.msra.mxu0 %v5775
    %5797 = vmatprep.subr.mxu0 0.0
    %5798 = vmatpush1.msra.mxu0 %v5776
    %5799 = vmatprep.subr.mxu0 0.0
    %5800 = vmatpush1.msra.mxu0 %v5777
    %5801 = vmatprep.subr.mxu0 0.0
    %5802 = vmatpush1.msra.mxu0 0.0
    %5803 = vmatprep.subr.mxu0 0.0
    %5804 = vmatpush1.msra.mxu0 0.0
    %5805 = vmatprep.subr.mxu0 0.0
    %5806 = vmatpush1.msra.mxu0 0.0
    %5807 = vmatprep.subr.mxu0 0.0
    %5808 = vmatpush1.msra.mxu0 0.0
    %5809 = vmatprep.subr.mxu0 0.0
    %5810 = vmatpush1.msra.mxu0 0.0
    %5811 = vmatprep.subr.mxu0 0.0
    %5812 = vmatpush1.msra.mxu0 0.0
    %5813 = vmatprep.subr.mxu0 0.0
    %5814 = vmatpush1.msra.mxu0 0.0
    %5815 = vmatprep.subr.mxu0 0.0
    %5816 = vmatpush1.msra.mxu0 0.0
    %5817 = vmatprep.subr.mxu0 0.0
    %5818 = vmatpush1.msra.mxu0 0.0
    %5819 = vmatprep.subr.mxu0 0.0
    %5820 = vmatpush1.msra.mxu0 0.0
    %5821 = vmatprep.subr.mxu0 0.0
    %5822 = vmatpush1.msra.mxu0 0.0
    %5823 = vmatprep.subr.mxu0 0.0
    %5824 = vmatpush1.msra.mxu0 0.0
    %5825 = vmatprep.subr.mxu0 0.0
    %5826 = vmatpush1.msra.mxu0 0.0
    %5827 = vmatprep.subr.mxu0 0.0
    %5828 = vmatpush1.msra.mxu0 0.0
    %5829 = vmatprep.subr.mxu0 0.0
    %5830 = vmatpush1.msra.mxu0 0.0
    %5831 = vmatprep.subr.mxu0 0.0
    %5832 = vmatpush1.msra.mxu0 0.0
    %5833 = vmatprep.subr.mxu0 0.0
    %5834 = vmatpush1.msra.mxu0 0.0
    %5835 = vmatprep.subr.mxu0 0.0
    %5836 = vmatpush1.msra.mxu0 0.0
    %5837 = vmatprep.subr.mxu0 0.0
    %5838 = vmatpush1.msra.mxu0 0.0
    %5839 = vmatprep.subr.mxu0 0.0
    %5840 = vmatpush1.msra.mxu0 0.0
    %5841 = vmatprep.subr.mxu0 0.0
    %5842 = vmatpush1.msra.mxu0 0.0
    %5843 = vmatprep.subr.mxu0 0.0
    %5844 = vmatpush1.msra.mxu0 0.0
    %5845 = vmatprep.mubr.f32.mxu0 0.0
    %5846 = vmatmul.mubr.f32.gmra.mrb[0].mxu0 %v5779
    %v5847 = vpop.f32.mrb[0].mxu0
    %v5848 = vadd.f32 0.0, %v5847
    %v5849 = vpop.f32.mrb[0].mxu0
    %5850 = vdwg.mxu0
    %v5851 = vadd.f32 %v5767, %v5848
    %5852 = vst.msk [vmem:[#allocation2 + $0x1] sm:$0x1] %vm2955, %v5851
    // Predicated region
    $region42: #{net_forward.1} parent=1 // pred_check
      _
    $region43: #{net_forward.1} parent=1 // pred_check_branch
      %5854 = sbr.rel (0) target = $region45
    $region44: #{net_forward.1} parent=1 // pred_region
      %s5856 = ssub.s32 32, 32
      %5857 = vsyncadd [#allocation3], %s5856
      %s5859 = sshll.u32 [#allocation2], 4
      %s5860 = int_to_ptr.vmem [resolvable:$true] %s5859
      %5862 = dma.vmem_to_hbm [thread:$0]  %s5860, 32, %s10, [#allocation3]
    $region45: #{net_forward.1} parent=1 // pred_fallthru
      _
    // Predicated region
    $region46: #{net_forward.1} parent=1 // pred_check
      _
    $region47: #{net_forward.1} parent=1 // pred_check_branch
      %5864 = sbr.rel (0) target = $region49
    $region48: #{net_forward.1} parent=1 // pred_region
      %5865 = dma.done [#allocation3], 32
    $region49: #{net_forward.1} parent=1 // pred_fallthru
      _
    %5866 = vsyncpa [#allocation3], 1

</llo_original>
